<compile_context>
chip_gen: v5e
topology: v5e:2x2
jax: 0.10.0
libtpu: 0.0.40
codegen_flags: <defaults>
</compile_context>

<pallas_src>
import math
import functools

import jax
import jax.numpy as jnp
from jax import lax
from jax.experimental import pallas as pl
from jax.experimental.pallas import tpu as pltpu

EPS = 1e-5          # PyTorch GroupNorm default eps
NUM_GROUPS = 8
LANE = 128


def _round_up(n, m):
    return ((n + m - 1) // m) * m


def self_attention_kernel(x_ref, gamma_ref, beta_ref, gmat_ref,
                          wqkv_ref, bqkv_ref, wout_ref, bout_ref,
                          o_ref, *, num_heads, head_dim, head_dim_p, kv_chunk):
    x = x_ref[0]                                   # (S, Cp) float32
    S = x.shape[0]
    nh, Dp = num_heads, head_dim_p

    # ---------------- GroupNorm(8, C) ----------------
    # Column sums via MXU (ones-vector matmul) instead of an XLU cross-sublane
    # reduction.  gmat already folds the group structure and 1/(S * group_size),
    # so one more small matmul broadcasts per-group moments back onto channels.
    ones_row = jnp.ones((1, S), dtype=jnp.float32)
    col_sum = jnp.dot(ones_row, x, preferred_element_type=jnp.float32)        # (1, Cp)
    col_sumsq = jnp.dot(ones_row, x * x, preferred_element_type=jnp.float32)  # (1, Cp)
    mean_g = jnp.dot(col_sum, gmat_ref[...], preferred_element_type=jnp.float32)
    meansq_g = jnp.dot(col_sumsq, gmat_ref[...], preferred_element_type=jnp.float32)
    var_g = jnp.maximum(meansq_g - mean_g * mean_g, 0.0)   # clamp: E[x^2]-E[x]^2 guard
    inv_std = lax.rsqrt(var_g + EPS)
    scale_row = inv_std * gamma_ref[...]                    # (1, Cp)
    shift_row = beta_ref[...] - mean_g * scale_row          # (1, Cp)
    h = x * scale_row + shift_row                           # (S, Cp)

    # ---------------- QKV projection (1x1 conv == matmul, bf16 on the MXU) ----
    hb = h.astype(jnp.bfloat16)
    qkv = jnp.dot(hb, wqkv_ref[...], preferred_element_type=jnp.float32)
    qkv = qkv + bqkv_ref[...]                               # (S, 3*nh*Dp) f32

    # ---------------- multi-head flash-style attention ----------------
    sm_scale = 1.0 / math.sqrt(head_dim)
    n_chunks = S // kv_chunk
    head_outs = []
    # NOTE: nh is small (8); static unroll keeps per-head tiles as full-lane
    # (S, Dp) slices.  A head grid axis would require a separate QKV pre-pass.
    for hd in range(nh):
        qo = hd * Dp
        ko = nh * Dp + hd * Dp
        vo = 2 * nh * Dp + hd * Dp
        q_h = (qkv[:, qo:qo + Dp] * sm_scale).astype(jnp.bfloat16)   # (S, Dp)
        k_h = qkv[:, ko:ko + Dp].astype(jnp.bfloat16)                # (S, Dp)
        v_h = qkv[:, vo:vo + Dp].astype(jnp.bfloat16)                # (S, Dp)

        m_i = jnp.full((S, 1), -jnp.inf, dtype=jnp.float32)
        l_i = jnp.zeros((S, 1), dtype=jnp.float32)
        acc = jnp.zeros((S, Dp), dtype=jnp.float32)

        # Online softmax over KV chunks: no (S, S) buffer is ever live.
        for c in range(n_chunks):
            k_c = k_h[c * kv_chunk:(c + 1) * kv_chunk, :]
            v_c = v_h[c * kv_chunk:(c + 1) * kv_chunk, :]
            s = lax.dot_general(q_h, k_c, (((1,), (1,)), ((), ())),
                                preferred_element_type=jnp.float32)   # (S, Tk)
            m_new = jnp.maximum(m_i, jnp.max(s, axis=-1, keepdims=True))
            alpha = jnp.exp(m_i - m_new)
            p = jnp.exp(s - m_new)
            l_i = alpha * l_i + jnp.sum(p, axis=-1, keepdims=True)
            acc = alpha * acc + jnp.dot(p.astype(jnp.bfloat16), v_c,
                                        preferred_element_type=jnp.float32)
            m_i = m_new

        # Deferred softmax normalization on the (S, Dp) output (EUP reciprocal).
        head_outs.append(acc * pl.reciprocal(l_i, approx=True))

    attn_out = jnp.concatenate(head_outs, axis=-1).astype(jnp.bfloat16)   # (S, nh*Dp)

    # ---------------- output projection + residual (single lane-dense store) --
    proj = jnp.dot(attn_out, wout_ref[...], preferred_element_type=jnp.float32)
    o_ref[0] = x + proj + bout_ref[...]


@functools.partial(jax.jit, static_argnames=("num_heads", "kv_chunk"))
def self_attention(x_nchw, params, num_heads, kv_chunk=None):
    B, C, H, W = x_nchw.shape
    S = H * W
    assert C % num_heads == 0 and C % NUM_GROUPS == 0
    D = C // num_heads
    nh = num_heads
    Cp = _round_up(C, LANE)
    Dp = _round_up(D, LANE)
    if kv_chunk is None:
        kv_chunk = min(S, 512)
    assert S % kv_chunk == 0

    # NCHW -> (B, S, Cp): channels-last (C on lanes), zero-padded to a lane multiple.
    x = jnp.transpose(x_nchw, (0, 2, 3, 1)).reshape(B, S, C).astype(jnp.float32)
    x = jnp.pad(x, ((0, 0), (0, 0), (0, Cp - C)))

    def pad_last(a, n):
        return jnp.pad(a, [(0, 0)] * (a.ndim - 1) + [(0, n - a.shape[-1])])

    gamma = pad_last(params["gamma"].reshape(1, C).astype(jnp.float32), Cp)
    beta = pad_last(params["beta"].reshape(1, C).astype(jnp.float32), Cp)

    # Group aggregation matrix with 1/(S * group_size) folded in (zero on pad channels).
    cg = C // NUM_GROUPS
    gid = jnp.arange(C) // cg
    gmat = (gid[:, None] == gid[None, :]).astype(jnp.float32) / (cg * S)
    gmat = jnp.pad(gmat, ((0, Cp - C), (0, Cp - C)))

    # QKV conv weight (3C, C, 1, 1): pre-transpose to (Cp, 3*nh*Dp), head-major columns,
    # head_dim zero-padded to Dp so per-head slices in the kernel are full-lane.
    wqkv = params["wqkv"].reshape(3 * C, C).astype(jnp.float32)
    bqkv = params["bqkv"].reshape(3 * C).astype(jnp.float32)

    def split_pad_w(w):                   # (C_out=C, C_in=C) -> (Cp, nh*Dp)
        wt = w.T.reshape(C, nh, D)        # column index = head*D + dim
        wt = jnp.pad(wt, ((0, Cp - C), (0, 0), (0, Dp - D)))
        return wt.reshape(Cp, nh * Dp)

    def split_pad_b(b):                   # (C,) -> (nh*Dp,)
        bt = jnp.pad(b.reshape(nh, D), ((0, 0), (0, Dp - D)))
        return bt.reshape(nh * Dp)

    wqkv_t = jnp.concatenate(
        [split_pad_w(wqkv[i * C:(i + 1) * C]) for i in range(3)], axis=1
    ).astype(jnp.bfloat16)                                           # (Cp, 3*nh*Dp)
    bqkv_p = jnp.concatenate(
        [split_pad_b(bqkv[i * C:(i + 1) * C]) for i in range(3)]
    ).reshape(1, 3 * nh * Dp)

    # Out conv weight (C, C, 1, 1): pre-transpose to (nh*Dp, Cp), rows head-major.
    wout = params["wout"].reshape(C, C).astype(jnp.float32)
    wout_t = wout.T.reshape(nh, D, C)     # row index = head*D + dim
    wout_t = jnp.pad(wout_t, ((0, 0), (0, Dp - D), (0, Cp - C)))
    wout_t = wout_t.reshape(nh * Dp, Cp).astype(jnp.bfloat16)
    bout = pad_last(params["bout"].reshape(1, C).astype(jnp.float32), Cp)

    kernel = functools.partial(self_attention_kernel, num_heads=nh,
                               head_dim=D, head_dim_p=Dp, kv_chunk=kv_chunk)

    out = pl.pallas_call(
        kernel,
        out_shape=jax.ShapeDtypeStruct((B, S, Cp), jnp.float32),
        grid_spec=pltpu.PrefetchScalarGridSpec(
            num_scalar_prefetch=0,
            grid=(B,),
            in_specs=[
                pl.BlockSpec((1, S, Cp), lambda b: (b, 0, 0)),        # x (padded)
                pl.BlockSpec((1, Cp), lambda b: (0, 0)),              # gamma
                pl.BlockSpec((1, Cp), lambda b: (0, 0)),              # beta
                pl.BlockSpec((Cp, Cp), lambda b: (0, 0)),             # group agg matrix
                pl.BlockSpec((Cp, 3 * nh * Dp), lambda b: (0, 0)),    # Wqkv^T (bf16)
                pl.BlockSpec((1, 3 * nh * Dp), lambda b: (0, 0)),     # bqkv
                pl.BlockSpec((nh * Dp, Cp), lambda b: (0, 0)),        # Wout^T (bf16)
                pl.BlockSpec((1, Cp), lambda b: (0, 0)),              # bout
            ],
            out_specs=pl.BlockSpec((1, S, Cp), lambda b: (b, 0, 0)),
        ),
        input_output_aliases={0: 0},      # residual output reuses the x HBM buffer
        compiler_params=pltpu.CompilerParams(dimension_semantics=("parallel",)),
    )(x, gamma, beta, gmat, wqkv_t, bqkv_p, wout_t, bout)

    out = out[:, :, :C]
    return jnp.transpose(out.reshape(B, H, W, C), (0, 3, 1, 2))


def self_attention_reference(x, params, num_heads):
    """Plain-JAX fp32 replica of the PyTorch forward (NCHW)."""
    B, C, H, W = x.shape
    gamma, beta = params["gamma"], params["beta"]
    wqkv = params["wqkv"].reshape(3 * C, C)
    bqkv = params["bqkv"]
    wout = params["wout"].reshape(C, C)
    bout = params["bout"]

    cg = C // NUM_GROUPS
    xg = x.reshape(B, NUM_GROUPS, cg, H, W)
    mean = xg.mean(axis=(2, 3, 4), keepdims=True)
    var = ((xg - mean) ** 2).mean(axis=(2, 3, 4), keepdims=True)
    h = ((xg - mean) / jnp.sqrt(var + EPS)).reshape(B, C, H, W)
    h = h * gamma[None, :, None, None] + beta[None, :, None, None]

    qkv = jnp.einsum("bchw,oc->bohw", h, wqkv) + bqkv[None, :, None, None]
    q, k, v = qkv[:, :C], qkv[:, C:2 * C], qkv[:, 2 * C:]
    D = C // num_heads

    def split(t):
        return t.reshape(B, num_heads, D, H * W).transpose(0, 1, 3, 2)

    q, k, v = split(q), split(k), split(v)
    scale = 1.0 / math.sqrt(D)
    attn = jnp.einsum("bhqd,bhkd->bhqk", q, k) * scale
    attn = jax.nn.softmax(attn, axis=-1)
    o = jnp.einsum("bhqk,bhkd->bhqd", attn, v)
    o = o.transpose(0, 1, 3, 2).reshape(B, C, H, W)
    o = jnp.einsum("bchw,oc->bohw", o, wout) + bout[None, :, None, None]
    return x + o


if __name__ == "__main__":
    B, C, H, W = 2, 32, 8, 8
    num_heads = 8

    key = jax.random.PRNGKey(0)
    kx, kg, kb, kw1, kb1, kw2, kb2 = jax.random.split(key, 7)

    x = jax.random.normal(kx, (B, C, H, W), dtype=jnp.float32)
    params = {
        "gamma": 1.0 + 0.1 * jax.random.normal(kg, (C,), dtype=jnp.float32),
        "beta": 0.1 * jax.random.normal(kb, (C,), dtype=jnp.float32),
        "wqkv": 0.1 * jax.random.normal(kw1, (3 * C, C, 1, 1), dtype=jnp.float32),
        "bqkv": 0.1 * jax.random.normal(kb1, (3 * C,), dtype=jnp.float32),
        "wout": 0.1 * jax.random.normal(kw2, (C, C, 1, 1), dtype=jnp.float32),
        "bout": 0.1 * jax.random.normal(kb2, (C,), dtype=jnp.float32),
    }

    # kv_chunk=32 splits S=64 into 2 KV chunks so the online-softmax path is exercised.
    out = self_attention(x, params, num_heads=num_heads, kv_chunk=32)
    out = jax.block_until_ready(out)

    ref = self_attention_reference(x, params, num_heads)
    assert out.shape == (B, C, H, W)
    # Kernel runs its matmuls in bf16 with fp32 accumulation, so compare against the
    # fp32 reference with a bf16-appropriate tolerance.
    err = float(jnp.max(jnp.abs(out - ref)))
    assert err < 5e-2, f"max abs err = {err}"

    print("KERNEL_OK")
</pallas_src>

<mosaic_0001>
module attributes {stable_mosaic.version = 11 : i64} {
  func.func @self_attention_kernel(%arg0: i32, %arg1: memref<1x64x128xf32, #tpu.memory_space<vmem>>, %arg2: memref<1x128xf32, #tpu.memory_space<vmem>>, %arg3: memref<1x128xf32, #tpu.memory_space<vmem>>, %arg4: memref<128x128xf32, #tpu.memory_space<vmem>>, %arg5: memref<128x3072xbf16, #tpu.memory_space<vmem>>, %arg6: memref<1x3072xf32, #tpu.memory_space<vmem>>, %arg7: memref<1024x128xbf16, #tpu.memory_space<vmem>>, %arg8: memref<1x128xf32, #tpu.memory_space<vmem>>, %arg9: memref<1x64x128xf32, #tpu.memory_space<vmem>>) attributes {dimension_semantics = [#tpu.dimension_semantics<parallel>], iteration_bounds = array<i64: 2>, scalar_prefetch = 0 : i64, scratch_operands = 0 : i64, tpu.core_type = #tpu.core_type<tc>, window_params = [{transform_indices = @transform_0, window_bounds = array<i64: 1, 64, 128>}, {pipeline_mode = #tpu.pipeline_mode<synchronous>, transform_indices = @transform_1, window_bounds = array<i64: 1, 128>}, {pipeline_mode = #tpu.pipeline_mode<synchronous>, transform_indices = @transform_2, window_bounds = array<i64: 1, 128>}, {pipeline_mode = #tpu.pipeline_mode<synchronous>, transform_indices = @transform_3, window_bounds = array<i64: 128, 128>}, {pipeline_mode = #tpu.pipeline_mode<synchronous>, transform_indices = @transform_4, window_bounds = array<i64: 128, 3072>}, {pipeline_mode = #tpu.pipeline_mode<synchronous>, transform_indices = @transform_5, window_bounds = array<i64: 1, 3072>}, {pipeline_mode = #tpu.pipeline_mode<synchronous>, transform_indices = @transform_6, window_bounds = array<i64: 1024, 128>}, {pipeline_mode = #tpu.pipeline_mode<synchronous>, transform_indices = @transform_7, window_bounds = array<i64: 1, 128>}, {transform_indices = @transform_8, window_bounds = array<i64: 1, 64, 128>}]} {
    %c0 = arith.constant 0 : index
    %c0_0 = arith.constant 0 : index
    %c0_1 = arith.constant 0 : index
    %0 = vector.load %arg1[%c0, %c0_0, %c0_1] : memref<1x64x128xf32, #tpu.memory_space<vmem>>, vector<1x64x128xf32>
    %1 = vector.shape_cast %0 : vector<1x64x128xf32> to vector<64x128xf32>
    %cst = arith.constant 1.000000e+00 : f32
    %2 = vector.broadcast %cst : f32 to vector<1x64xf32>
    %cst_2 = arith.constant dense<0.000000e+00> : vector<1x128xf32>
    %3 = tpu.matmul %2, %1, %cst_2 {dimension_numbers = #tpu.dot_dimension_numbers<[1], [0], [0], [1], [0, 0, 1, 1], [], []>} : vector<1x64xf32>, vector<64x128xf32>, vector<1x128xf32> -> vector<1x128xf32>
    %4 = arith.mulf %1, %1 : vector<64x128xf32>
    %cst_3 = arith.constant dense<0.000000e+00> : vector<1x128xf32>
    %5 = tpu.matmul %2, %4, %cst_3 {dimension_numbers = #tpu.dot_dimension_numbers<[1], [0], [0], [1], [0, 0, 1, 1], [], []>} : vector<1x64xf32>, vector<64x128xf32>, vector<1x128xf32> -> vector<1x128xf32>
    %c0_4 = arith.constant 0 : index
    %c0_5 = arith.constant 0 : index
    %6 = vector.load %arg4[%c0_4, %c0_5] : memref<128x128xf32, #tpu.memory_space<vmem>>, vector<128x128xf32>
    %cst_6 = arith.constant dense<0.000000e+00> : vector<1x128xf32>
    %7 = tpu.matmul %3, %6, %cst_6 {dimension_numbers = #tpu.dot_dimension_numbers<[1], [0], [0], [1], [0, 0, 1, 1], [], []>} : vector<1x128xf32>, vector<128x128xf32>, vector<1x128xf32> -> vector<1x128xf32>
    %c0_7 = arith.constant 0 : index
    %c0_8 = arith.constant 0 : index
    %8 = vector.load %arg4[%c0_7, %c0_8] : memref<128x128xf32, #tpu.memory_space<vmem>>, vector<128x128xf32>
    %cst_9 = arith.constant dense<0.000000e+00> : vector<1x128xf32>
    %9 = tpu.matmul %5, %8, %cst_9 {dimension_numbers = #tpu.dot_dimension_numbers<[1], [0], [0], [1], [0, 0, 1, 1], [], []>} : vector<1x128xf32>, vector<128x128xf32>, vector<1x128xf32> -> vector<1x128xf32>
    %10 = arith.mulf %7, %7 : vector<1x128xf32>
    %11 = arith.subf %9, %10 : vector<1x128xf32>
    %cst_10 = arith.constant 0.000000e+00 : f32
    %12 = vector.broadcast %cst_10 : f32 to vector<1x128xf32>
    %13 = arith.maximumf %11, %12 : vector<1x128xf32>
    %cst_11 = arith.constant 9.99999974E-6 : f32
    %14 = vector.broadcast %cst_11 : f32 to vector<1x128xf32>
    %15 = arith.addf %13, %14 : vector<1x128xf32>
    %16 = math.rsqrt %15 : vector<1x128xf32>
    %c0_12 = arith.constant 0 : index
    %c0_13 = arith.constant 0 : index
    %17 = vector.load %arg2[%c0_12, %c0_13] : memref<1x128xf32, #tpu.memory_space<vmem>>, vector<1x128xf32>
    %18 = arith.mulf %16, %17 : vector<1x128xf32>
    %c0_14 = arith.constant 0 : index
    %c0_15 = arith.constant 0 : index
    %19 = vector.load %arg3[%c0_14, %c0_15] : memref<1x128xf32, #tpu.memory_space<vmem>>, vector<1x128xf32>
    %20 = arith.mulf %7, %18 : vector<1x128xf32>
    %21 = arith.subf %19, %20 : vector<1x128xf32>
    %22 = vector.broadcast %18 : vector<1x128xf32> to vector<64x128xf32>
    %23 = arith.mulf %1, %22 : vector<64x128xf32>
    %24 = vector.broadcast %21 : vector<1x128xf32> to vector<64x128xf32>
    %25 = arith.addf %23, %24 : vector<64x128xf32>
    %26 = arith.truncf %25 : vector<64x128xf32> to vector<64x128xbf16>
    %c0_16 = arith.constant 0 : index
    %c0_17 = arith.constant 0 : index
    %27 = vector.load %arg5[%c0_16, %c0_17] : memref<128x3072xbf16, #tpu.memory_space<vmem>>, vector<128x3072xbf16>
    %cst_18 = arith.constant dense<0.000000e+00> : vector<64x3072xf32>
    %28 = tpu.matmul %26, %27, %cst_18 {dimension_numbers = #tpu.dot_dimension_numbers<[1], [0], [0], [1], [0, 0, 1, 1], [], []>} : vector<64x128xbf16>, vector<128x3072xbf16>, vector<64x3072xf32> -> vector<64x3072xf32>
    %c0_19 = arith.constant 0 : index
    %c0_20 = arith.constant 0 : index
    %29 = vector.load %arg6[%c0_19, %c0_20] : memref<1x3072xf32, #tpu.memory_space<vmem>>, vector<1x3072xf32>
    %30 = vector.broadcast %29 : vector<1x3072xf32> to vector<64x3072xf32>
    %31 = arith.addf %28, %30 : vector<64x3072xf32>
    %32 = vector.extract_strided_slice %31 {offsets = [0, 0], sizes = [64, 128], strides = [1, 1]} : vector<64x3072xf32> to vector<64x128xf32>
    %cst_21 = arith.constant 5.000000e-01 : f32
    %33 = vector.broadcast %cst_21 : f32 to vector<64x128xf32>
    %34 = arith.mulf %32, %33 : vector<64x128xf32>
    %35 = arith.truncf %34 : vector<64x128xf32> to vector<64x128xbf16>
    %36 = vector.extract_strided_slice %31 {offsets = [0, 1024], sizes = [64, 128], strides = [1, 1]} : vector<64x3072xf32> to vector<64x128xf32>
    %37 = arith.truncf %36 : vector<64x128xf32> to vector<64x128xbf16>
    %38 = vector.extract_strided_slice %31 {offsets = [0, 2048], sizes = [64, 128], strides = [1, 1]} : vector<64x3072xf32> to vector<64x128xf32>
    %39 = arith.truncf %38 : vector<64x128xf32> to vector<64x128xbf16>
    %cst_22 = arith.constant 0xFF800000 : f32
    %40 = vector.broadcast %cst_22 : f32 to vector<64x1xf32>
    %cst_23 = arith.constant 0.000000e+00 : f32
    %41 = vector.broadcast %cst_23 : f32 to vector<64x1xf32>
    %cst_24 = arith.constant 0.000000e+00 : f32
    %42 = vector.broadcast %cst_24 : f32 to vector<64x128xf32>
    %43 = vector.extract_strided_slice %37 {offsets = [0, 0], sizes = [32, 128], strides = [1, 1]} : vector<64x128xbf16> to vector<32x128xbf16>
    %44 = vector.extract_strided_slice %39 {offsets = [0, 0], sizes = [32, 128], strides = [1, 1]} : vector<64x128xbf16> to vector<32x128xbf16>
    %cst_25 = arith.constant dense<0.000000e+00> : vector<64x32xf32>
    %45 = tpu.matmul %35, %43, %cst_25 {dimension_numbers = #tpu.dot_dimension_numbers<[1], [1], [0], [0], [0, 0, 1, 0], [], []>} : vector<64x128xbf16>, vector<32x128xbf16>, vector<64x32xf32> -> vector<64x32xf32>
    %cst_26 = arith.constant dense<0xFF800000> : vector<64xf32>
    %46 = vector.multi_reduction <maximumf>, %45, %cst_26 [1] : vector<64x32xf32> to vector<64xf32>
    %47 = vector.shape_cast %46 : vector<64xf32> to vector<64x1xf32>
    %48 = arith.maximumf %40, %47 : vector<64x1xf32>
    %49 = arith.subf %40, %48 : vector<64x1xf32>
    %50 = math.exp %49 : vector<64x1xf32>
    %51 = vector.broadcast %48 : vector<64x1xf32> to vector<64x32xf32>
    %52 = arith.subf %45, %51 : vector<64x32xf32>
    %53 = math.exp %52 : vector<64x32xf32>
    %54 = arith.mulf %50, %41 : vector<64x1xf32>
    %cst_27 = arith.constant dense<0.000000e+00> : vector<64xf32>
    %55 = vector.multi_reduction <add>, %53, %cst_27 [1] : vector<64x32xf32> to vector<64xf32>
    %56 = vector.shape_cast %55 : vector<64xf32> to vector<64x1xf32>
    %57 = arith.addf %54, %56 : vector<64x1xf32>
    %58 = vector.broadcast %50 : vector<64x1xf32> to vector<64x128xf32>
    %59 = arith.mulf %58, %42 : vector<64x128xf32>
    %60 = arith.truncf %53 : vector<64x32xf32> to vector<64x32xbf16>
    %cst_28 = arith.constant dense<0.000000e+00> : vector<64x128xf32>
    %61 = tpu.matmul %60, %44, %cst_28 {dimension_numbers = #tpu.dot_dimension_numbers<[1], [0], [0], [1], [0, 0, 1, 1], [], []>} : vector<64x32xbf16>, vector<32x128xbf16>, vector<64x128xf32> -> vector<64x128xf32>
    %62 = arith.addf %59, %61 : vector<64x128xf32>
    %63 = vector.extract_strided_slice %37 {offsets = [32, 0], sizes = [32, 128], strides = [1, 1]} : vector<64x128xbf16> to vector<32x128xbf16>
    %64 = vector.extract_strided_slice %39 {offsets = [32, 0], sizes = [32, 128], strides = [1, 1]} : vector<64x128xbf16> to vector<32x128xbf16>
    %cst_29 = arith.constant dense<0.000000e+00> : vector<64x32xf32>
    %65 = tpu.matmul %35, %63, %cst_29 {dimension_numbers = #tpu.dot_dimension_numbers<[1], [1], [0], [0], [0, 0, 1, 0], [], []>} : vector<64x128xbf16>, vector<32x128xbf16>, vector<64x32xf32> -> vector<64x32xf32>
    %cst_30 = arith.constant dense<0xFF800000> : vector<64xf32>
    %66 = vector.multi_reduction <maximumf>, %65, %cst_30 [1] : vector<64x32xf32> to vector<64xf32>
    %67 = vector.shape_cast %66 : vector<64xf32> to vector<64x1xf32>
    %68 = arith.maximumf %48, %67 : vector<64x1xf32>
    %69 = arith.subf %48, %68 : vector<64x1xf32>
    %70 = math.exp %69 : vector<64x1xf32>
    %71 = vector.broadcast %68 : vector<64x1xf32> to vector<64x32xf32>
    %72 = arith.subf %65, %71 : vector<64x32xf32>
    %73 = math.exp %72 : vector<64x32xf32>
    %74 = arith.mulf %70, %57 : vector<64x1xf32>
    %cst_31 = arith.constant dense<0.000000e+00> : vector<64xf32>
    %75 = vector.multi_reduction <add>, %73, %cst_31 [1] : vector<64x32xf32> to vector<64xf32>
    %76 = vector.shape_cast %75 : vector<64xf32> to vector<64x1xf32>
    %77 = arith.addf %74, %76 : vector<64x1xf32>
    %78 = vector.broadcast %70 : vector<64x1xf32> to vector<64x128xf32>
    %79 = arith.mulf %78, %62 : vector<64x128xf32>
    %80 = arith.truncf %73 : vector<64x32xf32> to vector<64x32xbf16>
    %cst_32 = arith.constant dense<0.000000e+00> : vector<64x128xf32>
    %81 = tpu.matmul %80, %64, %cst_32 {dimension_numbers = #tpu.dot_dimension_numbers<[1], [0], [0], [1], [0, 0, 1, 1], [], []>} : vector<64x32xbf16>, vector<32x128xbf16>, vector<64x128xf32> -> vector<64x128xf32>
    %82 = arith.addf %79, %81 : vector<64x128xf32>
    %83 = tpu.reciprocal %77 {approx = true} : vector<64x1xf32> -> vector<64x1xf32>
    %84 = vector.broadcast %83 : vector<64x1xf32> to vector<64x128xf32>
    %85 = arith.mulf %82, %84 : vector<64x128xf32>
    %86 = vector.extract_strided_slice %31 {offsets = [0, 128], sizes = [64, 128], strides = [1, 1]} : vector<64x3072xf32> to vector<64x128xf32>
    %cst_33 = arith.constant 5.000000e-01 : f32
    %87 = vector.broadcast %cst_33 : f32 to vector<64x128xf32>
    %88 = arith.mulf %86, %87 : vector<64x128xf32>
    %89 = arith.truncf %88 : vector<64x128xf32> to vector<64x128xbf16>
    %90 = vector.extract_strided_slice %31 {offsets = [0, 1152], sizes = [64, 128], strides = [1, 1]} : vector<64x3072xf32> to vector<64x128xf32>
    %91 = arith.truncf %90 : vector<64x128xf32> to vector<64x128xbf16>
    %92 = vector.extract_strided_slice %31 {offsets = [0, 2176], sizes = [64, 128], strides = [1, 1]} : vector<64x3072xf32> to vector<64x128xf32>
    %93 = arith.truncf %92 : vector<64x128xf32> to vector<64x128xbf16>
    %cst_34 = arith.constant 0xFF800000 : f32
    %94 = vector.broadcast %cst_34 : f32 to vector<64x1xf32>
    %cst_35 = arith.constant 0.000000e+00 : f32
    %95 = vector.broadcast %cst_35 : f32 to vector<64x1xf32>
    %cst_36 = arith.constant 0.000000e+00 : f32
    %96 = vector.broadcast %cst_36 : f32 to vector<64x128xf32>
    %97 = vector.extract_strided_slice %91 {offsets = [0, 0], sizes = [32, 128], strides = [1, 1]} : vector<64x128xbf16> to vector<32x128xbf16>
    %98 = vector.extract_strided_slice %93 {offsets = [0, 0], sizes = [32, 128], strides = [1, 1]} : vector<64x128xbf16> to vector<32x128xbf16>
    %cst_37 = arith.constant dense<0.000000e+00> : vector<64x32xf32>
    %99 = tpu.matmul %89, %97, %cst_37 {dimension_numbers = #tpu.dot_dimension_numbers<[1], [1], [0], [0], [0, 0, 1, 0], [], []>} : vector<64x128xbf16>, vector<32x128xbf16>, vector<64x32xf32> -> vector<64x32xf32>
    %cst_38 = arith.constant dense<0xFF800000> : vector<64xf32>
    %100 = vector.multi_reduction <maximumf>, %99, %cst_38 [1] : vector<64x32xf32> to vector<64xf32>
    %101 = vector.shape_cast %100 : vector<64xf32> to vector<64x1xf32>
    %102 = arith.maximumf %94, %101 : vector<64x1xf32>
    %103 = arith.subf %94, %102 : vector<64x1xf32>
    %104 = math.exp %103 : vector<64x1xf32>
    %105 = vector.broadcast %102 : vector<64x1xf32> to vector<64x32xf32>
    %106 = arith.subf %99, %105 : vector<64x32xf32>
    %107 = math.exp %106 : vector<64x32xf32>
    %108 = arith.mulf %104, %95 : vector<64x1xf32>
    %cst_39 = arith.constant dense<0.000000e+00> : vector<64xf32>
    %109 = vector.multi_reduction <add>, %107, %cst_39 [1] : vector<64x32xf32> to vector<64xf32>
    %110 = vector.shape_cast %109 : vector<64xf32> to vector<64x1xf32>
    %111 = arith.addf %108, %110 : vector<64x1xf32>
    %112 = vector.broadcast %104 : vector<64x1xf32> to vector<64x128xf32>
    %113 = arith.mulf %112, %96 : vector<64x128xf32>
    %114 = arith.truncf %107 : vector<64x32xf32> to vector<64x32xbf16>
    %cst_40 = arith.constant dense<0.000000e+00> : vector<64x128xf32>
    %115 = tpu.matmul %114, %98, %cst_40 {dimension_numbers = #tpu.dot_dimension_numbers<[1], [0], [0], [1], [0, 0, 1, 1], [], []>} : vector<64x32xbf16>, vector<32x128xbf16>, vector<64x128xf32> -> vector<64x128xf32>
    %116 = arith.addf %113, %115 : vector<64x128xf32>
    %117 = vector.extract_strided_slice %91 {offsets = [32, 0], sizes = [32, 128], strides = [1, 1]} : vector<64x128xbf16> to vector<32x128xbf16>
    %118 = vector.extract_strided_slice %93 {offsets = [32, 0], sizes = [32, 128], strides = [1, 1]} : vector<64x128xbf16> to vector<32x128xbf16>
    %cst_41 = arith.constant dense<0.000000e+00> : vector<64x32xf32>
    %119 = tpu.matmul %89, %117, %cst_41 {dimension_numbers = #tpu.dot_dimension_numbers<[1], [1], [0], [0], [0, 0, 1, 0], [], []>} : vector<64x128xbf16>, vector<32x128xbf16>, vector<64x32xf32> -> vector<64x32xf32>
    %cst_42 = arith.constant dense<0xFF800000> : vector<64xf32>
    %120 = vector.multi_reduction <maximumf>, %119, %cst_42 [1] : vector<64x32xf32> to vector<64xf32>
    %121 = vector.shape_cast %120 : vector<64xf32> to vector<64x1xf32>
    %122 = arith.maximumf %102, %121 : vector<64x1xf32>
    %123 = arith.subf %102, %122 : vector<64x1xf32>
    %124 = math.exp %123 : vector<64x1xf32>
    %125 = vector.broadcast %122 : vector<64x1xf32> to vector<64x32xf32>
    %126 = arith.subf %119, %125 : vector<64x32xf32>
    %127 = math.exp %126 : vector<64x32xf32>
    %128 = arith.mulf %124, %111 : vector<64x1xf32>
    %cst_43 = arith.constant dense<0.000000e+00> : vector<64xf32>
    %129 = vector.multi_reduction <add>, %127, %cst_43 [1] : vector<64x32xf32> to vector<64xf32>
    %130 = vector.shape_cast %129 : vector<64xf32> to vector<64x1xf32>
    %131 = arith.addf %128, %130 : vector<64x1xf32>
    %132 = vector.broadcast %124 : vector<64x1xf32> to vector<64x128xf32>
    %133 = arith.mulf %132, %116 : vector<64x128xf32>
    %134 = arith.truncf %127 : vector<64x32xf32> to vector<64x32xbf16>
    %cst_44 = arith.constant dense<0.000000e+00> : vector<64x128xf32>
    %135 = tpu.matmul %134, %118, %cst_44 {dimension_numbers = #tpu.dot_dimension_numbers<[1], [0], [0], [1], [0, 0, 1, 1], [], []>} : vector<64x32xbf16>, vector<32x128xbf16>, vector<64x128xf32> -> vector<64x128xf32>
    %136 = arith.addf %133, %135 : vector<64x128xf32>
    %137 = tpu.reciprocal %131 {approx = true} : vector<64x1xf32> -> vector<64x1xf32>
    %138 = vector.broadcast %137 : vector<64x1xf32> to vector<64x128xf32>
    %139 = arith.mulf %136, %138 : vector<64x128xf32>
    %140 = vector.extract_strided_slice %31 {offsets = [0, 256], sizes = [64, 128], strides = [1, 1]} : vector<64x3072xf32> to vector<64x128xf32>
    %cst_45 = arith.constant 5.000000e-01 : f32
    %141 = vector.broadcast %cst_45 : f32 to vector<64x128xf32>
    %142 = arith.mulf %140, %141 : vector<64x128xf32>
    %143 = arith.truncf %142 : vector<64x128xf32> to vector<64x128xbf16>
    %144 = vector.extract_strided_slice %31 {offsets = [0, 1280], sizes = [64, 128], strides = [1, 1]} : vector<64x3072xf32> to vector<64x128xf32>
    %145 = arith.truncf %144 : vector<64x128xf32> to vector<64x128xbf16>
    %146 = vector.extract_strided_slice %31 {offsets = [0, 2304], sizes = [64, 128], strides = [1, 1]} : vector<64x3072xf32> to vector<64x128xf32>
    %147 = arith.truncf %146 : vector<64x128xf32> to vector<64x128xbf16>
    %cst_46 = arith.constant 0xFF800000 : f32
    %148 = vector.broadcast %cst_46 : f32 to vector<64x1xf32>
    %cst_47 = arith.constant 0.000000e+00 : f32
    %149 = vector.broadcast %cst_47 : f32 to vector<64x1xf32>
    %cst_48 = arith.constant 0.000000e+00 : f32
    %150 = vector.broadcast %cst_48 : f32 to vector<64x128xf32>
    %151 = vector.extract_strided_slice %145 {offsets = [0, 0], sizes = [32, 128], strides = [1, 1]} : vector<64x128xbf16> to vector<32x128xbf16>
    %152 = vector.extract_strided_slice %147 {offsets = [0, 0], sizes = [32, 128], strides = [1, 1]} : vector<64x128xbf16> to vector<32x128xbf16>
    %cst_49 = arith.constant dense<0.000000e+00> : vector<64x32xf32>
    %153 = tpu.matmul %143, %151, %cst_49 {dimension_numbers = #tpu.dot_dimension_numbers<[1], [1], [0], [0], [0, 0, 1, 0], [], []>} : vector<64x128xbf16>, vector<32x128xbf16>, vector<64x32xf32> -> vector<64x32xf32>
    %cst_50 = arith.constant dense<0xFF800000> : vector<64xf32>
    %154 = vector.multi_reduction <maximumf>, %153, %cst_50 [1] : vector<64x32xf32> to vector<64xf32>
    %155 = vector.shape_cast %154 : vector<64xf32> to vector<64x1xf32>
    %156 = arith.maximumf %148, %155 : vector<64x1xf32>
    %157 = arith.subf %148, %156 : vector<64x1xf32>
    %158 = math.exp %157 : vector<64x1xf32>
    %159 = vector.broadcast %156 : vector<64x1xf32> to vector<64x32xf32>
    %160 = arith.subf %153, %159 : vector<64x32xf32>
    %161 = math.exp %160 : vector<64x32xf32>
    %162 = arith.mulf %158, %149 : vector<64x1xf32>
    %cst_51 = arith.constant dense<0.000000e+00> : vector<64xf32>
    %163 = vector.multi_reduction <add>, %161, %cst_51 [1] : vector<64x32xf32> to vector<64xf32>
    %164 = vector.shape_cast %163 : vector<64xf32> to vector<64x1xf32>
    %165 = arith.addf %162, %164 : vector<64x1xf32>
    %166 = vector.broadcast %158 : vector<64x1xf32> to vector<64x128xf32>
    %167 = arith.mulf %166, %150 : vector<64x128xf32>
    %168 = arith.truncf %161 : vector<64x32xf32> to vector<64x32xbf16>
    %cst_52 = arith.constant dense<0.000000e+00> : vector<64x128xf32>
    %169 = tpu.matmul %168, %152, %cst_52 {dimension_numbers = #tpu.dot_dimension_numbers<[1], [0], [0], [1], [0, 0, 1, 1], [], []>} : vector<64x32xbf16>, vector<32x128xbf16>, vector<64x128xf32> -> vector<64x128xf32>
    %170 = arith.addf %167, %169 : vector<64x128xf32>
    %171 = vector.extract_strided_slice %145 {offsets = [32, 0], sizes = [32, 128], strides = [1, 1]} : vector<64x128xbf16> to vector<32x128xbf16>
    %172 = vector.extract_strided_slice %147 {offsets = [32, 0], sizes = [32, 128], strides = [1, 1]} : vector<64x128xbf16> to vector<32x128xbf16>
    %cst_53 = arith.constant dense<0.000000e+00> : vector<64x32xf32>
    %173 = tpu.matmul %143, %171, %cst_53 {dimension_numbers = #tpu.dot_dimension_numbers<[1], [1], [0], [0], [0, 0, 1, 0], [], []>} : vector<64x128xbf16>, vector<32x128xbf16>, vector<64x32xf32> -> vector<64x32xf32>
    %cst_54 = arith.constant dense<0xFF800000> : vector<64xf32>
    %174 = vector.multi_reduction <maximumf>, %173, %cst_54 [1] : vector<64x32xf32> to vector<64xf32>
    %175 = vector.shape_cast %174 : vector<64xf32> to vector<64x1xf32>
    %176 = arith.maximumf %156, %175 : vector<64x1xf32>
    %177 = arith.subf %156, %176 : vector<64x1xf32>
    %178 = math.exp %177 : vector<64x1xf32>
    %179 = vector.broadcast %176 : vector<64x1xf32> to vector<64x32xf32>
    %180 = arith.subf %173, %179 : vector<64x32xf32>
    %181 = math.exp %180 : vector<64x32xf32>
    %182 = arith.mulf %178, %165 : vector<64x1xf32>
    %cst_55 = arith.constant dense<0.000000e+00> : vector<64xf32>
    %183 = vector.multi_reduction <add>, %181, %cst_55 [1] : vector<64x32xf32> to vector<64xf32>
    %184 = vector.shape_cast %183 : vector<64xf32> to vector<64x1xf32>
    %185 = arith.addf %182, %184 : vector<64x1xf32>
    %186 = vector.broadcast %178 : vector<64x1xf32> to vector<64x128xf32>
    %187 = arith.mulf %186, %170 : vector<64x128xf32>
    %188 = arith.truncf %181 : vector<64x32xf32> to vector<64x32xbf16>
    %cst_56 = arith.constant dense<0.000000e+00> : vector<64x128xf32>
    %189 = tpu.matmul %188, %172, %cst_56 {dimension_numbers = #tpu.dot_dimension_numbers<[1], [0], [0], [1], [0, 0, 1, 1], [], []>} : vector<64x32xbf16>, vector<32x128xbf16>, vector<64x128xf32> -> vector<64x128xf32>
    %190 = arith.addf %187, %189 : vector<64x128xf32>
    %191 = tpu.reciprocal %185 {approx = true} : vector<64x1xf32> -> vector<64x1xf32>
    %192 = vector.broadcast %191 : vector<64x1xf32> to vector<64x128xf32>
    %193 = arith.mulf %190, %192 : vector<64x128xf32>
    %194 = vector.extract_strided_slice %31 {offsets = [0, 384], sizes = [64, 128], strides = [1, 1]} : vector<64x3072xf32> to vector<64x128xf32>
    %cst_57 = arith.constant 5.000000e-01 : f32
    %195 = vector.broadcast %cst_57 : f32 to vector<64x128xf32>
    %196 = arith.mulf %194, %195 : vector<64x128xf32>
    %197 = arith.truncf %196 : vector<64x128xf32> to vector<64x128xbf16>
    %198 = vector.extract_strided_slice %31 {offsets = [0, 1408], sizes = [64, 128], strides = [1, 1]} : vector<64x3072xf32> to vector<64x128xf32>
    %199 = arith.truncf %198 : vector<64x128xf32> to vector<64x128xbf16>
    %200 = vector.extract_strided_slice %31 {offsets = [0, 2432], sizes = [64, 128], strides = [1, 1]} : vector<64x3072xf32> to vector<64x128xf32>
    %201 = arith.truncf %200 : vector<64x128xf32> to vector<64x128xbf16>
    %cst_58 = arith.constant 0xFF800000 : f32
    %202 = vector.broadcast %cst_58 : f32 to vector<64x1xf32>
    %cst_59 = arith.constant 0.000000e+00 : f32
    %203 = vector.broadcast %cst_59 : f32 to vector<64x1xf32>
    %cst_60 = arith.constant 0.000000e+00 : f32
    %204 = vector.broadcast %cst_60 : f32 to vector<64x128xf32>
    %205 = vector.extract_strided_slice %199 {offsets = [0, 0], sizes = [32, 128], strides = [1, 1]} : vector<64x128xbf16> to vector<32x128xbf16>
    %206 = vector.extract_strided_slice %201 {offsets = [0, 0], sizes = [32, 128], strides = [1, 1]} : vector<64x128xbf16> to vector<32x128xbf16>
    %cst_61 = arith.constant dense<0.000000e+00> : vector<64x32xf32>
    %207 = tpu.matmul %197, %205, %cst_61 {dimension_numbers = #tpu.dot_dimension_numbers<[1], [1], [0], [0], [0, 0, 1, 0], [], []>} : vector<64x128xbf16>, vector<32x128xbf16>, vector<64x32xf32> -> vector<64x32xf32>
    %cst_62 = arith.constant dense<0xFF800000> : vector<64xf32>
    %208 = vector.multi_reduction <maximumf>, %207, %cst_62 [1] : vector<64x32xf32> to vector<64xf32>
    %209 = vector.shape_cast %208 : vector<64xf32> to vector<64x1xf32>
    %210 = arith.maximumf %202, %209 : vector<64x1xf32>
    %211 = arith.subf %202, %210 : vector<64x1xf32>
    %212 = math.exp %211 : vector<64x1xf32>
    %213 = vector.broadcast %210 : vector<64x1xf32> to vector<64x32xf32>
    %214 = arith.subf %207, %213 : vector<64x32xf32>
    %215 = math.exp %214 : vector<64x32xf32>
    %216 = arith.mulf %212, %203 : vector<64x1xf32>
    %cst_63 = arith.constant dense<0.000000e+00> : vector<64xf32>
    %217 = vector.multi_reduction <add>, %215, %cst_63 [1] : vector<64x32xf32> to vector<64xf32>
    %218 = vector.shape_cast %217 : vector<64xf32> to vector<64x1xf32>
    %219 = arith.addf %216, %218 : vector<64x1xf32>
    %220 = vector.broadcast %212 : vector<64x1xf32> to vector<64x128xf32>
    %221 = arith.mulf %220, %204 : vector<64x128xf32>
    %222 = arith.truncf %215 : vector<64x32xf32> to vector<64x32xbf16>
    %cst_64 = arith.constant dense<0.000000e+00> : vector<64x128xf32>
    %223 = tpu.matmul %222, %206, %cst_64 {dimension_numbers = #tpu.dot_dimension_numbers<[1], [0], [0], [1], [0, 0, 1, 1], [], []>} : vector<64x32xbf16>, vector<32x128xbf16>, vector<64x128xf32> -> vector<64x128xf32>
    %224 = arith.addf %221, %223 : vector<64x128xf32>
    %225 = vector.extract_strided_slice %199 {offsets = [32, 0], sizes = [32, 128], strides = [1, 1]} : vector<64x128xbf16> to vector<32x128xbf16>
    %226 = vector.extract_strided_slice %201 {offsets = [32, 0], sizes = [32, 128], strides = [1, 1]} : vector<64x128xbf16> to vector<32x128xbf16>
    %cst_65 = arith.constant dense<0.000000e+00> : vector<64x32xf32>
    %227 = tpu.matmul %197, %225, %cst_65 {dimension_numbers = #tpu.dot_dimension_numbers<[1], [1], [0], [0], [0, 0, 1, 0], [], []>} : vector<64x128xbf16>, vector<32x128xbf16>, vector<64x32xf32> -> vector<64x32xf32>
    %cst_66 = arith.constant dense<0xFF800000> : vector<64xf32>
    %228 = vector.multi_reduction <maximumf>, %227, %cst_66 [1] : vector<64x32xf32> to vector<64xf32>
    %229 = vector.shape_cast %228 : vector<64xf32> to vector<64x1xf32>
    %230 = arith.maximumf %210, %229 : vector<64x1xf32>
    %231 = arith.subf %210, %230 : vector<64x1xf32>
    %232 = math.exp %231 : vector<64x1xf32>
    %233 = vector.broadcast %230 : vector<64x1xf32> to vector<64x32xf32>
    %234 = arith.subf %227, %233 : vector<64x32xf32>
    %235 = math.exp %234 : vector<64x32xf32>
    %236 = arith.mulf %232, %219 : vector<64x1xf32>
    %cst_67 = arith.constant dense<0.000000e+00> : vector<64xf32>
    %237 = vector.multi_reduction <add>, %235, %cst_67 [1] : vector<64x32xf32> to vector<64xf32>
    %238 = vector.shape_cast %237 : vector<64xf32> to vector<64x1xf32>
    %239 = arith.addf %236, %238 : vector<64x1xf32>
    %240 = vector.broadcast %232 : vector<64x1xf32> to vector<64x128xf32>
    %241 = arith.mulf %240, %224 : vector<64x128xf32>
    %242 = arith.truncf %235 : vector<64x32xf32> to vector<64x32xbf16>
    %cst_68 = arith.constant dense<0.000000e+00> : vector<64x128xf32>
    %243 = tpu.matmul %242, %226, %cst_68 {dimension_numbers = #tpu.dot_dimension_numbers<[1], [0], [0], [1], [0, 0, 1, 1], [], []>} : vector<64x32xbf16>, vector<32x128xbf16>, vector<64x128xf32> -> vector<64x128xf32>
    %244 = arith.addf %241, %243 : vector<64x128xf32>
    %245 = tpu.reciprocal %239 {approx = true} : vector<64x1xf32> -> vector<64x1xf32>
    %246 = vector.broadcast %245 : vector<64x1xf32> to vector<64x128xf32>
    %247 = arith.mulf %244, %246 : vector<64x128xf32>
    %248 = vector.extract_strided_slice %31 {offsets = [0, 512], sizes = [64, 128], strides = [1, 1]} : vector<64x3072xf32> to vector<64x128xf32>
    %cst_69 = arith.constant 5.000000e-01 : f32
    %249 = vector.broadcast %cst_69 : f32 to vector<64x128xf32>
    %250 = arith.mulf %248, %249 : vector<64x128xf32>
    %251 = arith.truncf %250 : vector<64x128xf32> to vector<64x128xbf16>
    %252 = vector.extract_strided_slice %31 {offsets = [0, 1536], sizes = [64, 128], strides = [1, 1]} : vector<64x3072xf32> to vector<64x128xf32>
    %253 = arith.truncf %252 : vector<64x128xf32> to vector<64x128xbf16>
    %254 = vector.extract_strided_slice %31 {offsets = [0, 2560], sizes = [64, 128], strides = [1, 1]} : vector<64x3072xf32> to vector<64x128xf32>
    %255 = arith.truncf %254 : vector<64x128xf32> to vector<64x128xbf16>
    %cst_70 = arith.constant 0xFF800000 : f32
    %256 = vector.broadcast %cst_70 : f32 to vector<64x1xf32>
    %cst_71 = arith.constant 0.000000e+00 : f32
    %257 = vector.broadcast %cst_71 : f32 to vector<64x1xf32>
    %cst_72 = arith.constant 0.000000e+00 : f32
    %258 = vector.broadcast %cst_72 : f32 to vector<64x128xf32>
    %259 = vector.extract_strided_slice %253 {offsets = [0, 0], sizes = [32, 128], strides = [1, 1]} : vector<64x128xbf16> to vector<32x128xbf16>
    %260 = vector.extract_strided_slice %255 {offsets = [0, 0], sizes = [32, 128], strides = [1, 1]} : vector<64x128xbf16> to vector<32x128xbf16>
    %cst_73 = arith.constant dense<0.000000e+00> : vector<64x32xf32>
    %261 = tpu.matmul %251, %259, %cst_73 {dimension_numbers = #tpu.dot_dimension_numbers<[1], [1], [0], [0], [0, 0, 1, 0], [], []>} : vector<64x128xbf16>, vector<32x128xbf16>, vector<64x32xf32> -> vector<64x32xf32>
    %cst_74 = arith.constant dense<0xFF800000> : vector<64xf32>
    %262 = vector.multi_reduction <maximumf>, %261, %cst_74 [1] : vector<64x32xf32> to vector<64xf32>
    %263 = vector.shape_cast %262 : vector<64xf32> to vector<64x1xf32>
    %264 = arith.maximumf %256, %263 : vector<64x1xf32>
    %265 = arith.subf %256, %264 : vector<64x1xf32>
    %266 = math.exp %265 : vector<64x1xf32>
    %267 = vector.broadcast %264 : vector<64x1xf32> to vector<64x32xf32>
    %268 = arith.subf %261, %267 : vector<64x32xf32>
    %269 = math.exp %268 : vector<64x32xf32>
    %270 = arith.mulf %266, %257 : vector<64x1xf32>
    %cst_75 = arith.constant dense<0.000000e+00> : vector<64xf32>
    %271 = vector.multi_reduction <add>, %269, %cst_75 [1] : vector<64x32xf32> to vector<64xf32>
    %272 = vector.shape_cast %271 : vector<64xf32> to vector<64x1xf32>
    %273 = arith.addf %270, %272 : vector<64x1xf32>
    %274 = vector.broadcast %266 : vector<64x1xf32> to vector<64x128xf32>
    %275 = arith.mulf %274, %258 : vector<64x128xf32>
    %276 = arith.truncf %269 : vector<64x32xf32> to vector<64x32xbf16>
    %cst_76 = arith.constant dense<0.000000e+00> : vector<64x128xf32>
    %277 = tpu.matmul %276, %260, %cst_76 {dimension_numbers = #tpu.dot_dimension_numbers<[1], [0], [0], [1], [0, 0, 1, 1], [], []>} : vector<64x32xbf16>, vector<32x128xbf16>, vector<64x128xf32> -> vector<64x128xf32>
    %278 = arith.addf %275, %277 : vector<64x128xf32>
    %279 = vector.extract_strided_slice %253 {offsets = [32, 0], sizes = [32, 128], strides = [1, 1]} : vector<64x128xbf16> to vector<32x128xbf16>
    %280 = vector.extract_strided_slice %255 {offsets = [32, 0], sizes = [32, 128], strides = [1, 1]} : vector<64x128xbf16> to vector<32x128xbf16>
    %cst_77 = arith.constant dense<0.000000e+00> : vector<64x32xf32>
    %281 = tpu.matmul %251, %279, %cst_77 {dimension_numbers = #tpu.dot_dimension_numbers<[1], [1], [0], [0], [0, 0, 1, 0], [], []>} : vector<64x128xbf16>, vector<32x128xbf16>, vector<64x32xf32> -> vector<64x32xf32>
    %cst_78 = arith.constant dense<0xFF800000> : vector<64xf32>
    %282 = vector.multi_reduction <maximumf>, %281, %cst_78 [1] : vector<64x32xf32> to vector<64xf32>
    %283 = vector.shape_cast %282 : vector<64xf32> to vector<64x1xf32>
    %284 = arith.maximumf %264, %283 : vector<64x1xf32>
    %285 = arith.subf %264, %284 : vector<64x1xf32>
    %286 = math.exp %285 : vector<64x1xf32>
    %287 = vector.broadcast %284 : vector<64x1xf32> to vector<64x32xf32>
    %288 = arith.subf %281, %287 : vector<64x32xf32>
    %289 = math.exp %288 : vector<64x32xf32>
    %290 = arith.mulf %286, %273 : vector<64x1xf32>
    %cst_79 = arith.constant dense<0.000000e+00> : vector<64xf32>
    %291 = vector.multi_reduction <add>, %289, %cst_79 [1] : vector<64x32xf32> to vector<64xf32>
    %292 = vector.shape_cast %291 : vector<64xf32> to vector<64x1xf32>
    %293 = arith.addf %290, %292 : vector<64x1xf32>
    %294 = vector.broadcast %286 : vector<64x1xf32> to vector<64x128xf32>
    %295 = arith.mulf %294, %278 : vector<64x128xf32>
    %296 = arith.truncf %289 : vector<64x32xf32> to vector<64x32xbf16>
    %cst_80 = arith.constant dense<0.000000e+00> : vector<64x128xf32>
    %297 = tpu.matmul %296, %280, %cst_80 {dimension_numbers = #tpu.dot_dimension_numbers<[1], [0], [0], [1], [0, 0, 1, 1], [], []>} : vector<64x32xbf16>, vector<32x128xbf16>, vector<64x128xf32> -> vector<64x128xf32>
    %298 = arith.addf %295, %297 : vector<64x128xf32>
    %299 = tpu.reciprocal %293 {approx = true} : vector<64x1xf32> -> vector<64x1xf32>
    %300 = vector.broadcast %299 : vector<64x1xf32> to vector<64x128xf32>
    %301 = arith.mulf %298, %300 : vector<64x128xf32>
    %302 = vector.extract_strided_slice %31 {offsets = [0, 640], sizes = [64, 128], strides = [1, 1]} : vector<64x3072xf32> to vector<64x128xf32>
    %cst_81 = arith.constant 5.000000e-01 : f32
    %303 = vector.broadcast %cst_81 : f32 to vector<64x128xf32>
    %304 = arith.mulf %302, %303 : vector<64x128xf32>
    %305 = arith.truncf %304 : vector<64x128xf32> to vector<64x128xbf16>
    %306 = vector.extract_strided_slice %31 {offsets = [0, 1664], sizes = [64, 128], strides = [1, 1]} : vector<64x3072xf32> to vector<64x128xf32>
    %307 = arith.truncf %306 : vector<64x128xf32> to vector<64x128xbf16>
    %308 = vector.extract_strided_slice %31 {offsets = [0, 2688], sizes = [64, 128], strides = [1, 1]} : vector<64x3072xf32> to vector<64x128xf32>
    %309 = arith.truncf %308 : vector<64x128xf32> to vector<64x128xbf16>
    %cst_82 = arith.constant 0xFF800000 : f32
    %310 = vector.broadcast %cst_82 : f32 to vector<64x1xf32>
    %cst_83 = arith.constant 0.000000e+00 : f32
    %311 = vector.broadcast %cst_83 : f32 to vector<64x1xf32>
    %cst_84 = arith.constant 0.000000e+00 : f32
    %312 = vector.broadcast %cst_84 : f32 to vector<64x128xf32>
    %313 = vector.extract_strided_slice %307 {offsets = [0, 0], sizes = [32, 128], strides = [1, 1]} : vector<64x128xbf16> to vector<32x128xbf16>
    %314 = vector.extract_strided_slice %309 {offsets = [0, 0], sizes = [32, 128], strides = [1, 1]} : vector<64x128xbf16> to vector<32x128xbf16>
    %cst_85 = arith.constant dense<0.000000e+00> : vector<64x32xf32>
    %315 = tpu.matmul %305, %313, %cst_85 {dimension_numbers = #tpu.dot_dimension_numbers<[1], [1], [0], [0], [0, 0, 1, 0], [], []>} : vector<64x128xbf16>, vector<32x128xbf16>, vector<64x32xf32> -> vector<64x32xf32>
    %cst_86 = arith.constant dense<0xFF800000> : vector<64xf32>
    %316 = vector.multi_reduction <maximumf>, %315, %cst_86 [1] : vector<64x32xf32> to vector<64xf32>
    %317 = vector.shape_cast %316 : vector<64xf32> to vector<64x1xf32>
    %318 = arith.maximumf %310, %317 : vector<64x1xf32>
    %319 = arith.subf %310, %318 : vector<64x1xf32>
    %320 = math.exp %319 : vector<64x1xf32>
    %321 = vector.broadcast %318 : vector<64x1xf32> to vector<64x32xf32>
    %322 = arith.subf %315, %321 : vector<64x32xf32>
    %323 = math.exp %322 : vector<64x32xf32>
    %324 = arith.mulf %320, %311 : vector<64x1xf32>
    %cst_87 = arith.constant dense<0.000000e+00> : vector<64xf32>
    %325 = vector.multi_reduction <add>, %323, %cst_87 [1] : vector<64x32xf32> to vector<64xf32>
    %326 = vector.shape_cast %325 : vector<64xf32> to vector<64x1xf32>
    %327 = arith.addf %324, %326 : vector<64x1xf32>
    %328 = vector.broadcast %320 : vector<64x1xf32> to vector<64x128xf32>
    %329 = arith.mulf %328, %312 : vector<64x128xf32>
    %330 = arith.truncf %323 : vector<64x32xf32> to vector<64x32xbf16>
    %cst_88 = arith.constant dense<0.000000e+00> : vector<64x128xf32>
    %331 = tpu.matmul %330, %314, %cst_88 {dimension_numbers = #tpu.dot_dimension_numbers<[1], [0], [0], [1], [0, 0, 1, 1], [], []>} : vector<64x32xbf16>, vector<32x128xbf16>, vector<64x128xf32> -> vector<64x128xf32>
    %332 = arith.addf %329, %331 : vector<64x128xf32>
    %333 = vector.extract_strided_slice %307 {offsets = [32, 0], sizes = [32, 128], strides = [1, 1]} : vector<64x128xbf16> to vector<32x128xbf16>
    %334 = vector.extract_strided_slice %309 {offsets = [32, 0], sizes = [32, 128], strides = [1, 1]} : vector<64x128xbf16> to vector<32x128xbf16>
    %cst_89 = arith.constant dense<0.000000e+00> : vector<64x32xf32>
    %335 = tpu.matmul %305, %333, %cst_89 {dimension_numbers = #tpu.dot_dimension_numbers<[1], [1], [0], [0], [0, 0, 1, 0], [], []>} : vector<64x128xbf16>, vector<32x128xbf16>, vector<64x32xf32> -> vector<64x32xf32>
    %cst_90 = arith.constant dense<0xFF800000> : vector<64xf32>
    %336 = vector.multi_reduction <maximumf>, %335, %cst_90 [1] : vector<64x32xf32> to vector<64xf32>
    %337 = vector.shape_cast %336 : vector<64xf32> to vector<64x1xf32>
    %338 = arith.maximumf %318, %337 : vector<64x1xf32>
    %339 = arith.subf %318, %338 : vector<64x1xf32>
    %340 = math.exp %339 : vector<64x1xf32>
    %341 = vector.broadcast %338 : vector<64x1xf32> to vector<64x32xf32>
    %342 = arith.subf %335, %341 : vector<64x32xf32>
    %343 = math.exp %342 : vector<64x32xf32>
    %344 = arith.mulf %340, %327 : vector<64x1xf32>
    %cst_91 = arith.constant dense<0.000000e+00> : vector<64xf32>
    %345 = vector.multi_reduction <add>, %343, %cst_91 [1] : vector<64x32xf32> to vector<64xf32>
    %346 = vector.shape_cast %345 : vector<64xf32> to vector<64x1xf32>
    %347 = arith.addf %344, %346 : vector<64x1xf32>
    %348 = vector.broadcast %340 : vector<64x1xf32> to vector<64x128xf32>
    %349 = arith.mulf %348, %332 : vector<64x128xf32>
    %350 = arith.truncf %343 : vector<64x32xf32> to vector<64x32xbf16>
    %cst_92 = arith.constant dense<0.000000e+00> : vector<64x128xf32>
    %351 = tpu.matmul %350, %334, %cst_92 {dimension_numbers = #tpu.dot_dimension_numbers<[1], [0], [0], [1], [0, 0, 1, 1], [], []>} : vector<64x32xbf16>, vector<32x128xbf16>, vector<64x128xf32> -> vector<64x128xf32>
    %352 = arith.addf %349, %351 : vector<64x128xf32>
    %353 = tpu.reciprocal %347 {approx = true} : vector<64x1xf32> -> vector<64x1xf32>
    %354 = vector.broadcast %353 : vector<64x1xf32> to vector<64x128xf32>
    %355 = arith.mulf %352, %354 : vector<64x128xf32>
    %356 = vector.extract_strided_slice %31 {offsets = [0, 768], sizes = [64, 128], strides = [1, 1]} : vector<64x3072xf32> to vector<64x128xf32>
    %cst_93 = arith.constant 5.000000e-01 : f32
    %357 = vector.broadcast %cst_93 : f32 to vector<64x128xf32>
    %358 = arith.mulf %356, %357 : vector<64x128xf32>
    %359 = arith.truncf %358 : vector<64x128xf32> to vector<64x128xbf16>
    %360 = vector.extract_strided_slice %31 {offsets = [0, 1792], sizes = [64, 128], strides = [1, 1]} : vector<64x3072xf32> to vector<64x128xf32>
    %361 = arith.truncf %360 : vector<64x128xf32> to vector<64x128xbf16>
    %362 = vector.extract_strided_slice %31 {offsets = [0, 2816], sizes = [64, 128], strides = [1, 1]} : vector<64x3072xf32> to vector<64x128xf32>
    %363 = arith.truncf %362 : vector<64x128xf32> to vector<64x128xbf16>
    %cst_94 = arith.constant 0xFF800000 : f32
    %364 = vector.broadcast %cst_94 : f32 to vector<64x1xf32>
    %cst_95 = arith.constant 0.000000e+00 : f32
    %365 = vector.broadcast %cst_95 : f32 to vector<64x1xf32>
    %cst_96 = arith.constant 0.000000e+00 : f32
    %366 = vector.broadcast %cst_96 : f32 to vector<64x128xf32>
    %367 = vector.extract_strided_slice %361 {offsets = [0, 0], sizes = [32, 128], strides = [1, 1]} : vector<64x128xbf16> to vector<32x128xbf16>
    %368 = vector.extract_strided_slice %363 {offsets = [0, 0], sizes = [32, 128], strides = [1, 1]} : vector<64x128xbf16> to vector<32x128xbf16>
    %cst_97 = arith.constant dense<0.000000e+00> : vector<64x32xf32>
    %369 = tpu.matmul %359, %367, %cst_97 {dimension_numbers = #tpu.dot_dimension_numbers<[1], [1], [0], [0], [0, 0, 1, 0], [], []>} : vector<64x128xbf16>, vector<32x128xbf16>, vector<64x32xf32> -> vector<64x32xf32>
    %cst_98 = arith.constant dense<0xFF800000> : vector<64xf32>
    %370 = vector.multi_reduction <maximumf>, %369, %cst_98 [1] : vector<64x32xf32> to vector<64xf32>
    %371 = vector.shape_cast %370 : vector<64xf32> to vector<64x1xf32>
    %372 = arith.maximumf %364, %371 : vector<64x1xf32>
    %373 = arith.subf %364, %372 : vector<64x1xf32>
    %374 = math.exp %373 : vector<64x1xf32>
    %375 = vector.broadcast %372 : vector<64x1xf32> to vector<64x32xf32>
    %376 = arith.subf %369, %375 : vector<64x32xf32>
    %377 = math.exp %376 : vector<64x32xf32>
    %378 = arith.mulf %374, %365 : vector<64x1xf32>
    %cst_99 = arith.constant dense<0.000000e+00> : vector<64xf32>
    %379 = vector.multi_reduction <add>, %377, %cst_99 [1] : vector<64x32xf32> to vector<64xf32>
    %380 = vector.shape_cast %379 : vector<64xf32> to vector<64x1xf32>
    %381 = arith.addf %378, %380 : vector<64x1xf32>
    %382 = vector.broadcast %374 : vector<64x1xf32> to vector<64x128xf32>
    %383 = arith.mulf %382, %366 : vector<64x128xf32>
    %384 = arith.truncf %377 : vector<64x32xf32> to vector<64x32xbf16>
    %cst_100 = arith.constant dense<0.000000e+00> : vector<64x128xf32>
    %385 = tpu.matmul %384, %368, %cst_100 {dimension_numbers = #tpu.dot_dimension_numbers<[1], [0], [0], [1], [0, 0, 1, 1], [], []>} : vector<64x32xbf16>, vector<32x128xbf16>, vector<64x128xf32> -> vector<64x128xf32>
    %386 = arith.addf %383, %385 : vector<64x128xf32>
    %387 = vector.extract_strided_slice %361 {offsets = [32, 0], sizes = [32, 128], strides = [1, 1]} : vector<64x128xbf16> to vector<32x128xbf16>
    %388 = vector.extract_strided_slice %363 {offsets = [32, 0], sizes = [32, 128], strides = [1, 1]} : vector<64x128xbf16> to vector<32x128xbf16>
    %cst_101 = arith.constant dense<0.000000e+00> : vector<64x32xf32>
    %389 = tpu.matmul %359, %387, %cst_101 {dimension_numbers = #tpu.dot_dimension_numbers<[1], [1], [0], [0], [0, 0, 1, 0], [], []>} : vector<64x128xbf16>, vector<32x128xbf16>, vector<64x32xf32> -> vector<64x32xf32>
    %cst_102 = arith.constant dense<0xFF800000> : vector<64xf32>
    %390 = vector.multi_reduction <maximumf>, %389, %cst_102 [1] : vector<64x32xf32> to vector<64xf32>
    %391 = vector.shape_cast %390 : vector<64xf32> to vector<64x1xf32>
    %392 = arith.maximumf %372, %391 : vector<64x1xf32>
    %393 = arith.subf %372, %392 : vector<64x1xf32>
    %394 = math.exp %393 : vector<64x1xf32>
    %395 = vector.broadcast %392 : vector<64x1xf32> to vector<64x32xf32>
    %396 = arith.subf %389, %395 : vector<64x32xf32>
    %397 = math.exp %396 : vector<64x32xf32>
    %398 = arith.mulf %394, %381 : vector<64x1xf32>
    %cst_103 = arith.constant dense<0.000000e+00> : vector<64xf32>
    %399 = vector.multi_reduction <add>, %397, %cst_103 [1] : vector<64x32xf32> to vector<64xf32>
    %400 = vector.shape_cast %399 : vector<64xf32> to vector<64x1xf32>
    %401 = arith.addf %398, %400 : vector<64x1xf32>
    %402 = vector.broadcast %394 : vector<64x1xf32> to vector<64x128xf32>
    %403 = arith.mulf %402, %386 : vector<64x128xf32>
    %404 = arith.truncf %397 : vector<64x32xf32> to vector<64x32xbf16>
    %cst_104 = arith.constant dense<0.000000e+00> : vector<64x128xf32>
    %405 = tpu.matmul %404, %388, %cst_104 {dimension_numbers = #tpu.dot_dimension_numbers<[1], [0], [0], [1], [0, 0, 1, 1], [], []>} : vector<64x32xbf16>, vector<32x128xbf16>, vector<64x128xf32> -> vector<64x128xf32>
    %406 = arith.addf %403, %405 : vector<64x128xf32>
    %407 = tpu.reciprocal %401 {approx = true} : vector<64x1xf32> -> vector<64x1xf32>
    %408 = vector.broadcast %407 : vector<64x1xf32> to vector<64x128xf32>
    %409 = arith.mulf %406, %408 : vector<64x128xf32>
    %410 = vector.extract_strided_slice %31 {offsets = [0, 896], sizes = [64, 128], strides = [1, 1]} : vector<64x3072xf32> to vector<64x128xf32>
    %cst_105 = arith.constant 5.000000e-01 : f32
    %411 = vector.broadcast %cst_105 : f32 to vector<64x128xf32>
    %412 = arith.mulf %410, %411 : vector<64x128xf32>
    %413 = arith.truncf %412 : vector<64x128xf32> to vector<64x128xbf16>
    %414 = vector.extract_strided_slice %31 {offsets = [0, 1920], sizes = [64, 128], strides = [1, 1]} : vector<64x3072xf32> to vector<64x128xf32>
    %415 = arith.truncf %414 : vector<64x128xf32> to vector<64x128xbf16>
    %416 = vector.extract_strided_slice %31 {offsets = [0, 2944], sizes = [64, 128], strides = [1, 1]} : vector<64x3072xf32> to vector<64x128xf32>
    %417 = arith.truncf %416 : vector<64x128xf32> to vector<64x128xbf16>
    %cst_106 = arith.constant 0xFF800000 : f32
    %418 = vector.broadcast %cst_106 : f32 to vector<64x1xf32>
    %cst_107 = arith.constant 0.000000e+00 : f32
    %419 = vector.broadcast %cst_107 : f32 to vector<64x1xf32>
    %cst_108 = arith.constant 0.000000e+00 : f32
    %420 = vector.broadcast %cst_108 : f32 to vector<64x128xf32>
    %421 = vector.extract_strided_slice %415 {offsets = [0, 0], sizes = [32, 128], strides = [1, 1]} : vector<64x128xbf16> to vector<32x128xbf16>
    %422 = vector.extract_strided_slice %417 {offsets = [0, 0], sizes = [32, 128], strides = [1, 1]} : vector<64x128xbf16> to vector<32x128xbf16>
    %cst_109 = arith.constant dense<0.000000e+00> : vector<64x32xf32>
    %423 = tpu.matmul %413, %421, %cst_109 {dimension_numbers = #tpu.dot_dimension_numbers<[1], [1], [0], [0], [0, 0, 1, 0], [], []>} : vector<64x128xbf16>, vector<32x128xbf16>, vector<64x32xf32> -> vector<64x32xf32>
    %cst_110 = arith.constant dense<0xFF800000> : vector<64xf32>
    %424 = vector.multi_reduction <maximumf>, %423, %cst_110 [1] : vector<64x32xf32> to vector<64xf32>
    %425 = vector.shape_cast %424 : vector<64xf32> to vector<64x1xf32>
    %426 = arith.maximumf %418, %425 : vector<64x1xf32>
    %427 = arith.subf %418, %426 : vector<64x1xf32>
    %428 = math.exp %427 : vector<64x1xf32>
    %429 = vector.broadcast %426 : vector<64x1xf32> to vector<64x32xf32>
    %430 = arith.subf %423, %429 : vector<64x32xf32>
    %431 = math.exp %430 : vector<64x32xf32>
    %432 = arith.mulf %428, %419 : vector<64x1xf32>
    %cst_111 = arith.constant dense<0.000000e+00> : vector<64xf32>
    %433 = vector.multi_reduction <add>, %431, %cst_111 [1] : vector<64x32xf32> to vector<64xf32>
    %434 = vector.shape_cast %433 : vector<64xf32> to vector<64x1xf32>
    %435 = arith.addf %432, %434 : vector<64x1xf32>
    %436 = vector.broadcast %428 : vector<64x1xf32> to vector<64x128xf32>
    %437 = arith.mulf %436, %420 : vector<64x128xf32>
    %438 = arith.truncf %431 : vector<64x32xf32> to vector<64x32xbf16>
    %cst_112 = arith.constant dense<0.000000e+00> : vector<64x128xf32>
    %439 = tpu.matmul %438, %422, %cst_112 {dimension_numbers = #tpu.dot_dimension_numbers<[1], [0], [0], [1], [0, 0, 1, 1], [], []>} : vector<64x32xbf16>, vector<32x128xbf16>, vector<64x128xf32> -> vector<64x128xf32>
    %440 = arith.addf %437, %439 : vector<64x128xf32>
    %441 = vector.extract_strided_slice %415 {offsets = [32, 0], sizes = [32, 128], strides = [1, 1]} : vector<64x128xbf16> to vector<32x128xbf16>
    %442 = vector.extract_strided_slice %417 {offsets = [32, 0], sizes = [32, 128], strides = [1, 1]} : vector<64x128xbf16> to vector<32x128xbf16>
    %cst_113 = arith.constant dense<0.000000e+00> : vector<64x32xf32>
    %443 = tpu.matmul %413, %441, %cst_113 {dimension_numbers = #tpu.dot_dimension_numbers<[1], [1], [0], [0], [0, 0, 1, 0], [], []>} : vector<64x128xbf16>, vector<32x128xbf16>, vector<64x32xf32> -> vector<64x32xf32>
    %cst_114 = arith.constant dense<0xFF800000> : vector<64xf32>
    %444 = vector.multi_reduction <maximumf>, %443, %cst_114 [1] : vector<64x32xf32> to vector<64xf32>
    %445 = vector.shape_cast %444 : vector<64xf32> to vector<64x1xf32>
    %446 = arith.maximumf %426, %445 : vector<64x1xf32>
    %447 = arith.subf %426, %446 : vector<64x1xf32>
    %448 = math.exp %447 : vector<64x1xf32>
    %449 = vector.broadcast %446 : vector<64x1xf32> to vector<64x32xf32>
    %450 = arith.subf %443, %449 : vector<64x32xf32>
    %451 = math.exp %450 : vector<64x32xf32>
    %452 = arith.mulf %448, %435 : vector<64x1xf32>
    %cst_115 = arith.constant dense<0.000000e+00> : vector<64xf32>
    %453 = vector.multi_reduction <add>, %451, %cst_115 [1] : vector<64x32xf32> to vector<64xf32>
    %454 = vector.shape_cast %453 : vector<64xf32> to vector<64x1xf32>
    %455 = arith.addf %452, %454 : vector<64x1xf32>
    %456 = vector.broadcast %448 : vector<64x1xf32> to vector<64x128xf32>
    %457 = arith.mulf %456, %440 : vector<64x128xf32>
    %458 = arith.truncf %451 : vector<64x32xf32> to vector<64x32xbf16>
    %cst_116 = arith.constant dense<0.000000e+00> : vector<64x128xf32>
    %459 = tpu.matmul %458, %442, %cst_116 {dimension_numbers = #tpu.dot_dimension_numbers<[1], [0], [0], [1], [0, 0, 1, 1], [], []>} : vector<64x32xbf16>, vector<32x128xbf16>, vector<64x128xf32> -> vector<64x128xf32>
    %460 = arith.addf %457, %459 : vector<64x128xf32>
    %461 = tpu.reciprocal %455 {approx = true} : vector<64x1xf32> -> vector<64x1xf32>
    %462 = vector.broadcast %461 : vector<64x1xf32> to vector<64x128xf32>
    %463 = arith.mulf %460, %462 : vector<64x128xf32>
    %464 = tpu.concatenate %85, %139, %193, %247, %301, %355, %409, %463 in 1 : vector<64x128xf32>, vector<64x128xf32>, vector<64x128xf32>, vector<64x128xf32>, vector<64x128xf32>, vector<64x128xf32>, vector<64x128xf32>, vector<64x128xf32> -> vector<64x1024xf32>
    %465 = arith.truncf %464 : vector<64x1024xf32> to vector<64x1024xbf16>
    %c0_117 = arith.constant 0 : index
    %c0_118 = arith.constant 0 : index
    %466 = vector.load %arg7[%c0_117, %c0_118] : memref<1024x128xbf16, #tpu.memory_space<vmem>>, vector<1024x128xbf16>
    %cst_119 = arith.constant dense<0.000000e+00> : vector<64x128xf32>
    %467 = tpu.matmul %465, %466, %cst_119 {dimension_numbers = #tpu.dot_dimension_numbers<[1], [0], [0], [1], [0, 0, 1, 1], [], []>} : vector<64x1024xbf16>, vector<1024x128xbf16>, vector<64x128xf32> -> vector<64x128xf32>
    %468 = arith.addf %1, %467 : vector<64x128xf32>
    %c0_120 = arith.constant 0 : index
    %c0_121 = arith.constant 0 : index
    %469 = vector.load %arg8[%c0_120, %c0_121] : memref<1x128xf32, #tpu.memory_space<vmem>>, vector<1x128xf32>
    %470 = vector.broadcast %469 : vector<1x128xf32> to vector<64x128xf32>
    %471 = arith.addf %468, %470 : vector<64x128xf32>
    %c0_122 = arith.constant 0 : index
    %c0_123 = arith.constant 0 : index
    %c0_124 = arith.constant 0 : index
    %472 = vector.load %arg9[%c0_122, %c0_123, %c0_124] : memref<1x64x128xf32, #tpu.memory_space<vmem>>, vector<1x64x128xf32>
    %473 = vector.shape_cast %472 : vector<1x64x128xf32> to vector<64x128xf32>
    %474 = vector.shape_cast %471 : vector<64x128xf32> to vector<1x64x128xf32>
    tpu.vector_store %arg9[%c0_122, %c0_123, %c0_124], %474 {strides = array<i32>} : memref<1x64x128xf32, #tpu.memory_space<vmem>>, vector<1x64x128xf32>,
    return
  }
  func.func @transform_0(%arg0: i32) -> (i32, i32, i32) {
    %c0_i32 = arith.constant 0 : i32
    %c0_i32_0 = arith.constant 0 : i32
    %c0_i32_1 = arith.constant 0 : i32
    return %arg0, %c0_i32, %c0_i32_0 : i32, i32, i32
  }
  func.func @transform_1(%arg0: i32) -> (i32, i32) {
    %c0_i32 = arith.constant 0 : i32
    %c0_i32_0 = arith.constant 0 : i32
    %c0_i32_1 = arith.constant 0 : i32
    return %c0_i32, %c0_i32_0 : i32, i32
  }
  func.func @transform_2(%arg0: i32) -> (i32, i32) {
    %c0_i32 = arith.constant 0 : i32
    %c0_i32_0 = arith.constant 0 : i32
    %c0_i32_1 = arith.constant 0 : i32
    return %c0_i32, %c0_i32_0 : i32, i32
  }
  func.func @transform_3(%arg0: i32) -> (i32, i32) {
    %c0_i32 = arith.constant 0 : i32
    %c0_i32_0 = arith.constant 0 : i32
    %c0_i32_1 = arith.constant 0 : i32
    return %c0_i32, %c0_i32_0 : i32, i32
  }
  func.func @transform_4(%arg0: i32) -> (i32, i32) {
    %c0_i32 = arith.constant 0 : i32
    %c0_i32_0 = arith.constant 0 : i32
    %c0_i32_1 = arith.constant 0 : i32
    return %c0_i32, %c0_i32_0 : i32, i32
  }
  func.func @transform_5(%arg0: i32) -> (i32, i32) {
    %c0_i32 = arith.constant 0 : i32
    %c0_i32_0 = arith.constant 0 : i32
    %c0_i32_1 = arith.constant 0 : i32
    return %c0_i32, %c0_i32_0 : i32, i32
  }
  func.func @transform_6(%arg0: i32) -> (i32, i32) {
    %c0_i32 = arith.constant 0 : i32
    %c0_i32_0 = arith.constant 0 : i32
    %c0_i32_1 = arith.constant 0 : i32
    return %c0_i32, %c0_i32_0 : i32, i32
  }
  func.func @transform_7(%arg0: i32) -> (i32, i32) {
    %c0_i32 = arith.constant 0 : i32
    %c0_i32_0 = arith.constant 0 : i32
    %c0_i32_1 = arith.constant 0 : i32
    return %c0_i32, %c0_i32_0 : i32, i32
  }
  func.func @transform_8(%arg0: i32) -> (i32, i32, i32) {
    %c0_i32 = arith.constant 0 : i32
    %c0_i32_0 = arith.constant 0 : i32
    %c0_i32_1 = arith.constant 0 : i32
    return %arg0, %c0_i32, %c0_i32_0 : i32, i32, i32
  }
}

</mosaic_0001>

<llo_original>
// kernel: self_attention.1
$region0: #{self_attention.1}
  #allocation0 [shape = 'u32[]', space=smem, size = 0x4, offset = 0x4, fixed_abs, tag = 'smem constant byte address 0x4 - core index']
  #allocation1 [shape = 'u32[72,128]{1,0:T(1,128)}', space=vmem, size = 0x9000, scoped, tag = 'internal scratch']
  %s0 = inlined_call_operand.vmem [shape: f32[2,64,128], index: 0, kind: input, shape index: {}, may-alias: {0,8}]
  %s1 = inlined_call_operand.vmem [shape: f32[1,128], index: 1, kind: input, shape index: {}]
  %s2 = inlined_call_operand.vmem [shape: f32[1,128], index: 2, kind: input, shape index: {}]
  %s3 = inlined_call_operand.vmem [shape: f32[128,128], index: 3, kind: input, shape index: {}]
  %s4 = inlined_call_operand.vmem [shape: bf16[128,3072], index: 4, kind: input, shape index: {}]
  %s5 = inlined_call_operand.vmem [shape: f32[1,3072], index: 5, kind: input, shape index: {}]
  %s6 = inlined_call_operand.vmem [shape: bf16[1024,128], index: 6, kind: input, shape index: {}]
  %s7 = inlined_call_operand.vmem [shape: f32[1,128], index: 7, kind: input, shape index: {}]
  %s8 = inlined_call_operand.vmem [shape: f32[2,64,128], index: 8, kind: output, shape index: {}, may-alias: {0,8}]
  %s9 = sld [smem:[#allocation0]]
  $region65: #{self_attention.1} parent=0
    _
  %s11 = ssub.s32 1, %s9
  %s12 = scalar_select 0, %s11, %s9
  loop: start=0, step=1, limit=4
  $region2: #{self_attention.1} parent=0 // loop_pre_header
    _
  $region3: #{self_attention.1} parent=0 // loop_header
    %s14 = sphi 0, %s18
    %p15 = scmp.ge.s32.totalorder %s14, 4
    %s24 = sphi 0, %s26
    %s27 = sphi 0, %s24
    %s28 = sphi 0, %s27
    %s44 = sphi 0, %s28
    %s48 = sphi 0, %s48
    %s50 = sphi 0, %s48
    %s51 = sphi 0, %s50
    %s65 = sphi 0, %s51
    %s69 = sphi 0, %s69
    %s71 = sphi 0, %s69
    %s72 = sphi 0, %s71
    %s86 = sphi 0, %s72
    %s90 = sphi 0, %s90
    %s92 = sphi 0, %s90
    %s93 = sphi 0, %s92
    %s107 = sphi 0, %s93
    %s111 = sphi 0, %s111
    %s113 = sphi 0, %s111
    %s114 = sphi 0, %s113
    %s128 = sphi 0, %s114
    %s132 = sphi 0, %s132
    %s134 = sphi 0, %s132
    %s135 = sphi 0, %s134
    %s149 = sphi 0, %s135
    %s153 = sphi 0, %s153
    %s155 = sphi 0, %s153
    %s156 = sphi 0, %s155
    %s170 = sphi 0, %s156
    %s174 = sphi 0, %s174
    %s176 = sphi 0, %s174
    %s177 = sphi 0, %s176
    %s191 = sphi 0, %s177
    %s197 = sphi 0, %s199
    %s200 = sphi 0, %s197
    %s201 = sphi 0, %s200
    %s217 = sphi 0, %s201
  $region4: #{self_attention.1} parent=0 // loop_header_branch
    %17 = sbr.rel (%p15) target = $region8
  $region5: #{self_attention.1} parent=0 // loop_body
    %s19 = ssub.s32 %s14, 1
    %s20 = ssub.s32 %s14, 2
    %s21 = sadd.s32 %s14, 1
    %s22 = ssub.s32 %s14, %s21
    %p23 = scmp.eq.s32.totalorder %s22, 0
    %s25 = sadd.s32 %s24, 1
    %s26 = scalar_select %p23, %s24, %s25
    %p29 = pneg %p23
    %p30 = scmp.eq.s32.totalorder %s14, 1
    %p31 = por %p29, %p30
    %p32 = scmp.ne.s32.totalorder %s24, %s27
    %p33 = scmp.eq.s32.totalorder %s14, 0
    %p34 = por %p32, %p33
    %p35 = scmp.ne.s32.totalorder %s24, %s27
    %p36 = scmp.eq.s32.totalorder %s19, 1
    %p37 = por %p35, %p36
    %p38 = scmp.ne.s32.totalorder %s27, %s28
    %p39 = scmp.eq.s32.totalorder %s19, 0
    %p40 = por %p38, %p39
    %p41 = scmp.ne.s32.totalorder %s27, %s28
    %p42 = scmp.eq.s32.totalorder %s20, 1
    %p43 = por %p41, %p42
    %p45 = scmp.ne.s32.totalorder %s28, %s44
    %p46 = scmp.eq.s32.totalorder %s20, 0
    %p47 = por %p45, %p46
    %s49 = sadd.s32 %s48, 1
    %p52 = scmp.eq.s32.totalorder %s14, 1
    %p53 = scmp.ne.s32.totalorder %s48, %s50
    %p54 = scmp.eq.s32.totalorder %s14, 0
    %p55 = por %p53, %p54
    %p56 = scmp.ne.s32.totalorder %s48, %s50
    %p57 = scmp.eq.s32.totalorder %s19, 1
    %p58 = por %p56, %p57
    %p59 = scmp.ne.s32.totalorder %s50, %s51
    %p60 = scmp.eq.s32.totalorder %s19, 0
    %p61 = por %p59, %p60
    %p62 = scmp.ne.s32.totalorder %s50, %s51
    %p63 = scmp.eq.s32.totalorder %s20, 1
    %p64 = por %p62, %p63
    %p66 = scmp.ne.s32.totalorder %s51, %s65
    %p67 = scmp.eq.s32.totalorder %s20, 0
    %p68 = por %p66, %p67
    %s70 = sadd.s32 %s69, 1
    %p73 = scmp.eq.s32.totalorder %s14, 1
    %p74 = scmp.ne.s32.totalorder %s69, %s71
    %p75 = scmp.eq.s32.totalorder %s14, 0
    %p76 = por %p74, %p75
    %p77 = scmp.ne.s32.totalorder %s69, %s71
    %p78 = scmp.eq.s32.totalorder %s19, 1
    %p79 = por %p77, %p78
    %p80 = scmp.ne.s32.totalorder %s71, %s72
    %p81 = scmp.eq.s32.totalorder %s19, 0
    %p82 = por %p80, %p81
    %p83 = scmp.ne.s32.totalorder %s71, %s72
    %p84 = scmp.eq.s32.totalorder %s20, 1
    %p85 = por %p83, %p84
    %p87 = scmp.ne.s32.totalorder %s72, %s86
    %p88 = scmp.eq.s32.totalorder %s20, 0
    %p89 = por %p87, %p88
    %s91 = sadd.s32 %s90, 1
    %p94 = scmp.eq.s32.totalorder %s14, 1
    %p95 = scmp.ne.s32.totalorder %s90, %s92
    %p96 = scmp.eq.s32.totalorder %s14, 0
    %p97 = por %p95, %p96
    %p98 = scmp.ne.s32.totalorder %s90, %s92
    %p99 = scmp.eq.s32.totalorder %s19, 1
    %p100 = por %p98, %p99
    %p101 = scmp.ne.s32.totalorder %s92, %s93
    %p102 = scmp.eq.s32.totalorder %s19, 0
    %p103 = por %p101, %p102
    %p104 = scmp.ne.s32.totalorder %s92, %s93
    %p105 = scmp.eq.s32.totalorder %s20, 1
    %p106 = por %p104, %p105
    %p108 = scmp.ne.s32.totalorder %s93, %s107
    %p109 = scmp.eq.s32.totalorder %s20, 0
    %p110 = por %p108, %p109
    %s112 = sadd.s32 %s111, 1
    %p115 = scmp.eq.s32.totalorder %s14, 1
    %p116 = scmp.ne.s32.totalorder %s111, %s113
    %p117 = scmp.eq.s32.totalorder %s14, 0
    %p118 = por %p116, %p117
    %p119 = scmp.ne.s32.totalorder %s111, %s113
    %p120 = scmp.eq.s32.totalorder %s19, 1
    %p121 = por %p119, %p120
    %p122 = scmp.ne.s32.totalorder %s113, %s114
    %p123 = scmp.eq.s32.totalorder %s19, 0
    %p124 = por %p122, %p123
    %p125 = scmp.ne.s32.totalorder %s113, %s114
    %p126 = scmp.eq.s32.totalorder %s20, 1
    %p127 = por %p125, %p126
    %p129 = scmp.ne.s32.totalorder %s114, %s128
    %p130 = scmp.eq.s32.totalorder %s20, 0
    %p131 = por %p129, %p130
    %s133 = sadd.s32 %s132, 1
    %p136 = scmp.eq.s32.totalorder %s14, 1
    %p137 = scmp.ne.s32.totalorder %s132, %s134
    %p138 = scmp.eq.s32.totalorder %s14, 0
    %p139 = por %p137, %p138
    %p140 = scmp.ne.s32.totalorder %s132, %s134
    %p141 = scmp.eq.s32.totalorder %s19, 1
    %p142 = por %p140, %p141
    %p143 = scmp.ne.s32.totalorder %s134, %s135
    %p144 = scmp.eq.s32.totalorder %s19, 0
    %p145 = por %p143, %p144
    %p146 = scmp.ne.s32.totalorder %s134, %s135
    %p147 = scmp.eq.s32.totalorder %s20, 1
    %p148 = por %p146, %p147
    %p150 = scmp.ne.s32.totalorder %s135, %s149
    %p151 = scmp.eq.s32.totalorder %s20, 0
    %p152 = por %p150, %p151
    %s154 = sadd.s32 %s153, 1
    %p157 = scmp.eq.s32.totalorder %s14, 1
    %p158 = scmp.ne.s32.totalorder %s153, %s155
    %p159 = scmp.eq.s32.totalorder %s14, 0
    %p160 = por %p158, %p159
    %p161 = scmp.ne.s32.totalorder %s153, %s155
    %p162 = scmp.eq.s32.totalorder %s19, 1
    %p163 = por %p161, %p162
    %p164 = scmp.ne.s32.totalorder %s155, %s156
    %p165 = scmp.eq.s32.totalorder %s19, 0
    %p166 = por %p164, %p165
    %p167 = scmp.ne.s32.totalorder %s155, %s156
    %p168 = scmp.eq.s32.totalorder %s20, 1
    %p169 = por %p167, %p168
    %p171 = scmp.ne.s32.totalorder %s156, %s170
    %p172 = scmp.eq.s32.totalorder %s20, 0
    %p173 = por %p171, %p172
    %s175 = sadd.s32 %s174, 1
    %p178 = scmp.eq.s32.totalorder %s14, 1
    %p179 = scmp.ne.s32.totalorder %s174, %s176
    %p180 = scmp.eq.s32.totalorder %s14, 0
    %p181 = por %p179, %p180
    %p182 = scmp.ne.s32.totalorder %s174, %s176
    %p183 = scmp.eq.s32.totalorder %s19, 1
    %p184 = por %p182, %p183
    %p185 = scmp.ne.s32.totalorder %s176, %s177
    %p186 = scmp.eq.s32.totalorder %s19, 0
    %p187 = por %p185, %p186
    %p188 = scmp.ne.s32.totalorder %s176, %s177
    %p189 = scmp.eq.s32.totalorder %s20, 1
    %p190 = por %p188, %p189
    %p192 = scmp.ne.s32.totalorder %s177, %s191
    %p193 = scmp.eq.s32.totalorder %s20, 0
    %p194 = por %p192, %p193
    %s195 = ssub.s32 %s14, %s21
    %p196 = scmp.eq.s32.totalorder %s195, 0
    %s198 = sadd.s32 %s197, 1
    %s199 = scalar_select %p196, %s197, %s198
    %p202 = pneg %p196
    %p203 = scmp.eq.s32.totalorder %s14, 1
    %p204 = por %p202, %p203
    %p205 = scmp.ne.s32.totalorder %s197, %s200
    %p206 = scmp.eq.s32.totalorder %s14, 0
    %p207 = por %p205, %p206
    %p208 = scmp.ne.s32.totalorder %s197, %s200
    %p209 = scmp.eq.s32.totalorder %s19, 1
    %p210 = por %p208, %p209
    %p211 = scmp.ne.s32.totalorder %s200, %s201
    %p212 = scmp.eq.s32.totalorder %s19, 0
    %p213 = por %p211, %p212
    %p214 = scmp.ne.s32.totalorder %s200, %s201
    %p215 = scmp.eq.s32.totalorder %s20, 1
    %p216 = por %p214, %p215
    %p218 = scmp.ne.s32.totalorder %s201, %s217
    %p219 = scmp.eq.s32.totalorder %s20, 0
    %p220 = por %p218, %p219
    %p221 = scmp.le.s32.totalorder 1, %s14
    %p222 = scmp.lt.s32.totalorder %s14, 3
    %p223 = pnand %p221, %p222
    %p224 = pneg %p223
    // Predicated region
    $region9: #{self_attention.1} parent=5 // pred_check
      _
    $region10: #{self_attention.1} parent=5 // pred_check_branch
      %226 = sbr.rel (%p223) target = $region12
    $region11: #{self_attention.1} parent=5 // pred_region
      %s227 = ssub.s32 %s14, 1
      // Predicated region
      $region13: #{self_attention.1} parent=11 // pred_check
        %p228 = pneg %p61
      $region14: #{self_attention.1} parent=11 // pred_check_branch
        %230 = sbr.rel (%p228) target = $region16
      $region15: #{self_attention.1} parent=11 // pred_region
        _
      $region16: #{self_attention.1} parent=11 // pred_fallthru
        _
      // Predicated region
      $region17: #{self_attention.1} parent=11 // pred_check
        %p231 = pneg %p82
      $region18: #{self_attention.1} parent=11 // pred_check_branch
        %233 = sbr.rel (%p231) target = $region20
      $region19: #{self_attention.1} parent=11 // pred_region
        _
      $region20: #{self_attention.1} parent=11 // pred_fallthru
        _
      // Predicated region
      $region21: #{self_attention.1} parent=11 // pred_check
        %p234 = pneg %p103
      $region22: #{self_attention.1} parent=11 // pred_check_branch
        %236 = sbr.rel (%p234) target = $region24
      $region23: #{self_attention.1} parent=11 // pred_region
        _
      $region24: #{self_attention.1} parent=11 // pred_fallthru
        _
      // Predicated region
      $region25: #{self_attention.1} parent=11 // pred_check
        %p237 = pneg %p124
      $region26: #{self_attention.1} parent=11 // pred_check_branch
        %239 = sbr.rel (%p237) target = $region28
      $region27: #{self_attention.1} parent=11 // pred_region
        _
      $region28: #{self_attention.1} parent=11 // pred_fallthru
        _
      // Predicated region
      $region29: #{self_attention.1} parent=11 // pred_check
        %p240 = pneg %p145
      $region30: #{self_attention.1} parent=11 // pred_check_branch
        %242 = sbr.rel (%p240) target = $region32
      $region31: #{self_attention.1} parent=11 // pred_region
        _
      $region32: #{self_attention.1} parent=11 // pred_fallthru
        _
      // Predicated region
      $region33: #{self_attention.1} parent=11 // pred_check
        %p243 = pneg %p166
      $region34: #{self_attention.1} parent=11 // pred_check_branch
        %245 = sbr.rel (%p243) target = $region36
      $region35: #{self_attention.1} parent=11 // pred_region
        _
      $region36: #{self_attention.1} parent=11 // pred_fallthru
        _
      // Predicated region
      $region37: #{self_attention.1} parent=11 // pred_check
        %p246 = pneg %p187
      $region38: #{self_attention.1} parent=11 // pred_check_branch
        %248 = sbr.rel (%p246) target = $region40
      $region39: #{self_attention.1} parent=11 // pred_region
        _
      $region40: #{self_attention.1} parent=11 // pred_fallthru
        _
    $region12: #{self_attention.1} parent=5 // pred_fallthru
      _
    %p249 = scmp.lt.s32.totalorder %s14, 2
    // Predicated region
    $region41: #{self_attention.1} parent=5 // pred_check
      %p250 = pneg %p249
    $region42: #{self_attention.1} parent=5 // pred_check_branch
      %252 = sbr.rel (%p250) target = $region44
    $region43: #{self_attention.1} parent=5 // pred_region
      // Predicated region
      $region45: #{self_attention.1} parent=43 // pred_check
        %p253 = pneg %p34
      $region46: #{self_attention.1} parent=43 // pred_check_branch
        %255 = sbr.rel (%p253) target = $region48
      $region47: #{self_attention.1} parent=43 // pred_region
        %p256 = scmp.lt.s32.totalorder %s14, 1
        %s257 = scalar_select %p256, %s14, 1
        %s258 = smul.addr %s257, 8
        %s259 = smul.addr %s258, 8
        %s260 = scalar_lea.vmem %s0, %s259
      $region48: #{self_attention.1} parent=43 // pred_fallthru
        _
    $region44: #{self_attention.1} parent=5 // pred_fallthru
      _
    %p261 = scmp.le.s32.totalorder 1, %s14
    %p262 = scmp.lt.s32.totalorder %s14, 3
    %p263 = pnand %p261, %p262
    %p264 = pneg %p263
    // Predicated region
    $region49: #{self_attention.1} parent=5 // pred_check
      _
    $region50: #{self_attention.1} parent=5 // pred_check_branch
      %266 = sbr.rel (%p263) target = $region52
    $region51: #{self_attention.1} parent=5 // pred_region
      %s267 = ssub.s32 %s14, 1
      %p268 = scmp.lt.s32.totalorder %s19, 1
      %s269 = scalar_select %p268, %s19, 1
      %s270 = smul.addr %s269, 8
      %s271 = smul.addr %s270, 8
      %s272 = scalar_lea.vmem %s0, %s271
      %p273 = pneg %p40
      %p274 = pneg %p37
      %p275 = pneg %p61
      %p276 = pneg %p58
      %p277 = pneg %p82
      %p278 = pneg %p79
      %p279 = pneg %p103
      %p280 = pneg %p100
      %p281 = pneg %p124
      %p282 = pneg %p121
      %p283 = pneg %p145
      %p284 = pneg %p142
      %p285 = pneg %p166
      %p286 = pneg %p163
      %p287 = pneg %p187
      %p288 = pneg %p184
      %p289 = pneg %p213
      %p290 = pneg %p210
      %p291 = scmp.lt.s32.totalorder %s19, 1
      %s292 = scalar_select %p291, %s19, 1
      %s293 = smul.addr %s292, 8
      %s294 = smul.addr %s293, 8
      %s295 = scalar_lea.vmem %s8, %s294
      %p296 = scmp.lt.s32.totalorder %s19, 1
      %s297 = scalar_select %p296, %s19, 1
      %s298 = smul.addr %s297, 8
      %s299 = smul.addr %s298, 8
      %s300 = scalar_lea.vmem %s0, %s299
      %p301 = scmp.lt.s32.totalorder %s19, 1
      %s302 = scalar_select %p301, %s19, 1
      %s303 = smul.addr %s302, 8
      %s304 = smul.addr %s303, 8
      %s305 = scalar_lea.vmem %s8, %s304
      %v307 = vld [vmem:[%s300] sm:$0xff]
      %v308 = vld [vmem:[%s300 + $0x8] sm:$0xff]
      %v309 = vld [vmem:[%s300 + $0x10] sm:$0xff]
      %v310 = vld [vmem:[%s300 + $0x18] sm:$0xff]
      %v311 = vld [vmem:[%s300 + $0x20] sm:$0xff]
      %v312 = vld [vmem:[%s300 + $0x28] sm:$0xff]
      %v313 = vld [vmem:[%s300 + $0x30] sm:$0xff]
      %v314 = vld [vmem:[%s300 + $0x38] sm:$0xff]
      %vm315 = vcmask 523264
      %v317 = vsel %vm315, 1.0, 0
      %319 = vmatpush.msra.mxu0 0.0
      %320 = vmatpush.msra.mxu0 0.0
      %321 = vmatpush.msra.mxu0 0.0
      %322 = vmatpush.msra.mxu0 0.0
      %323 = vmatpush.msra.mxu0 0.0
      %324 = vmatpush.msra.mxu0 0.0
      %325 = vmatpush.msra.mxu0 0.0
      %326 = vmatpush.msra.mxu0 0.0
      %327 = vmatpush.msra.mxu0 %v314
      %328 = vmatpush.msra.mxu0 %v313
      %329 = vmatpush.msra.mxu0 %v312
      %330 = vmatpush.msra.mxu0 %v311
      %331 = vmatpush.msra.mxu0 %v310
      %332 = vmatpush.msra.mxu0 %v309
      %333 = vmatpush.msra.mxu0 %v308
      %334 = vmatpush.msra.mxu0 %v307
      %335 = vmatmul.f32.gmra.mxu0 %v317
      %v336 = vpop.f32.mrf.mxu0
      %v337 = vadd.f32 0.0, %v336
      %338 = vdwg.mxu0
      %v339 = vmul.f32 %v307, %v307
      %v340 = vmul.f32 %v308, %v308
      %v341 = vmul.f32 %v309, %v309
      %v342 = vmul.f32 %v310, %v310
      %v343 = vmul.f32 %v311, %v311
      %v344 = vmul.f32 %v312, %v312
      %v345 = vmul.f32 %v313, %v313
      %v346 = vmul.f32 %v314, %v314
      %347 = vmatpush.msra.mxu0 0.0
      %348 = vmatpush.msra.mxu0 0.0
      %349 = vmatpush.msra.mxu0 0.0
      %350 = vmatpush.msra.mxu0 0.0
      %351 = vmatpush.msra.mxu0 0.0
      %352 = vmatpush.msra.mxu0 0.0
      %353 = vmatpush.msra.mxu0 0.0
      %354 = vmatpush.msra.mxu0 0.0
      %355 = vmatpush.msra.mxu0 %v346
      %356 = vmatpush.msra.mxu0 %v345
      %357 = vmatpush.msra.mxu0 %v344
      %358 = vmatpush.msra.mxu0 %v343
      %359 = vmatpush.msra.mxu0 %v342
      %360 = vmatpush.msra.mxu0 %v341
      %361 = vmatpush.msra.mxu0 %v340
      %362 = vmatpush.msra.mxu0 %v339
      %363 = vmatmul.f32.gmra.mxu0 %v317
      %v364 = vpop.f32.mrf.mxu0
      %v365 = vadd.f32 0.0, %v364
      %366 = vdwg.mxu0
      %v367 = vld [vmem:[%s3] sm:$0xff]
      %v368 = vld [vmem:[%s3 + $0x8] sm:$0xff]
      %v369 = vld [vmem:[%s3 + $0x10] sm:$0xff]
      %v370 = vld [vmem:[%s3 + $0x18] sm:$0xff]
      %v371 = vld [vmem:[%s3 + $0x20] sm:$0xff]
      %v372 = vld [vmem:[%s3 + $0x28] sm:$0xff]
      %v373 = vld [vmem:[%s3 + $0x30] sm:$0xff]
      %v374 = vld [vmem:[%s3 + $0x38] sm:$0xff]
      %v375 = vld [vmem:[%s3 + $0x40] sm:$0xff]
      %v376 = vld [vmem:[%s3 + $0x48] sm:$0xff]
      %v377 = vld [vmem:[%s3 + $0x50] sm:$0xff]
      %v378 = vld [vmem:[%s3 + $0x58] sm:$0xff]
      %v379 = vld [vmem:[%s3 + $0x60] sm:$0xff]
      %v380 = vld [vmem:[%s3 + $0x68] sm:$0xff]
      %v381 = vld [vmem:[%s3 + $0x70] sm:$0xff]
      %v382 = vld [vmem:[%s3 + $0x78] sm:$0xff]
      %383 = vmatpush.msra.mxu0 %v382
      %384 = vmatpush.msra.mxu0 %v381
      %385 = vmatpush.msra.mxu0 %v380
      %386 = vmatpush.msra.mxu0 %v379
      %387 = vmatpush.msra.mxu0 %v378
      %388 = vmatpush.msra.mxu0 %v377
      %389 = vmatpush.msra.mxu0 %v376
      %390 = vmatpush.msra.mxu0 %v375
      %391 = vmatpush.msra.mxu0 %v374
      %392 = vmatpush.msra.mxu0 %v373
      %393 = vmatpush.msra.mxu0 %v372
      %394 = vmatpush.msra.mxu0 %v371
      %395 = vmatpush.msra.mxu0 %v370
      %396 = vmatpush.msra.mxu0 %v369
      %397 = vmatpush.msra.mxu0 %v368
      %398 = vmatpush.msra.mxu0 %v367
      %399 = vmatmul.f32.gmra.mxu0 %v337
      %v400 = vpop.f32.mrf.mxu0
      %v401 = vadd.f32 0.0, %v400
      %402 = vdwg.mxu0
      %403 = vmatpush.msra.mxu0 %v382
      %404 = vmatpush.msra.mxu0 %v381
      %405 = vmatpush.msra.mxu0 %v380
      %406 = vmatpush.msra.mxu0 %v379
      %407 = vmatpush.msra.mxu0 %v378
      %408 = vmatpush.msra.mxu0 %v377
      %409 = vmatpush.msra.mxu0 %v376
      %410 = vmatpush.msra.mxu0 %v375
      %411 = vmatpush.msra.mxu0 %v374
      %412 = vmatpush.msra.mxu0 %v373
      %413 = vmatpush.msra.mxu0 %v372
      %414 = vmatpush.msra.mxu0 %v371
      %415 = vmatpush.msra.mxu0 %v370
      %416 = vmatpush.msra.mxu0 %v369
      %417 = vmatpush.msra.mxu0 %v368
      %418 = vmatpush.msra.mxu0 %v367
      %419 = vmatmul.f32.gmra.mxu0 %v365
      %v420 = vpop.f32.mrf.mxu0
      %v421 = vadd.f32 0.0, %v420
      %422 = vdwg.mxu0
      %v423 = vmul.f32 %v401, %v401
      %v424 = vsub.f32 %v421, %v423
      %v425 = vmax.f32 %v424, 0.0
      %v426 = vadd.f32 %v425, 1e-05
      %v427 = vrsqrt.pop %v426
      %v428 = vmul.f32 %v427, %v426
      %v429 = vmul.f32 %v428, %v427
      %v430 = vmul.f32 0.5, %v429
      %v431 = vsub.f32 1.5, %v430
      %v432 = vmul.f32 %v427, %v431
      %vm433 = vweird.f32 %v426
      %vm434 = vweird.f32 %v427
      %vm435 = vmor %vm433, %vm434
      %v436 = vsel %vm435, %v427, %v432
      %v437 = vld [vmem:[%s1] sm:$0x1]
      %v438 = vmul.f32 %v436, %v437
      %v439 = vld [vmem:[%s2] sm:$0x1]
      %v440 = vmul.f32 %v401, %v438
      %v441 = vsub.f32 %v439, %v440
      %v442 = vperm.slane %v438, 0
      %v443 = vmul.f32 %v307, %v442
      %v444 = vmul.f32 %v308, %v442
      %v445 = vmul.f32 %v309, %v442
      %v446 = vmul.f32 %v310, %v442
      %v447 = vmul.f32 %v311, %v442
      %v448 = vmul.f32 %v312, %v442
      %v449 = vmul.f32 %v313, %v442
      %v450 = vmul.f32 %v314, %v442
      %v452 = vperm.slane %v441, 0
      %v454 = vadd.f32 %v443, %v452
      %v455 = vadd.f32 %v444, %v452
      %v456 = vadd.f32 %v445, %v452
      %v457 = vadd.f32 %v446, %v452
      %v458 = vadd.f32 %v447, %v452
      %v459 = vadd.f32 %v448, %v452
      %v460 = vadd.f32 %v449, %v452
      %v461 = vadd.f32 %v450, %v452
      %v462 = vpack.c.bf16 %v455, %v454
      %v463 = vpack.c.bf16 %v457, %v456
      %v464 = vpack.c.bf16 %v459, %v458
      %v465 = vpack.c.bf16 %v461, %v460
      %v466 = vld [vmem:[%s4] sm:$0xff]
      %v467 = vld [vmem:[%s4 + $0x8] sm:$0xff]
      %v468 = vld [vmem:[%s4 + $0x10] sm:$0xff]
      %v469 = vld [vmem:[%s4 + $0x18] sm:$0xff]
      %v470 = vld [vmem:[%s4 + $0x20] sm:$0xff]
      %v471 = vld [vmem:[%s4 + $0x28] sm:$0xff]
      %v472 = vld [vmem:[%s4 + $0x30] sm:$0xff]
      %v473 = vld [vmem:[%s4 + $0x38] sm:$0xff]
      %v474 = vld [vmem:[%s4 + $0x40] sm:$0xff]
      %v475 = vld [vmem:[%s4 + $0x48] sm:$0xff]
      %v476 = vld [vmem:[%s4 + $0x50] sm:$0xff]
      %v477 = vld [vmem:[%s4 + $0x58] sm:$0xff]
      %v478 = vld [vmem:[%s4 + $0x60] sm:$0xff]
      %v479 = vld [vmem:[%s4 + $0x68] sm:$0xff]
      %v480 = vld [vmem:[%s4 + $0x70] sm:$0xff]
      %v481 = vld [vmem:[%s4 + $0x78] sm:$0xff]
      %v482 = vld [vmem:[%s4 + $0x80] sm:$0xff]
      %v483 = vld [vmem:[%s4 + $0x88] sm:$0xff]
      %v484 = vld [vmem:[%s4 + $0x90] sm:$0xff]
      %v485 = vld [vmem:[%s4 + $0x98] sm:$0xff]
      %v486 = vld [vmem:[%s4 + $0xa0] sm:$0xff]
      %v487 = vld [vmem:[%s4 + $0xa8] sm:$0xff]
      %v488 = vld [vmem:[%s4 + $0xb0] sm:$0xff]
      %v489 = vld [vmem:[%s4 + $0xb8] sm:$0xff]
      %v490 = vld [vmem:[%s4 + $0xc0] sm:$0xff]
      %v491 = vld [vmem:[%s4 + $0xc8] sm:$0xff]
      %v492 = vld [vmem:[%s4 + $0xd0] sm:$0xff]
      %v493 = vld [vmem:[%s4 + $0xd8] sm:$0xff]
      %v494 = vld [vmem:[%s4 + $0xe0] sm:$0xff]
      %v495 = vld [vmem:[%s4 + $0xe8] sm:$0xff]
      %v496 = vld [vmem:[%s4 + $0xf0] sm:$0xff]
      %v497 = vld [vmem:[%s4 + $0xf8] sm:$0xff]
      %v498 = vld [vmem:[%s4 + $0x100] sm:$0xff]
      %v499 = vld [vmem:[%s4 + $0x108] sm:$0xff]
      %v500 = vld [vmem:[%s4 + $0x110] sm:$0xff]
      %v501 = vld [vmem:[%s4 + $0x118] sm:$0xff]
      %v502 = vld [vmem:[%s4 + $0x120] sm:$0xff]
      %v503 = vld [vmem:[%s4 + $0x128] sm:$0xff]
      %v504 = vld [vmem:[%s4 + $0x130] sm:$0xff]
      %v505 = vld [vmem:[%s4 + $0x138] sm:$0xff]
      %v506 = vld [vmem:[%s4 + $0x140] sm:$0xff]
      %v507 = vld [vmem:[%s4 + $0x148] sm:$0xff]
      %v508 = vld [vmem:[%s4 + $0x150] sm:$0xff]
      %v509 = vld [vmem:[%s4 + $0x158] sm:$0xff]
      %v510 = vld [vmem:[%s4 + $0x160] sm:$0xff]
      %v511 = vld [vmem:[%s4 + $0x168] sm:$0xff]
      %v512 = vld [vmem:[%s4 + $0x170] sm:$0xff]
      %v513 = vld [vmem:[%s4 + $0x178] sm:$0xff]
      %v514 = vld [vmem:[%s4 + $0x180] sm:$0xff]
      %v515 = vld [vmem:[%s4 + $0x188] sm:$0xff]
      %v516 = vld [vmem:[%s4 + $0x190] sm:$0xff]
      %v517 = vld [vmem:[%s4 + $0x198] sm:$0xff]
      %v518 = vld [vmem:[%s4 + $0x1a0] sm:$0xff]
      %v519 = vld [vmem:[%s4 + $0x1a8] sm:$0xff]
      %v520 = vld [vmem:[%s4 + $0x1b0] sm:$0xff]
      %v521 = vld [vmem:[%s4 + $0x1b8] sm:$0xff]
      %v522 = vld [vmem:[%s4 + $0x1c0] sm:$0xff]
      %v523 = vld [vmem:[%s4 + $0x1c8] sm:$0xff]
      %v524 = vld [vmem:[%s4 + $0x1d0] sm:$0xff]
      %v525 = vld [vmem:[%s4 + $0x1d8] sm:$0xff]
      %v526 = vld [vmem:[%s4 + $0x1e0] sm:$0xff]
      %v527 = vld [vmem:[%s4 + $0x1e8] sm:$0xff]
      %v528 = vld [vmem:[%s4 + $0x1f0] sm:$0xff]
      %v529 = vld [vmem:[%s4 + $0x1f8] sm:$0xff]
      %v530 = vld [vmem:[%s4 + $0x200] sm:$0xff]
      %v531 = vld [vmem:[%s4 + $0x208] sm:$0xff]
      %v532 = vld [vmem:[%s4 + $0x210] sm:$0xff]
      %v533 = vld [vmem:[%s4 + $0x218] sm:$0xff]
      %v534 = vld [vmem:[%s4 + $0x220] sm:$0xff]
      %v535 = vld [vmem:[%s4 + $0x228] sm:$0xff]
      %v536 = vld [vmem:[%s4 + $0x230] sm:$0xff]
      %v537 = vld [vmem:[%s4 + $0x238] sm:$0xff]
      %v538 = vld [vmem:[%s4 + $0x240] sm:$0xff]
      %v539 = vld [vmem:[%s4 + $0x248] sm:$0xff]
      %v540 = vld [vmem:[%s4 + $0x250] sm:$0xff]
      %v541 = vld [vmem:[%s4 + $0x258] sm:$0xff]
      %v542 = vld [vmem:[%s4 + $0x260] sm:$0xff]
      %v543 = vld [vmem:[%s4 + $0x268] sm:$0xff]
      %v544 = vld [vmem:[%s4 + $0x270] sm:$0xff]
      %v545 = vld [vmem:[%s4 + $0x278] sm:$0xff]
      %v546 = vld [vmem:[%s4 + $0x280] sm:$0xff]
      %v547 = vld [vmem:[%s4 + $0x288] sm:$0xff]
      %v548 = vld [vmem:[%s4 + $0x290] sm:$0xff]
      %v549 = vld [vmem:[%s4 + $0x298] sm:$0xff]
      %v550 = vld [vmem:[%s4 + $0x2a0] sm:$0xff]
      %v551 = vld [vmem:[%s4 + $0x2a8] sm:$0xff]
      %v552 = vld [vmem:[%s4 + $0x2b0] sm:$0xff]
      %v553 = vld [vmem:[%s4 + $0x2b8] sm:$0xff]
      %v554 = vld [vmem:[%s4 + $0x2c0] sm:$0xff]
      %v555 = vld [vmem:[%s4 + $0x2c8] sm:$0xff]
      %v556 = vld [vmem:[%s4 + $0x2d0] sm:$0xff]
      %v557 = vld [vmem:[%s4 + $0x2d8] sm:$0xff]
      %v558 = vld [vmem:[%s4 + $0x2e0] sm:$0xff]
      %v559 = vld [vmem:[%s4 + $0x2e8] sm:$0xff]
      %v560 = vld [vmem:[%s4 + $0x2f0] sm:$0xff]
      %v561 = vld [vmem:[%s4 + $0x2f8] sm:$0xff]
      %v562 = vld [vmem:[%s4 + $0x300] sm:$0xff]
      %v563 = vld [vmem:[%s4 + $0x308] sm:$0xff]
      %v564 = vld [vmem:[%s4 + $0x310] sm:$0xff]
      %v565 = vld [vmem:[%s4 + $0x318] sm:$0xff]
      %v566 = vld [vmem:[%s4 + $0x320] sm:$0xff]
      %v567 = vld [vmem:[%s4 + $0x328] sm:$0xff]
      %v568 = vld [vmem:[%s4 + $0x330] sm:$0xff]
      %v569 = vld [vmem:[%s4 + $0x338] sm:$0xff]
      %v570 = vld [vmem:[%s4 + $0x340] sm:$0xff]
      %v571 = vld [vmem:[%s4 + $0x348] sm:$0xff]
      %v572 = vld [vmem:[%s4 + $0x350] sm:$0xff]
      %v573 = vld [vmem:[%s4 + $0x358] sm:$0xff]
      %v574 = vld [vmem:[%s4 + $0x360] sm:$0xff]
      %v575 = vld [vmem:[%s4 + $0x368] sm:$0xff]
      %v576 = vld [vmem:[%s4 + $0x370] sm:$0xff]
      %v577 = vld [vmem:[%s4 + $0x378] sm:$0xff]
      %v578 = vld [vmem:[%s4 + $0x380] sm:$0xff]
      %v579 = vld [vmem:[%s4 + $0x388] sm:$0xff]
      %v580 = vld [vmem:[%s4 + $0x390] sm:$0xff]
      %v581 = vld [vmem:[%s4 + $0x398] sm:$0xff]
      %v582 = vld [vmem:[%s4 + $0x3a0] sm:$0xff]
      %v583 = vld [vmem:[%s4 + $0x3a8] sm:$0xff]
      %v584 = vld [vmem:[%s4 + $0x3b0] sm:$0xff]
      %v585 = vld [vmem:[%s4 + $0x3b8] sm:$0xff]
      %v586 = vld [vmem:[%s4 + $0x3c0] sm:$0xff]
      %v587 = vld [vmem:[%s4 + $0x3c8] sm:$0xff]
      %v588 = vld [vmem:[%s4 + $0x3d0] sm:$0xff]
      %v589 = vld [vmem:[%s4 + $0x3d8] sm:$0xff]
      %v590 = vld [vmem:[%s4 + $0x3e0] sm:$0xff]
      %v591 = vld [vmem:[%s4 + $0x3e8] sm:$0xff]
      %v592 = vld [vmem:[%s4 + $0x3f0] sm:$0xff]
      %v593 = vld [vmem:[%s4 + $0x3f8] sm:$0xff]
      %v594 = vld [vmem:[%s4 + $0x400] sm:$0xff]
      %v595 = vld [vmem:[%s4 + $0x408] sm:$0xff]
      %v596 = vld [vmem:[%s4 + $0x410] sm:$0xff]
      %v597 = vld [vmem:[%s4 + $0x418] sm:$0xff]
      %v598 = vld [vmem:[%s4 + $0x420] sm:$0xff]
      %v599 = vld [vmem:[%s4 + $0x428] sm:$0xff]
      %v600 = vld [vmem:[%s4 + $0x430] sm:$0xff]
      %v601 = vld [vmem:[%s4 + $0x438] sm:$0xff]
      %v602 = vld [vmem:[%s4 + $0x440] sm:$0xff]
      %v603 = vld [vmem:[%s4 + $0x448] sm:$0xff]
      %v604 = vld [vmem:[%s4 + $0x450] sm:$0xff]
      %v605 = vld [vmem:[%s4 + $0x458] sm:$0xff]
      %v606 = vld [vmem:[%s4 + $0x460] sm:$0xff]
      %v607 = vld [vmem:[%s4 + $0x468] sm:$0xff]
      %v608 = vld [vmem:[%s4 + $0x470] sm:$0xff]
      %v609 = vld [vmem:[%s4 + $0x478] sm:$0xff]
      %v610 = vld [vmem:[%s4 + $0x480] sm:$0xff]
      %v611 = vld [vmem:[%s4 + $0x488] sm:$0xff]
      %v612 = vld [vmem:[%s4 + $0x490] sm:$0xff]
      %v613 = vld [vmem:[%s4 + $0x498] sm:$0xff]
      %v614 = vld [vmem:[%s4 + $0x4a0] sm:$0xff]
      %v615 = vld [vmem:[%s4 + $0x4a8] sm:$0xff]
      %v616 = vld [vmem:[%s4 + $0x4b0] sm:$0xff]
      %v617 = vld [vmem:[%s4 + $0x4b8] sm:$0xff]
      %v618 = vld [vmem:[%s4 + $0x4c0] sm:$0xff]
      %v619 = vld [vmem:[%s4 + $0x4c8] sm:$0xff]
      %v620 = vld [vmem:[%s4 + $0x4d0] sm:$0xff]
      %v621 = vld [vmem:[%s4 + $0x4d8] sm:$0xff]
      %v622 = vld [vmem:[%s4 + $0x4e0] sm:$0xff]
      %v623 = vld [vmem:[%s4 + $0x4e8] sm:$0xff]
      %v624 = vld [vmem:[%s4 + $0x4f0] sm:$0xff]
      %v625 = vld [vmem:[%s4 + $0x4f8] sm:$0xff]
      %v626 = vld [vmem:[%s4 + $0x500] sm:$0xff]
      %v627 = vld [vmem:[%s4 + $0x508] sm:$0xff]
      %v628 = vld [vmem:[%s4 + $0x510] sm:$0xff]
      %v629 = vld [vmem:[%s4 + $0x518] sm:$0xff]
      %v630 = vld [vmem:[%s4 + $0x520] sm:$0xff]
      %v631 = vld [vmem:[%s4 + $0x528] sm:$0xff]
      %v632 = vld [vmem:[%s4 + $0x530] sm:$0xff]
      %v633 = vld [vmem:[%s4 + $0x538] sm:$0xff]
      %v634 = vld [vmem:[%s4 + $0x540] sm:$0xff]
      %v635 = vld [vmem:[%s4 + $0x548] sm:$0xff]
      %v636 = vld [vmem:[%s4 + $0x550] sm:$0xff]
      %v637 = vld [vmem:[%s4 + $0x558] sm:$0xff]
      %v638 = vld [vmem:[%s4 + $0x560] sm:$0xff]
      %v639 = vld [vmem:[%s4 + $0x568] sm:$0xff]
      %v640 = vld [vmem:[%s4 + $0x570] sm:$0xff]
      %v641 = vld [vmem:[%s4 + $0x578] sm:$0xff]
      %v642 = vld [vmem:[%s4 + $0x580] sm:$0xff]
      %v643 = vld [vmem:[%s4 + $0x588] sm:$0xff]
      %v644 = vld [vmem:[%s4 + $0x590] sm:$0xff]
      %v645 = vld [vmem:[%s4 + $0x598] sm:$0xff]
      %v646 = vld [vmem:[%s4 + $0x5a0] sm:$0xff]
      %v647 = vld [vmem:[%s4 + $0x5a8] sm:$0xff]
      %v648 = vld [vmem:[%s4 + $0x5b0] sm:$0xff]
      %v649 = vld [vmem:[%s4 + $0x5b8] sm:$0xff]
      %v650 = vld [vmem:[%s4 + $0x5c0] sm:$0xff]
      %v651 = vld [vmem:[%s4 + $0x5c8] sm:$0xff]
      %v652 = vld [vmem:[%s4 + $0x5d0] sm:$0xff]
      %v653 = vld [vmem:[%s4 + $0x5d8] sm:$0xff]
      %v654 = vld [vmem:[%s4 + $0x5e0] sm:$0xff]
      %v655 = vld [vmem:[%s4 + $0x5e8] sm:$0xff]
      %v656 = vld [vmem:[%s4 + $0x5f0] sm:$0xff]
      %v657 = vld [vmem:[%s4 + $0x5f8] sm:$0xff]
      %v658 = vld [vmem:[%s5] sm:$0xff]
      %v659 = vld [vmem:[%s5 + $0x8] sm:$0xff]
      %v660 = vld [vmem:[%s5 + $0x10] sm:$0xff]
      %v664 = vperm.slane %v658, 0
      %v665 = vperm.slane %v658, 1
      %v666 = vperm.slane %v658, 2
      %v667 = vperm.slane %v658, 3
      %v668 = vperm.slane %v658, 4
      %v669 = vperm.slane %v658, 5
      %v670 = vperm.slane %v658, 6
      %v671 = vperm.slane %v658, 7
      %v672 = vperm.slane %v659, 0
      %v673 = vperm.slane %v659, 1
      %v674 = vperm.slane %v659, 2
      %v675 = vperm.slane %v659, 3
      %v676 = vperm.slane %v659, 4
      %v677 = vperm.slane %v659, 5
      %v678 = vperm.slane %v659, 6
      %v679 = vperm.slane %v659, 7
      %v680 = vperm.slane %v660, 0
      %v681 = vperm.slane %v660, 1
      %v682 = vperm.slane %v660, 2
      %v683 = vperm.slane %v660, 3
      %v684 = vperm.slane %v660, 4
      %v685 = vperm.slane %v660, 5
      %v686 = vperm.slane %v660, 6
      %v687 = vperm.slane %v660, 7
      %v904 = vunpack.c.l.b16 %v466
      %v905 = vunpack.c.h.b16 %v466
      %v906 = vunpack.c.l.b16 %v467
      %v907 = vunpack.c.h.b16 %v467
      %v908 = vunpack.c.l.b16 %v468
      %v909 = vunpack.c.h.b16 %v468
      %v910 = vunpack.c.l.b16 %v469
      %v911 = vunpack.c.h.b16 %v469
      %v912 = vunpack.c.l.b16 %v470
      %v913 = vunpack.c.h.b16 %v470
      %v914 = vunpack.c.l.b16 %v471
      %v915 = vunpack.c.h.b16 %v471
      %v916 = vunpack.c.l.b16 %v472
      %v917 = vunpack.c.h.b16 %v472
      %v918 = vunpack.c.l.b16 %v473
      %v919 = vunpack.c.h.b16 %v473
      %v920 = vunpack.c.l.b16 %v474
      %v921 = vunpack.c.h.b16 %v474
      %v922 = vunpack.c.l.b16 %v475
      %v923 = vunpack.c.h.b16 %v475
      %v924 = vunpack.c.l.b16 %v476
      %v925 = vunpack.c.h.b16 %v476
      %v926 = vunpack.c.l.b16 %v477
      %v927 = vunpack.c.h.b16 %v477
      %v928 = vunpack.c.l.b16 %v478
      %v929 = vunpack.c.h.b16 %v478
      %v930 = vunpack.c.l.b16 %v479
      %v931 = vunpack.c.h.b16 %v479
      %v932 = vunpack.c.l.b16 %v480
      %v933 = vunpack.c.h.b16 %v480
      %v934 = vunpack.c.l.b16 %v481
      %v935 = vunpack.c.h.b16 %v481
      %v936 = vunpack.c.l.b16 %v482
      %v937 = vunpack.c.h.b16 %v482
      %v938 = vunpack.c.l.b16 %v483
      %v939 = vunpack.c.h.b16 %v483
      %v940 = vunpack.c.l.b16 %v484
      %v941 = vunpack.c.h.b16 %v484
      %v942 = vunpack.c.l.b16 %v485
      %v943 = vunpack.c.h.b16 %v485
      %v944 = vunpack.c.l.b16 %v486
      %v945 = vunpack.c.h.b16 %v486
      %v946 = vunpack.c.l.b16 %v487
      %v947 = vunpack.c.h.b16 %v487
      %v948 = vunpack.c.l.b16 %v488
      %v949 = vunpack.c.h.b16 %v488
      %v950 = vunpack.c.l.b16 %v489
      %v951 = vunpack.c.h.b16 %v489
      %v952 = vunpack.c.l.b16 %v490
      %v953 = vunpack.c.h.b16 %v490
      %v954 = vunpack.c.l.b16 %v491
      %v955 = vunpack.c.h.b16 %v491
      %v956 = vunpack.c.l.b16 %v492
      %v957 = vunpack.c.h.b16 %v492
      %v958 = vunpack.c.l.b16 %v493
      %v959 = vunpack.c.h.b16 %v493
      %v960 = vunpack.c.l.b16 %v494
      %v961 = vunpack.c.h.b16 %v494
      %v962 = vunpack.c.l.b16 %v495
      %v963 = vunpack.c.h.b16 %v495
      %v964 = vunpack.c.l.b16 %v496
      %v965 = vunpack.c.h.b16 %v496
      %v966 = vunpack.c.l.b16 %v497
      %v967 = vunpack.c.h.b16 %v497
      %v968 = vunpack.c.l.b16 %v498
      %v969 = vunpack.c.h.b16 %v498
      %v970 = vunpack.c.l.b16 %v499
      %v971 = vunpack.c.h.b16 %v499
      %v972 = vunpack.c.l.b16 %v500
      %v973 = vunpack.c.h.b16 %v500
      %v974 = vunpack.c.l.b16 %v501
      %v975 = vunpack.c.h.b16 %v501
      %v976 = vunpack.c.l.b16 %v502
      %v977 = vunpack.c.h.b16 %v502
      %v978 = vunpack.c.l.b16 %v503
      %v979 = vunpack.c.h.b16 %v503
      %v980 = vunpack.c.l.b16 %v504
      %v981 = vunpack.c.h.b16 %v504
      %v982 = vunpack.c.l.b16 %v505
      %v983 = vunpack.c.h.b16 %v505
      %v984 = vunpack.c.l.b16 %v506
      %v985 = vunpack.c.h.b16 %v506
      %v986 = vunpack.c.l.b16 %v507
      %v987 = vunpack.c.h.b16 %v507
      %v988 = vunpack.c.l.b16 %v508
      %v989 = vunpack.c.h.b16 %v508
      %v990 = vunpack.c.l.b16 %v509
      %v991 = vunpack.c.h.b16 %v509
      %v992 = vunpack.c.l.b16 %v510
      %v993 = vunpack.c.h.b16 %v510
      %v994 = vunpack.c.l.b16 %v511
      %v995 = vunpack.c.h.b16 %v511
      %v996 = vunpack.c.l.b16 %v512
      %v997 = vunpack.c.h.b16 %v512
      %v998 = vunpack.c.l.b16 %v513
      %v999 = vunpack.c.h.b16 %v513
      %v1000 = vunpack.c.l.b16 %v514
      %v1001 = vunpack.c.h.b16 %v514
      %v1002 = vunpack.c.l.b16 %v515
      %v1003 = vunpack.c.h.b16 %v515
      %v1004 = vunpack.c.l.b16 %v516
      %v1005 = vunpack.c.h.b16 %v516
      %v1006 = vunpack.c.l.b16 %v517
      %v1007 = vunpack.c.h.b16 %v517
      %v1008 = vunpack.c.l.b16 %v518
      %v1009 = vunpack.c.h.b16 %v518
      %v1010 = vunpack.c.l.b16 %v519
      %v1011 = vunpack.c.h.b16 %v519
      %v1012 = vunpack.c.l.b16 %v520
      %v1013 = vunpack.c.h.b16 %v520
      %v1014 = vunpack.c.l.b16 %v521
      %v1015 = vunpack.c.h.b16 %v521
      %v1016 = vunpack.c.l.b16 %v522
      %v1017 = vunpack.c.h.b16 %v522
      %v1018 = vunpack.c.l.b16 %v523
      %v1019 = vunpack.c.h.b16 %v523
      %v1020 = vunpack.c.l.b16 %v524
      %v1021 = vunpack.c.h.b16 %v524
      %v1022 = vunpack.c.l.b16 %v525
      %v1023 = vunpack.c.h.b16 %v525
      %v1024 = vunpack.c.l.b16 %v526
      %v1025 = vunpack.c.h.b16 %v526
      %v1026 = vunpack.c.l.b16 %v527
      %v1027 = vunpack.c.h.b16 %v527
      %v1028 = vunpack.c.l.b16 %v528
      %v1029 = vunpack.c.h.b16 %v528
      %v1030 = vunpack.c.l.b16 %v529
      %v1031 = vunpack.c.h.b16 %v529
      %v1032 = vunpack.c.l.b16 %v530
      %v1033 = vunpack.c.h.b16 %v530
      %v1034 = vunpack.c.l.b16 %v531
      %v1035 = vunpack.c.h.b16 %v531
      %v1036 = vunpack.c.l.b16 %v532
      %v1037 = vunpack.c.h.b16 %v532
      %v1038 = vunpack.c.l.b16 %v533
      %v1039 = vunpack.c.h.b16 %v533
      %v1040 = vunpack.c.l.b16 %v534
      %v1041 = vunpack.c.h.b16 %v534
      %v1042 = vunpack.c.l.b16 %v535
      %v1043 = vunpack.c.h.b16 %v535
      %v1044 = vunpack.c.l.b16 %v536
      %v1045 = vunpack.c.h.b16 %v536
      %v1046 = vunpack.c.l.b16 %v537
      %v1047 = vunpack.c.h.b16 %v537
      %v1048 = vunpack.c.l.b16 %v538
      %v1049 = vunpack.c.h.b16 %v538
      %v1050 = vunpack.c.l.b16 %v539
      %v1051 = vunpack.c.h.b16 %v539
      %v1052 = vunpack.c.l.b16 %v540
      %v1053 = vunpack.c.h.b16 %v540
      %v1054 = vunpack.c.l.b16 %v541
      %v1055 = vunpack.c.h.b16 %v541
      %v1056 = vunpack.c.l.b16 %v542
      %v1057 = vunpack.c.h.b16 %v542
      %v1058 = vunpack.c.l.b16 %v543
      %v1059 = vunpack.c.h.b16 %v543
      %v1060 = vunpack.c.l.b16 %v544
      %v1061 = vunpack.c.h.b16 %v544
      %v1062 = vunpack.c.l.b16 %v545
      %v1063 = vunpack.c.h.b16 %v545
      %v1064 = vunpack.c.l.b16 %v546
      %v1065 = vunpack.c.h.b16 %v546
      %v1066 = vunpack.c.l.b16 %v547
      %v1067 = vunpack.c.h.b16 %v547
      %v1068 = vunpack.c.l.b16 %v548
      %v1069 = vunpack.c.h.b16 %v548
      %v1070 = vunpack.c.l.b16 %v549
      %v1071 = vunpack.c.h.b16 %v549
      %v1072 = vunpack.c.l.b16 %v550
      %v1073 = vunpack.c.h.b16 %v550
      %v1074 = vunpack.c.l.b16 %v551
      %v1075 = vunpack.c.h.b16 %v551
      %v1076 = vunpack.c.l.b16 %v552
      %v1077 = vunpack.c.h.b16 %v552
      %v1078 = vunpack.c.l.b16 %v553
      %v1079 = vunpack.c.h.b16 %v553
      %v1080 = vunpack.c.l.b16 %v554
      %v1081 = vunpack.c.h.b16 %v554
      %v1082 = vunpack.c.l.b16 %v555
      %v1083 = vunpack.c.h.b16 %v555
      %v1084 = vunpack.c.l.b16 %v556
      %v1085 = vunpack.c.h.b16 %v556
      %v1086 = vunpack.c.l.b16 %v557
      %v1087 = vunpack.c.h.b16 %v557
      %v1088 = vunpack.c.l.b16 %v558
      %v1089 = vunpack.c.h.b16 %v558
      %v1090 = vunpack.c.l.b16 %v559
      %v1091 = vunpack.c.h.b16 %v559
      %v1092 = vunpack.c.l.b16 %v560
      %v1093 = vunpack.c.h.b16 %v560
      %v1094 = vunpack.c.l.b16 %v561
      %v1095 = vunpack.c.h.b16 %v561
      %v1096 = vunpack.c.l.b16 %v562
      %v1097 = vunpack.c.h.b16 %v562
      %v1098 = vunpack.c.l.b16 %v563
      %v1099 = vunpack.c.h.b16 %v563
      %v1100 = vunpack.c.l.b16 %v564
      %v1101 = vunpack.c.h.b16 %v564
      %v1102 = vunpack.c.l.b16 %v565
      %v1103 = vunpack.c.h.b16 %v565
      %v1104 = vunpack.c.l.b16 %v566
      %v1105 = vunpack.c.h.b16 %v566
      %v1106 = vunpack.c.l.b16 %v567
      %v1107 = vunpack.c.h.b16 %v567
      %v1108 = vunpack.c.l.b16 %v568
      %v1109 = vunpack.c.h.b16 %v568
      %v1110 = vunpack.c.l.b16 %v569
      %v1111 = vunpack.c.h.b16 %v569
      %v1112 = vunpack.c.l.b16 %v570
      %v1113 = vunpack.c.h.b16 %v570
      %v1114 = vunpack.c.l.b16 %v571
      %v1115 = vunpack.c.h.b16 %v571
      %v1116 = vunpack.c.l.b16 %v572
      %v1117 = vunpack.c.h.b16 %v572
      %v1118 = vunpack.c.l.b16 %v573
      %v1119 = vunpack.c.h.b16 %v573
      %v1120 = vunpack.c.l.b16 %v574
      %v1121 = vunpack.c.h.b16 %v574
      %v1122 = vunpack.c.l.b16 %v575
      %v1123 = vunpack.c.h.b16 %v575
      %v1124 = vunpack.c.l.b16 %v576
      %v1125 = vunpack.c.h.b16 %v576
      %v1126 = vunpack.c.l.b16 %v577
      %v1127 = vunpack.c.h.b16 %v577
      %v1128 = vunpack.c.l.b16 %v578
      %v1129 = vunpack.c.h.b16 %v578
      %v1130 = vunpack.c.l.b16 %v579
      %v1131 = vunpack.c.h.b16 %v579
      %v1132 = vunpack.c.l.b16 %v580
      %v1133 = vunpack.c.h.b16 %v580
      %v1134 = vunpack.c.l.b16 %v581
      %v1135 = vunpack.c.h.b16 %v581
      %v1136 = vunpack.c.l.b16 %v582
      %v1137 = vunpack.c.h.b16 %v582
      %v1138 = vunpack.c.l.b16 %v583
      %v1139 = vunpack.c.h.b16 %v583
      %v1140 = vunpack.c.l.b16 %v584
      %v1141 = vunpack.c.h.b16 %v584
      %v1142 = vunpack.c.l.b16 %v585
      %v1143 = vunpack.c.h.b16 %v585
      %v1144 = vunpack.c.l.b16 %v586
      %v1145 = vunpack.c.h.b16 %v586
      %v1146 = vunpack.c.l.b16 %v587
      %v1147 = vunpack.c.h.b16 %v587
      %v1148 = vunpack.c.l.b16 %v588
      %v1149 = vunpack.c.h.b16 %v588
      %v1150 = vunpack.c.l.b16 %v589
      %v1151 = vunpack.c.h.b16 %v589
      %v1152 = vunpack.c.l.b16 %v590
      %v1153 = vunpack.c.h.b16 %v590
      %v1154 = vunpack.c.l.b16 %v591
      %v1155 = vunpack.c.h.b16 %v591
      %v1156 = vunpack.c.l.b16 %v592
      %v1157 = vunpack.c.h.b16 %v592
      %v1158 = vunpack.c.l.b16 %v593
      %v1159 = vunpack.c.h.b16 %v593
      %v1160 = vunpack.c.l.b16 %v594
      %v1161 = vunpack.c.h.b16 %v594
      %v1162 = vunpack.c.l.b16 %v595
      %v1163 = vunpack.c.h.b16 %v595
      %v1164 = vunpack.c.l.b16 %v596
      %v1165 = vunpack.c.h.b16 %v596
      %v1166 = vunpack.c.l.b16 %v597
      %v1167 = vunpack.c.h.b16 %v597
      %v1168 = vunpack.c.l.b16 %v598
      %v1169 = vunpack.c.h.b16 %v598
      %v1170 = vunpack.c.l.b16 %v599
      %v1171 = vunpack.c.h.b16 %v599
      %v1172 = vunpack.c.l.b16 %v600
      %v1173 = vunpack.c.h.b16 %v600
      %v1174 = vunpack.c.l.b16 %v601
      %v1175 = vunpack.c.h.b16 %v601
      %v1176 = vunpack.c.l.b16 %v602
      %v1177 = vunpack.c.h.b16 %v602
      %v1178 = vunpack.c.l.b16 %v603
      %v1179 = vunpack.c.h.b16 %v603
      %v1180 = vunpack.c.l.b16 %v604
      %v1181 = vunpack.c.h.b16 %v604
      %v1182 = vunpack.c.l.b16 %v605
      %v1183 = vunpack.c.h.b16 %v605
      %v1184 = vunpack.c.l.b16 %v606
      %v1185 = vunpack.c.h.b16 %v606
      %v1186 = vunpack.c.l.b16 %v607
      %v1187 = vunpack.c.h.b16 %v607
      %v1188 = vunpack.c.l.b16 %v608
      %v1189 = vunpack.c.h.b16 %v608
      %v1190 = vunpack.c.l.b16 %v609
      %v1191 = vunpack.c.h.b16 %v609
      %v1192 = vunpack.c.l.b16 %v610
      %v1193 = vunpack.c.h.b16 %v610
      %v1194 = vunpack.c.l.b16 %v611
      %v1195 = vunpack.c.h.b16 %v611
      %v1196 = vunpack.c.l.b16 %v612
      %v1197 = vunpack.c.h.b16 %v612
      %v1198 = vunpack.c.l.b16 %v613
      %v1199 = vunpack.c.h.b16 %v613
      %v1200 = vunpack.c.l.b16 %v614
      %v1201 = vunpack.c.h.b16 %v614
      %v1202 = vunpack.c.l.b16 %v615
      %v1203 = vunpack.c.h.b16 %v615
      %v1204 = vunpack.c.l.b16 %v616
      %v1205 = vunpack.c.h.b16 %v616
      %v1206 = vunpack.c.l.b16 %v617
      %v1207 = vunpack.c.h.b16 %v617
      %v1208 = vunpack.c.l.b16 %v618
      %v1209 = vunpack.c.h.b16 %v618
      %v1210 = vunpack.c.l.b16 %v619
      %v1211 = vunpack.c.h.b16 %v619
      %v1212 = vunpack.c.l.b16 %v620
      %v1213 = vunpack.c.h.b16 %v620
      %v1214 = vunpack.c.l.b16 %v621
      %v1215 = vunpack.c.h.b16 %v621
      %v1216 = vunpack.c.l.b16 %v622
      %v1217 = vunpack.c.h.b16 %v622
      %v1218 = vunpack.c.l.b16 %v623
      %v1219 = vunpack.c.h.b16 %v623
      %v1220 = vunpack.c.l.b16 %v624
      %v1221 = vunpack.c.h.b16 %v624
      %v1222 = vunpack.c.l.b16 %v625
      %v1223 = vunpack.c.h.b16 %v625
      %v1224 = vunpack.c.l.b16 %v626
      %v1225 = vunpack.c.h.b16 %v626
      %v1226 = vunpack.c.l.b16 %v627
      %v1227 = vunpack.c.h.b16 %v627
      %v1228 = vunpack.c.l.b16 %v628
      %v1229 = vunpack.c.h.b16 %v628
      %v1230 = vunpack.c.l.b16 %v629
      %v1231 = vunpack.c.h.b16 %v629
      %v1232 = vunpack.c.l.b16 %v630
      %v1233 = vunpack.c.h.b16 %v630
      %v1234 = vunpack.c.l.b16 %v631
      %v1235 = vunpack.c.h.b16 %v631
      %v1236 = vunpack.c.l.b16 %v632
      %v1237 = vunpack.c.h.b16 %v632
      %v1238 = vunpack.c.l.b16 %v633
      %v1239 = vunpack.c.h.b16 %v633
      %v1240 = vunpack.c.l.b16 %v634
      %v1241 = vunpack.c.h.b16 %v634
      %v1242 = vunpack.c.l.b16 %v635
      %v1243 = vunpack.c.h.b16 %v635
      %v1244 = vunpack.c.l.b16 %v636
      %v1245 = vunpack.c.h.b16 %v636
      %v1246 = vunpack.c.l.b16 %v637
      %v1247 = vunpack.c.h.b16 %v637
      %v1248 = vunpack.c.l.b16 %v638
      %v1249 = vunpack.c.h.b16 %v638
      %v1250 = vunpack.c.l.b16 %v639
      %v1251 = vunpack.c.h.b16 %v639
      %v1252 = vunpack.c.l.b16 %v640
      %v1253 = vunpack.c.h.b16 %v640
      %v1254 = vunpack.c.l.b16 %v641
      %v1255 = vunpack.c.h.b16 %v641
      %v1256 = vunpack.c.l.b16 %v642
      %v1257 = vunpack.c.h.b16 %v642
      %v1258 = vunpack.c.l.b16 %v643
      %v1259 = vunpack.c.h.b16 %v643
      %v1260 = vunpack.c.l.b16 %v644
      %v1261 = vunpack.c.h.b16 %v644
      %v1262 = vunpack.c.l.b16 %v645
      %v1263 = vunpack.c.h.b16 %v645
      %v1264 = vunpack.c.l.b16 %v646
      %v1265 = vunpack.c.h.b16 %v646
      %v1266 = vunpack.c.l.b16 %v647
      %v1267 = vunpack.c.h.b16 %v647
      %v1268 = vunpack.c.l.b16 %v648
      %v1269 = vunpack.c.h.b16 %v648
      %v1270 = vunpack.c.l.b16 %v649
      %v1271 = vunpack.c.h.b16 %v649
      %v1272 = vunpack.c.l.b16 %v650
      %v1273 = vunpack.c.h.b16 %v650
      %v1274 = vunpack.c.l.b16 %v651
      %v1275 = vunpack.c.h.b16 %v651
      %v1276 = vunpack.c.l.b16 %v652
      %v1277 = vunpack.c.h.b16 %v652
      %v1278 = vunpack.c.l.b16 %v653
      %v1279 = vunpack.c.h.b16 %v653
      %v1280 = vunpack.c.l.b16 %v654
      %v1281 = vunpack.c.h.b16 %v654
      %v1282 = vunpack.c.l.b16 %v655
      %v1283 = vunpack.c.h.b16 %v655
      %v1284 = vunpack.c.l.b16 %v656
      %v1285 = vunpack.c.h.b16 %v656
      %v1286 = vunpack.c.l.b16 %v657
      %v1287 = vunpack.c.h.b16 %v657
      %v1288 = vpack.c.b16 %v928, %v904
      %v1289 = vpack.c.b16 %v929, %v905
      %v1290 = vpack.c.b16 %v930, %v906
      %v1291 = vpack.c.b16 %v931, %v907
      %v1292 = vpack.c.b16 %v932, %v908
      %v1293 = vpack.c.b16 %v933, %v909
      %v1294 = vpack.c.b16 %v934, %v910
      %v1295 = vpack.c.b16 %v935, %v911
      %v1296 = vpack.c.b16 %v936, %v912
      %v1297 = vpack.c.b16 %v937, %v913
      %v1298 = vpack.c.b16 %v938, %v914
      %v1299 = vpack.c.b16 %v939, %v915
      %v1300 = vpack.c.b16 %v940, %v916
      %v1301 = vpack.c.b16 %v941, %v917
      %v1302 = vpack.c.b16 %v942, %v918
      %v1303 = vpack.c.b16 %v943, %v919
      %v1304 = vpack.c.b16 %v944, %v920
      %v1305 = vpack.c.b16 %v945, %v921
      %v1306 = vpack.c.b16 %v946, %v922
      %v1307 = vpack.c.b16 %v947, %v923
      %v1308 = vpack.c.b16 %v948, %v924
      %v1309 = vpack.c.b16 %v949, %v925
      %v1310 = vpack.c.b16 %v950, %v926
      %v1311 = vpack.c.b16 %v951, %v927
      %v1312 = vpack.c.b16 %v976, %v952
      %v1313 = vpack.c.b16 %v977, %v953
      %v1314 = vpack.c.b16 %v978, %v954
      %v1315 = vpack.c.b16 %v979, %v955
      %v1316 = vpack.c.b16 %v980, %v956
      %v1317 = vpack.c.b16 %v981, %v957
      %v1318 = vpack.c.b16 %v982, %v958
      %v1319 = vpack.c.b16 %v983, %v959
      %v1320 = vpack.c.b16 %v984, %v960
      %v1321 = vpack.c.b16 %v985, %v961
      %v1322 = vpack.c.b16 %v986, %v962
      %v1323 = vpack.c.b16 %v987, %v963
      %v1324 = vpack.c.b16 %v988, %v964
      %v1325 = vpack.c.b16 %v989, %v965
      %v1326 = vpack.c.b16 %v990, %v966
      %v1327 = vpack.c.b16 %v991, %v967
      %v1328 = vpack.c.b16 %v992, %v968
      %v1329 = vpack.c.b16 %v993, %v969
      %v1330 = vpack.c.b16 %v994, %v970
      %v1331 = vpack.c.b16 %v995, %v971
      %v1332 = vpack.c.b16 %v996, %v972
      %v1333 = vpack.c.b16 %v997, %v973
      %v1334 = vpack.c.b16 %v998, %v974
      %v1335 = vpack.c.b16 %v999, %v975
      %v1336 = vpack.c.b16 %v1024, %v1000
      %v1337 = vpack.c.b16 %v1025, %v1001
      %v1338 = vpack.c.b16 %v1026, %v1002
      %v1339 = vpack.c.b16 %v1027, %v1003
      %v1340 = vpack.c.b16 %v1028, %v1004
      %v1341 = vpack.c.b16 %v1029, %v1005
      %v1342 = vpack.c.b16 %v1030, %v1006
      %v1343 = vpack.c.b16 %v1031, %v1007
      %v1344 = vpack.c.b16 %v1032, %v1008
      %v1345 = vpack.c.b16 %v1033, %v1009
      %v1346 = vpack.c.b16 %v1034, %v1010
      %v1347 = vpack.c.b16 %v1035, %v1011
      %v1348 = vpack.c.b16 %v1036, %v1012
      %v1349 = vpack.c.b16 %v1037, %v1013
      %v1350 = vpack.c.b16 %v1038, %v1014
      %v1351 = vpack.c.b16 %v1039, %v1015
      %v1352 = vpack.c.b16 %v1040, %v1016
      %v1353 = vpack.c.b16 %v1041, %v1017
      %v1354 = vpack.c.b16 %v1042, %v1018
      %v1355 = vpack.c.b16 %v1043, %v1019
      %v1356 = vpack.c.b16 %v1044, %v1020
      %v1357 = vpack.c.b16 %v1045, %v1021
      %v1358 = vpack.c.b16 %v1046, %v1022
      %v1359 = vpack.c.b16 %v1047, %v1023
      %v1360 = vpack.c.b16 %v1072, %v1048
      %v1361 = vpack.c.b16 %v1073, %v1049
      %v1362 = vpack.c.b16 %v1074, %v1050
      %v1363 = vpack.c.b16 %v1075, %v1051
      %v1364 = vpack.c.b16 %v1076, %v1052
      %v1365 = vpack.c.b16 %v1077, %v1053
      %v1366 = vpack.c.b16 %v1078, %v1054
      %v1367 = vpack.c.b16 %v1079, %v1055
      %v1368 = vpack.c.b16 %v1080, %v1056
      %v1369 = vpack.c.b16 %v1081, %v1057
      %v1370 = vpack.c.b16 %v1082, %v1058
      %v1371 = vpack.c.b16 %v1083, %v1059
      %v1372 = vpack.c.b16 %v1084, %v1060
      %v1373 = vpack.c.b16 %v1085, %v1061
      %v1374 = vpack.c.b16 %v1086, %v1062
      %v1375 = vpack.c.b16 %v1087, %v1063
      %v1376 = vpack.c.b16 %v1088, %v1064
      %v1377 = vpack.c.b16 %v1089, %v1065
      %v1378 = vpack.c.b16 %v1090, %v1066
      %v1379 = vpack.c.b16 %v1091, %v1067
      %v1380 = vpack.c.b16 %v1092, %v1068
      %v1381 = vpack.c.b16 %v1093, %v1069
      %v1382 = vpack.c.b16 %v1094, %v1070
      %v1383 = vpack.c.b16 %v1095, %v1071
      %v1384 = vpack.c.b16 %v1120, %v1096
      %v1385 = vpack.c.b16 %v1121, %v1097
      %v1386 = vpack.c.b16 %v1122, %v1098
      %v1387 = vpack.c.b16 %v1123, %v1099
      %v1388 = vpack.c.b16 %v1124, %v1100
      %v1389 = vpack.c.b16 %v1125, %v1101
      %v1390 = vpack.c.b16 %v1126, %v1102
      %v1391 = vpack.c.b16 %v1127, %v1103
      %v1392 = vpack.c.b16 %v1128, %v1104
      %v1393 = vpack.c.b16 %v1129, %v1105
      %v1394 = vpack.c.b16 %v1130, %v1106
      %v1395 = vpack.c.b16 %v1131, %v1107
      %v1396 = vpack.c.b16 %v1132, %v1108
      %v1397 = vpack.c.b16 %v1133, %v1109
      %v1398 = vpack.c.b16 %v1134, %v1110
      %v1399 = vpack.c.b16 %v1135, %v1111
      %v1400 = vpack.c.b16 %v1136, %v1112
      %v1401 = vpack.c.b16 %v1137, %v1113
      %v1402 = vpack.c.b16 %v1138, %v1114
      %v1403 = vpack.c.b16 %v1139, %v1115
      %v1404 = vpack.c.b16 %v1140, %v1116
      %v1405 = vpack.c.b16 %v1141, %v1117
      %v1406 = vpack.c.b16 %v1142, %v1118
      %v1407 = vpack.c.b16 %v1143, %v1119
      %v1408 = vpack.c.b16 %v1168, %v1144
      %v1409 = vpack.c.b16 %v1169, %v1145
      %v1410 = vpack.c.b16 %v1170, %v1146
      %v1411 = vpack.c.b16 %v1171, %v1147
      %v1412 = vpack.c.b16 %v1172, %v1148
      %v1413 = vpack.c.b16 %v1173, %v1149
      %v1414 = vpack.c.b16 %v1174, %v1150
      %v1415 = vpack.c.b16 %v1175, %v1151
      %v1416 = vpack.c.b16 %v1176, %v1152
      %v1417 = vpack.c.b16 %v1177, %v1153
      %v1418 = vpack.c.b16 %v1178, %v1154
      %v1419 = vpack.c.b16 %v1179, %v1155
      %v1420 = vpack.c.b16 %v1180, %v1156
      %v1421 = vpack.c.b16 %v1181, %v1157
      %v1422 = vpack.c.b16 %v1182, %v1158
      %v1423 = vpack.c.b16 %v1183, %v1159
      %v1424 = vpack.c.b16 %v1184, %v1160
      %v1425 = vpack.c.b16 %v1185, %v1161
      %v1426 = vpack.c.b16 %v1186, %v1162
      %v1427 = vpack.c.b16 %v1187, %v1163
      %v1428 = vpack.c.b16 %v1188, %v1164
      %v1429 = vpack.c.b16 %v1189, %v1165
      %v1430 = vpack.c.b16 %v1190, %v1166
      %v1431 = vpack.c.b16 %v1191, %v1167
      %v1432 = vpack.c.b16 %v1216, %v1192
      %v1433 = vpack.c.b16 %v1217, %v1193
      %v1434 = vpack.c.b16 %v1218, %v1194
      %v1435 = vpack.c.b16 %v1219, %v1195
      %v1436 = vpack.c.b16 %v1220, %v1196
      %v1437 = vpack.c.b16 %v1221, %v1197
      %v1438 = vpack.c.b16 %v1222, %v1198
      %v1439 = vpack.c.b16 %v1223, %v1199
      %v1440 = vpack.c.b16 %v1224, %v1200
      %v1441 = vpack.c.b16 %v1225, %v1201
      %v1442 = vpack.c.b16 %v1226, %v1202
      %v1443 = vpack.c.b16 %v1227, %v1203
      %v1444 = vpack.c.b16 %v1228, %v1204
      %v1445 = vpack.c.b16 %v1229, %v1205
      %v1446 = vpack.c.b16 %v1230, %v1206
      %v1447 = vpack.c.b16 %v1231, %v1207
      %v1448 = vpack.c.b16 %v1232, %v1208
      %v1449 = vpack.c.b16 %v1233, %v1209
      %v1450 = vpack.c.b16 %v1234, %v1210
      %v1451 = vpack.c.b16 %v1235, %v1211
      %v1452 = vpack.c.b16 %v1236, %v1212
      %v1453 = vpack.c.b16 %v1237, %v1213
      %v1454 = vpack.c.b16 %v1238, %v1214
      %v1455 = vpack.c.b16 %v1239, %v1215
      %v1456 = vpack.c.b16 %v1264, %v1240
      %v1457 = vpack.c.b16 %v1265, %v1241
      %v1458 = vpack.c.b16 %v1266, %v1242
      %v1459 = vpack.c.b16 %v1267, %v1243
      %v1460 = vpack.c.b16 %v1268, %v1244
      %v1461 = vpack.c.b16 %v1269, %v1245
      %v1462 = vpack.c.b16 %v1270, %v1246
      %v1463 = vpack.c.b16 %v1271, %v1247
      %v1464 = vpack.c.b16 %v1272, %v1248
      %v1465 = vpack.c.b16 %v1273, %v1249
      %v1466 = vpack.c.b16 %v1274, %v1250
      %v1467 = vpack.c.b16 %v1275, %v1251
      %v1468 = vpack.c.b16 %v1276, %v1252
      %v1469 = vpack.c.b16 %v1277, %v1253
      %v1470 = vpack.c.b16 %v1278, %v1254
      %v1471 = vpack.c.b16 %v1279, %v1255
      %v1472 = vpack.c.b16 %v1280, %v1256
      %v1473 = vpack.c.b16 %v1281, %v1257
      %v1474 = vpack.c.b16 %v1282, %v1258
      %v1475 = vpack.c.b16 %v1283, %v1259
      %v1476 = vpack.c.b16 %v1284, %v1260
      %v1477 = vpack.c.b16 %v1285, %v1261
      %v1478 = vpack.c.b16 %v1286, %v1262
      %v1479 = vpack.c.b16 %v1287, %v1263
      %1672 = vmatpush.bf16.msra.mxu0 %v1456
      %1673 = vmatpush.bf16.msra.mxu0 %v1432
      %1674 = vmatpush.bf16.msra.mxu0 %v1408
      %1675 = vmatpush.bf16.msra.mxu0 %v1384
      %1676 = vmatpush.bf16.msra.mxu0 %v1360
      %1677 = vmatpush.bf16.msra.mxu0 %v1336
      %1678 = vmatpush.bf16.msra.mxu0 %v1312
      %1679 = vmatpush.bf16.msra.mxu0 %v1288
      %1680 = vmatmul.bf16.gmra.mxu0 %v462
      %v1681 = vpop.f32.mrf.mxu0
      %v1682 = vadd.f32 %v664, %v1681
      %v1683 = vpop.f32.mrf.mxu0
      %v1684 = vadd.f32 %v664, %v1683
      %1685 = vmatmul.bf16.gmra.mxu0 %v463
      %v1686 = vpop.f32.mrf.mxu0
      %v1687 = vadd.f32 %v664, %v1686
      %v1688 = vpop.f32.mrf.mxu0
      %v1689 = vadd.f32 %v664, %v1688
      %1690 = vmatmul.bf16.gmra.mxu0 %v464
      %v1691 = vpop.f32.mrf.mxu0
      %v1692 = vadd.f32 %v664, %v1691
      %v1693 = vpop.f32.mrf.mxu0
      %v1694 = vadd.f32 %v664, %v1693
      %1695 = vmatmul.bf16.gmra.mxu0 %v465
      %v1696 = vpop.f32.mrf.mxu0
      %v1697 = vadd.f32 %v664, %v1696
      %v1698 = vpop.f32.mrf.mxu0
      %v1699 = vadd.f32 %v664, %v1698
      %1700 = vdwg.mxu0
      %1701 = vmatpush.bf16.msra.mxu0 %v1457
      %1702 = vmatpush.bf16.msra.mxu0 %v1433
      %1703 = vmatpush.bf16.msra.mxu0 %v1409
      %1704 = vmatpush.bf16.msra.mxu0 %v1385
      %1705 = vmatpush.bf16.msra.mxu0 %v1361
      %1706 = vmatpush.bf16.msra.mxu0 %v1337
      %1707 = vmatpush.bf16.msra.mxu0 %v1313
      %1708 = vmatpush.bf16.msra.mxu0 %v1289
      %1709 = vmatmul.bf16.gmra.mxu0 %v462
      %v1710 = vpop.f32.mrf.mxu0
      %v1711 = vadd.f32 %v665, %v1710
      %v1712 = vpop.f32.mrf.mxu0
      %v1713 = vadd.f32 %v665, %v1712
      %1714 = vmatmul.bf16.gmra.mxu0 %v463
      %v1715 = vpop.f32.mrf.mxu0
      %v1716 = vadd.f32 %v665, %v1715
      %v1717 = vpop.f32.mrf.mxu0
      %v1718 = vadd.f32 %v665, %v1717
      %1719 = vmatmul.bf16.gmra.mxu0 %v464
      %v1720 = vpop.f32.mrf.mxu0
      %v1721 = vadd.f32 %v665, %v1720
      %v1722 = vpop.f32.mrf.mxu0
      %v1723 = vadd.f32 %v665, %v1722
      %1724 = vmatmul.bf16.gmra.mxu0 %v465
      %v1725 = vpop.f32.mrf.mxu0
      %v1726 = vadd.f32 %v665, %v1725
      %v1727 = vpop.f32.mrf.mxu0
      %v1728 = vadd.f32 %v665, %v1727
      %1729 = vdwg.mxu0
      %1730 = vmatpush.bf16.msra.mxu0 %v1458
      %1731 = vmatpush.bf16.msra.mxu0 %v1434
      %1732 = vmatpush.bf16.msra.mxu0 %v1410
      %1733 = vmatpush.bf16.msra.mxu0 %v1386
      %1734 = vmatpush.bf16.msra.mxu0 %v1362
      %1735 = vmatpush.bf16.msra.mxu0 %v1338
      %1736 = vmatpush.bf16.msra.mxu0 %v1314
      %1737 = vmatpush.bf16.msra.mxu0 %v1290
      %1738 = vmatmul.bf16.gmra.mxu0 %v462
      %v1739 = vpop.f32.mrf.mxu0
      %v1740 = vadd.f32 %v666, %v1739
      %v1741 = vpop.f32.mrf.mxu0
      %v1742 = vadd.f32 %v666, %v1741
      %1743 = vmatmul.bf16.gmra.mxu0 %v463
      %v1744 = vpop.f32.mrf.mxu0
      %v1745 = vadd.f32 %v666, %v1744
      %v1746 = vpop.f32.mrf.mxu0
      %v1747 = vadd.f32 %v666, %v1746
      %1748 = vmatmul.bf16.gmra.mxu0 %v464
      %v1749 = vpop.f32.mrf.mxu0
      %v1750 = vadd.f32 %v666, %v1749
      %v1751 = vpop.f32.mrf.mxu0
      %v1752 = vadd.f32 %v666, %v1751
      %1753 = vmatmul.bf16.gmra.mxu0 %v465
      %v1754 = vpop.f32.mrf.mxu0
      %v1755 = vadd.f32 %v666, %v1754
      %v1756 = vpop.f32.mrf.mxu0
      %v1757 = vadd.f32 %v666, %v1756
      %1758 = vdwg.mxu0
      %1759 = vmatpush.bf16.msra.mxu0 %v1459
      %1760 = vmatpush.bf16.msra.mxu0 %v1435
      %1761 = vmatpush.bf16.msra.mxu0 %v1411
      %1762 = vmatpush.bf16.msra.mxu0 %v1387
      %1763 = vmatpush.bf16.msra.mxu0 %v1363
      %1764 = vmatpush.bf16.msra.mxu0 %v1339
      %1765 = vmatpush.bf16.msra.mxu0 %v1315
      %1766 = vmatpush.bf16.msra.mxu0 %v1291
      %1767 = vmatmul.bf16.gmra.mxu0 %v462
      %v1768 = vpop.f32.mrf.mxu0
      %v1769 = vadd.f32 %v667, %v1768
      %v1770 = vpop.f32.mrf.mxu0
      %v1771 = vadd.f32 %v667, %v1770
      %1772 = vmatmul.bf16.gmra.mxu0 %v463
      %v1773 = vpop.f32.mrf.mxu0
      %v1774 = vadd.f32 %v667, %v1773
      %v1775 = vpop.f32.mrf.mxu0
      %v1776 = vadd.f32 %v667, %v1775
      %1777 = vmatmul.bf16.gmra.mxu0 %v464
      %v1778 = vpop.f32.mrf.mxu0
      %v1779 = vadd.f32 %v667, %v1778
      %v1780 = vpop.f32.mrf.mxu0
      %v1781 = vadd.f32 %v667, %v1780
      %1782 = vmatmul.bf16.gmra.mxu0 %v465
      %v1783 = vpop.f32.mrf.mxu0
      %v1784 = vadd.f32 %v667, %v1783
      %v1785 = vpop.f32.mrf.mxu0
      %v1786 = vadd.f32 %v667, %v1785
      %1787 = vdwg.mxu0
      %1788 = vmatpush.bf16.msra.mxu0 %v1460
      %1789 = vmatpush.bf16.msra.mxu0 %v1436
      %1790 = vmatpush.bf16.msra.mxu0 %v1412
      %1791 = vmatpush.bf16.msra.mxu0 %v1388
      %1792 = vmatpush.bf16.msra.mxu0 %v1364
      %1793 = vmatpush.bf16.msra.mxu0 %v1340
      %1794 = vmatpush.bf16.msra.mxu0 %v1316
      %1795 = vmatpush.bf16.msra.mxu0 %v1292
      %1796 = vmatmul.bf16.gmra.mxu0 %v462
      %v1797 = vpop.f32.mrf.mxu0
      %v1798 = vadd.f32 %v668, %v1797
      %v1799 = vpop.f32.mrf.mxu0
      %v1800 = vadd.f32 %v668, %v1799
      %1801 = vmatmul.bf16.gmra.mxu0 %v463
      %v1802 = vpop.f32.mrf.mxu0
      %v1803 = vadd.f32 %v668, %v1802
      %v1804 = vpop.f32.mrf.mxu0
      %v1805 = vadd.f32 %v668, %v1804
      %1806 = vmatmul.bf16.gmra.mxu0 %v464
      %v1807 = vpop.f32.mrf.mxu0
      %v1808 = vadd.f32 %v668, %v1807
      %v1809 = vpop.f32.mrf.mxu0
      %v1810 = vadd.f32 %v668, %v1809
      %1811 = vmatmul.bf16.gmra.mxu0 %v465
      %v1812 = vpop.f32.mrf.mxu0
      %v1813 = vadd.f32 %v668, %v1812
      %v1814 = vpop.f32.mrf.mxu0
      %v1815 = vadd.f32 %v668, %v1814
      %1816 = vdwg.mxu0
      %1817 = vmatpush.bf16.msra.mxu0 %v1461
      %1818 = vmatpush.bf16.msra.mxu0 %v1437
      %1819 = vmatpush.bf16.msra.mxu0 %v1413
      %1820 = vmatpush.bf16.msra.mxu0 %v1389
      %1821 = vmatpush.bf16.msra.mxu0 %v1365
      %1822 = vmatpush.bf16.msra.mxu0 %v1341
      %1823 = vmatpush.bf16.msra.mxu0 %v1317
      %1824 = vmatpush.bf16.msra.mxu0 %v1293
      %1825 = vmatmul.bf16.gmra.mxu0 %v462
      %v1826 = vpop.f32.mrf.mxu0
      %v1827 = vadd.f32 %v669, %v1826
      %v1828 = vpop.f32.mrf.mxu0
      %v1829 = vadd.f32 %v669, %v1828
      %1830 = vmatmul.bf16.gmra.mxu0 %v463
      %v1831 = vpop.f32.mrf.mxu0
      %v1832 = vadd.f32 %v669, %v1831
      %v1833 = vpop.f32.mrf.mxu0
      %v1834 = vadd.f32 %v669, %v1833
      %1835 = vmatmul.bf16.gmra.mxu0 %v464
      %v1836 = vpop.f32.mrf.mxu0
      %v1837 = vadd.f32 %v669, %v1836
      %v1838 = vpop.f32.mrf.mxu0
      %v1839 = vadd.f32 %v669, %v1838
      %1840 = vmatmul.bf16.gmra.mxu0 %v465
      %v1841 = vpop.f32.mrf.mxu0
      %v1842 = vadd.f32 %v669, %v1841
      %v1843 = vpop.f32.mrf.mxu0
      %v1844 = vadd.f32 %v669, %v1843
      %1845 = vdwg.mxu0
      %1846 = vmatpush.bf16.msra.mxu0 %v1462
      %1847 = vmatpush.bf16.msra.mxu0 %v1438
      %1848 = vmatpush.bf16.msra.mxu0 %v1414
      %1849 = vmatpush.bf16.msra.mxu0 %v1390
      %1850 = vmatpush.bf16.msra.mxu0 %v1366
      %1851 = vmatpush.bf16.msra.mxu0 %v1342
      %1852 = vmatpush.bf16.msra.mxu0 %v1318
      %1853 = vmatpush.bf16.msra.mxu0 %v1294
      %1854 = vmatmul.bf16.gmra.mxu0 %v462
      %v1855 = vpop.f32.mrf.mxu0
      %v1856 = vadd.f32 %v670, %v1855
      %v1857 = vpop.f32.mrf.mxu0
      %v1858 = vadd.f32 %v670, %v1857
      %1859 = vmatmul.bf16.gmra.mxu0 %v463
      %v1860 = vpop.f32.mrf.mxu0
      %v1861 = vadd.f32 %v670, %v1860
      %v1862 = vpop.f32.mrf.mxu0
      %v1863 = vadd.f32 %v670, %v1862
      %1864 = vmatmul.bf16.gmra.mxu0 %v464
      %v1865 = vpop.f32.mrf.mxu0
      %v1866 = vadd.f32 %v670, %v1865
      %v1867 = vpop.f32.mrf.mxu0
      %v1868 = vadd.f32 %v670, %v1867
      %1869 = vmatmul.bf16.gmra.mxu0 %v465
      %v1870 = vpop.f32.mrf.mxu0
      %v1871 = vadd.f32 %v670, %v1870
      %v1872 = vpop.f32.mrf.mxu0
      %v1873 = vadd.f32 %v670, %v1872
      %1874 = vdwg.mxu0
      %1875 = vmatpush.bf16.msra.mxu0 %v1463
      %1876 = vmatpush.bf16.msra.mxu0 %v1439
      %1877 = vmatpush.bf16.msra.mxu0 %v1415
      %1878 = vmatpush.bf16.msra.mxu0 %v1391
      %1879 = vmatpush.bf16.msra.mxu0 %v1367
      %1880 = vmatpush.bf16.msra.mxu0 %v1343
      %1881 = vmatpush.bf16.msra.mxu0 %v1319
      %1882 = vmatpush.bf16.msra.mxu0 %v1295
      %1883 = vmatmul.bf16.gmra.mxu0 %v462
      %v1884 = vpop.f32.mrf.mxu0
      %v1885 = vadd.f32 %v671, %v1884
      %v1886 = vpop.f32.mrf.mxu0
      %v1887 = vadd.f32 %v671, %v1886
      %1888 = vmatmul.bf16.gmra.mxu0 %v463
      %v1889 = vpop.f32.mrf.mxu0
      %v1890 = vadd.f32 %v671, %v1889
      %v1891 = vpop.f32.mrf.mxu0
      %v1892 = vadd.f32 %v671, %v1891
      %1893 = vmatmul.bf16.gmra.mxu0 %v464
      %v1894 = vpop.f32.mrf.mxu0
      %v1895 = vadd.f32 %v671, %v1894
      %v1896 = vpop.f32.mrf.mxu0
      %v1897 = vadd.f32 %v671, %v1896
      %1898 = vmatmul.bf16.gmra.mxu0 %v465
      %v1899 = vpop.f32.mrf.mxu0
      %v1900 = vadd.f32 %v671, %v1899
      %v1901 = vpop.f32.mrf.mxu0
      %v1902 = vadd.f32 %v671, %v1901
      %1903 = vdwg.mxu0
      %1904 = vmatpush.bf16.msra.mxu0 %v1464
      %1905 = vmatpush.bf16.msra.mxu0 %v1440
      %1906 = vmatpush.bf16.msra.mxu0 %v1416
      %1907 = vmatpush.bf16.msra.mxu0 %v1392
      %1908 = vmatpush.bf16.msra.mxu0 %v1368
      %1909 = vmatpush.bf16.msra.mxu0 %v1344
      %1910 = vmatpush.bf16.msra.mxu0 %v1320
      %1911 = vmatpush.bf16.msra.mxu0 %v1296
      %1912 = vmatmul.bf16.gmra.mxu0 %v462
      %v1913 = vpop.f32.mrf.mxu0
      %v1914 = vadd.f32 %v672, %v1913
      %v1915 = vpop.f32.mrf.mxu0
      %v1916 = vadd.f32 %v672, %v1915
      %1917 = vmatmul.bf16.gmra.mxu0 %v463
      %v1918 = vpop.f32.mrf.mxu0
      %v1919 = vadd.f32 %v672, %v1918
      %v1920 = vpop.f32.mrf.mxu0
      %v1921 = vadd.f32 %v672, %v1920
      %1922 = vmatmul.bf16.gmra.mxu0 %v464
      %v1923 = vpop.f32.mrf.mxu0
      %v1924 = vadd.f32 %v672, %v1923
      %v1925 = vpop.f32.mrf.mxu0
      %v1926 = vadd.f32 %v672, %v1925
      %1927 = vmatmul.bf16.gmra.mxu0 %v465
      %v1928 = vpop.f32.mrf.mxu0
      %v1929 = vadd.f32 %v672, %v1928
      %v1930 = vpop.f32.mrf.mxu0
      %v1931 = vadd.f32 %v672, %v1930
      %1932 = vdwg.mxu0
      %1933 = vmatpush.bf16.msra.mxu0 %v1465
      %1934 = vmatpush.bf16.msra.mxu0 %v1441
      %1935 = vmatpush.bf16.msra.mxu0 %v1417
      %1936 = vmatpush.bf16.msra.mxu0 %v1393
      %1937 = vmatpush.bf16.msra.mxu0 %v1369
      %1938 = vmatpush.bf16.msra.mxu0 %v1345
      %1939 = vmatpush.bf16.msra.mxu0 %v1321
      %1940 = vmatpush.bf16.msra.mxu0 %v1297
      %1941 = vmatmul.bf16.gmra.mxu0 %v462
      %v1942 = vpop.f32.mrf.mxu0
      %v1943 = vadd.f32 %v673, %v1942
      %v1944 = vpop.f32.mrf.mxu0
      %v1945 = vadd.f32 %v673, %v1944
      %1946 = vmatmul.bf16.gmra.mxu0 %v463
      %v1947 = vpop.f32.mrf.mxu0
      %v1948 = vadd.f32 %v673, %v1947
      %v1949 = vpop.f32.mrf.mxu0
      %v1950 = vadd.f32 %v673, %v1949
      %1951 = vmatmul.bf16.gmra.mxu0 %v464
      %v1952 = vpop.f32.mrf.mxu0
      %v1953 = vadd.f32 %v673, %v1952
      %v1954 = vpop.f32.mrf.mxu0
      %v1955 = vadd.f32 %v673, %v1954
      %1956 = vmatmul.bf16.gmra.mxu0 %v465
      %v1957 = vpop.f32.mrf.mxu0
      %v1958 = vadd.f32 %v673, %v1957
      %v1959 = vpop.f32.mrf.mxu0
      %v1960 = vadd.f32 %v673, %v1959
      %1961 = vdwg.mxu0
      %1962 = vmatpush.bf16.msra.mxu0 %v1466
      %1963 = vmatpush.bf16.msra.mxu0 %v1442
      %1964 = vmatpush.bf16.msra.mxu0 %v1418
      %1965 = vmatpush.bf16.msra.mxu0 %v1394
      %1966 = vmatpush.bf16.msra.mxu0 %v1370
      %1967 = vmatpush.bf16.msra.mxu0 %v1346
      %1968 = vmatpush.bf16.msra.mxu0 %v1322
      %1969 = vmatpush.bf16.msra.mxu0 %v1298
      %1970 = vmatmul.bf16.gmra.mxu0 %v462
      %v1971 = vpop.f32.mrf.mxu0
      %v1972 = vadd.f32 %v674, %v1971
      %v1973 = vpop.f32.mrf.mxu0
      %v1974 = vadd.f32 %v674, %v1973
      %1975 = vmatmul.bf16.gmra.mxu0 %v463
      %v1976 = vpop.f32.mrf.mxu0
      %v1977 = vadd.f32 %v674, %v1976
      %v1978 = vpop.f32.mrf.mxu0
      %v1979 = vadd.f32 %v674, %v1978
      %1980 = vmatmul.bf16.gmra.mxu0 %v464
      %v1981 = vpop.f32.mrf.mxu0
      %v1982 = vadd.f32 %v674, %v1981
      %v1983 = vpop.f32.mrf.mxu0
      %v1984 = vadd.f32 %v674, %v1983
      %1985 = vmatmul.bf16.gmra.mxu0 %v465
      %v1986 = vpop.f32.mrf.mxu0
      %v1987 = vadd.f32 %v674, %v1986
      %v1988 = vpop.f32.mrf.mxu0
      %v1989 = vadd.f32 %v674, %v1988
      %1990 = vdwg.mxu0
      %1991 = vmatpush.bf16.msra.mxu0 %v1467
      %1992 = vmatpush.bf16.msra.mxu0 %v1443
      %1993 = vmatpush.bf16.msra.mxu0 %v1419
      %1994 = vmatpush.bf16.msra.mxu0 %v1395
      %1995 = vmatpush.bf16.msra.mxu0 %v1371
      %1996 = vmatpush.bf16.msra.mxu0 %v1347
      %1997 = vmatpush.bf16.msra.mxu0 %v1323
      %1998 = vmatpush.bf16.msra.mxu0 %v1299
      %1999 = vmatmul.bf16.gmra.mxu0 %v462
      %v2000 = vpop.f32.mrf.mxu0
      %v2001 = vadd.f32 %v675, %v2000
      %v2002 = vpop.f32.mrf.mxu0
      %v2003 = vadd.f32 %v675, %v2002
      %2004 = vmatmul.bf16.gmra.mxu0 %v463
      %v2005 = vpop.f32.mrf.mxu0
      %v2006 = vadd.f32 %v675, %v2005
      %v2007 = vpop.f32.mrf.mxu0
      %v2008 = vadd.f32 %v675, %v2007
      %2009 = vmatmul.bf16.gmra.mxu0 %v464
      %v2010 = vpop.f32.mrf.mxu0
      %v2011 = vadd.f32 %v675, %v2010
      %v2012 = vpop.f32.mrf.mxu0
      %v2013 = vadd.f32 %v675, %v2012
      %2014 = vmatmul.bf16.gmra.mxu0 %v465
      %v2015 = vpop.f32.mrf.mxu0
      %v2016 = vadd.f32 %v675, %v2015
      %v2017 = vpop.f32.mrf.mxu0
      %v2018 = vadd.f32 %v675, %v2017
      %2019 = vdwg.mxu0
      %2020 = vmatpush.bf16.msra.mxu0 %v1468
      %2021 = vmatpush.bf16.msra.mxu0 %v1444
      %2022 = vmatpush.bf16.msra.mxu0 %v1420
      %2023 = vmatpush.bf16.msra.mxu0 %v1396
      %2024 = vmatpush.bf16.msra.mxu0 %v1372
      %2025 = vmatpush.bf16.msra.mxu0 %v1348
      %2026 = vmatpush.bf16.msra.mxu0 %v1324
      %2027 = vmatpush.bf16.msra.mxu0 %v1300
      %2028 = vmatmul.bf16.gmra.mxu0 %v462
      %v2029 = vpop.f32.mrf.mxu0
      %v2030 = vadd.f32 %v676, %v2029
      %v2031 = vpop.f32.mrf.mxu0
      %v2032 = vadd.f32 %v676, %v2031
      %2033 = vmatmul.bf16.gmra.mxu0 %v463
      %v2034 = vpop.f32.mrf.mxu0
      %v2035 = vadd.f32 %v676, %v2034
      %v2036 = vpop.f32.mrf.mxu0
      %v2037 = vadd.f32 %v676, %v2036
      %2038 = vmatmul.bf16.gmra.mxu0 %v464
      %v2039 = vpop.f32.mrf.mxu0
      %v2040 = vadd.f32 %v676, %v2039
      %v2041 = vpop.f32.mrf.mxu0
      %v2042 = vadd.f32 %v676, %v2041
      %2043 = vmatmul.bf16.gmra.mxu0 %v465
      %v2044 = vpop.f32.mrf.mxu0
      %v2045 = vadd.f32 %v676, %v2044
      %v2046 = vpop.f32.mrf.mxu0
      %v2047 = vadd.f32 %v676, %v2046
      %2048 = vdwg.mxu0
      %2049 = vmatpush.bf16.msra.mxu0 %v1469
      %2050 = vmatpush.bf16.msra.mxu0 %v1445
      %2051 = vmatpush.bf16.msra.mxu0 %v1421
      %2052 = vmatpush.bf16.msra.mxu0 %v1397
      %2053 = vmatpush.bf16.msra.mxu0 %v1373
      %2054 = vmatpush.bf16.msra.mxu0 %v1349
      %2055 = vmatpush.bf16.msra.mxu0 %v1325
      %2056 = vmatpush.bf16.msra.mxu0 %v1301
      %2057 = vmatmul.bf16.gmra.mxu0 %v462
      %v2058 = vpop.f32.mrf.mxu0
      %v2059 = vadd.f32 %v677, %v2058
      %v2060 = vpop.f32.mrf.mxu0
      %v2061 = vadd.f32 %v677, %v2060
      %2062 = vmatmul.bf16.gmra.mxu0 %v463
      %v2063 = vpop.f32.mrf.mxu0
      %v2064 = vadd.f32 %v677, %v2063
      %v2065 = vpop.f32.mrf.mxu0
      %v2066 = vadd.f32 %v677, %v2065
      %2067 = vmatmul.bf16.gmra.mxu0 %v464
      %v2068 = vpop.f32.mrf.mxu0
      %v2069 = vadd.f32 %v677, %v2068
      %v2070 = vpop.f32.mrf.mxu0
      %v2071 = vadd.f32 %v677, %v2070
      %2072 = vmatmul.bf16.gmra.mxu0 %v465
      %v2073 = vpop.f32.mrf.mxu0
      %v2074 = vadd.f32 %v677, %v2073
      %v2075 = vpop.f32.mrf.mxu0
      %v2076 = vadd.f32 %v677, %v2075
      %2077 = vdwg.mxu0
      %2078 = vmatpush.bf16.msra.mxu0 %v1470
      %2079 = vmatpush.bf16.msra.mxu0 %v1446
      %2080 = vmatpush.bf16.msra.mxu0 %v1422
      %2081 = vmatpush.bf16.msra.mxu0 %v1398
      %2082 = vmatpush.bf16.msra.mxu0 %v1374
      %2083 = vmatpush.bf16.msra.mxu0 %v1350
      %2084 = vmatpush.bf16.msra.mxu0 %v1326
      %2085 = vmatpush.bf16.msra.mxu0 %v1302
      %2086 = vmatmul.bf16.gmra.mxu0 %v462
      %v2087 = vpop.f32.mrf.mxu0
      %v2088 = vadd.f32 %v678, %v2087
      %v2089 = vpop.f32.mrf.mxu0
      %v2090 = vadd.f32 %v678, %v2089
      %2091 = vmatmul.bf16.gmra.mxu0 %v463
      %v2092 = vpop.f32.mrf.mxu0
      %v2093 = vadd.f32 %v678, %v2092
      %v2094 = vpop.f32.mrf.mxu0
      %v2095 = vadd.f32 %v678, %v2094
      %2096 = vmatmul.bf16.gmra.mxu0 %v464
      %v2097 = vpop.f32.mrf.mxu0
      %v2098 = vadd.f32 %v678, %v2097
      %v2099 = vpop.f32.mrf.mxu0
      %v2100 = vadd.f32 %v678, %v2099
      %2101 = vmatmul.bf16.gmra.mxu0 %v465
      %v2102 = vpop.f32.mrf.mxu0
      %v2103 = vadd.f32 %v678, %v2102
      %v2104 = vpop.f32.mrf.mxu0
      %v2105 = vadd.f32 %v678, %v2104
      %2106 = vdwg.mxu0
      %2107 = vmatpush.bf16.msra.mxu0 %v1471
      %2108 = vmatpush.bf16.msra.mxu0 %v1447
      %2109 = vmatpush.bf16.msra.mxu0 %v1423
      %2110 = vmatpush.bf16.msra.mxu0 %v1399
      %2111 = vmatpush.bf16.msra.mxu0 %v1375
      %2112 = vmatpush.bf16.msra.mxu0 %v1351
      %2113 = vmatpush.bf16.msra.mxu0 %v1327
      %2114 = vmatpush.bf16.msra.mxu0 %v1303
      %2115 = vmatmul.bf16.gmra.mxu0 %v462
      %v2116 = vpop.f32.mrf.mxu0
      %v2117 = vadd.f32 %v679, %v2116
      %v2118 = vpop.f32.mrf.mxu0
      %v2119 = vadd.f32 %v679, %v2118
      %2120 = vmatmul.bf16.gmra.mxu0 %v463
      %v2121 = vpop.f32.mrf.mxu0
      %v2122 = vadd.f32 %v679, %v2121
      %v2123 = vpop.f32.mrf.mxu0
      %v2124 = vadd.f32 %v679, %v2123
      %2125 = vmatmul.bf16.gmra.mxu0 %v464
      %v2126 = vpop.f32.mrf.mxu0
      %v2127 = vadd.f32 %v679, %v2126
      %v2128 = vpop.f32.mrf.mxu0
      %v2129 = vadd.f32 %v679, %v2128
      %2130 = vmatmul.bf16.gmra.mxu0 %v465
      %v2131 = vpop.f32.mrf.mxu0
      %v2132 = vadd.f32 %v679, %v2131
      %v2133 = vpop.f32.mrf.mxu0
      %v2134 = vadd.f32 %v679, %v2133
      %2135 = vdwg.mxu0
      %2136 = vmatpush.bf16.msra.mxu0 %v1472
      %2137 = vmatpush.bf16.msra.mxu0 %v1448
      %2138 = vmatpush.bf16.msra.mxu0 %v1424
      %2139 = vmatpush.bf16.msra.mxu0 %v1400
      %2140 = vmatpush.bf16.msra.mxu0 %v1376
      %2141 = vmatpush.bf16.msra.mxu0 %v1352
      %2142 = vmatpush.bf16.msra.mxu0 %v1328
      %2143 = vmatpush.bf16.msra.mxu0 %v1304
      %2144 = vmatmul.bf16.gmra.mxu0 %v462
      %v2145 = vpop.f32.mrf.mxu0
      %v2146 = vadd.f32 %v680, %v2145
      %v2147 = vpop.f32.mrf.mxu0
      %v2148 = vadd.f32 %v680, %v2147
      %2149 = vmatmul.bf16.gmra.mxu0 %v463
      %v2150 = vpop.f32.mrf.mxu0
      %v2151 = vadd.f32 %v680, %v2150
      %v2152 = vpop.f32.mrf.mxu0
      %v2153 = vadd.f32 %v680, %v2152
      %2154 = vmatmul.bf16.gmra.mxu0 %v464
      %v2155 = vpop.f32.mrf.mxu0
      %v2156 = vadd.f32 %v680, %v2155
      %v2157 = vpop.f32.mrf.mxu0
      %v2158 = vadd.f32 %v680, %v2157
      %2159 = vmatmul.bf16.gmra.mxu0 %v465
      %v2160 = vpop.f32.mrf.mxu0
      %v2161 = vadd.f32 %v680, %v2160
      %v2162 = vpop.f32.mrf.mxu0
      %v2163 = vadd.f32 %v680, %v2162
      %2164 = vdwg.mxu0
      %2165 = vmatpush.bf16.msra.mxu0 %v1473
      %2166 = vmatpush.bf16.msra.mxu0 %v1449
      %2167 = vmatpush.bf16.msra.mxu0 %v1425
      %2168 = vmatpush.bf16.msra.mxu0 %v1401
      %2169 = vmatpush.bf16.msra.mxu0 %v1377
      %2170 = vmatpush.bf16.msra.mxu0 %v1353
      %2171 = vmatpush.bf16.msra.mxu0 %v1329
      %2172 = vmatpush.bf16.msra.mxu0 %v1305
      %2173 = vmatmul.bf16.gmra.mxu0 %v462
      %v2174 = vpop.f32.mrf.mxu0
      %v2175 = vadd.f32 %v681, %v2174
      %v2176 = vpop.f32.mrf.mxu0
      %v2177 = vadd.f32 %v681, %v2176
      %2178 = vmatmul.bf16.gmra.mxu0 %v463
      %v2179 = vpop.f32.mrf.mxu0
      %v2180 = vadd.f32 %v681, %v2179
      %v2181 = vpop.f32.mrf.mxu0
      %v2182 = vadd.f32 %v681, %v2181
      %2183 = vmatmul.bf16.gmra.mxu0 %v464
      %v2184 = vpop.f32.mrf.mxu0
      %v2185 = vadd.f32 %v681, %v2184
      %v2186 = vpop.f32.mrf.mxu0
      %v2187 = vadd.f32 %v681, %v2186
      %2188 = vmatmul.bf16.gmra.mxu0 %v465
      %v2189 = vpop.f32.mrf.mxu0
      %v2190 = vadd.f32 %v681, %v2189
      %v2191 = vpop.f32.mrf.mxu0
      %v2192 = vadd.f32 %v681, %v2191
      %2193 = vdwg.mxu0
      %2194 = vmatpush.bf16.msra.mxu0 %v1474
      %2195 = vmatpush.bf16.msra.mxu0 %v1450
      %2196 = vmatpush.bf16.msra.mxu0 %v1426
      %2197 = vmatpush.bf16.msra.mxu0 %v1402
      %2198 = vmatpush.bf16.msra.mxu0 %v1378
      %2199 = vmatpush.bf16.msra.mxu0 %v1354
      %2200 = vmatpush.bf16.msra.mxu0 %v1330
      %2201 = vmatpush.bf16.msra.mxu0 %v1306
      %2202 = vmatmul.bf16.gmra.mxu0 %v462
      %v2203 = vpop.f32.mrf.mxu0
      %v2204 = vadd.f32 %v682, %v2203
      %v2205 = vpop.f32.mrf.mxu0
      %v2206 = vadd.f32 %v682, %v2205
      %2207 = vmatmul.bf16.gmra.mxu0 %v463
      %v2208 = vpop.f32.mrf.mxu0
      %v2209 = vadd.f32 %v682, %v2208
      %v2210 = vpop.f32.mrf.mxu0
      %v2211 = vadd.f32 %v682, %v2210
      %2212 = vmatmul.bf16.gmra.mxu0 %v464
      %v2213 = vpop.f32.mrf.mxu0
      %v2214 = vadd.f32 %v682, %v2213
      %v2215 = vpop.f32.mrf.mxu0
      %v2216 = vadd.f32 %v682, %v2215
      %2217 = vmatmul.bf16.gmra.mxu0 %v465
      %v2218 = vpop.f32.mrf.mxu0
      %v2219 = vadd.f32 %v682, %v2218
      %v2220 = vpop.f32.mrf.mxu0
      %v2221 = vadd.f32 %v682, %v2220
      %2222 = vdwg.mxu0
      %2223 = vmatpush.bf16.msra.mxu0 %v1475
      %2224 = vmatpush.bf16.msra.mxu0 %v1451
      %2225 = vmatpush.bf16.msra.mxu0 %v1427
      %2226 = vmatpush.bf16.msra.mxu0 %v1403
      %2227 = vmatpush.bf16.msra.mxu0 %v1379
      %2228 = vmatpush.bf16.msra.mxu0 %v1355
      %2229 = vmatpush.bf16.msra.mxu0 %v1331
      %2230 = vmatpush.bf16.msra.mxu0 %v1307
      %2231 = vmatmul.bf16.gmra.mxu0 %v462
      %v2232 = vpop.f32.mrf.mxu0
      %v2233 = vadd.f32 %v683, %v2232
      %v2234 = vpop.f32.mrf.mxu0
      %v2235 = vadd.f32 %v683, %v2234
      %2236 = vmatmul.bf16.gmra.mxu0 %v463
      %v2237 = vpop.f32.mrf.mxu0
      %v2238 = vadd.f32 %v683, %v2237
      %v2239 = vpop.f32.mrf.mxu0
      %v2240 = vadd.f32 %v683, %v2239
      %2241 = vmatmul.bf16.gmra.mxu0 %v464
      %v2242 = vpop.f32.mrf.mxu0
      %v2243 = vadd.f32 %v683, %v2242
      %v2244 = vpop.f32.mrf.mxu0
      %v2245 = vadd.f32 %v683, %v2244
      %2246 = vmatmul.bf16.gmra.mxu0 %v465
      %v2247 = vpop.f32.mrf.mxu0
      %v2248 = vadd.f32 %v683, %v2247
      %v2249 = vpop.f32.mrf.mxu0
      %v2250 = vadd.f32 %v683, %v2249
      %2251 = vdwg.mxu0
      %2252 = vmatpush.bf16.msra.mxu0 %v1476
      %2253 = vmatpush.bf16.msra.mxu0 %v1452
      %2254 = vmatpush.bf16.msra.mxu0 %v1428
      %2255 = vmatpush.bf16.msra.mxu0 %v1404
      %2256 = vmatpush.bf16.msra.mxu0 %v1380
      %2257 = vmatpush.bf16.msra.mxu0 %v1356
      %2258 = vmatpush.bf16.msra.mxu0 %v1332
      %2259 = vmatpush.bf16.msra.mxu0 %v1308
      %2260 = vmatmul.bf16.gmra.mxu0 %v462
      %v2261 = vpop.f32.mrf.mxu0
      %v2262 = vadd.f32 %v684, %v2261
      %v2263 = vpop.f32.mrf.mxu0
      %v2264 = vadd.f32 %v684, %v2263
      %2265 = vmatmul.bf16.gmra.mxu0 %v463
      %v2266 = vpop.f32.mrf.mxu0
      %v2267 = vadd.f32 %v684, %v2266
      %v2268 = vpop.f32.mrf.mxu0
      %v2269 = vadd.f32 %v684, %v2268
      %2270 = vmatmul.bf16.gmra.mxu0 %v464
      %v2271 = vpop.f32.mrf.mxu0
      %v2272 = vadd.f32 %v684, %v2271
      %v2273 = vpop.f32.mrf.mxu0
      %v2274 = vadd.f32 %v684, %v2273
      %2275 = vmatmul.bf16.gmra.mxu0 %v465
      %v2276 = vpop.f32.mrf.mxu0
      %v2277 = vadd.f32 %v684, %v2276
      %v2278 = vpop.f32.mrf.mxu0
      %v2279 = vadd.f32 %v684, %v2278
      %2280 = vdwg.mxu0
      %2281 = vmatpush.bf16.msra.mxu0 %v1477
      %2282 = vmatpush.bf16.msra.mxu0 %v1453
      %2283 = vmatpush.bf16.msra.mxu0 %v1429
      %2284 = vmatpush.bf16.msra.mxu0 %v1405
      %2285 = vmatpush.bf16.msra.mxu0 %v1381
      %2286 = vmatpush.bf16.msra.mxu0 %v1357
      %2287 = vmatpush.bf16.msra.mxu0 %v1333
      %2288 = vmatpush.bf16.msra.mxu0 %v1309
      %2289 = vmatmul.bf16.gmra.mxu0 %v462
      %v2290 = vpop.f32.mrf.mxu0
      %v2291 = vadd.f32 %v685, %v2290
      %v2292 = vpop.f32.mrf.mxu0
      %v2293 = vadd.f32 %v685, %v2292
      %2294 = vmatmul.bf16.gmra.mxu0 %v463
      %v2295 = vpop.f32.mrf.mxu0
      %v2296 = vadd.f32 %v685, %v2295
      %v2297 = vpop.f32.mrf.mxu0
      %v2298 = vadd.f32 %v685, %v2297
      %2299 = vmatmul.bf16.gmra.mxu0 %v464
      %v2300 = vpop.f32.mrf.mxu0
      %v2301 = vadd.f32 %v685, %v2300
      %v2302 = vpop.f32.mrf.mxu0
      %v2303 = vadd.f32 %v685, %v2302
      %2304 = vmatmul.bf16.gmra.mxu0 %v465
      %v2305 = vpop.f32.mrf.mxu0
      %v2306 = vadd.f32 %v685, %v2305
      %v2307 = vpop.f32.mrf.mxu0
      %v2308 = vadd.f32 %v685, %v2307
      %2309 = vdwg.mxu0
      %2310 = vmatpush.bf16.msra.mxu0 %v1478
      %2311 = vmatpush.bf16.msra.mxu0 %v1454
      %2312 = vmatpush.bf16.msra.mxu0 %v1430
      %2313 = vmatpush.bf16.msra.mxu0 %v1406
      %2314 = vmatpush.bf16.msra.mxu0 %v1382
      %2315 = vmatpush.bf16.msra.mxu0 %v1358
      %2316 = vmatpush.bf16.msra.mxu0 %v1334
      %2317 = vmatpush.bf16.msra.mxu0 %v1310
      %2318 = vmatmul.bf16.gmra.mxu0 %v462
      %v2319 = vpop.f32.mrf.mxu0
      %v2320 = vadd.f32 %v686, %v2319
      %v2321 = vpop.f32.mrf.mxu0
      %v2322 = vadd.f32 %v686, %v2321
      %2323 = vmatmul.bf16.gmra.mxu0 %v463
      %v2324 = vpop.f32.mrf.mxu0
      %v2325 = vadd.f32 %v686, %v2324
      %v2326 = vpop.f32.mrf.mxu0
      %v2327 = vadd.f32 %v686, %v2326
      %2328 = vmatmul.bf16.gmra.mxu0 %v464
      %v2329 = vpop.f32.mrf.mxu0
      %v2330 = vadd.f32 %v686, %v2329
      %v2331 = vpop.f32.mrf.mxu0
      %v2332 = vadd.f32 %v686, %v2331
      %2333 = vmatmul.bf16.gmra.mxu0 %v465
      %v2334 = vpop.f32.mrf.mxu0
      %v2335 = vadd.f32 %v686, %v2334
      %v2336 = vpop.f32.mrf.mxu0
      %v2337 = vadd.f32 %v686, %v2336
      %2338 = vdwg.mxu0
      %2339 = vmatpush.bf16.msra.mxu0 %v1479
      %2340 = vmatpush.bf16.msra.mxu0 %v1455
      %2341 = vmatpush.bf16.msra.mxu0 %v1431
      %2342 = vmatpush.bf16.msra.mxu0 %v1407
      %2343 = vmatpush.bf16.msra.mxu0 %v1383
      %2344 = vmatpush.bf16.msra.mxu0 %v1359
      %2345 = vmatpush.bf16.msra.mxu0 %v1335
      %2346 = vmatpush.bf16.msra.mxu0 %v1311
      %2347 = vmatmul.bf16.gmra.mxu0 %v462
      %v2348 = vpop.f32.mrf.mxu0
      %v2349 = vadd.f32 %v687, %v2348
      %v2350 = vpop.f32.mrf.mxu0
      %v2351 = vadd.f32 %v687, %v2350
      %2352 = vmatmul.bf16.gmra.mxu0 %v463
      %v2353 = vpop.f32.mrf.mxu0
      %v2354 = vadd.f32 %v687, %v2353
      %v2355 = vpop.f32.mrf.mxu0
      %v2356 = vadd.f32 %v687, %v2355
      %2357 = vmatmul.bf16.gmra.mxu0 %v464
      %v2358 = vpop.f32.mrf.mxu0
      %v2359 = vadd.f32 %v687, %v2358
      %v2360 = vpop.f32.mrf.mxu0
      %v2361 = vadd.f32 %v687, %v2360
      %2362 = vmatmul.bf16.gmra.mxu0 %v465
      %v2363 = vpop.f32.mrf.mxu0
      %v2364 = vadd.f32 %v687, %v2363
      %v2365 = vpop.f32.mrf.mxu0
      %v2366 = vadd.f32 %v687, %v2365
      %2367 = vdwg.mxu0
      %v2368 = vmul.f32 %v1682, 0.5
      %v2369 = vmul.f32 %v1684, 0.5
      %v2370 = vmul.f32 %v1687, 0.5
      %v2371 = vmul.f32 %v1689, 0.5
      %v2372 = vmul.f32 %v1692, 0.5
      %v2373 = vmul.f32 %v1694, 0.5
      %v2374 = vmul.f32 %v1697, 0.5
      %v2375 = vmul.f32 %v1699, 0.5
      %v2376 = vpack.c.bf16 %v2369, %v2368
      %v2377 = vpack.c.bf16 %v2371, %v2370
      %v2378 = vpack.c.bf16 %v2373, %v2372
      %v2379 = vpack.c.bf16 %v2375, %v2374
      %v2380 = vpack.c.bf16 %v1914, %v1914
      %v2381 = vpack.c.bf16 %v1916, %v1916
      %v2382 = vpack.c.bf16 %v1919, %v1919
      %v2383 = vpack.c.bf16 %v1921, %v1921
      %v2384 = vpack.c.bf16 %v1924, %v1924
      %v2385 = vpack.c.bf16 %v1926, %v1926
      %v2386 = vpack.c.bf16 %v1929, %v1929
      %v2387 = vpack.c.bf16 %v1931, %v1931
      %v2388 = vpack.c.bf16 %v2146, %v2146
      %v2389 = vpack.c.bf16 %v2148, %v2148
      %v2390 = vpack.c.bf16 %v2151, %v2151
      %v2391 = vpack.c.bf16 %v2153, %v2153
      %v2392 = vpack.c.bf16 %v2156, %v2156
      %v2393 = vpack.c.bf16 %v2158, %v2158
      %v2394 = vpack.c.bf16 %v2161, %v2161
      %v2395 = vpack.c.bf16 %v2163, %v2163
      %v2400 = vunpack.c.l.b16 %v2380
      %v2401 = vunpack.c.l.b16 %v2381
      %v2402 = vunpack.c.l.b16 %v2382
      %v2403 = vunpack.c.l.b16 %v2383
      %v2404 = vpack.c.b16 %v2401, %v2400
      %v2405 = vpack.c.b16 %v2403, %v2402
      %2408 = vmatpush.bf16.xpose.msra.mxu0 0
      %2409 = vmatpush.bf16.xpose.msra.mxu0 0
      %2410 = vmatpush.bf16.xpose.msra.mxu0 0
      %2411 = vmatpush.bf16.xpose.msra.mxu0 0
      %2412 = vmatpush.bf16.xpose.msra.mxu0 0
      %2413 = vmatpush.bf16.xpose.msra.mxu0 0
      %2414 = vmatpush.bf16.xpose.msra.mxu0 %v2405
      %2415 = vmatpush.bf16.xpose.msra.mxu0 %v2404
      %2416 = vmatmul.bf16.gmra.mxu0 %v2376
      %v2417 = vpop.f32.mrf.mxu0
      %v2418 = vadd.f32 0.0, %v2417
      %v2419 = vpop.f32.mrf.mxu0
      %v2420 = vadd.f32 0.0, %v2419
      %2421 = vmatmul.bf16.gmra.mxu0 %v2377
      %v2422 = vpop.f32.mrf.mxu0
      %v2423 = vadd.f32 0.0, %v2422
      %v2424 = vpop.f32.mrf.mxu0
      %v2425 = vadd.f32 0.0, %v2424
      %2426 = vmatmul.bf16.gmra.mxu0 %v2378
      %v2427 = vpop.f32.mrf.mxu0
      %v2428 = vadd.f32 0.0, %v2427
      %v2429 = vpop.f32.mrf.mxu0
      %v2430 = vadd.f32 0.0, %v2429
      %2431 = vmatmul.bf16.gmra.mxu0 %v2379
      %v2432 = vpop.f32.mrf.mxu0
      %v2433 = vadd.f32 0.0, %v2432
      %v2434 = vpop.f32.mrf.mxu0
      %v2435 = vadd.f32 0.0, %v2434
      %2436 = vdwg.mxu0
      %vm2437 = vcmask 261120
      %v2438 = vsel %vm2437, %v2418, -inf
      %2439 = vmax.xlane.f32.xlu0 %v2438
      %v2440 = vpop.xlane.xlu0 %2439
      %v2441 = vsel %vm2437, %v2420, -inf
      %2442 = vmax.xlane.f32.xlu0 %v2441
      %v2443 = vpop.xlane.xlu0 %2442
      %v2444 = vsel %vm2437, %v2423, -inf
      %2445 = vmax.xlane.f32.xlu0 %v2444
      %v2446 = vpop.xlane.xlu0 %2445
      %v2447 = vsel %vm2437, %v2425, -inf
      %2448 = vmax.xlane.f32.xlu0 %v2447
      %v2449 = vpop.xlane.xlu0 %2448
      %v2450 = vsel %vm2437, %v2428, -inf
      %2451 = vmax.xlane.f32.xlu0 %v2450
      %v2452 = vpop.xlane.xlu0 %2451
      %v2453 = vsel %vm2437, %v2430, -inf
      %2454 = vmax.xlane.f32.xlu0 %v2453
      %v2455 = vpop.xlane.xlu0 %2454
      %v2456 = vsel %vm2437, %v2433, -inf
      %2457 = vmax.xlane.f32.xlu0 %v2456
      %v2458 = vpop.xlane.xlu0 %2457
      %v2459 = vsel %vm2437, %v2435, -inf
      %2460 = vmax.xlane.f32.xlu0 %v2459
      %v2461 = vpop.xlane.xlu0 %2460
      %v2462 = vsub.f32 -inf, %v2440
      %v2463 = vsub.f32 -inf, %v2443
      %v2464 = vsub.f32 -inf, %v2446
      %v2465 = vsub.f32 -inf, %v2449
      %v2466 = vsub.f32 -inf, %v2452
      %v2467 = vsub.f32 -inf, %v2455
      %v2468 = vsub.f32 -inf, %v2458
      %v2469 = vsub.f32 -inf, %v2461
      %v2470 = vmul.f32 %v2462, 1.442695
      %v2471 = vpow.pop %v2470
      %v2472 = vmul.f32 %v2463, 1.442695
      %v2473 = vpow.pop %v2472
      %v2474 = vmul.f32 %v2464, 1.442695
      %v2475 = vpow.pop %v2474
      %v2476 = vmul.f32 %v2465, 1.442695
      %v2477 = vpow.pop %v2476
      %v2478 = vmul.f32 %v2466, 1.442695
      %v2479 = vpow.pop %v2478
      %v2480 = vmul.f32 %v2467, 1.442695
      %v2481 = vpow.pop %v2480
      %v2482 = vmul.f32 %v2468, 1.442695
      %v2483 = vpow.pop %v2482
      %v2484 = vmul.f32 %v2469, 1.442695
      %v2485 = vpow.pop %v2484
      %v2486 = vsub.f32 %v2418, %v2440
      %v2487 = vsub.f32 %v2420, %v2443
      %v2488 = vsub.f32 %v2423, %v2446
      %v2489 = vsub.f32 %v2425, %v2449
      %v2490 = vsub.f32 %v2428, %v2452
      %v2491 = vsub.f32 %v2430, %v2455
      %v2492 = vsub.f32 %v2433, %v2458
      %v2493 = vsub.f32 %v2435, %v2461
      %v2494 = vmul.f32 %v2486, 1.442695
      %v2495 = vpow.pop %v2494
      %v2496 = vmul.f32 %v2487, 1.442695
      %v2497 = vpow.pop %v2496
      %v2498 = vmul.f32 %v2488, 1.442695
      %v2499 = vpow.pop %v2498
      %v2500 = vmul.f32 %v2489, 1.442695
      %v2501 = vpow.pop %v2500
      %v2502 = vmul.f32 %v2490, 1.442695
      %v2503 = vpow.pop %v2502
      %v2504 = vmul.f32 %v2491, 1.442695
      %v2505 = vpow.pop %v2504
      %v2506 = vmul.f32 %v2492, 1.442695
      %v2507 = vpow.pop %v2506
      %v2508 = vmul.f32 %v2493, 1.442695
      %v2509 = vpow.pop %v2508
      %v2510 = vmul.f32 %v2471, 0.0
      %v2511 = vmul.f32 %v2473, 0.0
      %v2512 = vmul.f32 %v2475, 0.0
      %v2513 = vmul.f32 %v2477, 0.0
      %v2514 = vmul.f32 %v2479, 0.0
      %v2515 = vmul.f32 %v2481, 0.0
      %v2516 = vmul.f32 %v2483, 0.0
      %v2517 = vmul.f32 %v2485, 0.0
      %v2518 = vsel %vm2437, %v2495, 0.0
      %2519 = vadd.xlane.f32.xlu0 %v2518
      %v2520 = vpop.xlane.xlu0 %2519
      %v2521 = vsel %vm2437, %v2497, 0.0
      %2522 = vadd.xlane.f32.xlu0 %v2521
      %v2523 = vpop.xlane.xlu0 %2522
      %v2524 = vsel %vm2437, %v2499, 0.0
      %2525 = vadd.xlane.f32.xlu0 %v2524
      %v2526 = vpop.xlane.xlu0 %2525
      %v2527 = vsel %vm2437, %v2501, 0.0
      %2528 = vadd.xlane.f32.xlu0 %v2527
      %v2529 = vpop.xlane.xlu0 %2528
      %v2530 = vsel %vm2437, %v2503, 0.0
      %2531 = vadd.xlane.f32.xlu0 %v2530
      %v2532 = vpop.xlane.xlu0 %2531
      %v2533 = vsel %vm2437, %v2505, 0.0
      %2534 = vadd.xlane.f32.xlu0 %v2533
      %v2535 = vpop.xlane.xlu0 %2534
      %v2536 = vsel %vm2437, %v2507, 0.0
      %2537 = vadd.xlane.f32.xlu0 %v2536
      %v2538 = vpop.xlane.xlu0 %2537
      %v2539 = vsel %vm2437, %v2509, 0.0
      %2540 = vadd.xlane.f32.xlu0 %v2539
      %v2541 = vpop.xlane.xlu0 %2540
      %v2542 = vadd.f32 %v2510, %v2520
      %v2543 = vadd.f32 %v2511, %v2523
      %v2544 = vadd.f32 %v2512, %v2526
      %v2545 = vadd.f32 %v2513, %v2529
      %v2546 = vadd.f32 %v2514, %v2532
      %v2547 = vadd.f32 %v2515, %v2535
      %v2548 = vadd.f32 %v2516, %v2538
      %v2549 = vadd.f32 %v2517, %v2541
      %v2550 = vpack.c.bf16 %v2497, %v2495
      %v2551 = vpack.c.bf16 %v2501, %v2499
      %v2552 = vpack.c.bf16 %v2505, %v2503
      %v2553 = vpack.c.bf16 %v2509, %v2507
      %v2558 = vunpack.c.l.b16 %v2388
      %v2559 = vunpack.c.l.b16 %v2389
      %v2560 = vunpack.c.l.b16 %v2390
      %v2561 = vunpack.c.l.b16 %v2391
      %v2562 = vpack.c.b16 %v2559, %v2558
      %v2563 = vpack.c.b16 %v2561, %v2560
      %v2567 = vsel %vm2437, %v2550, 0
      %v2570 = vsel %vm2437, %v2551, 0
      %v2573 = vsel %vm2437, %v2552, 0
      %v2576 = vsel %vm2437, %v2553, 0
      %2578 = vmatpush.bf16.msra.mxu0 0
      %2579 = vmatpush.bf16.msra.mxu0 0
      %2580 = vmatpush.bf16.msra.mxu0 0
      %2581 = vmatpush.bf16.msra.mxu0 0
      %2582 = vmatpush.bf16.msra.mxu0 0
      %2583 = vmatpush.bf16.msra.mxu0 0
      %2584 = vmatpush.bf16.msra.mxu0 %v2563
      %2585 = vmatpush.bf16.msra.mxu0 %v2562
      %2586 = vmatmul.bf16.gmra.mxu0 %v2567
      %v2587 = vpop.f32.mrf.mxu0
      %v2588 = vadd.f32 0.0, %v2587
      %v2589 = vpop.f32.mrf.mxu0
      %v2590 = vadd.f32 0.0, %v2589
      %2591 = vmatmul.bf16.gmra.mxu0 %v2570
      %v2592 = vpop.f32.mrf.mxu0
      %v2593 = vadd.f32 0.0, %v2592
      %v2594 = vpop.f32.mrf.mxu0
      %v2595 = vadd.f32 0.0, %v2594
      %2596 = vmatmul.bf16.gmra.mxu0 %v2573
      %v2597 = vpop.f32.mrf.mxu0
      %v2598 = vadd.f32 0.0, %v2597
      %v2599 = vpop.f32.mrf.mxu0
      %v2600 = vadd.f32 0.0, %v2599
      %2601 = vmatmul.bf16.gmra.mxu0 %v2576
      %v2602 = vpop.f32.mrf.mxu0
      %v2603 = vadd.f32 0.0, %v2602
      %v2604 = vpop.f32.mrf.mxu0
      %v2605 = vadd.f32 0.0, %v2604
      %2606 = vdwg.mxu0
      %v2607 = vadd.f32 %v2510, %v2588
      %v2608 = vadd.f32 %v2511, %v2590
      %v2609 = vadd.f32 %v2512, %v2593
      %v2610 = vadd.f32 %v2513, %v2595
      %v2611 = vadd.f32 %v2514, %v2598
      %v2612 = vadd.f32 %v2515, %v2600
      %v2613 = vadd.f32 %v2516, %v2603
      %v2614 = vadd.f32 %v2517, %v2605
      %v2619 = vunpack.c.l.b16 %v2384
      %v2620 = vunpack.c.l.b16 %v2385
      %v2621 = vunpack.c.l.b16 %v2386
      %v2622 = vunpack.c.l.b16 %v2387
      %v2623 = vpack.c.b16 %v2620, %v2619
      %v2624 = vpack.c.b16 %v2622, %v2621
      %2627 = vmatpush.bf16.xpose.msra.mxu0 0
      %2628 = vmatpush.bf16.xpose.msra.mxu0 0
      %2629 = vmatpush.bf16.xpose.msra.mxu0 0
      %2630 = vmatpush.bf16.xpose.msra.mxu0 0
      %2631 = vmatpush.bf16.xpose.msra.mxu0 0
      %2632 = vmatpush.bf16.xpose.msra.mxu0 0
      %2633 = vmatpush.bf16.xpose.msra.mxu0 %v2624
      %2634 = vmatpush.bf16.xpose.msra.mxu0 %v2623
      %2635 = vmatmul.bf16.gmra.mxu0 %v2376
      %v2636 = vpop.f32.mrf.mxu0
      %v2637 = vadd.f32 0.0, %v2636
      %v2638 = vpop.f32.mrf.mxu0
      %v2639 = vadd.f32 0.0, %v2638
      %2640 = vmatmul.bf16.gmra.mxu0 %v2377
      %v2641 = vpop.f32.mrf.mxu0
      %v2642 = vadd.f32 0.0, %v2641
      %v2643 = vpop.f32.mrf.mxu0
      %v2644 = vadd.f32 0.0, %v2643
      %2645 = vmatmul.bf16.gmra.mxu0 %v2378
      %v2646 = vpop.f32.mrf.mxu0
      %v2647 = vadd.f32 0.0, %v2646
      %v2648 = vpop.f32.mrf.mxu0
      %v2649 = vadd.f32 0.0, %v2648
      %2650 = vmatmul.bf16.gmra.mxu0 %v2379
      %v2651 = vpop.f32.mrf.mxu0
      %v2652 = vadd.f32 0.0, %v2651
      %v2653 = vpop.f32.mrf.mxu0
      %v2654 = vadd.f32 0.0, %v2653
      %2655 = vdwg.mxu0
      %v2656 = vsel %vm2437, %v2637, -inf
      %2657 = vmax.xlane.f32.xlu0 %v2656
      %v2658 = vpop.xlane.xlu0 %2657
      %v2659 = vsel %vm2437, %v2639, -inf
      %2660 = vmax.xlane.f32.xlu0 %v2659
      %v2661 = vpop.xlane.xlu0 %2660
      %v2662 = vsel %vm2437, %v2642, -inf
      %2663 = vmax.xlane.f32.xlu0 %v2662
      %v2664 = vpop.xlane.xlu0 %2663
      %v2665 = vsel %vm2437, %v2644, -inf
      %2666 = vmax.xlane.f32.xlu0 %v2665
      %v2667 = vpop.xlane.xlu0 %2666
      %v2668 = vsel %vm2437, %v2647, -inf
      %2669 = vmax.xlane.f32.xlu0 %v2668
      %v2670 = vpop.xlane.xlu0 %2669
      %v2671 = vsel %vm2437, %v2649, -inf
      %2672 = vmax.xlane.f32.xlu0 %v2671
      %v2673 = vpop.xlane.xlu0 %2672
      %v2674 = vsel %vm2437, %v2652, -inf
      %2675 = vmax.xlane.f32.xlu0 %v2674
      %v2676 = vpop.xlane.xlu0 %2675
      %v2677 = vsel %vm2437, %v2654, -inf
      %2678 = vmax.xlane.f32.xlu0 %v2677
      %v2679 = vpop.xlane.xlu0 %2678
      %v2680 = vmax.f32 %v2440, %v2658
      %v2681 = vmax.f32 %v2443, %v2661
      %v2682 = vmax.f32 %v2446, %v2664
      %v2683 = vmax.f32 %v2449, %v2667
      %v2684 = vmax.f32 %v2452, %v2670
      %v2685 = vmax.f32 %v2455, %v2673
      %v2686 = vmax.f32 %v2458, %v2676
      %v2687 = vmax.f32 %v2461, %v2679
      %v2688 = vsub.f32 %v2440, %v2680
      %v2689 = vsub.f32 %v2443, %v2681
      %v2690 = vsub.f32 %v2446, %v2682
      %v2691 = vsub.f32 %v2449, %v2683
      %v2692 = vsub.f32 %v2452, %v2684
      %v2693 = vsub.f32 %v2455, %v2685
      %v2694 = vsub.f32 %v2458, %v2686
      %v2695 = vsub.f32 %v2461, %v2687
      %v2696 = vmul.f32 %v2688, 1.442695
      %v2697 = vpow.pop %v2696
      %v2698 = vmul.f32 %v2689, 1.442695
      %v2699 = vpow.pop %v2698
      %v2700 = vmul.f32 %v2690, 1.442695
      %v2701 = vpow.pop %v2700
      %v2702 = vmul.f32 %v2691, 1.442695
      %v2703 = vpow.pop %v2702
      %v2704 = vmul.f32 %v2692, 1.442695
      %v2705 = vpow.pop %v2704
      %v2706 = vmul.f32 %v2693, 1.442695
      %v2707 = vpow.pop %v2706
      %v2708 = vmul.f32 %v2694, 1.442695
      %v2709 = vpow.pop %v2708
      %v2710 = vmul.f32 %v2695, 1.442695
      %v2711 = vpow.pop %v2710
      %v2712 = vsub.f32 %v2637, %v2680
      %v2713 = vsub.f32 %v2639, %v2681
      %v2714 = vsub.f32 %v2642, %v2682
      %v2715 = vsub.f32 %v2644, %v2683
      %v2716 = vsub.f32 %v2647, %v2684
      %v2717 = vsub.f32 %v2649, %v2685
      %v2718 = vsub.f32 %v2652, %v2686
      %v2719 = vsub.f32 %v2654, %v2687
      %v2720 = vmul.f32 %v2712, 1.442695
      %v2721 = vpow.pop %v2720
      %v2722 = vmul.f32 %v2713, 1.442695
      %v2723 = vpow.pop %v2722
      %v2724 = vmul.f32 %v2714, 1.442695
      %v2725 = vpow.pop %v2724
      %v2726 = vmul.f32 %v2715, 1.442695
      %v2727 = vpow.pop %v2726
      %v2728 = vmul.f32 %v2716, 1.442695
      %v2729 = vpow.pop %v2728
      %v2730 = vmul.f32 %v2717, 1.442695
      %v2731 = vpow.pop %v2730
      %v2732 = vmul.f32 %v2718, 1.442695
      %v2733 = vpow.pop %v2732
      %v2734 = vmul.f32 %v2719, 1.442695
      %v2735 = vpow.pop %v2734
      %v2736 = vmul.f32 %v2697, %v2542
      %v2737 = vmul.f32 %v2699, %v2543
      %v2738 = vmul.f32 %v2701, %v2544
      %v2739 = vmul.f32 %v2703, %v2545
      %v2740 = vmul.f32 %v2705, %v2546
      %v2741 = vmul.f32 %v2707, %v2547
      %v2742 = vmul.f32 %v2709, %v2548
      %v2743 = vmul.f32 %v2711, %v2549
      %v2744 = vsel %vm2437, %v2721, 0.0
      %2745 = vadd.xlane.f32.xlu0 %v2744
      %v2746 = vpop.xlane.xlu0 %2745
      %v2747 = vsel %vm2437, %v2723, 0.0
      %2748 = vadd.xlane.f32.xlu0 %v2747
      %v2749 = vpop.xlane.xlu0 %2748
      %v2750 = vsel %vm2437, %v2725, 0.0
      %2751 = vadd.xlane.f32.xlu0 %v2750
      %v2752 = vpop.xlane.xlu0 %2751
      %v2753 = vsel %vm2437, %v2727, 0.0
      %2754 = vadd.xlane.f32.xlu0 %v2753
      %v2755 = vpop.xlane.xlu0 %2754
      %v2756 = vsel %vm2437, %v2729, 0.0
      %2757 = vadd.xlane.f32.xlu0 %v2756
      %v2758 = vpop.xlane.xlu0 %2757
      %v2759 = vsel %vm2437, %v2731, 0.0
      %2760 = vadd.xlane.f32.xlu0 %v2759
      %v2761 = vpop.xlane.xlu0 %2760
      %v2762 = vsel %vm2437, %v2733, 0.0
      %2763 = vadd.xlane.f32.xlu0 %v2762
      %v2764 = vpop.xlane.xlu0 %2763
      %v2765 = vsel %vm2437, %v2735, 0.0
      %2766 = vadd.xlane.f32.xlu0 %v2765
      %v2767 = vpop.xlane.xlu0 %2766
      %v2768 = vadd.f32 %v2736, %v2746
      %v2769 = vadd.f32 %v2737, %v2749
      %v2770 = vadd.f32 %v2738, %v2752
      %v2771 = vadd.f32 %v2739, %v2755
      %v2772 = vadd.f32 %v2740, %v2758
      %v2773 = vadd.f32 %v2741, %v2761
      %v2774 = vadd.f32 %v2742, %v2764
      %v2775 = vadd.f32 %v2743, %v2767
      %v2776 = vmul.f32 %v2697, %v2607
      %v2777 = vmul.f32 %v2699, %v2608
      %v2778 = vmul.f32 %v2701, %v2609
      %v2779 = vmul.f32 %v2703, %v2610
      %v2780 = vmul.f32 %v2705, %v2611
      %v2781 = vmul.f32 %v2707, %v2612
      %v2782 = vmul.f32 %v2709, %v2613
      %v2783 = vmul.f32 %v2711, %v2614
      %v2784 = vpack.c.bf16 %v2723, %v2721
      %v2785 = vpack.c.bf16 %v2727, %v2725
      %v2786 = vpack.c.bf16 %v2731, %v2729
      %v2787 = vpack.c.bf16 %v2735, %v2733
      %v2792 = vunpack.c.l.b16 %v2392
      %v2793 = vunpack.c.l.b16 %v2393
      %v2794 = vunpack.c.l.b16 %v2394
      %v2795 = vunpack.c.l.b16 %v2395
      %v2796 = vpack.c.b16 %v2793, %v2792
      %v2797 = vpack.c.b16 %v2795, %v2794
      %v2801 = vsel %vm2437, %v2784, 0
      %v2804 = vsel %vm2437, %v2785, 0
      %v2807 = vsel %vm2437, %v2786, 0
      %v2810 = vsel %vm2437, %v2787, 0
      %2812 = vmatpush.bf16.msra.mxu0 0
      %2813 = vmatpush.bf16.msra.mxu0 0
      %2814 = vmatpush.bf16.msra.mxu0 0
      %2815 = vmatpush.bf16.msra.mxu0 0
      %2816 = vmatpush.bf16.msra.mxu0 0
      %2817 = vmatpush.bf16.msra.mxu0 0
      %2818 = vmatpush.bf16.msra.mxu0 %v2797
      %2819 = vmatpush.bf16.msra.mxu0 %v2796
      %2820 = vmatmul.bf16.gmra.mxu0 %v2801
      %v2821 = vpop.f32.mrf.mxu0
      %v2822 = vadd.f32 0.0, %v2821
      %v2823 = vpop.f32.mrf.mxu0
      %v2824 = vadd.f32 0.0, %v2823
      %2825 = vmatmul.bf16.gmra.mxu0 %v2804
      %v2826 = vpop.f32.mrf.mxu0
      %v2827 = vadd.f32 0.0, %v2826
      %v2828 = vpop.f32.mrf.mxu0
      %v2829 = vadd.f32 0.0, %v2828
      %2830 = vmatmul.bf16.gmra.mxu0 %v2807
      %v2831 = vpop.f32.mrf.mxu0
      %v2832 = vadd.f32 0.0, %v2831
      %v2833 = vpop.f32.mrf.mxu0
      %v2834 = vadd.f32 0.0, %v2833
      %2835 = vmatmul.bf16.gmra.mxu0 %v2810
      %v2836 = vpop.f32.mrf.mxu0
      %v2837 = vadd.f32 0.0, %v2836
      %v2838 = vpop.f32.mrf.mxu0
      %v2839 = vadd.f32 0.0, %v2838
      %2840 = vdwg.mxu0
      %v2841 = vadd.f32 %v2776, %v2822
      %v2842 = vadd.f32 %v2777, %v2824
      %v2843 = vadd.f32 %v2778, %v2827
      %v2844 = vadd.f32 %v2779, %v2829
      %v2845 = vadd.f32 %v2780, %v2832
      %v2846 = vadd.f32 %v2781, %v2834
      %v2847 = vadd.f32 %v2782, %v2837
      %v2848 = vadd.f32 %v2783, %v2839
      %v2849 = vrcp.pop %v2768
      %v2850 = vrcp.pop %v2769
      %v2851 = vrcp.pop %v2770
      %v2852 = vrcp.pop %v2771
      %v2853 = vrcp.pop %v2772
      %v2854 = vrcp.pop %v2773
      %v2855 = vrcp.pop %v2774
      %v2856 = vrcp.pop %v2775
      %v2857 = vmul.f32 %v2841, %v2849
      %v2858 = vmul.f32 %v2842, %v2850
      %v2859 = vmul.f32 %v2843, %v2851
      %v2860 = vmul.f32 %v2844, %v2852
      %v2861 = vmul.f32 %v2845, %v2853
      %v2862 = vmul.f32 %v2846, %v2854
      %v2863 = vmul.f32 %v2847, %v2855
      %v2864 = vmul.f32 %v2848, %v2856
      %v2865 = vmul.f32 %v1711, 0.5
      %v2866 = vmul.f32 %v1713, 0.5
      %v2867 = vmul.f32 %v1716, 0.5
      %v2868 = vmul.f32 %v1718, 0.5
      %v2869 = vmul.f32 %v1721, 0.5
      %v2870 = vmul.f32 %v1723, 0.5
      %v2871 = vmul.f32 %v1726, 0.5
      %v2872 = vmul.f32 %v1728, 0.5
      %v2873 = vpack.c.bf16 %v2866, %v2865
      %v2874 = vpack.c.bf16 %v2868, %v2867
      %v2875 = vpack.c.bf16 %v2870, %v2869
      %v2876 = vpack.c.bf16 %v2872, %v2871
      %v2877 = vpack.c.bf16 %v1943, %v1943
      %v2878 = vpack.c.bf16 %v1945, %v1945
      %v2879 = vpack.c.bf16 %v1948, %v1948
      %v2880 = vpack.c.bf16 %v1950, %v1950
      %v2881 = vpack.c.bf16 %v1953, %v1953
      %v2882 = vpack.c.bf16 %v1955, %v1955
      %v2883 = vpack.c.bf16 %v1958, %v1958
      %v2884 = vpack.c.bf16 %v1960, %v1960
      %v2885 = vpack.c.bf16 %v2175, %v2175
      %v2886 = vpack.c.bf16 %v2177, %v2177
      %v2887 = vpack.c.bf16 %v2180, %v2180
      %v2888 = vpack.c.bf16 %v2182, %v2182
      %v2889 = vpack.c.bf16 %v2185, %v2185
      %v2890 = vpack.c.bf16 %v2187, %v2187
      %v2891 = vpack.c.bf16 %v2190, %v2190
      %v2892 = vpack.c.bf16 %v2192, %v2192
      %v2897 = vunpack.c.l.b16 %v2877
      %v2898 = vunpack.c.l.b16 %v2878
      %v2899 = vunpack.c.l.b16 %v2879
      %v2900 = vunpack.c.l.b16 %v2880
      %v2901 = vpack.c.b16 %v2898, %v2897
      %v2902 = vpack.c.b16 %v2900, %v2899
      %2905 = vmatpush.bf16.xpose.msra.mxu0 0
      %2906 = vmatpush.bf16.xpose.msra.mxu0 0
      %2907 = vmatpush.bf16.xpose.msra.mxu0 0
      %2908 = vmatpush.bf16.xpose.msra.mxu0 0
      %2909 = vmatpush.bf16.xpose.msra.mxu0 0
      %2910 = vmatpush.bf16.xpose.msra.mxu0 0
      %2911 = vmatpush.bf16.xpose.msra.mxu0 %v2902
      %2912 = vmatpush.bf16.xpose.msra.mxu0 %v2901
      %2913 = vmatmul.bf16.gmra.mxu0 %v2873
      %v2914 = vpop.f32.mrf.mxu0
      %v2915 = vadd.f32 0.0, %v2914
      %v2916 = vpop.f32.mrf.mxu0
      %v2917 = vadd.f32 0.0, %v2916
      %2918 = vmatmul.bf16.gmra.mxu0 %v2874
      %v2919 = vpop.f32.mrf.mxu0
      %v2920 = vadd.f32 0.0, %v2919
      %v2921 = vpop.f32.mrf.mxu0
      %v2922 = vadd.f32 0.0, %v2921
      %2923 = vmatmul.bf16.gmra.mxu0 %v2875
      %v2924 = vpop.f32.mrf.mxu0
      %v2925 = vadd.f32 0.0, %v2924
      %v2926 = vpop.f32.mrf.mxu0
      %v2927 = vadd.f32 0.0, %v2926
      %2928 = vmatmul.bf16.gmra.mxu0 %v2876
      %v2929 = vpop.f32.mrf.mxu0
      %v2930 = vadd.f32 0.0, %v2929
      %v2931 = vpop.f32.mrf.mxu0
      %v2932 = vadd.f32 0.0, %v2931
      %2933 = vdwg.mxu0
      %v2934 = vsel %vm2437, %v2915, -inf
      %2935 = vmax.xlane.f32.xlu0 %v2934
      %v2936 = vpop.xlane.xlu0 %2935
      %v2937 = vsel %vm2437, %v2917, -inf
      %2938 = vmax.xlane.f32.xlu0 %v2937
      %v2939 = vpop.xlane.xlu0 %2938
      %v2940 = vsel %vm2437, %v2920, -inf
      %2941 = vmax.xlane.f32.xlu0 %v2940
      %v2942 = vpop.xlane.xlu0 %2941
      %v2943 = vsel %vm2437, %v2922, -inf
      %2944 = vmax.xlane.f32.xlu0 %v2943
      %v2945 = vpop.xlane.xlu0 %2944
      %v2946 = vsel %vm2437, %v2925, -inf
      %2947 = vmax.xlane.f32.xlu0 %v2946
      %v2948 = vpop.xlane.xlu0 %2947
      %v2949 = vsel %vm2437, %v2927, -inf
      %2950 = vmax.xlane.f32.xlu0 %v2949
      %v2951 = vpop.xlane.xlu0 %2950
      %v2952 = vsel %vm2437, %v2930, -inf
      %2953 = vmax.xlane.f32.xlu0 %v2952
      %v2954 = vpop.xlane.xlu0 %2953
      %v2955 = vsel %vm2437, %v2932, -inf
      %2956 = vmax.xlane.f32.xlu0 %v2955
      %v2957 = vpop.xlane.xlu0 %2956
      %v2958 = vsub.f32 -inf, %v2936
      %v2959 = vsub.f32 -inf, %v2939
      %v2960 = vsub.f32 -inf, %v2942
      %v2961 = vsub.f32 -inf, %v2945
      %v2962 = vsub.f32 -inf, %v2948
      %v2963 = vsub.f32 -inf, %v2951
      %v2964 = vsub.f32 -inf, %v2954
      %v2965 = vsub.f32 -inf, %v2957
      %v2966 = vmul.f32 %v2958, 1.442695
      %v2967 = vpow.pop %v2966
      %v2968 = vmul.f32 %v2959, 1.442695
      %v2969 = vpow.pop %v2968
      %v2970 = vmul.f32 %v2960, 1.442695
      %v2971 = vpow.pop %v2970
      %v2972 = vmul.f32 %v2961, 1.442695
      %v2973 = vpow.pop %v2972
      %v2974 = vmul.f32 %v2962, 1.442695
      %v2975 = vpow.pop %v2974
      %v2976 = vmul.f32 %v2963, 1.442695
      %v2977 = vpow.pop %v2976
      %v2978 = vmul.f32 %v2964, 1.442695
      %v2979 = vpow.pop %v2978
      %v2980 = vmul.f32 %v2965, 1.442695
      %v2981 = vpow.pop %v2980
      %v2982 = vsub.f32 %v2915, %v2936
      %v2983 = vsub.f32 %v2917, %v2939
      %v2984 = vsub.f32 %v2920, %v2942
      %v2985 = vsub.f32 %v2922, %v2945
      %v2986 = vsub.f32 %v2925, %v2948
      %v2987 = vsub.f32 %v2927, %v2951
      %v2988 = vsub.f32 %v2930, %v2954
      %v2989 = vsub.f32 %v2932, %v2957
      %v2990 = vmul.f32 %v2982, 1.442695
      %v2991 = vpow.pop %v2990
      %v2992 = vmul.f32 %v2983, 1.442695
      %v2993 = vpow.pop %v2992
      %v2994 = vmul.f32 %v2984, 1.442695
      %v2995 = vpow.pop %v2994
      %v2996 = vmul.f32 %v2985, 1.442695
      %v2997 = vpow.pop %v2996
      %v2998 = vmul.f32 %v2986, 1.442695
      %v2999 = vpow.pop %v2998
      %v3000 = vmul.f32 %v2987, 1.442695
      %v3001 = vpow.pop %v3000
      %v3002 = vmul.f32 %v2988, 1.442695
      %v3003 = vpow.pop %v3002
      %v3004 = vmul.f32 %v2989, 1.442695
      %v3005 = vpow.pop %v3004
      %v3006 = vmul.f32 %v2967, 0.0
      %v3007 = vmul.f32 %v2969, 0.0
      %v3008 = vmul.f32 %v2971, 0.0
      %v3009 = vmul.f32 %v2973, 0.0
      %v3010 = vmul.f32 %v2975, 0.0
      %v3011 = vmul.f32 %v2977, 0.0
      %v3012 = vmul.f32 %v2979, 0.0
      %v3013 = vmul.f32 %v2981, 0.0
      %v3014 = vsel %vm2437, %v2991, 0.0
      %3015 = vadd.xlane.f32.xlu0 %v3014
      %v3016 = vpop.xlane.xlu0 %3015
      %v3017 = vsel %vm2437, %v2993, 0.0
      %3018 = vadd.xlane.f32.xlu0 %v3017
      %v3019 = vpop.xlane.xlu0 %3018
      %v3020 = vsel %vm2437, %v2995, 0.0
      %3021 = vadd.xlane.f32.xlu0 %v3020
      %v3022 = vpop.xlane.xlu0 %3021
      %v3023 = vsel %vm2437, %v2997, 0.0
      %3024 = vadd.xlane.f32.xlu0 %v3023
      %v3025 = vpop.xlane.xlu0 %3024
      %v3026 = vsel %vm2437, %v2999, 0.0
      %3027 = vadd.xlane.f32.xlu0 %v3026
      %v3028 = vpop.xlane.xlu0 %3027
      %v3029 = vsel %vm2437, %v3001, 0.0
      %3030 = vadd.xlane.f32.xlu0 %v3029
      %v3031 = vpop.xlane.xlu0 %3030
      %v3032 = vsel %vm2437, %v3003, 0.0
      %3033 = vadd.xlane.f32.xlu0 %v3032
      %v3034 = vpop.xlane.xlu0 %3033
      %v3035 = vsel %vm2437, %v3005, 0.0
      %3036 = vadd.xlane.f32.xlu0 %v3035
      %v3037 = vpop.xlane.xlu0 %3036
      %v3038 = vadd.f32 %v3006, %v3016
      %v3039 = vadd.f32 %v3007, %v3019
      %v3040 = vadd.f32 %v3008, %v3022
      %v3041 = vadd.f32 %v3009, %v3025
      %v3042 = vadd.f32 %v3010, %v3028
      %v3043 = vadd.f32 %v3011, %v3031
      %v3044 = vadd.f32 %v3012, %v3034
      %v3045 = vadd.f32 %v3013, %v3037
      %v3046 = vpack.c.bf16 %v2993, %v2991
      %v3047 = vpack.c.bf16 %v2997, %v2995
      %v3048 = vpack.c.bf16 %v3001, %v2999
      %v3049 = vpack.c.bf16 %v3005, %v3003
      %v3054 = vunpack.c.l.b16 %v2885
      %v3055 = vunpack.c.l.b16 %v2886
      %v3056 = vunpack.c.l.b16 %v2887
      %v3057 = vunpack.c.l.b16 %v2888
      %v3058 = vpack.c.b16 %v3055, %v3054
      %v3059 = vpack.c.b16 %v3057, %v3056
      %v3063 = vsel %vm2437, %v3046, 0
      %v3066 = vsel %vm2437, %v3047, 0
      %v3069 = vsel %vm2437, %v3048, 0
      %v3072 = vsel %vm2437, %v3049, 0
      %3074 = vmatpush.bf16.msra.mxu0 0
      %3075 = vmatpush.bf16.msra.mxu0 0
      %3076 = vmatpush.bf16.msra.mxu0 0
      %3077 = vmatpush.bf16.msra.mxu0 0
      %3078 = vmatpush.bf16.msra.mxu0 0
      %3079 = vmatpush.bf16.msra.mxu0 0
      %3080 = vmatpush.bf16.msra.mxu0 %v3059
      %3081 = vmatpush.bf16.msra.mxu0 %v3058
      %3082 = vmatmul.bf16.gmra.mxu0 %v3063
      %v3083 = vpop.f32.mrf.mxu0
      %v3084 = vadd.f32 0.0, %v3083
      %v3085 = vpop.f32.mrf.mxu0
      %v3086 = vadd.f32 0.0, %v3085
      %3087 = vmatmul.bf16.gmra.mxu0 %v3066
      %v3088 = vpop.f32.mrf.mxu0
      %v3089 = vadd.f32 0.0, %v3088
      %v3090 = vpop.f32.mrf.mxu0
      %v3091 = vadd.f32 0.0, %v3090
      %3092 = vmatmul.bf16.gmra.mxu0 %v3069
      %v3093 = vpop.f32.mrf.mxu0
      %v3094 = vadd.f32 0.0, %v3093
      %v3095 = vpop.f32.mrf.mxu0
      %v3096 = vadd.f32 0.0, %v3095
      %3097 = vmatmul.bf16.gmra.mxu0 %v3072
      %v3098 = vpop.f32.mrf.mxu0
      %v3099 = vadd.f32 0.0, %v3098
      %v3100 = vpop.f32.mrf.mxu0
      %v3101 = vadd.f32 0.0, %v3100
      %3102 = vdwg.mxu0
      %v3103 = vadd.f32 %v3006, %v3084
      %v3104 = vadd.f32 %v3007, %v3086
      %v3105 = vadd.f32 %v3008, %v3089
      %v3106 = vadd.f32 %v3009, %v3091
      %v3107 = vadd.f32 %v3010, %v3094
      %v3108 = vadd.f32 %v3011, %v3096
      %v3109 = vadd.f32 %v3012, %v3099
      %v3110 = vadd.f32 %v3013, %v3101
      %v3115 = vunpack.c.l.b16 %v2881
      %v3116 = vunpack.c.l.b16 %v2882
      %v3117 = vunpack.c.l.b16 %v2883
      %v3118 = vunpack.c.l.b16 %v2884
      %v3119 = vpack.c.b16 %v3116, %v3115
      %v3120 = vpack.c.b16 %v3118, %v3117
      %3123 = vmatpush.bf16.xpose.msra.mxu0 0
      %3124 = vmatpush.bf16.xpose.msra.mxu0 0
      %3125 = vmatpush.bf16.xpose.msra.mxu0 0
      %3126 = vmatpush.bf16.xpose.msra.mxu0 0
      %3127 = vmatpush.bf16.xpose.msra.mxu0 0
      %3128 = vmatpush.bf16.xpose.msra.mxu0 0
      %3129 = vmatpush.bf16.xpose.msra.mxu0 %v3120
      %3130 = vmatpush.bf16.xpose.msra.mxu0 %v3119
      %3131 = vmatmul.bf16.gmra.mxu0 %v2873
      %v3132 = vpop.f32.mrf.mxu0
      %v3133 = vadd.f32 0.0, %v3132
      %v3134 = vpop.f32.mrf.mxu0
      %v3135 = vadd.f32 0.0, %v3134
      %3136 = vmatmul.bf16.gmra.mxu0 %v2874
      %v3137 = vpop.f32.mrf.mxu0
      %v3138 = vadd.f32 0.0, %v3137
      %v3139 = vpop.f32.mrf.mxu0
      %v3140 = vadd.f32 0.0, %v3139
      %3141 = vmatmul.bf16.gmra.mxu0 %v2875
      %v3142 = vpop.f32.mrf.mxu0
      %v3143 = vadd.f32 0.0, %v3142
      %v3144 = vpop.f32.mrf.mxu0
      %v3145 = vadd.f32 0.0, %v3144
      %3146 = vmatmul.bf16.gmra.mxu0 %v2876
      %v3147 = vpop.f32.mrf.mxu0
      %v3148 = vadd.f32 0.0, %v3147
      %v3149 = vpop.f32.mrf.mxu0
      %v3150 = vadd.f32 0.0, %v3149
      %3151 = vdwg.mxu0
      %v3152 = vsel %vm2437, %v3133, -inf
      %3153 = vmax.xlane.f32.xlu0 %v3152
      %v3154 = vpop.xlane.xlu0 %3153
      %v3155 = vsel %vm2437, %v3135, -inf
      %3156 = vmax.xlane.f32.xlu0 %v3155
      %v3157 = vpop.xlane.xlu0 %3156
      %v3158 = vsel %vm2437, %v3138, -inf
      %3159 = vmax.xlane.f32.xlu0 %v3158
      %v3160 = vpop.xlane.xlu0 %3159
      %v3161 = vsel %vm2437, %v3140, -inf
      %3162 = vmax.xlane.f32.xlu0 %v3161
      %v3163 = vpop.xlane.xlu0 %3162
      %v3164 = vsel %vm2437, %v3143, -inf
      %3165 = vmax.xlane.f32.xlu0 %v3164
      %v3166 = vpop.xlane.xlu0 %3165
      %v3167 = vsel %vm2437, %v3145, -inf
      %3168 = vmax.xlane.f32.xlu0 %v3167
      %v3169 = vpop.xlane.xlu0 %3168
      %v3170 = vsel %vm2437, %v3148, -inf
      %3171 = vmax.xlane.f32.xlu0 %v3170
      %v3172 = vpop.xlane.xlu0 %3171
      %v3173 = vsel %vm2437, %v3150, -inf
      %3174 = vmax.xlane.f32.xlu0 %v3173
      %v3175 = vpop.xlane.xlu0 %3174
      %v3176 = vmax.f32 %v2936, %v3154
      %v3177 = vmax.f32 %v2939, %v3157
      %v3178 = vmax.f32 %v2942, %v3160
      %v3179 = vmax.f32 %v2945, %v3163
      %v3180 = vmax.f32 %v2948, %v3166
      %v3181 = vmax.f32 %v2951, %v3169
      %v3182 = vmax.f32 %v2954, %v3172
      %v3183 = vmax.f32 %v2957, %v3175
      %v3184 = vsub.f32 %v2936, %v3176
      %v3185 = vsub.f32 %v2939, %v3177
      %v3186 = vsub.f32 %v2942, %v3178
      %v3187 = vsub.f32 %v2945, %v3179
      %v3188 = vsub.f32 %v2948, %v3180
      %v3189 = vsub.f32 %v2951, %v3181
      %v3190 = vsub.f32 %v2954, %v3182
      %v3191 = vsub.f32 %v2957, %v3183
      %v3192 = vmul.f32 %v3184, 1.442695
      %v3193 = vpow.pop %v3192
      %v3194 = vmul.f32 %v3185, 1.442695
      %v3195 = vpow.pop %v3194
      %v3196 = vmul.f32 %v3186, 1.442695
      %v3197 = vpow.pop %v3196
      %v3198 = vmul.f32 %v3187, 1.442695
      %v3199 = vpow.pop %v3198
      %v3200 = vmul.f32 %v3188, 1.442695
      %v3201 = vpow.pop %v3200
      %v3202 = vmul.f32 %v3189, 1.442695
      %v3203 = vpow.pop %v3202
      %v3204 = vmul.f32 %v3190, 1.442695
      %v3205 = vpow.pop %v3204
      %v3206 = vmul.f32 %v3191, 1.442695
      %v3207 = vpow.pop %v3206
      %v3208 = vsub.f32 %v3133, %v3176
      %v3209 = vsub.f32 %v3135, %v3177
      %v3210 = vsub.f32 %v3138, %v3178
      %v3211 = vsub.f32 %v3140, %v3179
      %v3212 = vsub.f32 %v3143, %v3180
      %v3213 = vsub.f32 %v3145, %v3181
      %v3214 = vsub.f32 %v3148, %v3182
      %v3215 = vsub.f32 %v3150, %v3183
      %v3216 = vmul.f32 %v3208, 1.442695
      %v3217 = vpow.pop %v3216
      %v3218 = vmul.f32 %v3209, 1.442695
      %v3219 = vpow.pop %v3218
      %v3220 = vmul.f32 %v3210, 1.442695
      %v3221 = vpow.pop %v3220
      %v3222 = vmul.f32 %v3211, 1.442695
      %v3223 = vpow.pop %v3222
      %v3224 = vmul.f32 %v3212, 1.442695
      %v3225 = vpow.pop %v3224
      %v3226 = vmul.f32 %v3213, 1.442695
      %v3227 = vpow.pop %v3226
      %v3228 = vmul.f32 %v3214, 1.442695
      %v3229 = vpow.pop %v3228
      %v3230 = vmul.f32 %v3215, 1.442695
      %v3231 = vpow.pop %v3230
      %v3232 = vmul.f32 %v3193, %v3038
      %v3233 = vmul.f32 %v3195, %v3039
      %v3234 = vmul.f32 %v3197, %v3040
      %v3235 = vmul.f32 %v3199, %v3041
      %v3236 = vmul.f32 %v3201, %v3042
      %v3237 = vmul.f32 %v3203, %v3043
      %v3238 = vmul.f32 %v3205, %v3044
      %v3239 = vmul.f32 %v3207, %v3045
      %v3240 = vsel %vm2437, %v3217, 0.0
      %3241 = vadd.xlane.f32.xlu0 %v3240
      %v3242 = vpop.xlane.xlu0 %3241
      %v3243 = vsel %vm2437, %v3219, 0.0
      %3244 = vadd.xlane.f32.xlu0 %v3243
      %v3245 = vpop.xlane.xlu0 %3244
      %v3246 = vsel %vm2437, %v3221, 0.0
      %3247 = vadd.xlane.f32.xlu0 %v3246
      %v3248 = vpop.xlane.xlu0 %3247
      %v3249 = vsel %vm2437, %v3223, 0.0
      %3250 = vadd.xlane.f32.xlu0 %v3249
      %v3251 = vpop.xlane.xlu0 %3250
      %v3252 = vsel %vm2437, %v3225, 0.0
      %3253 = vadd.xlane.f32.xlu0 %v3252
      %v3254 = vpop.xlane.xlu0 %3253
      %v3255 = vsel %vm2437, %v3227, 0.0
      %3256 = vadd.xlane.f32.xlu0 %v3255
      %v3257 = vpop.xlane.xlu0 %3256
      %v3258 = vsel %vm2437, %v3229, 0.0
      %3259 = vadd.xlane.f32.xlu0 %v3258
      %v3260 = vpop.xlane.xlu0 %3259
      %v3261 = vsel %vm2437, %v3231, 0.0
      %3262 = vadd.xlane.f32.xlu0 %v3261
      %v3263 = vpop.xlane.xlu0 %3262
      %v3264 = vadd.f32 %v3232, %v3242
      %v3265 = vadd.f32 %v3233, %v3245
      %v3266 = vadd.f32 %v3234, %v3248
      %v3267 = vadd.f32 %v3235, %v3251
      %v3268 = vadd.f32 %v3236, %v3254
      %v3269 = vadd.f32 %v3237, %v3257
      %v3270 = vadd.f32 %v3238, %v3260
      %v3271 = vadd.f32 %v3239, %v3263
      %v3272 = vmul.f32 %v3193, %v3103
      %v3273 = vmul.f32 %v3195, %v3104
      %v3274 = vmul.f32 %v3197, %v3105
      %v3275 = vmul.f32 %v3199, %v3106
      %v3276 = vmul.f32 %v3201, %v3107
      %v3277 = vmul.f32 %v3203, %v3108
      %v3278 = vmul.f32 %v3205, %v3109
      %v3279 = vmul.f32 %v3207, %v3110
      %v3280 = vpack.c.bf16 %v3219, %v3217
      %v3281 = vpack.c.bf16 %v3223, %v3221
      %v3282 = vpack.c.bf16 %v3227, %v3225
      %v3283 = vpack.c.bf16 %v3231, %v3229
      %v3288 = vunpack.c.l.b16 %v2889
      %v3289 = vunpack.c.l.b16 %v2890
      %v3290 = vunpack.c.l.b16 %v2891
      %v3291 = vunpack.c.l.b16 %v2892
      %v3292 = vpack.c.b16 %v3289, %v3288
      %v3293 = vpack.c.b16 %v3291, %v3290
      %v3297 = vsel %vm2437, %v3280, 0
      %v3300 = vsel %vm2437, %v3281, 0
      %v3303 = vsel %vm2437, %v3282, 0
      %v3306 = vsel %vm2437, %v3283, 0
      %3308 = vmatpush.bf16.msra.mxu0 0
      %3309 = vmatpush.bf16.msra.mxu0 0
      %3310 = vmatpush.bf16.msra.mxu0 0
      %3311 = vmatpush.bf16.msra.mxu0 0
      %3312 = vmatpush.bf16.msra.mxu0 0
      %3313 = vmatpush.bf16.msra.mxu0 0
      %3314 = vmatpush.bf16.msra.mxu0 %v3293
      %3315 = vmatpush.bf16.msra.mxu0 %v3292
      %3316 = vmatmul.bf16.gmra.mxu0 %v3297
      %v3317 = vpop.f32.mrf.mxu0
      %v3318 = vadd.f32 0.0, %v3317
      %v3319 = vpop.f32.mrf.mxu0
      %v3320 = vadd.f32 0.0, %v3319
      %3321 = vmatmul.bf16.gmra.mxu0 %v3300
      %v3322 = vpop.f32.mrf.mxu0
      %v3323 = vadd.f32 0.0, %v3322
      %v3324 = vpop.f32.mrf.mxu0
      %v3325 = vadd.f32 0.0, %v3324
      %3326 = vmatmul.bf16.gmra.mxu0 %v3303
      %v3327 = vpop.f32.mrf.mxu0
      %v3328 = vadd.f32 0.0, %v3327
      %v3329 = vpop.f32.mrf.mxu0
      %v3330 = vadd.f32 0.0, %v3329
      %3331 = vmatmul.bf16.gmra.mxu0 %v3306
      %v3332 = vpop.f32.mrf.mxu0
      %v3333 = vadd.f32 0.0, %v3332
      %v3334 = vpop.f32.mrf.mxu0
      %v3335 = vadd.f32 0.0, %v3334
      %3336 = vdwg.mxu0
      %v3337 = vadd.f32 %v3272, %v3318
      %v3338 = vadd.f32 %v3273, %v3320
      %v3339 = vadd.f32 %v3274, %v3323
      %v3340 = vadd.f32 %v3275, %v3325
      %v3341 = vadd.f32 %v3276, %v3328
      %v3342 = vadd.f32 %v3277, %v3330
      %v3343 = vadd.f32 %v3278, %v3333
      %v3344 = vadd.f32 %v3279, %v3335
      %v3345 = vrcp.pop %v3264
      %v3346 = vrcp.pop %v3265
      %v3347 = vrcp.pop %v3266
      %v3348 = vrcp.pop %v3267
      %v3349 = vrcp.pop %v3268
      %v3350 = vrcp.pop %v3269
      %v3351 = vrcp.pop %v3270
      %v3352 = vrcp.pop %v3271
      %v3353 = vmul.f32 %v3337, %v3345
      %v3354 = vmul.f32 %v3338, %v3346
      %v3355 = vmul.f32 %v3339, %v3347
      %v3356 = vmul.f32 %v3340, %v3348
      %v3357 = vmul.f32 %v3341, %v3349
      %v3358 = vmul.f32 %v3342, %v3350
      %v3359 = vmul.f32 %v3343, %v3351
      %v3360 = vmul.f32 %v3344, %v3352
      %v3361 = vmul.f32 %v1740, 0.5
      %v3362 = vmul.f32 %v1742, 0.5
      %v3363 = vmul.f32 %v1745, 0.5
      %v3364 = vmul.f32 %v1747, 0.5
      %v3365 = vmul.f32 %v1750, 0.5
      %v3366 = vmul.f32 %v1752, 0.5
      %v3367 = vmul.f32 %v1755, 0.5
      %v3368 = vmul.f32 %v1757, 0.5
      %v3369 = vpack.c.bf16 %v3362, %v3361
      %v3370 = vpack.c.bf16 %v3364, %v3363
      %v3371 = vpack.c.bf16 %v3366, %v3365
      %v3372 = vpack.c.bf16 %v3368, %v3367
      %v3373 = vpack.c.bf16 %v1972, %v1972
      %v3374 = vpack.c.bf16 %v1974, %v1974
      %v3375 = vpack.c.bf16 %v1977, %v1977
      %v3376 = vpack.c.bf16 %v1979, %v1979
      %v3377 = vpack.c.bf16 %v1982, %v1982
      %v3378 = vpack.c.bf16 %v1984, %v1984
      %v3379 = vpack.c.bf16 %v1987, %v1987
      %v3380 = vpack.c.bf16 %v1989, %v1989
      %v3381 = vpack.c.bf16 %v2204, %v2204
      %v3382 = vpack.c.bf16 %v2206, %v2206
      %v3383 = vpack.c.bf16 %v2209, %v2209
      %v3384 = vpack.c.bf16 %v2211, %v2211
      %v3385 = vpack.c.bf16 %v2214, %v2214
      %v3386 = vpack.c.bf16 %v2216, %v2216
      %v3387 = vpack.c.bf16 %v2219, %v2219
      %v3388 = vpack.c.bf16 %v2221, %v2221
      %v3393 = vunpack.c.l.b16 %v3373
      %v3394 = vunpack.c.l.b16 %v3374
      %v3395 = vunpack.c.l.b16 %v3375
      %v3396 = vunpack.c.l.b16 %v3376
      %v3397 = vpack.c.b16 %v3394, %v3393
      %v3398 = vpack.c.b16 %v3396, %v3395
      %3401 = vmatpush.bf16.xpose.msra.mxu0 0
      %3402 = vmatpush.bf16.xpose.msra.mxu0 0
      %3403 = vmatpush.bf16.xpose.msra.mxu0 0
      %3404 = vmatpush.bf16.xpose.msra.mxu0 0
      %3405 = vmatpush.bf16.xpose.msra.mxu0 0
      %3406 = vmatpush.bf16.xpose.msra.mxu0 0
      %3407 = vmatpush.bf16.xpose.msra.mxu0 %v3398
      %3408 = vmatpush.bf16.xpose.msra.mxu0 %v3397
      %3409 = vmatmul.bf16.gmra.mxu0 %v3369
      %v3410 = vpop.f32.mrf.mxu0
      %v3411 = vadd.f32 0.0, %v3410
      %v3412 = vpop.f32.mrf.mxu0
      %v3413 = vadd.f32 0.0, %v3412
      %3414 = vmatmul.bf16.gmra.mxu0 %v3370
      %v3415 = vpop.f32.mrf.mxu0
      %v3416 = vadd.f32 0.0, %v3415
      %v3417 = vpop.f32.mrf.mxu0
      %v3418 = vadd.f32 0.0, %v3417
      %3419 = vmatmul.bf16.gmra.mxu0 %v3371
      %v3420 = vpop.f32.mrf.mxu0
      %v3421 = vadd.f32 0.0, %v3420
      %v3422 = vpop.f32.mrf.mxu0
      %v3423 = vadd.f32 0.0, %v3422
      %3424 = vmatmul.bf16.gmra.mxu0 %v3372
      %v3425 = vpop.f32.mrf.mxu0
      %v3426 = vadd.f32 0.0, %v3425
      %v3427 = vpop.f32.mrf.mxu0
      %v3428 = vadd.f32 0.0, %v3427
      %3429 = vdwg.mxu0
      %v3430 = vsel %vm2437, %v3411, -inf
      %3431 = vmax.xlane.f32.xlu0 %v3430
      %v3432 = vpop.xlane.xlu0 %3431
      %v3433 = vsel %vm2437, %v3413, -inf
      %3434 = vmax.xlane.f32.xlu0 %v3433
      %v3435 = vpop.xlane.xlu0 %3434
      %v3436 = vsel %vm2437, %v3416, -inf
      %3437 = vmax.xlane.f32.xlu0 %v3436
      %v3438 = vpop.xlane.xlu0 %3437
      %v3439 = vsel %vm2437, %v3418, -inf
      %3440 = vmax.xlane.f32.xlu0 %v3439
      %v3441 = vpop.xlane.xlu0 %3440
      %v3442 = vsel %vm2437, %v3421, -inf
      %3443 = vmax.xlane.f32.xlu0 %v3442
      %v3444 = vpop.xlane.xlu0 %3443
      %v3445 = vsel %vm2437, %v3423, -inf
      %3446 = vmax.xlane.f32.xlu0 %v3445
      %v3447 = vpop.xlane.xlu0 %3446
      %v3448 = vsel %vm2437, %v3426, -inf
      %3449 = vmax.xlane.f32.xlu0 %v3448
      %v3450 = vpop.xlane.xlu0 %3449
      %v3451 = vsel %vm2437, %v3428, -inf
      %3452 = vmax.xlane.f32.xlu0 %v3451
      %v3453 = vpop.xlane.xlu0 %3452
      %v3454 = vsub.f32 -inf, %v3432
      %v3455 = vsub.f32 -inf, %v3435
      %v3456 = vsub.f32 -inf, %v3438
      %v3457 = vsub.f32 -inf, %v3441
      %v3458 = vsub.f32 -inf, %v3444
      %v3459 = vsub.f32 -inf, %v3447
      %v3460 = vsub.f32 -inf, %v3450
      %v3461 = vsub.f32 -inf, %v3453
      %v3462 = vmul.f32 %v3454, 1.442695
      %v3463 = vpow.pop %v3462
      %v3464 = vmul.f32 %v3455, 1.442695
      %v3465 = vpow.pop %v3464
      %v3466 = vmul.f32 %v3456, 1.442695
      %v3467 = vpow.pop %v3466
      %v3468 = vmul.f32 %v3457, 1.442695
      %v3469 = vpow.pop %v3468
      %v3470 = vmul.f32 %v3458, 1.442695
      %v3471 = vpow.pop %v3470
      %v3472 = vmul.f32 %v3459, 1.442695
      %v3473 = vpow.pop %v3472
      %v3474 = vmul.f32 %v3460, 1.442695
      %v3475 = vpow.pop %v3474
      %v3476 = vmul.f32 %v3461, 1.442695
      %v3477 = vpow.pop %v3476
      %v3478 = vsub.f32 %v3411, %v3432
      %v3479 = vsub.f32 %v3413, %v3435
      %v3480 = vsub.f32 %v3416, %v3438
      %v3481 = vsub.f32 %v3418, %v3441
      %v3482 = vsub.f32 %v3421, %v3444
      %v3483 = vsub.f32 %v3423, %v3447
      %v3484 = vsub.f32 %v3426, %v3450
      %v3485 = vsub.f32 %v3428, %v3453
      %v3486 = vmul.f32 %v3478, 1.442695
      %v3487 = vpow.pop %v3486
      %v3488 = vmul.f32 %v3479, 1.442695
      %v3489 = vpow.pop %v3488
      %v3490 = vmul.f32 %v3480, 1.442695
      %v3491 = vpow.pop %v3490
      %v3492 = vmul.f32 %v3481, 1.442695
      %v3493 = vpow.pop %v3492
      %v3494 = vmul.f32 %v3482, 1.442695
      %v3495 = vpow.pop %v3494
      %v3496 = vmul.f32 %v3483, 1.442695
      %v3497 = vpow.pop %v3496
      %v3498 = vmul.f32 %v3484, 1.442695
      %v3499 = vpow.pop %v3498
      %v3500 = vmul.f32 %v3485, 1.442695
      %v3501 = vpow.pop %v3500
      %v3502 = vmul.f32 %v3463, 0.0
      %v3503 = vmul.f32 %v3465, 0.0
      %v3504 = vmul.f32 %v3467, 0.0
      %v3505 = vmul.f32 %v3469, 0.0
      %v3506 = vmul.f32 %v3471, 0.0
      %v3507 = vmul.f32 %v3473, 0.0
      %v3508 = vmul.f32 %v3475, 0.0
      %v3509 = vmul.f32 %v3477, 0.0
      %v3510 = vsel %vm2437, %v3487, 0.0
      %3511 = vadd.xlane.f32.xlu0 %v3510
      %v3512 = vpop.xlane.xlu0 %3511
      %v3513 = vsel %vm2437, %v3489, 0.0
      %3514 = vadd.xlane.f32.xlu0 %v3513
      %v3515 = vpop.xlane.xlu0 %3514
      %v3516 = vsel %vm2437, %v3491, 0.0
      %3517 = vadd.xlane.f32.xlu0 %v3516
      %v3518 = vpop.xlane.xlu0 %3517
      %v3519 = vsel %vm2437, %v3493, 0.0
      %3520 = vadd.xlane.f32.xlu0 %v3519
      %v3521 = vpop.xlane.xlu0 %3520
      %v3522 = vsel %vm2437, %v3495, 0.0
      %3523 = vadd.xlane.f32.xlu0 %v3522
      %v3524 = vpop.xlane.xlu0 %3523
      %v3525 = vsel %vm2437, %v3497, 0.0
      %3526 = vadd.xlane.f32.xlu0 %v3525
      %v3527 = vpop.xlane.xlu0 %3526
      %v3528 = vsel %vm2437, %v3499, 0.0
      %3529 = vadd.xlane.f32.xlu0 %v3528
      %v3530 = vpop.xlane.xlu0 %3529
      %v3531 = vsel %vm2437, %v3501, 0.0
      %3532 = vadd.xlane.f32.xlu0 %v3531
      %v3533 = vpop.xlane.xlu0 %3532
      %v3534 = vadd.f32 %v3502, %v3512
      %v3535 = vadd.f32 %v3503, %v3515
      %v3536 = vadd.f32 %v3504, %v3518
      %v3537 = vadd.f32 %v3505, %v3521
      %v3538 = vadd.f32 %v3506, %v3524
      %v3539 = vadd.f32 %v3507, %v3527
      %v3540 = vadd.f32 %v3508, %v3530
      %v3541 = vadd.f32 %v3509, %v3533
      %v3542 = vpack.c.bf16 %v3489, %v3487
      %v3543 = vpack.c.bf16 %v3493, %v3491
      %v3544 = vpack.c.bf16 %v3497, %v3495
      %v3545 = vpack.c.bf16 %v3501, %v3499
      %v3550 = vunpack.c.l.b16 %v3381
      %v3551 = vunpack.c.l.b16 %v3382
      %v3552 = vunpack.c.l.b16 %v3383
      %v3553 = vunpack.c.l.b16 %v3384
      %v3554 = vpack.c.b16 %v3551, %v3550
      %v3555 = vpack.c.b16 %v3553, %v3552
      %v3559 = vsel %vm2437, %v3542, 0
      %v3562 = vsel %vm2437, %v3543, 0
      %v3565 = vsel %vm2437, %v3544, 0
      %v3568 = vsel %vm2437, %v3545, 0
      %3570 = vmatpush.bf16.msra.mxu0 0
      %3571 = vmatpush.bf16.msra.mxu0 0
      %3572 = vmatpush.bf16.msra.mxu0 0
      %3573 = vmatpush.bf16.msra.mxu0 0
      %3574 = vmatpush.bf16.msra.mxu0 0
      %3575 = vmatpush.bf16.msra.mxu0 0
      %3576 = vmatpush.bf16.msra.mxu0 %v3555
      %3577 = vmatpush.bf16.msra.mxu0 %v3554
      %3578 = vmatmul.bf16.gmra.mxu0 %v3559
      %v3579 = vpop.f32.mrf.mxu0
      %v3580 = vadd.f32 0.0, %v3579
      %v3581 = vpop.f32.mrf.mxu0
      %v3582 = vadd.f32 0.0, %v3581
      %3583 = vmatmul.bf16.gmra.mxu0 %v3562
      %v3584 = vpop.f32.mrf.mxu0
      %v3585 = vadd.f32 0.0, %v3584
      %v3586 = vpop.f32.mrf.mxu0
      %v3587 = vadd.f32 0.0, %v3586
      %3588 = vmatmul.bf16.gmra.mxu0 %v3565
      %v3589 = vpop.f32.mrf.mxu0
      %v3590 = vadd.f32 0.0, %v3589
      %v3591 = vpop.f32.mrf.mxu0
      %v3592 = vadd.f32 0.0, %v3591
      %3593 = vmatmul.bf16.gmra.mxu0 %v3568
      %v3594 = vpop.f32.mrf.mxu0
      %v3595 = vadd.f32 0.0, %v3594
      %v3596 = vpop.f32.mrf.mxu0
      %v3597 = vadd.f32 0.0, %v3596
      %3598 = vdwg.mxu0
      %v3599 = vadd.f32 %v3502, %v3580
      %v3600 = vadd.f32 %v3503, %v3582
      %v3601 = vadd.f32 %v3504, %v3585
      %v3602 = vadd.f32 %v3505, %v3587
      %v3603 = vadd.f32 %v3506, %v3590
      %v3604 = vadd.f32 %v3507, %v3592
      %v3605 = vadd.f32 %v3508, %v3595
      %v3606 = vadd.f32 %v3509, %v3597
      %v3611 = vunpack.c.l.b16 %v3377
      %v3612 = vunpack.c.l.b16 %v3378
      %v3613 = vunpack.c.l.b16 %v3379
      %v3614 = vunpack.c.l.b16 %v3380
      %v3615 = vpack.c.b16 %v3612, %v3611
      %v3616 = vpack.c.b16 %v3614, %v3613
      %3619 = vmatpush.bf16.xpose.msra.mxu0 0
      %3620 = vmatpush.bf16.xpose.msra.mxu0 0
      %3621 = vmatpush.bf16.xpose.msra.mxu0 0
      %3622 = vmatpush.bf16.xpose.msra.mxu0 0
      %3623 = vmatpush.bf16.xpose.msra.mxu0 0
      %3624 = vmatpush.bf16.xpose.msra.mxu0 0
      %3625 = vmatpush.bf16.xpose.msra.mxu0 %v3616
      %3626 = vmatpush.bf16.xpose.msra.mxu0 %v3615
      %3627 = vmatmul.bf16.gmra.mxu0 %v3369
      %v3628 = vpop.f32.mrf.mxu0
      %v3629 = vadd.f32 0.0, %v3628
      %v3630 = vpop.f32.mrf.mxu0
      %v3631 = vadd.f32 0.0, %v3630
      %3632 = vmatmul.bf16.gmra.mxu0 %v3370
      %v3633 = vpop.f32.mrf.mxu0
      %v3634 = vadd.f32 0.0, %v3633
      %v3635 = vpop.f32.mrf.mxu0
      %v3636 = vadd.f32 0.0, %v3635
      %3637 = vmatmul.bf16.gmra.mxu0 %v3371
      %v3638 = vpop.f32.mrf.mxu0
      %v3639 = vadd.f32 0.0, %v3638
      %v3640 = vpop.f32.mrf.mxu0
      %v3641 = vadd.f32 0.0, %v3640
      %3642 = vmatmul.bf16.gmra.mxu0 %v3372
      %v3643 = vpop.f32.mrf.mxu0
      %v3644 = vadd.f32 0.0, %v3643
      %v3645 = vpop.f32.mrf.mxu0
      %v3646 = vadd.f32 0.0, %v3645
      %3647 = vdwg.mxu0
      %v3648 = vsel %vm2437, %v3629, -inf
      %3649 = vmax.xlane.f32.xlu0 %v3648
      %v3650 = vpop.xlane.xlu0 %3649
      %v3651 = vsel %vm2437, %v3631, -inf
      %3652 = vmax.xlane.f32.xlu0 %v3651
      %v3653 = vpop.xlane.xlu0 %3652
      %v3654 = vsel %vm2437, %v3634, -inf
      %3655 = vmax.xlane.f32.xlu0 %v3654
      %v3656 = vpop.xlane.xlu0 %3655
      %v3657 = vsel %vm2437, %v3636, -inf
      %3658 = vmax.xlane.f32.xlu0 %v3657
      %v3659 = vpop.xlane.xlu0 %3658
      %v3660 = vsel %vm2437, %v3639, -inf
      %3661 = vmax.xlane.f32.xlu0 %v3660
      %v3662 = vpop.xlane.xlu0 %3661
      %v3663 = vsel %vm2437, %v3641, -inf
      %3664 = vmax.xlane.f32.xlu0 %v3663
      %v3665 = vpop.xlane.xlu0 %3664
      %v3666 = vsel %vm2437, %v3644, -inf
      %3667 = vmax.xlane.f32.xlu0 %v3666
      %v3668 = vpop.xlane.xlu0 %3667
      %v3669 = vsel %vm2437, %v3646, -inf
      %3670 = vmax.xlane.f32.xlu0 %v3669
      %v3671 = vpop.xlane.xlu0 %3670
      %v3672 = vmax.f32 %v3432, %v3650
      %v3673 = vmax.f32 %v3435, %v3653
      %v3674 = vmax.f32 %v3438, %v3656
      %v3675 = vmax.f32 %v3441, %v3659
      %v3676 = vmax.f32 %v3444, %v3662
      %v3677 = vmax.f32 %v3447, %v3665
      %v3678 = vmax.f32 %v3450, %v3668
      %v3679 = vmax.f32 %v3453, %v3671
      %v3680 = vsub.f32 %v3432, %v3672
      %v3681 = vsub.f32 %v3435, %v3673
      %v3682 = vsub.f32 %v3438, %v3674
      %v3683 = vsub.f32 %v3441, %v3675
      %v3684 = vsub.f32 %v3444, %v3676
      %v3685 = vsub.f32 %v3447, %v3677
      %v3686 = vsub.f32 %v3450, %v3678
      %v3687 = vsub.f32 %v3453, %v3679
      %v3688 = vmul.f32 %v3680, 1.442695
      %v3689 = vpow.pop %v3688
      %v3690 = vmul.f32 %v3681, 1.442695
      %v3691 = vpow.pop %v3690
      %v3692 = vmul.f32 %v3682, 1.442695
      %v3693 = vpow.pop %v3692
      %v3694 = vmul.f32 %v3683, 1.442695
      %v3695 = vpow.pop %v3694
      %v3696 = vmul.f32 %v3684, 1.442695
      %v3697 = vpow.pop %v3696
      %v3698 = vmul.f32 %v3685, 1.442695
      %v3699 = vpow.pop %v3698
      %v3700 = vmul.f32 %v3686, 1.442695
      %v3701 = vpow.pop %v3700
      %v3702 = vmul.f32 %v3687, 1.442695
      %v3703 = vpow.pop %v3702
      %v3704 = vsub.f32 %v3629, %v3672
      %v3705 = vsub.f32 %v3631, %v3673
      %v3706 = vsub.f32 %v3634, %v3674
      %v3707 = vsub.f32 %v3636, %v3675
      %v3708 = vsub.f32 %v3639, %v3676
      %v3709 = vsub.f32 %v3641, %v3677
      %v3710 = vsub.f32 %v3644, %v3678
      %v3711 = vsub.f32 %v3646, %v3679
      %v3712 = vmul.f32 %v3704, 1.442695
      %v3713 = vpow.pop %v3712
      %v3714 = vmul.f32 %v3705, 1.442695
      %v3715 = vpow.pop %v3714
      %v3716 = vmul.f32 %v3706, 1.442695
      %v3717 = vpow.pop %v3716
      %v3718 = vmul.f32 %v3707, 1.442695
      %v3719 = vpow.pop %v3718
      %v3720 = vmul.f32 %v3708, 1.442695
      %v3721 = vpow.pop %v3720
      %v3722 = vmul.f32 %v3709, 1.442695
      %v3723 = vpow.pop %v3722
      %v3724 = vmul.f32 %v3710, 1.442695
      %v3725 = vpow.pop %v3724
      %v3726 = vmul.f32 %v3711, 1.442695
      %v3727 = vpow.pop %v3726
      %v3728 = vmul.f32 %v3689, %v3534
      %v3729 = vmul.f32 %v3691, %v3535
      %v3730 = vmul.f32 %v3693, %v3536
      %v3731 = vmul.f32 %v3695, %v3537
      %v3732 = vmul.f32 %v3697, %v3538
      %v3733 = vmul.f32 %v3699, %v3539
      %v3734 = vmul.f32 %v3701, %v3540
      %v3735 = vmul.f32 %v3703, %v3541
      %v3736 = vsel %vm2437, %v3713, 0.0
      %3737 = vadd.xlane.f32.xlu0 %v3736
      %v3738 = vpop.xlane.xlu0 %3737
      %v3739 = vsel %vm2437, %v3715, 0.0
      %3740 = vadd.xlane.f32.xlu0 %v3739
      %v3741 = vpop.xlane.xlu0 %3740
      %v3742 = vsel %vm2437, %v3717, 0.0
      %3743 = vadd.xlane.f32.xlu0 %v3742
      %v3744 = vpop.xlane.xlu0 %3743
      %v3745 = vsel %vm2437, %v3719, 0.0
      %3746 = vadd.xlane.f32.xlu0 %v3745
      %v3747 = vpop.xlane.xlu0 %3746
      %v3748 = vsel %vm2437, %v3721, 0.0
      %3749 = vadd.xlane.f32.xlu0 %v3748
      %v3750 = vpop.xlane.xlu0 %3749
      %v3751 = vsel %vm2437, %v3723, 0.0
      %3752 = vadd.xlane.f32.xlu0 %v3751
      %v3753 = vpop.xlane.xlu0 %3752
      %v3754 = vsel %vm2437, %v3725, 0.0
      %3755 = vadd.xlane.f32.xlu0 %v3754
      %v3756 = vpop.xlane.xlu0 %3755
      %v3757 = vsel %vm2437, %v3727, 0.0
      %3758 = vadd.xlane.f32.xlu0 %v3757
      %v3759 = vpop.xlane.xlu0 %3758
      %v3760 = vadd.f32 %v3728, %v3738
      %v3761 = vadd.f32 %v3729, %v3741
      %v3762 = vadd.f32 %v3730, %v3744
      %v3763 = vadd.f32 %v3731, %v3747
      %v3764 = vadd.f32 %v3732, %v3750
      %v3765 = vadd.f32 %v3733, %v3753
      %v3766 = vadd.f32 %v3734, %v3756
      %v3767 = vadd.f32 %v3735, %v3759
      %v3768 = vmul.f32 %v3689, %v3599
      %v3769 = vmul.f32 %v3691, %v3600
      %v3770 = vmul.f32 %v3693, %v3601
      %v3771 = vmul.f32 %v3695, %v3602
      %v3772 = vmul.f32 %v3697, %v3603
      %v3773 = vmul.f32 %v3699, %v3604
      %v3774 = vmul.f32 %v3701, %v3605
      %v3775 = vmul.f32 %v3703, %v3606
      %v3776 = vpack.c.bf16 %v3715, %v3713
      %v3777 = vpack.c.bf16 %v3719, %v3717
      %v3778 = vpack.c.bf16 %v3723, %v3721
      %v3779 = vpack.c.bf16 %v3727, %v3725
      %v3784 = vunpack.c.l.b16 %v3385
      %v3785 = vunpack.c.l.b16 %v3386
      %v3786 = vunpack.c.l.b16 %v3387
      %v3787 = vunpack.c.l.b16 %v3388
      %v3788 = vpack.c.b16 %v3785, %v3784
      %v3789 = vpack.c.b16 %v3787, %v3786
      %v3793 = vsel %vm2437, %v3776, 0
      %v3796 = vsel %vm2437, %v3777, 0
      %v3799 = vsel %vm2437, %v3778, 0
      %v3802 = vsel %vm2437, %v3779, 0
      %3804 = vmatpush.bf16.msra.mxu0 0
      %3805 = vmatpush.bf16.msra.mxu0 0
      %3806 = vmatpush.bf16.msra.mxu0 0
      %3807 = vmatpush.bf16.msra.mxu0 0
      %3808 = vmatpush.bf16.msra.mxu0 0
      %3809 = vmatpush.bf16.msra.mxu0 0
      %3810 = vmatpush.bf16.msra.mxu0 %v3789
      %3811 = vmatpush.bf16.msra.mxu0 %v3788
      %3812 = vmatmul.bf16.gmra.mxu0 %v3793
      %v3813 = vpop.f32.mrf.mxu0
      %v3814 = vadd.f32 0.0, %v3813
      %v3815 = vpop.f32.mrf.mxu0
      %v3816 = vadd.f32 0.0, %v3815
      %3817 = vmatmul.bf16.gmra.mxu0 %v3796
      %v3818 = vpop.f32.mrf.mxu0
      %v3819 = vadd.f32 0.0, %v3818
      %v3820 = vpop.f32.mrf.mxu0
      %v3821 = vadd.f32 0.0, %v3820
      %3822 = vmatmul.bf16.gmra.mxu0 %v3799
      %v3823 = vpop.f32.mrf.mxu0
      %v3824 = vadd.f32 0.0, %v3823
      %v3825 = vpop.f32.mrf.mxu0
      %v3826 = vadd.f32 0.0, %v3825
      %3827 = vmatmul.bf16.gmra.mxu0 %v3802
      %v3828 = vpop.f32.mrf.mxu0
      %v3829 = vadd.f32 0.0, %v3828
      %v3830 = vpop.f32.mrf.mxu0
      %v3831 = vadd.f32 0.0, %v3830
      %3832 = vdwg.mxu0
      %v3833 = vadd.f32 %v3768, %v3814
      %v3834 = vadd.f32 %v3769, %v3816
      %v3835 = vadd.f32 %v3770, %v3819
      %v3836 = vadd.f32 %v3771, %v3821
      %v3837 = vadd.f32 %v3772, %v3824
      %v3838 = vadd.f32 %v3773, %v3826
      %v3839 = vadd.f32 %v3774, %v3829
      %v3840 = vadd.f32 %v3775, %v3831
      %v3841 = vrcp.pop %v3760
      %v3842 = vrcp.pop %v3761
      %v3843 = vrcp.pop %v3762
      %v3844 = vrcp.pop %v3763
      %v3845 = vrcp.pop %v3764
      %v3846 = vrcp.pop %v3765
      %v3847 = vrcp.pop %v3766
      %v3848 = vrcp.pop %v3767
      %v3849 = vmul.f32 %v3833, %v3841
      %v3850 = vmul.f32 %v3834, %v3842
      %v3851 = vmul.f32 %v3835, %v3843
      %v3852 = vmul.f32 %v3836, %v3844
      %v3853 = vmul.f32 %v3837, %v3845
      %v3854 = vmul.f32 %v3838, %v3846
      %v3855 = vmul.f32 %v3839, %v3847
      %v3856 = vmul.f32 %v3840, %v3848
      %v3857 = vmul.f32 %v1769, 0.5
      %v3858 = vmul.f32 %v1771, 0.5
      %v3859 = vmul.f32 %v1774, 0.5
      %v3860 = vmul.f32 %v1776, 0.5
      %v3861 = vmul.f32 %v1779, 0.5
      %v3862 = vmul.f32 %v1781, 0.5
      %v3863 = vmul.f32 %v1784, 0.5
      %v3864 = vmul.f32 %v1786, 0.5
      %v3865 = vpack.c.bf16 %v3858, %v3857
      %v3866 = vpack.c.bf16 %v3860, %v3859
      %v3867 = vpack.c.bf16 %v3862, %v3861
      %v3868 = vpack.c.bf16 %v3864, %v3863
      %v3869 = vpack.c.bf16 %v2001, %v2001
      %v3870 = vpack.c.bf16 %v2003, %v2003
      %v3871 = vpack.c.bf16 %v2006, %v2006
      %v3872 = vpack.c.bf16 %v2008, %v2008
      %v3873 = vpack.c.bf16 %v2011, %v2011
      %v3874 = vpack.c.bf16 %v2013, %v2013
      %v3875 = vpack.c.bf16 %v2016, %v2016
      %v3876 = vpack.c.bf16 %v2018, %v2018
      %v3877 = vpack.c.bf16 %v2233, %v2233
      %v3878 = vpack.c.bf16 %v2235, %v2235
      %v3879 = vpack.c.bf16 %v2238, %v2238
      %v3880 = vpack.c.bf16 %v2240, %v2240
      %v3881 = vpack.c.bf16 %v2243, %v2243
      %v3882 = vpack.c.bf16 %v2245, %v2245
      %v3883 = vpack.c.bf16 %v2248, %v2248
      %v3884 = vpack.c.bf16 %v2250, %v2250
      %v3889 = vunpack.c.l.b16 %v3869
      %v3890 = vunpack.c.l.b16 %v3870
      %v3891 = vunpack.c.l.b16 %v3871
      %v3892 = vunpack.c.l.b16 %v3872
      %v3893 = vpack.c.b16 %v3890, %v3889
      %v3894 = vpack.c.b16 %v3892, %v3891
      %3897 = vmatpush.bf16.xpose.msra.mxu0 0
      %3898 = vmatpush.bf16.xpose.msra.mxu0 0
      %3899 = vmatpush.bf16.xpose.msra.mxu0 0
      %3900 = vmatpush.bf16.xpose.msra.mxu0 0
      %3901 = vmatpush.bf16.xpose.msra.mxu0 0
      %3902 = vmatpush.bf16.xpose.msra.mxu0 0
      %3903 = vmatpush.bf16.xpose.msra.mxu0 %v3894
      %3904 = vmatpush.bf16.xpose.msra.mxu0 %v3893
      %3905 = vmatmul.bf16.gmra.mxu0 %v3865
      %v3906 = vpop.f32.mrf.mxu0
      %v3907 = vadd.f32 0.0, %v3906
      %v3908 = vpop.f32.mrf.mxu0
      %v3909 = vadd.f32 0.0, %v3908
      %3910 = vmatmul.bf16.gmra.mxu0 %v3866
      %v3911 = vpop.f32.mrf.mxu0
      %v3912 = vadd.f32 0.0, %v3911
      %v3913 = vpop.f32.mrf.mxu0
      %v3914 = vadd.f32 0.0, %v3913
      %3915 = vmatmul.bf16.gmra.mxu0 %v3867
      %v3916 = vpop.f32.mrf.mxu0
      %v3917 = vadd.f32 0.0, %v3916
      %v3918 = vpop.f32.mrf.mxu0
      %v3919 = vadd.f32 0.0, %v3918
      %3920 = vmatmul.bf16.gmra.mxu0 %v3868
      %v3921 = vpop.f32.mrf.mxu0
      %v3922 = vadd.f32 0.0, %v3921
      %v3923 = vpop.f32.mrf.mxu0
      %v3924 = vadd.f32 0.0, %v3923
      %3925 = vdwg.mxu0
      %v3926 = vsel %vm2437, %v3907, -inf
      %3927 = vmax.xlane.f32.xlu0 %v3926
      %v3928 = vpop.xlane.xlu0 %3927
      %v3929 = vsel %vm2437, %v3909, -inf
      %3930 = vmax.xlane.f32.xlu0 %v3929
      %v3931 = vpop.xlane.xlu0 %3930
      %v3932 = vsel %vm2437, %v3912, -inf
      %3933 = vmax.xlane.f32.xlu0 %v3932
      %v3934 = vpop.xlane.xlu0 %3933
      %v3935 = vsel %vm2437, %v3914, -inf
      %3936 = vmax.xlane.f32.xlu0 %v3935
      %v3937 = vpop.xlane.xlu0 %3936
      %v3938 = vsel %vm2437, %v3917, -inf
      %3939 = vmax.xlane.f32.xlu0 %v3938
      %v3940 = vpop.xlane.xlu0 %3939
      %v3941 = vsel %vm2437, %v3919, -inf
      %3942 = vmax.xlane.f32.xlu0 %v3941
      %v3943 = vpop.xlane.xlu0 %3942
      %v3944 = vsel %vm2437, %v3922, -inf
      %3945 = vmax.xlane.f32.xlu0 %v3944
      %v3946 = vpop.xlane.xlu0 %3945
      %v3947 = vsel %vm2437, %v3924, -inf
      %3948 = vmax.xlane.f32.xlu0 %v3947
      %v3949 = vpop.xlane.xlu0 %3948
      %v3950 = vsub.f32 -inf, %v3928
      %v3951 = vsub.f32 -inf, %v3931
      %v3952 = vsub.f32 -inf, %v3934
      %v3953 = vsub.f32 -inf, %v3937
      %v3954 = vsub.f32 -inf, %v3940
      %v3955 = vsub.f32 -inf, %v3943
      %v3956 = vsub.f32 -inf, %v3946
      %v3957 = vsub.f32 -inf, %v3949
      %v3958 = vmul.f32 %v3950, 1.442695
      %v3959 = vpow.pop %v3958
      %v3960 = vmul.f32 %v3951, 1.442695
      %v3961 = vpow.pop %v3960
      %v3962 = vmul.f32 %v3952, 1.442695
      %v3963 = vpow.pop %v3962
      %v3964 = vmul.f32 %v3953, 1.442695
      %v3965 = vpow.pop %v3964
      %v3966 = vmul.f32 %v3954, 1.442695
      %v3967 = vpow.pop %v3966
      %v3968 = vmul.f32 %v3955, 1.442695
      %v3969 = vpow.pop %v3968
      %v3970 = vmul.f32 %v3956, 1.442695
      %v3971 = vpow.pop %v3970
      %v3972 = vmul.f32 %v3957, 1.442695
      %v3973 = vpow.pop %v3972
      %v3974 = vsub.f32 %v3907, %v3928
      %v3975 = vsub.f32 %v3909, %v3931
      %v3976 = vsub.f32 %v3912, %v3934
      %v3977 = vsub.f32 %v3914, %v3937
      %v3978 = vsub.f32 %v3917, %v3940
      %v3979 = vsub.f32 %v3919, %v3943
      %v3980 = vsub.f32 %v3922, %v3946
      %v3981 = vsub.f32 %v3924, %v3949
      %v3982 = vmul.f32 %v3974, 1.442695
      %v3983 = vpow.pop %v3982
      %v3984 = vmul.f32 %v3975, 1.442695
      %v3985 = vpow.pop %v3984
      %v3986 = vmul.f32 %v3976, 1.442695
      %v3987 = vpow.pop %v3986
      %v3988 = vmul.f32 %v3977, 1.442695
      %v3989 = vpow.pop %v3988
      %v3990 = vmul.f32 %v3978, 1.442695
      %v3991 = vpow.pop %v3990
      %v3992 = vmul.f32 %v3979, 1.442695
      %v3993 = vpow.pop %v3992
      %v3994 = vmul.f32 %v3980, 1.442695
      %v3995 = vpow.pop %v3994
      %v3996 = vmul.f32 %v3981, 1.442695
      %v3997 = vpow.pop %v3996
      %v3998 = vmul.f32 %v3959, 0.0
      %v3999 = vmul.f32 %v3961, 0.0
      %v4000 = vmul.f32 %v3963, 0.0
      %v4001 = vmul.f32 %v3965, 0.0
      %v4002 = vmul.f32 %v3967, 0.0
      %v4003 = vmul.f32 %v3969, 0.0
      %v4004 = vmul.f32 %v3971, 0.0
      %v4005 = vmul.f32 %v3973, 0.0
      %v4006 = vsel %vm2437, %v3983, 0.0
      %4007 = vadd.xlane.f32.xlu0 %v4006
      %v4008 = vpop.xlane.xlu0 %4007
      %v4009 = vsel %vm2437, %v3985, 0.0
      %4010 = vadd.xlane.f32.xlu0 %v4009
      %v4011 = vpop.xlane.xlu0 %4010
      %v4012 = vsel %vm2437, %v3987, 0.0
      %4013 = vadd.xlane.f32.xlu0 %v4012
      %v4014 = vpop.xlane.xlu0 %4013
      %v4015 = vsel %vm2437, %v3989, 0.0
      %4016 = vadd.xlane.f32.xlu0 %v4015
      %v4017 = vpop.xlane.xlu0 %4016
      %v4018 = vsel %vm2437, %v3991, 0.0
      %4019 = vadd.xlane.f32.xlu0 %v4018
      %v4020 = vpop.xlane.xlu0 %4019
      %v4021 = vsel %vm2437, %v3993, 0.0
      %4022 = vadd.xlane.f32.xlu0 %v4021
      %v4023 = vpop.xlane.xlu0 %4022
      %v4024 = vsel %vm2437, %v3995, 0.0
      %4025 = vadd.xlane.f32.xlu0 %v4024
      %v4026 = vpop.xlane.xlu0 %4025
      %v4027 = vsel %vm2437, %v3997, 0.0
      %4028 = vadd.xlane.f32.xlu0 %v4027
      %v4029 = vpop.xlane.xlu0 %4028
      %v4030 = vadd.f32 %v3998, %v4008
      %v4031 = vadd.f32 %v3999, %v4011
      %v4032 = vadd.f32 %v4000, %v4014
      %v4033 = vadd.f32 %v4001, %v4017
      %v4034 = vadd.f32 %v4002, %v4020
      %v4035 = vadd.f32 %v4003, %v4023
      %v4036 = vadd.f32 %v4004, %v4026
      %v4037 = vadd.f32 %v4005, %v4029
      %v4038 = vpack.c.bf16 %v3985, %v3983
      %v4039 = vpack.c.bf16 %v3989, %v3987
      %v4040 = vpack.c.bf16 %v3993, %v3991
      %v4041 = vpack.c.bf16 %v3997, %v3995
      %v4046 = vunpack.c.l.b16 %v3877
      %v4047 = vunpack.c.l.b16 %v3878
      %v4048 = vunpack.c.l.b16 %v3879
      %v4049 = vunpack.c.l.b16 %v3880
      %v4050 = vpack.c.b16 %v4047, %v4046
      %v4051 = vpack.c.b16 %v4049, %v4048
      %v4055 = vsel %vm2437, %v4038, 0
      %v4058 = vsel %vm2437, %v4039, 0
      %v4061 = vsel %vm2437, %v4040, 0
      %v4064 = vsel %vm2437, %v4041, 0
      %4066 = vmatpush.bf16.msra.mxu0 0
      %4067 = vmatpush.bf16.msra.mxu0 0
      %4068 = vmatpush.bf16.msra.mxu0 0
      %4069 = vmatpush.bf16.msra.mxu0 0
      %4070 = vmatpush.bf16.msra.mxu0 0
      %4071 = vmatpush.bf16.msra.mxu0 0
      %4072 = vmatpush.bf16.msra.mxu0 %v4051
      %4073 = vmatpush.bf16.msra.mxu0 %v4050
      %4074 = vmatmul.bf16.gmra.mxu0 %v4055
      %v4075 = vpop.f32.mrf.mxu0
      %v4076 = vadd.f32 0.0, %v4075
      %v4077 = vpop.f32.mrf.mxu0
      %v4078 = vadd.f32 0.0, %v4077
      %4079 = vmatmul.bf16.gmra.mxu0 %v4058
      %v4080 = vpop.f32.mrf.mxu0
      %v4081 = vadd.f32 0.0, %v4080
      %v4082 = vpop.f32.mrf.mxu0
      %v4083 = vadd.f32 0.0, %v4082
      %4084 = vmatmul.bf16.gmra.mxu0 %v4061
      %v4085 = vpop.f32.mrf.mxu0
      %v4086 = vadd.f32 0.0, %v4085
      %v4087 = vpop.f32.mrf.mxu0
      %v4088 = vadd.f32 0.0, %v4087
      %4089 = vmatmul.bf16.gmra.mxu0 %v4064
      %v4090 = vpop.f32.mrf.mxu0
      %v4091 = vadd.f32 0.0, %v4090
      %v4092 = vpop.f32.mrf.mxu0
      %v4093 = vadd.f32 0.0, %v4092
      %4094 = vdwg.mxu0
      %v4095 = vadd.f32 %v3998, %v4076
      %v4096 = vadd.f32 %v3999, %v4078
      %v4097 = vadd.f32 %v4000, %v4081
      %v4098 = vadd.f32 %v4001, %v4083
      %v4099 = vadd.f32 %v4002, %v4086
      %v4100 = vadd.f32 %v4003, %v4088
      %v4101 = vadd.f32 %v4004, %v4091
      %v4102 = vadd.f32 %v4005, %v4093
      %v4107 = vunpack.c.l.b16 %v3873
      %v4108 = vunpack.c.l.b16 %v3874
      %v4109 = vunpack.c.l.b16 %v3875
      %v4110 = vunpack.c.l.b16 %v3876
      %v4111 = vpack.c.b16 %v4108, %v4107
      %v4112 = vpack.c.b16 %v4110, %v4109
      %4115 = vmatpush.bf16.xpose.msra.mxu0 0
      %4116 = vmatpush.bf16.xpose.msra.mxu0 0
      %4117 = vmatpush.bf16.xpose.msra.mxu0 0
      %4118 = vmatpush.bf16.xpose.msra.mxu0 0
      %4119 = vmatpush.bf16.xpose.msra.mxu0 0
      %4120 = vmatpush.bf16.xpose.msra.mxu0 0
      %4121 = vmatpush.bf16.xpose.msra.mxu0 %v4112
      %4122 = vmatpush.bf16.xpose.msra.mxu0 %v4111
      %4123 = vmatmul.bf16.gmra.mxu0 %v3865
      %v4124 = vpop.f32.mrf.mxu0
      %v4125 = vadd.f32 0.0, %v4124
      %v4126 = vpop.f32.mrf.mxu0
      %v4127 = vadd.f32 0.0, %v4126
      %4128 = vmatmul.bf16.gmra.mxu0 %v3866
      %v4129 = vpop.f32.mrf.mxu0
      %v4130 = vadd.f32 0.0, %v4129
      %v4131 = vpop.f32.mrf.mxu0
      %v4132 = vadd.f32 0.0, %v4131
      %4133 = vmatmul.bf16.gmra.mxu0 %v3867
      %v4134 = vpop.f32.mrf.mxu0
      %v4135 = vadd.f32 0.0, %v4134
      %v4136 = vpop.f32.mrf.mxu0
      %v4137 = vadd.f32 0.0, %v4136
      %4138 = vmatmul.bf16.gmra.mxu0 %v3868
      %v4139 = vpop.f32.mrf.mxu0
      %v4140 = vadd.f32 0.0, %v4139
      %v4141 = vpop.f32.mrf.mxu0
      %v4142 = vadd.f32 0.0, %v4141
      %4143 = vdwg.mxu0
      %v4144 = vsel %vm2437, %v4125, -inf
      %4145 = vmax.xlane.f32.xlu0 %v4144
      %v4146 = vpop.xlane.xlu0 %4145
      %v4147 = vsel %vm2437, %v4127, -inf
      %4148 = vmax.xlane.f32.xlu0 %v4147
      %v4149 = vpop.xlane.xlu0 %4148
      %v4150 = vsel %vm2437, %v4130, -inf
      %4151 = vmax.xlane.f32.xlu0 %v4150
      %v4152 = vpop.xlane.xlu0 %4151
      %v4153 = vsel %vm2437, %v4132, -inf
      %4154 = vmax.xlane.f32.xlu0 %v4153
      %v4155 = vpop.xlane.xlu0 %4154
      %v4156 = vsel %vm2437, %v4135, -inf
      %4157 = vmax.xlane.f32.xlu0 %v4156
      %v4158 = vpop.xlane.xlu0 %4157
      %v4159 = vsel %vm2437, %v4137, -inf
      %4160 = vmax.xlane.f32.xlu0 %v4159
      %v4161 = vpop.xlane.xlu0 %4160
      %v4162 = vsel %vm2437, %v4140, -inf
      %4163 = vmax.xlane.f32.xlu0 %v4162
      %v4164 = vpop.xlane.xlu0 %4163
      %v4165 = vsel %vm2437, %v4142, -inf
      %4166 = vmax.xlane.f32.xlu0 %v4165
      %v4167 = vpop.xlane.xlu0 %4166
      %v4168 = vmax.f32 %v3928, %v4146
      %v4169 = vmax.f32 %v3931, %v4149
      %v4170 = vmax.f32 %v3934, %v4152
      %v4171 = vmax.f32 %v3937, %v4155
      %v4172 = vmax.f32 %v3940, %v4158
      %v4173 = vmax.f32 %v3943, %v4161
      %v4174 = vmax.f32 %v3946, %v4164
      %v4175 = vmax.f32 %v3949, %v4167
      %v4176 = vsub.f32 %v3928, %v4168
      %v4177 = vsub.f32 %v3931, %v4169
      %v4178 = vsub.f32 %v3934, %v4170
      %v4179 = vsub.f32 %v3937, %v4171
      %v4180 = vsub.f32 %v3940, %v4172
      %v4181 = vsub.f32 %v3943, %v4173
      %v4182 = vsub.f32 %v3946, %v4174
      %v4183 = vsub.f32 %v3949, %v4175
      %v4184 = vmul.f32 %v4176, 1.442695
      %v4185 = vpow.pop %v4184
      %v4186 = vmul.f32 %v4177, 1.442695
      %v4187 = vpow.pop %v4186
      %v4188 = vmul.f32 %v4178, 1.442695
      %v4189 = vpow.pop %v4188
      %v4190 = vmul.f32 %v4179, 1.442695
      %v4191 = vpow.pop %v4190
      %v4192 = vmul.f32 %v4180, 1.442695
      %v4193 = vpow.pop %v4192
      %v4194 = vmul.f32 %v4181, 1.442695
      %v4195 = vpow.pop %v4194
      %v4196 = vmul.f32 %v4182, 1.442695
      %v4197 = vpow.pop %v4196
      %v4198 = vmul.f32 %v4183, 1.442695
      %v4199 = vpow.pop %v4198
      %v4200 = vsub.f32 %v4125, %v4168
      %v4201 = vsub.f32 %v4127, %v4169
      %v4202 = vsub.f32 %v4130, %v4170
      %v4203 = vsub.f32 %v4132, %v4171
      %v4204 = vsub.f32 %v4135, %v4172
      %v4205 = vsub.f32 %v4137, %v4173
      %v4206 = vsub.f32 %v4140, %v4174
      %v4207 = vsub.f32 %v4142, %v4175
      %v4208 = vmul.f32 %v4200, 1.442695
      %v4209 = vpow.pop %v4208
      %v4210 = vmul.f32 %v4201, 1.442695
      %v4211 = vpow.pop %v4210
      %v4212 = vmul.f32 %v4202, 1.442695
      %v4213 = vpow.pop %v4212
      %v4214 = vmul.f32 %v4203, 1.442695
      %v4215 = vpow.pop %v4214
      %v4216 = vmul.f32 %v4204, 1.442695
      %v4217 = vpow.pop %v4216
      %v4218 = vmul.f32 %v4205, 1.442695
      %v4219 = vpow.pop %v4218
      %v4220 = vmul.f32 %v4206, 1.442695
      %v4221 = vpow.pop %v4220
      %v4222 = vmul.f32 %v4207, 1.442695
      %v4223 = vpow.pop %v4222
      %v4224 = vmul.f32 %v4185, %v4030
      %v4225 = vmul.f32 %v4187, %v4031
      %v4226 = vmul.f32 %v4189, %v4032
      %v4227 = vmul.f32 %v4191, %v4033
      %v4228 = vmul.f32 %v4193, %v4034
      %v4229 = vmul.f32 %v4195, %v4035
      %v4230 = vmul.f32 %v4197, %v4036
      %v4231 = vmul.f32 %v4199, %v4037
      %v4232 = vsel %vm2437, %v4209, 0.0
      %4233 = vadd.xlane.f32.xlu0 %v4232
      %v4234 = vpop.xlane.xlu0 %4233
      %v4235 = vsel %vm2437, %v4211, 0.0
      %4236 = vadd.xlane.f32.xlu0 %v4235
      %v4237 = vpop.xlane.xlu0 %4236
      %v4238 = vsel %vm2437, %v4213, 0.0
      %4239 = vadd.xlane.f32.xlu0 %v4238
      %v4240 = vpop.xlane.xlu0 %4239
      %v4241 = vsel %vm2437, %v4215, 0.0
      %4242 = vadd.xlane.f32.xlu0 %v4241
      %v4243 = vpop.xlane.xlu0 %4242
      %v4244 = vsel %vm2437, %v4217, 0.0
      %4245 = vadd.xlane.f32.xlu0 %v4244
      %v4246 = vpop.xlane.xlu0 %4245
      %v4247 = vsel %vm2437, %v4219, 0.0
      %4248 = vadd.xlane.f32.xlu0 %v4247
      %v4249 = vpop.xlane.xlu0 %4248
      %v4250 = vsel %vm2437, %v4221, 0.0
      %4251 = vadd.xlane.f32.xlu0 %v4250
      %v4252 = vpop.xlane.xlu0 %4251
      %v4253 = vsel %vm2437, %v4223, 0.0
      %4254 = vadd.xlane.f32.xlu0 %v4253
      %v4255 = vpop.xlane.xlu0 %4254
      %v4256 = vadd.f32 %v4224, %v4234
      %v4257 = vadd.f32 %v4225, %v4237
      %v4258 = vadd.f32 %v4226, %v4240
      %v4259 = vadd.f32 %v4227, %v4243
      %v4260 = vadd.f32 %v4228, %v4246
      %v4261 = vadd.f32 %v4229, %v4249
      %v4262 = vadd.f32 %v4230, %v4252
      %v4263 = vadd.f32 %v4231, %v4255
      %v4264 = vmul.f32 %v4185, %v4095
      %v4265 = vmul.f32 %v4187, %v4096
      %v4266 = vmul.f32 %v4189, %v4097
      %v4267 = vmul.f32 %v4191, %v4098
      %v4268 = vmul.f32 %v4193, %v4099
      %v4269 = vmul.f32 %v4195, %v4100
      %v4270 = vmul.f32 %v4197, %v4101
      %v4271 = vmul.f32 %v4199, %v4102
      %v4272 = vpack.c.bf16 %v4211, %v4209
      %v4273 = vpack.c.bf16 %v4215, %v4213
      %v4274 = vpack.c.bf16 %v4219, %v4217
      %v4275 = vpack.c.bf16 %v4223, %v4221
      %v4280 = vunpack.c.l.b16 %v3881
      %v4281 = vunpack.c.l.b16 %v3882
      %v4282 = vunpack.c.l.b16 %v3883
      %v4283 = vunpack.c.l.b16 %v3884
      %v4284 = vpack.c.b16 %v4281, %v4280
      %v4285 = vpack.c.b16 %v4283, %v4282
      %v4289 = vsel %vm2437, %v4272, 0
      %v4292 = vsel %vm2437, %v4273, 0
      %v4295 = vsel %vm2437, %v4274, 0
      %v4298 = vsel %vm2437, %v4275, 0
      %4300 = vmatpush.bf16.msra.mxu0 0
      %4301 = vmatpush.bf16.msra.mxu0 0
      %4302 = vmatpush.bf16.msra.mxu0 0
      %4303 = vmatpush.bf16.msra.mxu0 0
      %4304 = vmatpush.bf16.msra.mxu0 0
      %4305 = vmatpush.bf16.msra.mxu0 0
      %4306 = vmatpush.bf16.msra.mxu0 %v4285
      %4307 = vmatpush.bf16.msra.mxu0 %v4284
      %4308 = vmatmul.bf16.gmra.mxu0 %v4289
      %v4309 = vpop.f32.mrf.mxu0
      %v4310 = vadd.f32 0.0, %v4309
      %v4311 = vpop.f32.mrf.mxu0
      %v4312 = vadd.f32 0.0, %v4311
      %4313 = vmatmul.bf16.gmra.mxu0 %v4292
      %v4314 = vpop.f32.mrf.mxu0
      %v4315 = vadd.f32 0.0, %v4314
      %v4316 = vpop.f32.mrf.mxu0
      %v4317 = vadd.f32 0.0, %v4316
      %4318 = vmatmul.bf16.gmra.mxu0 %v4295
      %v4319 = vpop.f32.mrf.mxu0
      %v4320 = vadd.f32 0.0, %v4319
      %v4321 = vpop.f32.mrf.mxu0
      %v4322 = vadd.f32 0.0, %v4321
      %4323 = vmatmul.bf16.gmra.mxu0 %v4298
      %v4324 = vpop.f32.mrf.mxu0
      %v4325 = vadd.f32 0.0, %v4324
      %v4326 = vpop.f32.mrf.mxu0
      %v4327 = vadd.f32 0.0, %v4326
      %4328 = vdwg.mxu0
      %v4329 = vadd.f32 %v4264, %v4310
      %v4330 = vadd.f32 %v4265, %v4312
      %v4331 = vadd.f32 %v4266, %v4315
      %v4332 = vadd.f32 %v4267, %v4317
      %v4333 = vadd.f32 %v4268, %v4320
      %v4334 = vadd.f32 %v4269, %v4322
      %v4335 = vadd.f32 %v4270, %v4325
      %v4336 = vadd.f32 %v4271, %v4327
      %v4337 = vrcp.pop %v4256
      %v4338 = vrcp.pop %v4257
      %v4339 = vrcp.pop %v4258
      %v4340 = vrcp.pop %v4259
      %v4341 = vrcp.pop %v4260
      %v4342 = vrcp.pop %v4261
      %v4343 = vrcp.pop %v4262
      %v4344 = vrcp.pop %v4263
      %v4345 = vmul.f32 %v4329, %v4337
      %v4346 = vmul.f32 %v4330, %v4338
      %v4347 = vmul.f32 %v4331, %v4339
      %v4348 = vmul.f32 %v4332, %v4340
      %v4349 = vmul.f32 %v4333, %v4341
      %v4350 = vmul.f32 %v4334, %v4342
      %v4351 = vmul.f32 %v4335, %v4343
      %v4352 = vmul.f32 %v4336, %v4344
      %v4353 = vmul.f32 %v1798, 0.5
      %v4354 = vmul.f32 %v1800, 0.5
      %v4355 = vmul.f32 %v1803, 0.5
      %v4356 = vmul.f32 %v1805, 0.5
      %v4357 = vmul.f32 %v1808, 0.5
      %v4358 = vmul.f32 %v1810, 0.5
      %v4359 = vmul.f32 %v1813, 0.5
      %v4360 = vmul.f32 %v1815, 0.5
      %v4361 = vpack.c.bf16 %v4354, %v4353
      %v4362 = vpack.c.bf16 %v4356, %v4355
      %v4363 = vpack.c.bf16 %v4358, %v4357
      %v4364 = vpack.c.bf16 %v4360, %v4359
      %v4365 = vpack.c.bf16 %v2030, %v2030
      %v4366 = vpack.c.bf16 %v2032, %v2032
      %v4367 = vpack.c.bf16 %v2035, %v2035
      %v4368 = vpack.c.bf16 %v2037, %v2037
      %v4369 = vpack.c.bf16 %v2040, %v2040
      %v4370 = vpack.c.bf16 %v2042, %v2042
      %v4371 = vpack.c.bf16 %v2045, %v2045
      %v4372 = vpack.c.bf16 %v2047, %v2047
      %v4373 = vpack.c.bf16 %v2262, %v2262
      %v4374 = vpack.c.bf16 %v2264, %v2264
      %v4375 = vpack.c.bf16 %v2267, %v2267
      %v4376 = vpack.c.bf16 %v2269, %v2269
      %v4377 = vpack.c.bf16 %v2272, %v2272
      %v4378 = vpack.c.bf16 %v2274, %v2274
      %v4379 = vpack.c.bf16 %v2277, %v2277
      %v4380 = vpack.c.bf16 %v2279, %v2279
      %v4385 = vunpack.c.l.b16 %v4365
      %v4386 = vunpack.c.l.b16 %v4366
      %v4387 = vunpack.c.l.b16 %v4367
      %v4388 = vunpack.c.l.b16 %v4368
      %v4389 = vpack.c.b16 %v4386, %v4385
      %v4390 = vpack.c.b16 %v4388, %v4387
      %4393 = vmatpush.bf16.xpose.msra.mxu0 0
      %4394 = vmatpush.bf16.xpose.msra.mxu0 0
      %4395 = vmatpush.bf16.xpose.msra.mxu0 0
      %4396 = vmatpush.bf16.xpose.msra.mxu0 0
      %4397 = vmatpush.bf16.xpose.msra.mxu0 0
      %4398 = vmatpush.bf16.xpose.msra.mxu0 0
      %4399 = vmatpush.bf16.xpose.msra.mxu0 %v4390
      %4400 = vmatpush.bf16.xpose.msra.mxu0 %v4389
      %4401 = vmatmul.bf16.gmra.mxu0 %v4361
      %v4402 = vpop.f32.mrf.mxu0
      %v4403 = vadd.f32 0.0, %v4402
      %v4404 = vpop.f32.mrf.mxu0
      %v4405 = vadd.f32 0.0, %v4404
      %4406 = vmatmul.bf16.gmra.mxu0 %v4362
      %v4407 = vpop.f32.mrf.mxu0
      %v4408 = vadd.f32 0.0, %v4407
      %v4409 = vpop.f32.mrf.mxu0
      %v4410 = vadd.f32 0.0, %v4409
      %4411 = vmatmul.bf16.gmra.mxu0 %v4363
      %v4412 = vpop.f32.mrf.mxu0
      %v4413 = vadd.f32 0.0, %v4412
      %v4414 = vpop.f32.mrf.mxu0
      %v4415 = vadd.f32 0.0, %v4414
      %4416 = vmatmul.bf16.gmra.mxu0 %v4364
      %v4417 = vpop.f32.mrf.mxu0
      %v4418 = vadd.f32 0.0, %v4417
      %v4419 = vpop.f32.mrf.mxu0
      %v4420 = vadd.f32 0.0, %v4419
      %4421 = vdwg.mxu0
      %v4422 = vsel %vm2437, %v4403, -inf
      %4423 = vmax.xlane.f32.xlu0 %v4422
      %v4424 = vpop.xlane.xlu0 %4423
      %v4425 = vsel %vm2437, %v4405, -inf
      %4426 = vmax.xlane.f32.xlu0 %v4425
      %v4427 = vpop.xlane.xlu0 %4426
      %v4428 = vsel %vm2437, %v4408, -inf
      %4429 = vmax.xlane.f32.xlu0 %v4428
      %v4430 = vpop.xlane.xlu0 %4429
      %v4431 = vsel %vm2437, %v4410, -inf
      %4432 = vmax.xlane.f32.xlu0 %v4431
      %v4433 = vpop.xlane.xlu0 %4432
      %v4434 = vsel %vm2437, %v4413, -inf
      %4435 = vmax.xlane.f32.xlu0 %v4434
      %v4436 = vpop.xlane.xlu0 %4435
      %v4437 = vsel %vm2437, %v4415, -inf
      %4438 = vmax.xlane.f32.xlu0 %v4437
      %v4439 = vpop.xlane.xlu0 %4438
      %v4440 = vsel %vm2437, %v4418, -inf
      %4441 = vmax.xlane.f32.xlu0 %v4440
      %v4442 = vpop.xlane.xlu0 %4441
      %v4443 = vsel %vm2437, %v4420, -inf
      %4444 = vmax.xlane.f32.xlu0 %v4443
      %v4445 = vpop.xlane.xlu0 %4444
      %v4446 = vsub.f32 -inf, %v4424
      %v4447 = vsub.f32 -inf, %v4427
      %v4448 = vsub.f32 -inf, %v4430
      %v4449 = vsub.f32 -inf, %v4433
      %v4450 = vsub.f32 -inf, %v4436
      %v4451 = vsub.f32 -inf, %v4439
      %v4452 = vsub.f32 -inf, %v4442
      %v4453 = vsub.f32 -inf, %v4445
      %v4454 = vmul.f32 %v4446, 1.442695
      %v4455 = vpow.pop %v4454
      %v4456 = vmul.f32 %v4447, 1.442695
      %v4457 = vpow.pop %v4456
      %v4458 = vmul.f32 %v4448, 1.442695
      %v4459 = vpow.pop %v4458
      %v4460 = vmul.f32 %v4449, 1.442695
      %v4461 = vpow.pop %v4460
      %v4462 = vmul.f32 %v4450, 1.442695
      %v4463 = vpow.pop %v4462
      %v4464 = vmul.f32 %v4451, 1.442695
      %v4465 = vpow.pop %v4464
      %v4466 = vmul.f32 %v4452, 1.442695
      %v4467 = vpow.pop %v4466
      %v4468 = vmul.f32 %v4453, 1.442695
      %v4469 = vpow.pop %v4468
      %v4470 = vsub.f32 %v4403, %v4424
      %v4471 = vsub.f32 %v4405, %v4427
      %v4472 = vsub.f32 %v4408, %v4430
      %v4473 = vsub.f32 %v4410, %v4433
      %v4474 = vsub.f32 %v4413, %v4436
      %v4475 = vsub.f32 %v4415, %v4439
      %v4476 = vsub.f32 %v4418, %v4442
      %v4477 = vsub.f32 %v4420, %v4445
      %v4478 = vmul.f32 %v4470, 1.442695
      %v4479 = vpow.pop %v4478
      %v4480 = vmul.f32 %v4471, 1.442695
      %v4481 = vpow.pop %v4480
      %v4482 = vmul.f32 %v4472, 1.442695
      %v4483 = vpow.pop %v4482
      %v4484 = vmul.f32 %v4473, 1.442695
      %v4485 = vpow.pop %v4484
      %v4486 = vmul.f32 %v4474, 1.442695
      %v4487 = vpow.pop %v4486
      %v4488 = vmul.f32 %v4475, 1.442695
      %v4489 = vpow.pop %v4488
      %v4490 = vmul.f32 %v4476, 1.442695
      %v4491 = vpow.pop %v4490
      %v4492 = vmul.f32 %v4477, 1.442695
      %v4493 = vpow.pop %v4492
      %v4494 = vmul.f32 %v4455, 0.0
      %v4495 = vmul.f32 %v4457, 0.0
      %v4496 = vmul.f32 %v4459, 0.0
      %v4497 = vmul.f32 %v4461, 0.0
      %v4498 = vmul.f32 %v4463, 0.0
      %v4499 = vmul.f32 %v4465, 0.0
      %v4500 = vmul.f32 %v4467, 0.0
      %v4501 = vmul.f32 %v4469, 0.0
      %v4502 = vsel %vm2437, %v4479, 0.0
      %4503 = vadd.xlane.f32.xlu0 %v4502
      %v4504 = vpop.xlane.xlu0 %4503
      %v4505 = vsel %vm2437, %v4481, 0.0
      %4506 = vadd.xlane.f32.xlu0 %v4505
      %v4507 = vpop.xlane.xlu0 %4506
      %v4508 = vsel %vm2437, %v4483, 0.0
      %4509 = vadd.xlane.f32.xlu0 %v4508
      %v4510 = vpop.xlane.xlu0 %4509
      %v4511 = vsel %vm2437, %v4485, 0.0
      %4512 = vadd.xlane.f32.xlu0 %v4511
      %v4513 = vpop.xlane.xlu0 %4512
      %v4514 = vsel %vm2437, %v4487, 0.0
      %4515 = vadd.xlane.f32.xlu0 %v4514
      %v4516 = vpop.xlane.xlu0 %4515
      %v4517 = vsel %vm2437, %v4489, 0.0
      %4518 = vadd.xlane.f32.xlu0 %v4517
      %v4519 = vpop.xlane.xlu0 %4518
      %v4520 = vsel %vm2437, %v4491, 0.0
      %4521 = vadd.xlane.f32.xlu0 %v4520
      %v4522 = vpop.xlane.xlu0 %4521
      %v4523 = vsel %vm2437, %v4493, 0.0
      %4524 = vadd.xlane.f32.xlu0 %v4523
      %v4525 = vpop.xlane.xlu0 %4524
      %v4526 = vadd.f32 %v4494, %v4504
      %v4527 = vadd.f32 %v4495, %v4507
      %v4528 = vadd.f32 %v4496, %v4510
      %v4529 = vadd.f32 %v4497, %v4513
      %v4530 = vadd.f32 %v4498, %v4516
      %v4531 = vadd.f32 %v4499, %v4519
      %v4532 = vadd.f32 %v4500, %v4522
      %v4533 = vadd.f32 %v4501, %v4525
      %v4534 = vpack.c.bf16 %v4481, %v4479
      %v4535 = vpack.c.bf16 %v4485, %v4483
      %v4536 = vpack.c.bf16 %v4489, %v4487
      %v4537 = vpack.c.bf16 %v4493, %v4491
      %v4542 = vunpack.c.l.b16 %v4373
      %v4543 = vunpack.c.l.b16 %v4374
      %v4544 = vunpack.c.l.b16 %v4375
      %v4545 = vunpack.c.l.b16 %v4376
      %v4546 = vpack.c.b16 %v4543, %v4542
      %v4547 = vpack.c.b16 %v4545, %v4544
      %v4551 = vsel %vm2437, %v4534, 0
      %v4554 = vsel %vm2437, %v4535, 0
      %v4557 = vsel %vm2437, %v4536, 0
      %v4560 = vsel %vm2437, %v4537, 0
      %4562 = vmatpush.bf16.msra.mxu0 0
      %4563 = vmatpush.bf16.msra.mxu0 0
      %4564 = vmatpush.bf16.msra.mxu0 0
      %4565 = vmatpush.bf16.msra.mxu0 0
      %4566 = vmatpush.bf16.msra.mxu0 0
      %4567 = vmatpush.bf16.msra.mxu0 0
      %4568 = vmatpush.bf16.msra.mxu0 %v4547
      %4569 = vmatpush.bf16.msra.mxu0 %v4546
      %4570 = vmatmul.bf16.gmra.mxu0 %v4551
      %v4571 = vpop.f32.mrf.mxu0
      %v4572 = vadd.f32 0.0, %v4571
      %v4573 = vpop.f32.mrf.mxu0
      %v4574 = vadd.f32 0.0, %v4573
      %4575 = vmatmul.bf16.gmra.mxu0 %v4554
      %v4576 = vpop.f32.mrf.mxu0
      %v4577 = vadd.f32 0.0, %v4576
      %v4578 = vpop.f32.mrf.mxu0
      %v4579 = vadd.f32 0.0, %v4578
      %4580 = vmatmul.bf16.gmra.mxu0 %v4557
      %v4581 = vpop.f32.mrf.mxu0
      %v4582 = vadd.f32 0.0, %v4581
      %v4583 = vpop.f32.mrf.mxu0
      %v4584 = vadd.f32 0.0, %v4583
      %4585 = vmatmul.bf16.gmra.mxu0 %v4560
      %v4586 = vpop.f32.mrf.mxu0
      %v4587 = vadd.f32 0.0, %v4586
      %v4588 = vpop.f32.mrf.mxu0
      %v4589 = vadd.f32 0.0, %v4588
      %4590 = vdwg.mxu0
      %v4591 = vadd.f32 %v4494, %v4572
      %v4592 = vadd.f32 %v4495, %v4574
      %v4593 = vadd.f32 %v4496, %v4577
      %v4594 = vadd.f32 %v4497, %v4579
      %v4595 = vadd.f32 %v4498, %v4582
      %v4596 = vadd.f32 %v4499, %v4584
      %v4597 = vadd.f32 %v4500, %v4587
      %v4598 = vadd.f32 %v4501, %v4589
      %v4603 = vunpack.c.l.b16 %v4369
      %v4604 = vunpack.c.l.b16 %v4370
      %v4605 = vunpack.c.l.b16 %v4371
      %v4606 = vunpack.c.l.b16 %v4372
      %v4607 = vpack.c.b16 %v4604, %v4603
      %v4608 = vpack.c.b16 %v4606, %v4605
      %4611 = vmatpush.bf16.xpose.msra.mxu0 0
      %4612 = vmatpush.bf16.xpose.msra.mxu0 0
      %4613 = vmatpush.bf16.xpose.msra.mxu0 0
      %4614 = vmatpush.bf16.xpose.msra.mxu0 0
      %4615 = vmatpush.bf16.xpose.msra.mxu0 0
      %4616 = vmatpush.bf16.xpose.msra.mxu0 0
      %4617 = vmatpush.bf16.xpose.msra.mxu0 %v4608
      %4618 = vmatpush.bf16.xpose.msra.mxu0 %v4607
      %4619 = vmatmul.bf16.gmra.mxu0 %v4361
      %v4620 = vpop.f32.mrf.mxu0
      %v4621 = vadd.f32 0.0, %v4620
      %v4622 = vpop.f32.mrf.mxu0
      %v4623 = vadd.f32 0.0, %v4622
      %4624 = vmatmul.bf16.gmra.mxu0 %v4362
      %v4625 = vpop.f32.mrf.mxu0
      %v4626 = vadd.f32 0.0, %v4625
      %v4627 = vpop.f32.mrf.mxu0
      %v4628 = vadd.f32 0.0, %v4627
      %4629 = vmatmul.bf16.gmra.mxu0 %v4363
      %v4630 = vpop.f32.mrf.mxu0
      %v4631 = vadd.f32 0.0, %v4630
      %v4632 = vpop.f32.mrf.mxu0
      %v4633 = vadd.f32 0.0, %v4632
      %4634 = vmatmul.bf16.gmra.mxu0 %v4364
      %v4635 = vpop.f32.mrf.mxu0
      %v4636 = vadd.f32 0.0, %v4635
      %v4637 = vpop.f32.mrf.mxu0
      %v4638 = vadd.f32 0.0, %v4637
      %4639 = vdwg.mxu0
      %v4640 = vsel %vm2437, %v4621, -inf
      %4641 = vmax.xlane.f32.xlu0 %v4640
      %v4642 = vpop.xlane.xlu0 %4641
      %v4643 = vsel %vm2437, %v4623, -inf
      %4644 = vmax.xlane.f32.xlu0 %v4643
      %v4645 = vpop.xlane.xlu0 %4644
      %v4646 = vsel %vm2437, %v4626, -inf
      %4647 = vmax.xlane.f32.xlu0 %v4646
      %v4648 = vpop.xlane.xlu0 %4647
      %v4649 = vsel %vm2437, %v4628, -inf
      %4650 = vmax.xlane.f32.xlu0 %v4649
      %v4651 = vpop.xlane.xlu0 %4650
      %v4652 = vsel %vm2437, %v4631, -inf
      %4653 = vmax.xlane.f32.xlu0 %v4652
      %v4654 = vpop.xlane.xlu0 %4653
      %v4655 = vsel %vm2437, %v4633, -inf
      %4656 = vmax.xlane.f32.xlu0 %v4655
      %v4657 = vpop.xlane.xlu0 %4656
      %v4658 = vsel %vm2437, %v4636, -inf
      %4659 = vmax.xlane.f32.xlu0 %v4658
      %v4660 = vpop.xlane.xlu0 %4659
      %v4661 = vsel %vm2437, %v4638, -inf
      %4662 = vmax.xlane.f32.xlu0 %v4661
      %v4663 = vpop.xlane.xlu0 %4662
      %v4664 = vmax.f32 %v4424, %v4642
      %v4665 = vmax.f32 %v4427, %v4645
      %v4666 = vmax.f32 %v4430, %v4648
      %v4667 = vmax.f32 %v4433, %v4651
      %v4668 = vmax.f32 %v4436, %v4654
      %v4669 = vmax.f32 %v4439, %v4657
      %v4670 = vmax.f32 %v4442, %v4660
      %v4671 = vmax.f32 %v4445, %v4663
      %v4672 = vsub.f32 %v4424, %v4664
      %v4673 = vsub.f32 %v4427, %v4665
      %v4674 = vsub.f32 %v4430, %v4666
      %v4675 = vsub.f32 %v4433, %v4667
      %v4676 = vsub.f32 %v4436, %v4668
      %v4677 = vsub.f32 %v4439, %v4669
      %v4678 = vsub.f32 %v4442, %v4670
      %v4679 = vsub.f32 %v4445, %v4671
      %v4680 = vmul.f32 %v4672, 1.442695
      %v4681 = vpow.pop %v4680
      %v4682 = vmul.f32 %v4673, 1.442695
      %v4683 = vpow.pop %v4682
      %v4684 = vmul.f32 %v4674, 1.442695
      %v4685 = vpow.pop %v4684
      %v4686 = vmul.f32 %v4675, 1.442695
      %v4687 = vpow.pop %v4686
      %v4688 = vmul.f32 %v4676, 1.442695
      %v4689 = vpow.pop %v4688
      %v4690 = vmul.f32 %v4677, 1.442695
      %v4691 = vpow.pop %v4690
      %v4692 = vmul.f32 %v4678, 1.442695
      %v4693 = vpow.pop %v4692
      %v4694 = vmul.f32 %v4679, 1.442695
      %v4695 = vpow.pop %v4694
      %v4696 = vsub.f32 %v4621, %v4664
      %v4697 = vsub.f32 %v4623, %v4665
      %v4698 = vsub.f32 %v4626, %v4666
      %v4699 = vsub.f32 %v4628, %v4667
      %v4700 = vsub.f32 %v4631, %v4668
      %v4701 = vsub.f32 %v4633, %v4669
      %v4702 = vsub.f32 %v4636, %v4670
      %v4703 = vsub.f32 %v4638, %v4671
      %v4704 = vmul.f32 %v4696, 1.442695
      %v4705 = vpow.pop %v4704
      %v4706 = vmul.f32 %v4697, 1.442695
      %v4707 = vpow.pop %v4706
      %v4708 = vmul.f32 %v4698, 1.442695
      %v4709 = vpow.pop %v4708
      %v4710 = vmul.f32 %v4699, 1.442695
      %v4711 = vpow.pop %v4710
      %v4712 = vmul.f32 %v4700, 1.442695
      %v4713 = vpow.pop %v4712
      %v4714 = vmul.f32 %v4701, 1.442695
      %v4715 = vpow.pop %v4714
      %v4716 = vmul.f32 %v4702, 1.442695
      %v4717 = vpow.pop %v4716
      %v4718 = vmul.f32 %v4703, 1.442695
      %v4719 = vpow.pop %v4718
      %v4720 = vmul.f32 %v4681, %v4526
      %v4721 = vmul.f32 %v4683, %v4527
      %v4722 = vmul.f32 %v4685, %v4528
      %v4723 = vmul.f32 %v4687, %v4529
      %v4724 = vmul.f32 %v4689, %v4530
      %v4725 = vmul.f32 %v4691, %v4531
      %v4726 = vmul.f32 %v4693, %v4532
      %v4727 = vmul.f32 %v4695, %v4533
      %v4728 = vsel %vm2437, %v4705, 0.0
      %4729 = vadd.xlane.f32.xlu0 %v4728
      %v4730 = vpop.xlane.xlu0 %4729
      %v4731 = vsel %vm2437, %v4707, 0.0
      %4732 = vadd.xlane.f32.xlu0 %v4731
      %v4733 = vpop.xlane.xlu0 %4732
      %v4734 = vsel %vm2437, %v4709, 0.0
      %4735 = vadd.xlane.f32.xlu0 %v4734
      %v4736 = vpop.xlane.xlu0 %4735
      %v4737 = vsel %vm2437, %v4711, 0.0
      %4738 = vadd.xlane.f32.xlu0 %v4737
      %v4739 = vpop.xlane.xlu0 %4738
      %v4740 = vsel %vm2437, %v4713, 0.0
      %4741 = vadd.xlane.f32.xlu0 %v4740
      %v4742 = vpop.xlane.xlu0 %4741
      %v4743 = vsel %vm2437, %v4715, 0.0
      %4744 = vadd.xlane.f32.xlu0 %v4743
      %v4745 = vpop.xlane.xlu0 %4744
      %v4746 = vsel %vm2437, %v4717, 0.0
      %4747 = vadd.xlane.f32.xlu0 %v4746
      %v4748 = vpop.xlane.xlu0 %4747
      %v4749 = vsel %vm2437, %v4719, 0.0
      %4750 = vadd.xlane.f32.xlu0 %v4749
      %v4751 = vpop.xlane.xlu0 %4750
      %v4752 = vadd.f32 %v4720, %v4730
      %v4753 = vadd.f32 %v4721, %v4733
      %v4754 = vadd.f32 %v4722, %v4736
      %v4755 = vadd.f32 %v4723, %v4739
      %v4756 = vadd.f32 %v4724, %v4742
      %v4757 = vadd.f32 %v4725, %v4745
      %v4758 = vadd.f32 %v4726, %v4748
      %v4759 = vadd.f32 %v4727, %v4751
      %v4760 = vmul.f32 %v4681, %v4591
      %v4761 = vmul.f32 %v4683, %v4592
      %v4762 = vmul.f32 %v4685, %v4593
      %v4763 = vmul.f32 %v4687, %v4594
      %v4764 = vmul.f32 %v4689, %v4595
      %v4765 = vmul.f32 %v4691, %v4596
      %v4766 = vmul.f32 %v4693, %v4597
      %v4767 = vmul.f32 %v4695, %v4598
      %v4768 = vpack.c.bf16 %v4707, %v4705
      %v4769 = vpack.c.bf16 %v4711, %v4709
      %v4770 = vpack.c.bf16 %v4715, %v4713
      %v4771 = vpack.c.bf16 %v4719, %v4717
      %v4776 = vunpack.c.l.b16 %v4377
      %v4777 = vunpack.c.l.b16 %v4378
      %v4778 = vunpack.c.l.b16 %v4379
      %v4779 = vunpack.c.l.b16 %v4380
      %v4780 = vpack.c.b16 %v4777, %v4776
      %v4781 = vpack.c.b16 %v4779, %v4778
      %v4785 = vsel %vm2437, %v4768, 0
      %v4788 = vsel %vm2437, %v4769, 0
      %v4791 = vsel %vm2437, %v4770, 0
      %v4794 = vsel %vm2437, %v4771, 0
      %4796 = vmatpush.bf16.msra.mxu0 0
      %4797 = vmatpush.bf16.msra.mxu0 0
      %4798 = vmatpush.bf16.msra.mxu0 0
      %4799 = vmatpush.bf16.msra.mxu0 0
      %4800 = vmatpush.bf16.msra.mxu0 0
      %4801 = vmatpush.bf16.msra.mxu0 0
      %4802 = vmatpush.bf16.msra.mxu0 %v4781
      %4803 = vmatpush.bf16.msra.mxu0 %v4780
      %4804 = vmatmul.bf16.gmra.mxu0 %v4785
      %v4805 = vpop.f32.mrf.mxu0
      %v4806 = vadd.f32 0.0, %v4805
      %v4807 = vpop.f32.mrf.mxu0
      %v4808 = vadd.f32 0.0, %v4807
      %4809 = vmatmul.bf16.gmra.mxu0 %v4788
      %v4810 = vpop.f32.mrf.mxu0
      %v4811 = vadd.f32 0.0, %v4810
      %v4812 = vpop.f32.mrf.mxu0
      %v4813 = vadd.f32 0.0, %v4812
      %4814 = vmatmul.bf16.gmra.mxu0 %v4791
      %v4815 = vpop.f32.mrf.mxu0
      %v4816 = vadd.f32 0.0, %v4815
      %v4817 = vpop.f32.mrf.mxu0
      %v4818 = vadd.f32 0.0, %v4817
      %4819 = vmatmul.bf16.gmra.mxu0 %v4794
      %v4820 = vpop.f32.mrf.mxu0
      %v4821 = vadd.f32 0.0, %v4820
      %v4822 = vpop.f32.mrf.mxu0
      %v4823 = vadd.f32 0.0, %v4822
      %4824 = vdwg.mxu0
      %v4825 = vadd.f32 %v4760, %v4806
      %v4826 = vadd.f32 %v4761, %v4808
      %v4827 = vadd.f32 %v4762, %v4811
      %v4828 = vadd.f32 %v4763, %v4813
      %v4829 = vadd.f32 %v4764, %v4816
      %v4830 = vadd.f32 %v4765, %v4818
      %v4831 = vadd.f32 %v4766, %v4821
      %v4832 = vadd.f32 %v4767, %v4823
      %v4833 = vrcp.pop %v4752
      %v4834 = vrcp.pop %v4753
      %v4835 = vrcp.pop %v4754
      %v4836 = vrcp.pop %v4755
      %v4837 = vrcp.pop %v4756
      %v4838 = vrcp.pop %v4757
      %v4839 = vrcp.pop %v4758
      %v4840 = vrcp.pop %v4759
      %v4841 = vmul.f32 %v4825, %v4833
      %v4842 = vmul.f32 %v4826, %v4834
      %v4843 = vmul.f32 %v4827, %v4835
      %v4844 = vmul.f32 %v4828, %v4836
      %v4845 = vmul.f32 %v4829, %v4837
      %v4846 = vmul.f32 %v4830, %v4838
      %v4847 = vmul.f32 %v4831, %v4839
      %v4848 = vmul.f32 %v4832, %v4840
      %v4849 = vmul.f32 %v1827, 0.5
      %v4850 = vmul.f32 %v1829, 0.5
      %v4851 = vmul.f32 %v1832, 0.5
      %v4852 = vmul.f32 %v1834, 0.5
      %v4853 = vmul.f32 %v1837, 0.5
      %v4854 = vmul.f32 %v1839, 0.5
      %v4855 = vmul.f32 %v1842, 0.5
      %v4856 = vmul.f32 %v1844, 0.5
      %v4857 = vpack.c.bf16 %v4850, %v4849
      %v4858 = vpack.c.bf16 %v4852, %v4851
      %v4859 = vpack.c.bf16 %v4854, %v4853
      %v4860 = vpack.c.bf16 %v4856, %v4855
      %v4861 = vpack.c.bf16 %v2059, %v2059
      %v4862 = vpack.c.bf16 %v2061, %v2061
      %v4863 = vpack.c.bf16 %v2064, %v2064
      %v4864 = vpack.c.bf16 %v2066, %v2066
      %v4865 = vpack.c.bf16 %v2069, %v2069
      %v4866 = vpack.c.bf16 %v2071, %v2071
      %v4867 = vpack.c.bf16 %v2074, %v2074
      %v4868 = vpack.c.bf16 %v2076, %v2076
      %v4869 = vpack.c.bf16 %v2291, %v2291
      %v4870 = vpack.c.bf16 %v2293, %v2293
      %v4871 = vpack.c.bf16 %v2296, %v2296
      %v4872 = vpack.c.bf16 %v2298, %v2298
      %v4873 = vpack.c.bf16 %v2301, %v2301
      %v4874 = vpack.c.bf16 %v2303, %v2303
      %v4875 = vpack.c.bf16 %v2306, %v2306
      %v4876 = vpack.c.bf16 %v2308, %v2308
      %v4881 = vunpack.c.l.b16 %v4861
      %v4882 = vunpack.c.l.b16 %v4862
      %v4883 = vunpack.c.l.b16 %v4863
      %v4884 = vunpack.c.l.b16 %v4864
      %v4885 = vpack.c.b16 %v4882, %v4881
      %v4886 = vpack.c.b16 %v4884, %v4883
      %4889 = vmatpush.bf16.xpose.msra.mxu0 0
      %4890 = vmatpush.bf16.xpose.msra.mxu0 0
      %4891 = vmatpush.bf16.xpose.msra.mxu0 0
      %4892 = vmatpush.bf16.xpose.msra.mxu0 0
      %4893 = vmatpush.bf16.xpose.msra.mxu0 0
      %4894 = vmatpush.bf16.xpose.msra.mxu0 0
      %4895 = vmatpush.bf16.xpose.msra.mxu0 %v4886
      %4896 = vmatpush.bf16.xpose.msra.mxu0 %v4885
      %4897 = vmatmul.bf16.gmra.mxu0 %v4857
      %v4898 = vpop.f32.mrf.mxu0
      %v4899 = vadd.f32 0.0, %v4898
      %v4900 = vpop.f32.mrf.mxu0
      %v4901 = vadd.f32 0.0, %v4900
      %4902 = vmatmul.bf16.gmra.mxu0 %v4858
      %v4903 = vpop.f32.mrf.mxu0
      %v4904 = vadd.f32 0.0, %v4903
      %v4905 = vpop.f32.mrf.mxu0
      %v4906 = vadd.f32 0.0, %v4905
      %4907 = vmatmul.bf16.gmra.mxu0 %v4859
      %v4908 = vpop.f32.mrf.mxu0
      %v4909 = vadd.f32 0.0, %v4908
      %v4910 = vpop.f32.mrf.mxu0
      %v4911 = vadd.f32 0.0, %v4910
      %4912 = vmatmul.bf16.gmra.mxu0 %v4860
      %v4913 = vpop.f32.mrf.mxu0
      %v4914 = vadd.f32 0.0, %v4913
      %v4915 = vpop.f32.mrf.mxu0
      %v4916 = vadd.f32 0.0, %v4915
      %4917 = vdwg.mxu0
      %v4918 = vsel %vm2437, %v4899, -inf
      %4919 = vmax.xlane.f32.xlu0 %v4918
      %v4920 = vpop.xlane.xlu0 %4919
      %v4921 = vsel %vm2437, %v4901, -inf
      %4922 = vmax.xlane.f32.xlu0 %v4921
      %v4923 = vpop.xlane.xlu0 %4922
      %v4924 = vsel %vm2437, %v4904, -inf
      %4925 = vmax.xlane.f32.xlu0 %v4924
      %v4926 = vpop.xlane.xlu0 %4925
      %v4927 = vsel %vm2437, %v4906, -inf
      %4928 = vmax.xlane.f32.xlu0 %v4927
      %v4929 = vpop.xlane.xlu0 %4928
      %v4930 = vsel %vm2437, %v4909, -inf
      %4931 = vmax.xlane.f32.xlu0 %v4930
      %v4932 = vpop.xlane.xlu0 %4931
      %v4933 = vsel %vm2437, %v4911, -inf
      %4934 = vmax.xlane.f32.xlu0 %v4933
      %v4935 = vpop.xlane.xlu0 %4934
      %v4936 = vsel %vm2437, %v4914, -inf
      %4937 = vmax.xlane.f32.xlu0 %v4936
      %v4938 = vpop.xlane.xlu0 %4937
      %v4939 = vsel %vm2437, %v4916, -inf
      %4940 = vmax.xlane.f32.xlu0 %v4939
      %v4941 = vpop.xlane.xlu0 %4940
      %v4942 = vsub.f32 -inf, %v4920
      %v4943 = vsub.f32 -inf, %v4923
      %v4944 = vsub.f32 -inf, %v4926
      %v4945 = vsub.f32 -inf, %v4929
      %v4946 = vsub.f32 -inf, %v4932
      %v4947 = vsub.f32 -inf, %v4935
      %v4948 = vsub.f32 -inf, %v4938
      %v4949 = vsub.f32 -inf, %v4941
      %v4950 = vmul.f32 %v4942, 1.442695
      %v4951 = vpow.pop %v4950
      %v4952 = vmul.f32 %v4943, 1.442695
      %v4953 = vpow.pop %v4952
      %v4954 = vmul.f32 %v4944, 1.442695
      %v4955 = vpow.pop %v4954
      %v4956 = vmul.f32 %v4945, 1.442695
      %v4957 = vpow.pop %v4956
      %v4958 = vmul.f32 %v4946, 1.442695
      %v4959 = vpow.pop %v4958
      %v4960 = vmul.f32 %v4947, 1.442695
      %v4961 = vpow.pop %v4960
      %v4962 = vmul.f32 %v4948, 1.442695
      %v4963 = vpow.pop %v4962
      %v4964 = vmul.f32 %v4949, 1.442695
      %v4965 = vpow.pop %v4964
      %v4966 = vsub.f32 %v4899, %v4920
      %v4967 = vsub.f32 %v4901, %v4923
      %v4968 = vsub.f32 %v4904, %v4926
      %v4969 = vsub.f32 %v4906, %v4929
      %v4970 = vsub.f32 %v4909, %v4932
      %v4971 = vsub.f32 %v4911, %v4935
      %v4972 = vsub.f32 %v4914, %v4938
      %v4973 = vsub.f32 %v4916, %v4941
      %v4974 = vmul.f32 %v4966, 1.442695
      %v4975 = vpow.pop %v4974
      %v4976 = vmul.f32 %v4967, 1.442695
      %v4977 = vpow.pop %v4976
      %v4978 = vmul.f32 %v4968, 1.442695
      %v4979 = vpow.pop %v4978
      %v4980 = vmul.f32 %v4969, 1.442695
      %v4981 = vpow.pop %v4980
      %v4982 = vmul.f32 %v4970, 1.442695
      %v4983 = vpow.pop %v4982
      %v4984 = vmul.f32 %v4971, 1.442695
      %v4985 = vpow.pop %v4984
      %v4986 = vmul.f32 %v4972, 1.442695
      %v4987 = vpow.pop %v4986
      %v4988 = vmul.f32 %v4973, 1.442695
      %v4989 = vpow.pop %v4988
      %v4990 = vmul.f32 %v4951, 0.0
      %v4991 = vmul.f32 %v4953, 0.0
      %v4992 = vmul.f32 %v4955, 0.0
      %v4993 = vmul.f32 %v4957, 0.0
      %v4994 = vmul.f32 %v4959, 0.0
      %v4995 = vmul.f32 %v4961, 0.0
      %v4996 = vmul.f32 %v4963, 0.0
      %v4997 = vmul.f32 %v4965, 0.0
      %v4998 = vsel %vm2437, %v4975, 0.0
      %4999 = vadd.xlane.f32.xlu0 %v4998
      %v5000 = vpop.xlane.xlu0 %4999
      %v5001 = vsel %vm2437, %v4977, 0.0
      %5002 = vadd.xlane.f32.xlu0 %v5001
      %v5003 = vpop.xlane.xlu0 %5002
      %v5004 = vsel %vm2437, %v4979, 0.0
      %5005 = vadd.xlane.f32.xlu0 %v5004
      %v5006 = vpop.xlane.xlu0 %5005
      %v5007 = vsel %vm2437, %v4981, 0.0
      %5008 = vadd.xlane.f32.xlu0 %v5007
      %v5009 = vpop.xlane.xlu0 %5008
      %v5010 = vsel %vm2437, %v4983, 0.0
      %5011 = vadd.xlane.f32.xlu0 %v5010
      %v5012 = vpop.xlane.xlu0 %5011
      %v5013 = vsel %vm2437, %v4985, 0.0
      %5014 = vadd.xlane.f32.xlu0 %v5013
      %v5015 = vpop.xlane.xlu0 %5014
      %v5016 = vsel %vm2437, %v4987, 0.0
      %5017 = vadd.xlane.f32.xlu0 %v5016
      %v5018 = vpop.xlane.xlu0 %5017
      %v5019 = vsel %vm2437, %v4989, 0.0
      %5020 = vadd.xlane.f32.xlu0 %v5019
      %v5021 = vpop.xlane.xlu0 %5020
      %v5022 = vadd.f32 %v4990, %v5000
      %v5023 = vadd.f32 %v4991, %v5003
      %v5024 = vadd.f32 %v4992, %v5006
      %v5025 = vadd.f32 %v4993, %v5009
      %v5026 = vadd.f32 %v4994, %v5012
      %v5027 = vadd.f32 %v4995, %v5015
      %v5028 = vadd.f32 %v4996, %v5018
      %v5029 = vadd.f32 %v4997, %v5021
      %v5030 = vpack.c.bf16 %v4977, %v4975
      %v5031 = vpack.c.bf16 %v4981, %v4979
      %v5032 = vpack.c.bf16 %v4985, %v4983
      %v5033 = vpack.c.bf16 %v4989, %v4987
      %v5038 = vunpack.c.l.b16 %v4869
      %v5039 = vunpack.c.l.b16 %v4870
      %v5040 = vunpack.c.l.b16 %v4871
      %v5041 = vunpack.c.l.b16 %v4872
      %v5042 = vpack.c.b16 %v5039, %v5038
      %v5043 = vpack.c.b16 %v5041, %v5040
      %v5047 = vsel %vm2437, %v5030, 0
      %v5050 = vsel %vm2437, %v5031, 0
      %v5053 = vsel %vm2437, %v5032, 0
      %v5056 = vsel %vm2437, %v5033, 0
      %5058 = vmatpush.bf16.msra.mxu0 0
      %5059 = vmatpush.bf16.msra.mxu0 0
      %5060 = vmatpush.bf16.msra.mxu0 0
      %5061 = vmatpush.bf16.msra.mxu0 0
      %5062 = vmatpush.bf16.msra.mxu0 0
      %5063 = vmatpush.bf16.msra.mxu0 0
      %5064 = vmatpush.bf16.msra.mxu0 %v5043
      %5065 = vmatpush.bf16.msra.mxu0 %v5042
      %5066 = vmatmul.bf16.gmra.mxu0 %v5047
      %v5067 = vpop.f32.mrf.mxu0
      %v5068 = vadd.f32 0.0, %v5067
      %v5069 = vpop.f32.mrf.mxu0
      %v5070 = vadd.f32 0.0, %v5069
      %5071 = vmatmul.bf16.gmra.mxu0 %v5050
      %v5072 = vpop.f32.mrf.mxu0
      %v5073 = vadd.f32 0.0, %v5072
      %v5074 = vpop.f32.mrf.mxu0
      %v5075 = vadd.f32 0.0, %v5074
      %5076 = vmatmul.bf16.gmra.mxu0 %v5053
      %v5077 = vpop.f32.mrf.mxu0
      %v5078 = vadd.f32 0.0, %v5077
      %v5079 = vpop.f32.mrf.mxu0
      %v5080 = vadd.f32 0.0, %v5079
      %5081 = vmatmul.bf16.gmra.mxu0 %v5056
      %v5082 = vpop.f32.mrf.mxu0
      %v5083 = vadd.f32 0.0, %v5082
      %v5084 = vpop.f32.mrf.mxu0
      %v5085 = vadd.f32 0.0, %v5084
      %5086 = vdwg.mxu0
      %v5087 = vadd.f32 %v4990, %v5068
      %v5088 = vadd.f32 %v4991, %v5070
      %v5089 = vadd.f32 %v4992, %v5073
      %v5090 = vadd.f32 %v4993, %v5075
      %v5091 = vadd.f32 %v4994, %v5078
      %v5092 = vadd.f32 %v4995, %v5080
      %v5093 = vadd.f32 %v4996, %v5083
      %v5094 = vadd.f32 %v4997, %v5085
      %v5099 = vunpack.c.l.b16 %v4865
      %v5100 = vunpack.c.l.b16 %v4866
      %v5101 = vunpack.c.l.b16 %v4867
      %v5102 = vunpack.c.l.b16 %v4868
      %v5103 = vpack.c.b16 %v5100, %v5099
      %v5104 = vpack.c.b16 %v5102, %v5101
      %5107 = vmatpush.bf16.xpose.msra.mxu0 0
      %5108 = vmatpush.bf16.xpose.msra.mxu0 0
      %5109 = vmatpush.bf16.xpose.msra.mxu0 0
      %5110 = vmatpush.bf16.xpose.msra.mxu0 0
      %5111 = vmatpush.bf16.xpose.msra.mxu0 0
      %5112 = vmatpush.bf16.xpose.msra.mxu0 0
      %5113 = vmatpush.bf16.xpose.msra.mxu0 %v5104
      %5114 = vmatpush.bf16.xpose.msra.mxu0 %v5103
      %5115 = vmatmul.bf16.gmra.mxu0 %v4857
      %v5116 = vpop.f32.mrf.mxu0
      %v5117 = vadd.f32 0.0, %v5116
      %v5118 = vpop.f32.mrf.mxu0
      %v5119 = vadd.f32 0.0, %v5118
      %5120 = vmatmul.bf16.gmra.mxu0 %v4858
      %v5121 = vpop.f32.mrf.mxu0
      %v5122 = vadd.f32 0.0, %v5121
      %v5123 = vpop.f32.mrf.mxu0
      %v5124 = vadd.f32 0.0, %v5123
      %5125 = vmatmul.bf16.gmra.mxu0 %v4859
      %v5126 = vpop.f32.mrf.mxu0
      %v5127 = vadd.f32 0.0, %v5126
      %v5128 = vpop.f32.mrf.mxu0
      %v5129 = vadd.f32 0.0, %v5128
      %5130 = vmatmul.bf16.gmra.mxu0 %v4860
      %v5131 = vpop.f32.mrf.mxu0
      %v5132 = vadd.f32 0.0, %v5131
      %v5133 = vpop.f32.mrf.mxu0
      %v5134 = vadd.f32 0.0, %v5133
      %5135 = vdwg.mxu0
      %v5136 = vsel %vm2437, %v5117, -inf
      %5137 = vmax.xlane.f32.xlu0 %v5136
      %v5138 = vpop.xlane.xlu0 %5137
      %v5139 = vsel %vm2437, %v5119, -inf
      %5140 = vmax.xlane.f32.xlu0 %v5139
      %v5141 = vpop.xlane.xlu0 %5140
      %v5142 = vsel %vm2437, %v5122, -inf
      %5143 = vmax.xlane.f32.xlu0 %v5142
      %v5144 = vpop.xlane.xlu0 %5143
      %v5145 = vsel %vm2437, %v5124, -inf
      %5146 = vmax.xlane.f32.xlu0 %v5145
      %v5147 = vpop.xlane.xlu0 %5146
      %v5148 = vsel %vm2437, %v5127, -inf
      %5149 = vmax.xlane.f32.xlu0 %v5148
      %v5150 = vpop.xlane.xlu0 %5149
      %v5151 = vsel %vm2437, %v5129, -inf
      %5152 = vmax.xlane.f32.xlu0 %v5151
      %v5153 = vpop.xlane.xlu0 %5152
      %v5154 = vsel %vm2437, %v5132, -inf
      %5155 = vmax.xlane.f32.xlu0 %v5154
      %v5156 = vpop.xlane.xlu0 %5155
      %v5157 = vsel %vm2437, %v5134, -inf
      %5158 = vmax.xlane.f32.xlu0 %v5157
      %v5159 = vpop.xlane.xlu0 %5158
      %v5160 = vmax.f32 %v4920, %v5138
      %v5161 = vmax.f32 %v4923, %v5141
      %v5162 = vmax.f32 %v4926, %v5144
      %v5163 = vmax.f32 %v4929, %v5147
      %v5164 = vmax.f32 %v4932, %v5150
      %v5165 = vmax.f32 %v4935, %v5153
      %v5166 = vmax.f32 %v4938, %v5156
      %v5167 = vmax.f32 %v4941, %v5159
      %v5168 = vsub.f32 %v4920, %v5160
      %v5169 = vsub.f32 %v4923, %v5161
      %v5170 = vsub.f32 %v4926, %v5162
      %v5171 = vsub.f32 %v4929, %v5163
      %v5172 = vsub.f32 %v4932, %v5164
      %v5173 = vsub.f32 %v4935, %v5165
      %v5174 = vsub.f32 %v4938, %v5166
      %v5175 = vsub.f32 %v4941, %v5167
      %v5176 = vmul.f32 %v5168, 1.442695
      %v5177 = vpow.pop %v5176
      %v5178 = vmul.f32 %v5169, 1.442695
      %v5179 = vpow.pop %v5178
      %v5180 = vmul.f32 %v5170, 1.442695
      %v5181 = vpow.pop %v5180
      %v5182 = vmul.f32 %v5171, 1.442695
      %v5183 = vpow.pop %v5182
      %v5184 = vmul.f32 %v5172, 1.442695
      %v5185 = vpow.pop %v5184
      %v5186 = vmul.f32 %v5173, 1.442695
      %v5187 = vpow.pop %v5186
      %v5188 = vmul.f32 %v5174, 1.442695
      %v5189 = vpow.pop %v5188
      %v5190 = vmul.f32 %v5175, 1.442695
      %v5191 = vpow.pop %v5190
      %v5192 = vsub.f32 %v5117, %v5160
      %v5193 = vsub.f32 %v5119, %v5161
      %v5194 = vsub.f32 %v5122, %v5162
      %v5195 = vsub.f32 %v5124, %v5163
      %v5196 = vsub.f32 %v5127, %v5164
      %v5197 = vsub.f32 %v5129, %v5165
      %v5198 = vsub.f32 %v5132, %v5166
      %v5199 = vsub.f32 %v5134, %v5167
      %v5200 = vmul.f32 %v5192, 1.442695
      %v5201 = vpow.pop %v5200
      %v5202 = vmul.f32 %v5193, 1.442695
      %v5203 = vpow.pop %v5202
      %v5204 = vmul.f32 %v5194, 1.442695
      %v5205 = vpow.pop %v5204
      %v5206 = vmul.f32 %v5195, 1.442695
      %v5207 = vpow.pop %v5206
      %v5208 = vmul.f32 %v5196, 1.442695
      %v5209 = vpow.pop %v5208
      %v5210 = vmul.f32 %v5197, 1.442695
      %v5211 = vpow.pop %v5210
      %v5212 = vmul.f32 %v5198, 1.442695
      %v5213 = vpow.pop %v5212
      %v5214 = vmul.f32 %v5199, 1.442695
      %v5215 = vpow.pop %v5214
      %v5216 = vmul.f32 %v5177, %v5022
      %v5217 = vmul.f32 %v5179, %v5023
      %v5218 = vmul.f32 %v5181, %v5024
      %v5219 = vmul.f32 %v5183, %v5025
      %v5220 = vmul.f32 %v5185, %v5026
      %v5221 = vmul.f32 %v5187, %v5027
      %v5222 = vmul.f32 %v5189, %v5028
      %v5223 = vmul.f32 %v5191, %v5029
      %v5224 = vsel %vm2437, %v5201, 0.0
      %5225 = vadd.xlane.f32.xlu0 %v5224
      %v5226 = vpop.xlane.xlu0 %5225
      %v5227 = vsel %vm2437, %v5203, 0.0
      %5228 = vadd.xlane.f32.xlu0 %v5227
      %v5229 = vpop.xlane.xlu0 %5228
      %v5230 = vsel %vm2437, %v5205, 0.0
      %5231 = vadd.xlane.f32.xlu0 %v5230
      %v5232 = vpop.xlane.xlu0 %5231
      %v5233 = vsel %vm2437, %v5207, 0.0
      %5234 = vadd.xlane.f32.xlu0 %v5233
      %v5235 = vpop.xlane.xlu0 %5234
      %v5236 = vsel %vm2437, %v5209, 0.0
      %5237 = vadd.xlane.f32.xlu0 %v5236
      %v5238 = vpop.xlane.xlu0 %5237
      %v5239 = vsel %vm2437, %v5211, 0.0
      %5240 = vadd.xlane.f32.xlu0 %v5239
      %v5241 = vpop.xlane.xlu0 %5240
      %v5242 = vsel %vm2437, %v5213, 0.0
      %5243 = vadd.xlane.f32.xlu0 %v5242
      %v5244 = vpop.xlane.xlu0 %5243
      %v5245 = vsel %vm2437, %v5215, 0.0
      %5246 = vadd.xlane.f32.xlu0 %v5245
      %v5247 = vpop.xlane.xlu0 %5246
      %v5248 = vadd.f32 %v5216, %v5226
      %v5249 = vadd.f32 %v5217, %v5229
      %v5250 = vadd.f32 %v5218, %v5232
      %v5251 = vadd.f32 %v5219, %v5235
      %v5252 = vadd.f32 %v5220, %v5238
      %v5253 = vadd.f32 %v5221, %v5241
      %v5254 = vadd.f32 %v5222, %v5244
      %v5255 = vadd.f32 %v5223, %v5247
      %v5256 = vmul.f32 %v5177, %v5087
      %v5257 = vmul.f32 %v5179, %v5088
      %v5258 = vmul.f32 %v5181, %v5089
      %v5259 = vmul.f32 %v5183, %v5090
      %v5260 = vmul.f32 %v5185, %v5091
      %v5261 = vmul.f32 %v5187, %v5092
      %v5262 = vmul.f32 %v5189, %v5093
      %v5263 = vmul.f32 %v5191, %v5094
      %v5264 = vpack.c.bf16 %v5203, %v5201
      %v5265 = vpack.c.bf16 %v5207, %v5205
      %v5266 = vpack.c.bf16 %v5211, %v5209
      %v5267 = vpack.c.bf16 %v5215, %v5213
      %v5272 = vunpack.c.l.b16 %v4873
      %v5273 = vunpack.c.l.b16 %v4874
      %v5274 = vunpack.c.l.b16 %v4875
      %v5275 = vunpack.c.l.b16 %v4876
      %v5276 = vpack.c.b16 %v5273, %v5272
      %v5277 = vpack.c.b16 %v5275, %v5274
      %v5281 = vsel %vm2437, %v5264, 0
      %v5284 = vsel %vm2437, %v5265, 0
      %v5287 = vsel %vm2437, %v5266, 0
      %v5290 = vsel %vm2437, %v5267, 0
      %5292 = vmatpush.bf16.msra.mxu0 0
      %5293 = vmatpush.bf16.msra.mxu0 0
      %5294 = vmatpush.bf16.msra.mxu0 0
      %5295 = vmatpush.bf16.msra.mxu0 0
      %5296 = vmatpush.bf16.msra.mxu0 0
      %5297 = vmatpush.bf16.msra.mxu0 0
      %5298 = vmatpush.bf16.msra.mxu0 %v5277
      %5299 = vmatpush.bf16.msra.mxu0 %v5276
      %5300 = vmatmul.bf16.gmra.mxu0 %v5281
      %v5301 = vpop.f32.mrf.mxu0
      %v5302 = vadd.f32 0.0, %v5301
      %v5303 = vpop.f32.mrf.mxu0
      %v5304 = vadd.f32 0.0, %v5303
      %5305 = vmatmul.bf16.gmra.mxu0 %v5284
      %v5306 = vpop.f32.mrf.mxu0
      %v5307 = vadd.f32 0.0, %v5306
      %v5308 = vpop.f32.mrf.mxu0
      %v5309 = vadd.f32 0.0, %v5308
      %5310 = vmatmul.bf16.gmra.mxu0 %v5287
      %v5311 = vpop.f32.mrf.mxu0
      %v5312 = vadd.f32 0.0, %v5311
      %v5313 = vpop.f32.mrf.mxu0
      %v5314 = vadd.f32 0.0, %v5313
      %5315 = vmatmul.bf16.gmra.mxu0 %v5290
      %v5316 = vpop.f32.mrf.mxu0
      %v5317 = vadd.f32 0.0, %v5316
      %v5318 = vpop.f32.mrf.mxu0
      %v5319 = vadd.f32 0.0, %v5318
      %5320 = vdwg.mxu0
      %v5321 = vadd.f32 %v5256, %v5302
      %v5322 = vadd.f32 %v5257, %v5304
      %v5323 = vadd.f32 %v5258, %v5307
      %v5324 = vadd.f32 %v5259, %v5309
      %v5325 = vadd.f32 %v5260, %v5312
      %v5326 = vadd.f32 %v5261, %v5314
      %v5327 = vadd.f32 %v5262, %v5317
      %v5328 = vadd.f32 %v5263, %v5319
      %v5329 = vrcp.pop %v5248
      %v5330 = vrcp.pop %v5249
      %v5331 = vrcp.pop %v5250
      %v5332 = vrcp.pop %v5251
      %v5333 = vrcp.pop %v5252
      %v5334 = vrcp.pop %v5253
      %v5335 = vrcp.pop %v5254
      %v5336 = vrcp.pop %v5255
      %v5337 = vmul.f32 %v5321, %v5329
      %v5338 = vmul.f32 %v5322, %v5330
      %v5339 = vmul.f32 %v5323, %v5331
      %v5340 = vmul.f32 %v5324, %v5332
      %v5341 = vmul.f32 %v5325, %v5333
      %v5342 = vmul.f32 %v5326, %v5334
      %v5343 = vmul.f32 %v5327, %v5335
      %v5344 = vmul.f32 %v5328, %v5336
      %v5345 = vmul.f32 %v1856, 0.5
      %v5346 = vmul.f32 %v1858, 0.5
      %v5347 = vmul.f32 %v1861, 0.5
      %v5348 = vmul.f32 %v1863, 0.5
      %v5349 = vmul.f32 %v1866, 0.5
      %v5350 = vmul.f32 %v1868, 0.5
      %v5351 = vmul.f32 %v1871, 0.5
      %v5352 = vmul.f32 %v1873, 0.5
      %v5353 = vpack.c.bf16 %v5346, %v5345
      %v5354 = vpack.c.bf16 %v5348, %v5347
      %v5355 = vpack.c.bf16 %v5350, %v5349
      %v5356 = vpack.c.bf16 %v5352, %v5351
      %v5357 = vpack.c.bf16 %v2088, %v2088
      %v5358 = vpack.c.bf16 %v2090, %v2090
      %v5359 = vpack.c.bf16 %v2093, %v2093
      %v5360 = vpack.c.bf16 %v2095, %v2095
      %v5361 = vpack.c.bf16 %v2098, %v2098
      %v5362 = vpack.c.bf16 %v2100, %v2100
      %v5363 = vpack.c.bf16 %v2103, %v2103
      %v5364 = vpack.c.bf16 %v2105, %v2105
      %v5365 = vpack.c.bf16 %v2320, %v2320
      %v5366 = vpack.c.bf16 %v2322, %v2322
      %v5367 = vpack.c.bf16 %v2325, %v2325
      %v5368 = vpack.c.bf16 %v2327, %v2327
      %v5369 = vpack.c.bf16 %v2330, %v2330
      %v5370 = vpack.c.bf16 %v2332, %v2332
      %v5371 = vpack.c.bf16 %v2335, %v2335
      %v5372 = vpack.c.bf16 %v2337, %v2337
      %v5377 = vunpack.c.l.b16 %v5357
      %v5378 = vunpack.c.l.b16 %v5358
      %v5379 = vunpack.c.l.b16 %v5359
      %v5380 = vunpack.c.l.b16 %v5360
      %v5381 = vpack.c.b16 %v5378, %v5377
      %v5382 = vpack.c.b16 %v5380, %v5379
      %5385 = vmatpush.bf16.xpose.msra.mxu0 0
      %5386 = vmatpush.bf16.xpose.msra.mxu0 0
      %5387 = vmatpush.bf16.xpose.msra.mxu0 0
      %5388 = vmatpush.bf16.xpose.msra.mxu0 0
      %5389 = vmatpush.bf16.xpose.msra.mxu0 0
      %5390 = vmatpush.bf16.xpose.msra.mxu0 0
      %5391 = vmatpush.bf16.xpose.msra.mxu0 %v5382
      %5392 = vmatpush.bf16.xpose.msra.mxu0 %v5381
      %5393 = vmatmul.bf16.gmra.mxu0 %v5353
      %v5394 = vpop.f32.mrf.mxu0
      %v5395 = vadd.f32 0.0, %v5394
      %v5396 = vpop.f32.mrf.mxu0
      %v5397 = vadd.f32 0.0, %v5396
      %5398 = vmatmul.bf16.gmra.mxu0 %v5354
      %v5399 = vpop.f32.mrf.mxu0
      %v5400 = vadd.f32 0.0, %v5399
      %v5401 = vpop.f32.mrf.mxu0
      %v5402 = vadd.f32 0.0, %v5401
      %5403 = vmatmul.bf16.gmra.mxu0 %v5355
      %v5404 = vpop.f32.mrf.mxu0
      %v5405 = vadd.f32 0.0, %v5404
      %v5406 = vpop.f32.mrf.mxu0
      %v5407 = vadd.f32 0.0, %v5406
      %5408 = vmatmul.bf16.gmra.mxu0 %v5356
      %v5409 = vpop.f32.mrf.mxu0
      %v5410 = vadd.f32 0.0, %v5409
      %v5411 = vpop.f32.mrf.mxu0
      %v5412 = vadd.f32 0.0, %v5411
      %5413 = vdwg.mxu0
      %v5414 = vsel %vm2437, %v5395, -inf
      %5415 = vmax.xlane.f32.xlu0 %v5414
      %v5416 = vpop.xlane.xlu0 %5415
      %v5417 = vsel %vm2437, %v5397, -inf
      %5418 = vmax.xlane.f32.xlu0 %v5417
      %v5419 = vpop.xlane.xlu0 %5418
      %v5420 = vsel %vm2437, %v5400, -inf
      %5421 = vmax.xlane.f32.xlu0 %v5420
      %v5422 = vpop.xlane.xlu0 %5421
      %v5423 = vsel %vm2437, %v5402, -inf
      %5424 = vmax.xlane.f32.xlu0 %v5423
      %v5425 = vpop.xlane.xlu0 %5424
      %v5426 = vsel %vm2437, %v5405, -inf
      %5427 = vmax.xlane.f32.xlu0 %v5426
      %v5428 = vpop.xlane.xlu0 %5427
      %v5429 = vsel %vm2437, %v5407, -inf
      %5430 = vmax.xlane.f32.xlu0 %v5429
      %v5431 = vpop.xlane.xlu0 %5430
      %v5432 = vsel %vm2437, %v5410, -inf
      %5433 = vmax.xlane.f32.xlu0 %v5432
      %v5434 = vpop.xlane.xlu0 %5433
      %v5435 = vsel %vm2437, %v5412, -inf
      %5436 = vmax.xlane.f32.xlu0 %v5435
      %v5437 = vpop.xlane.xlu0 %5436
      %v5438 = vsub.f32 -inf, %v5416
      %v5439 = vsub.f32 -inf, %v5419
      %v5440 = vsub.f32 -inf, %v5422
      %v5441 = vsub.f32 -inf, %v5425
      %v5442 = vsub.f32 -inf, %v5428
      %v5443 = vsub.f32 -inf, %v5431
      %v5444 = vsub.f32 -inf, %v5434
      %v5445 = vsub.f32 -inf, %v5437
      %v5446 = vmul.f32 %v5438, 1.442695
      %v5447 = vpow.pop %v5446
      %v5448 = vmul.f32 %v5439, 1.442695
      %v5449 = vpow.pop %v5448
      %v5450 = vmul.f32 %v5440, 1.442695
      %v5451 = vpow.pop %v5450
      %v5452 = vmul.f32 %v5441, 1.442695
      %v5453 = vpow.pop %v5452
      %v5454 = vmul.f32 %v5442, 1.442695
      %v5455 = vpow.pop %v5454
      %v5456 = vmul.f32 %v5443, 1.442695
      %v5457 = vpow.pop %v5456
      %v5458 = vmul.f32 %v5444, 1.442695
      %v5459 = vpow.pop %v5458
      %v5460 = vmul.f32 %v5445, 1.442695
      %v5461 = vpow.pop %v5460
      %v5462 = vsub.f32 %v5395, %v5416
      %v5463 = vsub.f32 %v5397, %v5419
      %v5464 = vsub.f32 %v5400, %v5422
      %v5465 = vsub.f32 %v5402, %v5425
      %v5466 = vsub.f32 %v5405, %v5428
      %v5467 = vsub.f32 %v5407, %v5431
      %v5468 = vsub.f32 %v5410, %v5434
      %v5469 = vsub.f32 %v5412, %v5437
      %v5470 = vmul.f32 %v5462, 1.442695
      %v5471 = vpow.pop %v5470
      %v5472 = vmul.f32 %v5463, 1.442695
      %v5473 = vpow.pop %v5472
      %v5474 = vmul.f32 %v5464, 1.442695
      %v5475 = vpow.pop %v5474
      %v5476 = vmul.f32 %v5465, 1.442695
      %v5477 = vpow.pop %v5476
      %v5478 = vmul.f32 %v5466, 1.442695
      %v5479 = vpow.pop %v5478
      %v5480 = vmul.f32 %v5467, 1.442695
      %v5481 = vpow.pop %v5480
      %v5482 = vmul.f32 %v5468, 1.442695
      %v5483 = vpow.pop %v5482
      %v5484 = vmul.f32 %v5469, 1.442695
      %v5485 = vpow.pop %v5484
      %v5486 = vmul.f32 %v5447, 0.0
      %v5487 = vmul.f32 %v5449, 0.0
      %v5488 = vmul.f32 %v5451, 0.0
      %v5489 = vmul.f32 %v5453, 0.0
      %v5490 = vmul.f32 %v5455, 0.0
      %v5491 = vmul.f32 %v5457, 0.0
      %v5492 = vmul.f32 %v5459, 0.0
      %v5493 = vmul.f32 %v5461, 0.0
      %v5494 = vsel %vm2437, %v5471, 0.0
      %5495 = vadd.xlane.f32.xlu0 %v5494
      %v5496 = vpop.xlane.xlu0 %5495
      %v5497 = vsel %vm2437, %v5473, 0.0
      %5498 = vadd.xlane.f32.xlu0 %v5497
      %v5499 = vpop.xlane.xlu0 %5498
      %v5500 = vsel %vm2437, %v5475, 0.0
      %5501 = vadd.xlane.f32.xlu0 %v5500
      %v5502 = vpop.xlane.xlu0 %5501
      %v5503 = vsel %vm2437, %v5477, 0.0
      %5504 = vadd.xlane.f32.xlu0 %v5503
      %v5505 = vpop.xlane.xlu0 %5504
      %v5506 = vsel %vm2437, %v5479, 0.0
      %5507 = vadd.xlane.f32.xlu0 %v5506
      %v5508 = vpop.xlane.xlu0 %5507
      %v5509 = vsel %vm2437, %v5481, 0.0
      %5510 = vadd.xlane.f32.xlu0 %v5509
      %v5511 = vpop.xlane.xlu0 %5510
      %v5512 = vsel %vm2437, %v5483, 0.0
      %5513 = vadd.xlane.f32.xlu0 %v5512
      %v5514 = vpop.xlane.xlu0 %5513
      %v5515 = vsel %vm2437, %v5485, 0.0
      %5516 = vadd.xlane.f32.xlu0 %v5515
      %v5517 = vpop.xlane.xlu0 %5516
      %v5518 = vadd.f32 %v5486, %v5496
      %v5519 = vadd.f32 %v5487, %v5499
      %v5520 = vadd.f32 %v5488, %v5502
      %v5521 = vadd.f32 %v5489, %v5505
      %v5522 = vadd.f32 %v5490, %v5508
      %v5523 = vadd.f32 %v5491, %v5511
      %v5524 = vadd.f32 %v5492, %v5514
      %v5525 = vadd.f32 %v5493, %v5517
      %v5526 = vpack.c.bf16 %v5473, %v5471
      %v5527 = vpack.c.bf16 %v5477, %v5475
      %v5528 = vpack.c.bf16 %v5481, %v5479
      %v5529 = vpack.c.bf16 %v5485, %v5483
      %v5534 = vunpack.c.l.b16 %v5365
      %v5535 = vunpack.c.l.b16 %v5366
      %v5536 = vunpack.c.l.b16 %v5367
      %v5537 = vunpack.c.l.b16 %v5368
      %v5538 = vpack.c.b16 %v5535, %v5534
      %v5539 = vpack.c.b16 %v5537, %v5536
      %v5543 = vsel %vm2437, %v5526, 0
      %v5546 = vsel %vm2437, %v5527, 0
      %v5549 = vsel %vm2437, %v5528, 0
      %v5552 = vsel %vm2437, %v5529, 0
      %5554 = vmatpush.bf16.msra.mxu0 0
      %5555 = vmatpush.bf16.msra.mxu0 0
      %5556 = vmatpush.bf16.msra.mxu0 0
      %5557 = vmatpush.bf16.msra.mxu0 0
      %5558 = vmatpush.bf16.msra.mxu0 0
      %5559 = vmatpush.bf16.msra.mxu0 0
      %5560 = vmatpush.bf16.msra.mxu0 %v5539
      %5561 = vmatpush.bf16.msra.mxu0 %v5538
      %5562 = vmatmul.bf16.gmra.mxu0 %v5543
      %v5563 = vpop.f32.mrf.mxu0
      %v5564 = vadd.f32 0.0, %v5563
      %v5565 = vpop.f32.mrf.mxu0
      %v5566 = vadd.f32 0.0, %v5565
      %5567 = vmatmul.bf16.gmra.mxu0 %v5546
      %v5568 = vpop.f32.mrf.mxu0
      %v5569 = vadd.f32 0.0, %v5568
      %v5570 = vpop.f32.mrf.mxu0
      %v5571 = vadd.f32 0.0, %v5570
      %5572 = vmatmul.bf16.gmra.mxu0 %v5549
      %v5573 = vpop.f32.mrf.mxu0
      %v5574 = vadd.f32 0.0, %v5573
      %v5575 = vpop.f32.mrf.mxu0
      %v5576 = vadd.f32 0.0, %v5575
      %5577 = vmatmul.bf16.gmra.mxu0 %v5552
      %v5578 = vpop.f32.mrf.mxu0
      %v5579 = vadd.f32 0.0, %v5578
      %v5580 = vpop.f32.mrf.mxu0
      %v5581 = vadd.f32 0.0, %v5580
      %5582 = vdwg.mxu0
      %v5583 = vadd.f32 %v5486, %v5564
      %v5584 = vadd.f32 %v5487, %v5566
      %v5585 = vadd.f32 %v5488, %v5569
      %v5586 = vadd.f32 %v5489, %v5571
      %v5587 = vadd.f32 %v5490, %v5574
      %v5588 = vadd.f32 %v5491, %v5576
      %v5589 = vadd.f32 %v5492, %v5579
      %v5590 = vadd.f32 %v5493, %v5581
      %v5595 = vunpack.c.l.b16 %v5361
      %v5596 = vunpack.c.l.b16 %v5362
      %v5597 = vunpack.c.l.b16 %v5363
      %v5598 = vunpack.c.l.b16 %v5364
      %v5599 = vpack.c.b16 %v5596, %v5595
      %v5600 = vpack.c.b16 %v5598, %v5597
      %5603 = vmatpush.bf16.xpose.msra.mxu0 0
      %5604 = vmatpush.bf16.xpose.msra.mxu0 0
      %5605 = vmatpush.bf16.xpose.msra.mxu0 0
      %5606 = vmatpush.bf16.xpose.msra.mxu0 0
      %5607 = vmatpush.bf16.xpose.msra.mxu0 0
      %5608 = vmatpush.bf16.xpose.msra.mxu0 0
      %5609 = vmatpush.bf16.xpose.msra.mxu0 %v5600
      %5610 = vmatpush.bf16.xpose.msra.mxu0 %v5599
      %5611 = vmatmul.bf16.gmra.mxu0 %v5353
      %v5612 = vpop.f32.mrf.mxu0
      %v5613 = vadd.f32 0.0, %v5612
      %v5614 = vpop.f32.mrf.mxu0
      %v5615 = vadd.f32 0.0, %v5614
      %5616 = vmatmul.bf16.gmra.mxu0 %v5354
      %v5617 = vpop.f32.mrf.mxu0
      %v5618 = vadd.f32 0.0, %v5617
      %v5619 = vpop.f32.mrf.mxu0
      %v5620 = vadd.f32 0.0, %v5619
      %5621 = vmatmul.bf16.gmra.mxu0 %v5355
      %v5622 = vpop.f32.mrf.mxu0
      %v5623 = vadd.f32 0.0, %v5622
      %v5624 = vpop.f32.mrf.mxu0
      %v5625 = vadd.f32 0.0, %v5624
      %5626 = vmatmul.bf16.gmra.mxu0 %v5356
      %v5627 = vpop.f32.mrf.mxu0
      %v5628 = vadd.f32 0.0, %v5627
      %v5629 = vpop.f32.mrf.mxu0
      %v5630 = vadd.f32 0.0, %v5629
      %5631 = vdwg.mxu0
      %v5632 = vsel %vm2437, %v5613, -inf
      %5633 = vmax.xlane.f32.xlu0 %v5632
      %v5634 = vpop.xlane.xlu0 %5633
      %v5635 = vsel %vm2437, %v5615, -inf
      %5636 = vmax.xlane.f32.xlu0 %v5635
      %v5637 = vpop.xlane.xlu0 %5636
      %v5638 = vsel %vm2437, %v5618, -inf
      %5639 = vmax.xlane.f32.xlu0 %v5638
      %v5640 = vpop.xlane.xlu0 %5639
      %v5641 = vsel %vm2437, %v5620, -inf
      %5642 = vmax.xlane.f32.xlu0 %v5641
      %v5643 = vpop.xlane.xlu0 %5642
      %v5644 = vsel %vm2437, %v5623, -inf
      %5645 = vmax.xlane.f32.xlu0 %v5644
      %v5646 = vpop.xlane.xlu0 %5645
      %v5647 = vsel %vm2437, %v5625, -inf
      %5648 = vmax.xlane.f32.xlu0 %v5647
      %v5649 = vpop.xlane.xlu0 %5648
      %v5650 = vsel %vm2437, %v5628, -inf
      %5651 = vmax.xlane.f32.xlu0 %v5650
      %v5652 = vpop.xlane.xlu0 %5651
      %v5653 = vsel %vm2437, %v5630, -inf
      %5654 = vmax.xlane.f32.xlu0 %v5653
      %v5655 = vpop.xlane.xlu0 %5654
      %v5656 = vmax.f32 %v5416, %v5634
      %v5657 = vmax.f32 %v5419, %v5637
      %v5658 = vmax.f32 %v5422, %v5640
      %v5659 = vmax.f32 %v5425, %v5643
      %v5660 = vmax.f32 %v5428, %v5646
      %v5661 = vmax.f32 %v5431, %v5649
      %v5662 = vmax.f32 %v5434, %v5652
      %v5663 = vmax.f32 %v5437, %v5655
      %v5664 = vsub.f32 %v5416, %v5656
      %v5665 = vsub.f32 %v5419, %v5657
      %v5666 = vsub.f32 %v5422, %v5658
      %v5667 = vsub.f32 %v5425, %v5659
      %v5668 = vsub.f32 %v5428, %v5660
      %v5669 = vsub.f32 %v5431, %v5661
      %v5670 = vsub.f32 %v5434, %v5662
      %v5671 = vsub.f32 %v5437, %v5663
      %v5672 = vmul.f32 %v5664, 1.442695
      %v5673 = vpow.pop %v5672
      %v5674 = vmul.f32 %v5665, 1.442695
      %v5675 = vpow.pop %v5674
      %v5676 = vmul.f32 %v5666, 1.442695
      %v5677 = vpow.pop %v5676
      %v5678 = vmul.f32 %v5667, 1.442695
      %v5679 = vpow.pop %v5678
      %v5680 = vmul.f32 %v5668, 1.442695
      %v5681 = vpow.pop %v5680
      %v5682 = vmul.f32 %v5669, 1.442695
      %v5683 = vpow.pop %v5682
      %v5684 = vmul.f32 %v5670, 1.442695
      %v5685 = vpow.pop %v5684
      %v5686 = vmul.f32 %v5671, 1.442695
      %v5687 = vpow.pop %v5686
      %v5688 = vsub.f32 %v5613, %v5656
      %v5689 = vsub.f32 %v5615, %v5657
      %v5690 = vsub.f32 %v5618, %v5658
      %v5691 = vsub.f32 %v5620, %v5659
      %v5692 = vsub.f32 %v5623, %v5660
      %v5693 = vsub.f32 %v5625, %v5661
      %v5694 = vsub.f32 %v5628, %v5662
      %v5695 = vsub.f32 %v5630, %v5663
      %v5696 = vmul.f32 %v5688, 1.442695
      %v5697 = vpow.pop %v5696
      %v5698 = vmul.f32 %v5689, 1.442695
      %v5699 = vpow.pop %v5698
      %v5700 = vmul.f32 %v5690, 1.442695
      %v5701 = vpow.pop %v5700
      %v5702 = vmul.f32 %v5691, 1.442695
      %v5703 = vpow.pop %v5702
      %v5704 = vmul.f32 %v5692, 1.442695
      %v5705 = vpow.pop %v5704
      %v5706 = vmul.f32 %v5693, 1.442695
      %v5707 = vpow.pop %v5706
      %v5708 = vmul.f32 %v5694, 1.442695
      %v5709 = vpow.pop %v5708
      %v5710 = vmul.f32 %v5695, 1.442695
      %v5711 = vpow.pop %v5710
      %v5712 = vmul.f32 %v5673, %v5518
      %v5713 = vmul.f32 %v5675, %v5519
      %v5714 = vmul.f32 %v5677, %v5520
      %v5715 = vmul.f32 %v5679, %v5521
      %v5716 = vmul.f32 %v5681, %v5522
      %v5717 = vmul.f32 %v5683, %v5523
      %v5718 = vmul.f32 %v5685, %v5524
      %v5719 = vmul.f32 %v5687, %v5525
      %v5720 = vsel %vm2437, %v5697, 0.0
      %5721 = vadd.xlane.f32.xlu0 %v5720
      %v5722 = vpop.xlane.xlu0 %5721
      %v5723 = vsel %vm2437, %v5699, 0.0
      %5724 = vadd.xlane.f32.xlu0 %v5723
      %v5725 = vpop.xlane.xlu0 %5724
      %v5726 = vsel %vm2437, %v5701, 0.0
      %5727 = vadd.xlane.f32.xlu0 %v5726
      %v5728 = vpop.xlane.xlu0 %5727
      %v5729 = vsel %vm2437, %v5703, 0.0
      %5730 = vadd.xlane.f32.xlu0 %v5729
      %v5731 = vpop.xlane.xlu0 %5730
      %v5732 = vsel %vm2437, %v5705, 0.0
      %5733 = vadd.xlane.f32.xlu0 %v5732
      %v5734 = vpop.xlane.xlu0 %5733
      %v5735 = vsel %vm2437, %v5707, 0.0
      %5736 = vadd.xlane.f32.xlu0 %v5735
      %v5737 = vpop.xlane.xlu0 %5736
      %v5738 = vsel %vm2437, %v5709, 0.0
      %5739 = vadd.xlane.f32.xlu0 %v5738
      %v5740 = vpop.xlane.xlu0 %5739
      %v5741 = vsel %vm2437, %v5711, 0.0
      %5742 = vadd.xlane.f32.xlu0 %v5741
      %v5743 = vpop.xlane.xlu0 %5742
      %v5744 = vadd.f32 %v5712, %v5722
      %v5745 = vadd.f32 %v5713, %v5725
      %v5746 = vadd.f32 %v5714, %v5728
      %v5747 = vadd.f32 %v5715, %v5731
      %v5748 = vadd.f32 %v5716, %v5734
      %v5749 = vadd.f32 %v5717, %v5737
      %v5750 = vadd.f32 %v5718, %v5740
      %v5751 = vadd.f32 %v5719, %v5743
      %v5752 = vmul.f32 %v5673, %v5583
      %v5753 = vmul.f32 %v5675, %v5584
      %v5754 = vmul.f32 %v5677, %v5585
      %v5755 = vmul.f32 %v5679, %v5586
      %v5756 = vmul.f32 %v5681, %v5587
      %v5757 = vmul.f32 %v5683, %v5588
      %v5758 = vmul.f32 %v5685, %v5589
      %v5759 = vmul.f32 %v5687, %v5590
      %v5760 = vpack.c.bf16 %v5699, %v5697
      %v5761 = vpack.c.bf16 %v5703, %v5701
      %v5762 = vpack.c.bf16 %v5707, %v5705
      %v5763 = vpack.c.bf16 %v5711, %v5709
      %v5768 = vunpack.c.l.b16 %v5369
      %v5769 = vunpack.c.l.b16 %v5370
      %v5770 = vunpack.c.l.b16 %v5371
      %v5771 = vunpack.c.l.b16 %v5372
      %v5772 = vpack.c.b16 %v5769, %v5768
      %v5773 = vpack.c.b16 %v5771, %v5770
      %v5777 = vsel %vm2437, %v5760, 0
      %v5780 = vsel %vm2437, %v5761, 0
      %v5783 = vsel %vm2437, %v5762, 0
      %v5786 = vsel %vm2437, %v5763, 0
      %5788 = vmatpush.bf16.msra.mxu0 0
      %5789 = vmatpush.bf16.msra.mxu0 0
      %5790 = vmatpush.bf16.msra.mxu0 0
      %5791 = vmatpush.bf16.msra.mxu0 0
      %5792 = vmatpush.bf16.msra.mxu0 0
      %5793 = vmatpush.bf16.msra.mxu0 0
      %5794 = vmatpush.bf16.msra.mxu0 %v5773
      %5795 = vmatpush.bf16.msra.mxu0 %v5772
      %5796 = vmatmul.bf16.gmra.mxu0 %v5777
      %v5797 = vpop.f32.mrf.mxu0
      %v5798 = vadd.f32 0.0, %v5797
      %v5799 = vpop.f32.mrf.mxu0
      %v5800 = vadd.f32 0.0, %v5799
      %5801 = vmatmul.bf16.gmra.mxu0 %v5780
      %v5802 = vpop.f32.mrf.mxu0
      %v5803 = vadd.f32 0.0, %v5802
      %v5804 = vpop.f32.mrf.mxu0
      %v5805 = vadd.f32 0.0, %v5804
      %5806 = vmatmul.bf16.gmra.mxu0 %v5783
      %v5807 = vpop.f32.mrf.mxu0
      %v5808 = vadd.f32 0.0, %v5807
      %v5809 = vpop.f32.mrf.mxu0
      %v5810 = vadd.f32 0.0, %v5809
      %5811 = vmatmul.bf16.gmra.mxu0 %v5786
      %v5812 = vpop.f32.mrf.mxu0
      %v5813 = vadd.f32 0.0, %v5812
      %v5814 = vpop.f32.mrf.mxu0
      %v5815 = vadd.f32 0.0, %v5814
      %5816 = vdwg.mxu0
      %v5817 = vadd.f32 %v5752, %v5798
      %v5818 = vadd.f32 %v5753, %v5800
      %v5819 = vadd.f32 %v5754, %v5803
      %v5820 = vadd.f32 %v5755, %v5805
      %v5821 = vadd.f32 %v5756, %v5808
      %v5822 = vadd.f32 %v5757, %v5810
      %v5823 = vadd.f32 %v5758, %v5813
      %v5824 = vadd.f32 %v5759, %v5815
      %v5825 = vrcp.pop %v5744
      %v5826 = vrcp.pop %v5745
      %v5827 = vrcp.pop %v5746
      %v5828 = vrcp.pop %v5747
      %v5829 = vrcp.pop %v5748
      %v5830 = vrcp.pop %v5749
      %v5831 = vrcp.pop %v5750
      %v5832 = vrcp.pop %v5751
      %v5833 = vmul.f32 %v5817, %v5825
      %v5834 = vmul.f32 %v5818, %v5826
      %v5835 = vmul.f32 %v5819, %v5827
      %v5836 = vmul.f32 %v5820, %v5828
      %v5837 = vmul.f32 %v5821, %v5829
      %v5838 = vmul.f32 %v5822, %v5830
      %v5839 = vmul.f32 %v5823, %v5831
      %v5840 = vmul.f32 %v5824, %v5832
      %v5841 = vmul.f32 %v1885, 0.5
      %v5842 = vmul.f32 %v1887, 0.5
      %v5843 = vmul.f32 %v1890, 0.5
      %v5844 = vmul.f32 %v1892, 0.5
      %v5845 = vmul.f32 %v1895, 0.5
      %v5846 = vmul.f32 %v1897, 0.5
      %v5847 = vmul.f32 %v1900, 0.5
      %v5848 = vmul.f32 %v1902, 0.5
      %v5849 = vpack.c.bf16 %v5842, %v5841
      %v5850 = vpack.c.bf16 %v5844, %v5843
      %v5851 = vpack.c.bf16 %v5846, %v5845
      %v5852 = vpack.c.bf16 %v5848, %v5847
      %v5853 = vpack.c.bf16 %v2117, %v2117
      %v5854 = vpack.c.bf16 %v2119, %v2119
      %v5855 = vpack.c.bf16 %v2122, %v2122
      %v5856 = vpack.c.bf16 %v2124, %v2124
      %v5857 = vpack.c.bf16 %v2127, %v2127
      %v5858 = vpack.c.bf16 %v2129, %v2129
      %v5859 = vpack.c.bf16 %v2132, %v2132
      %v5860 = vpack.c.bf16 %v2134, %v2134
      %v5861 = vpack.c.bf16 %v2349, %v2349
      %v5862 = vpack.c.bf16 %v2351, %v2351
      %v5863 = vpack.c.bf16 %v2354, %v2354
      %v5864 = vpack.c.bf16 %v2356, %v2356
      %v5865 = vpack.c.bf16 %v2359, %v2359
      %v5866 = vpack.c.bf16 %v2361, %v2361
      %v5867 = vpack.c.bf16 %v2364, %v2364
      %v5868 = vpack.c.bf16 %v2366, %v2366
      %v5873 = vunpack.c.l.b16 %v5853
      %v5874 = vunpack.c.l.b16 %v5854
      %v5875 = vunpack.c.l.b16 %v5855
      %v5876 = vunpack.c.l.b16 %v5856
      %v5877 = vpack.c.b16 %v5874, %v5873
      %v5878 = vpack.c.b16 %v5876, %v5875
      %5881 = vmatpush.bf16.xpose.msra.mxu0 0
      %5882 = vmatpush.bf16.xpose.msra.mxu0 0
      %5883 = vmatpush.bf16.xpose.msra.mxu0 0
      %5884 = vmatpush.bf16.xpose.msra.mxu0 0
      %5885 = vmatpush.bf16.xpose.msra.mxu0 0
      %5886 = vmatpush.bf16.xpose.msra.mxu0 0
      %5887 = vmatpush.bf16.xpose.msra.mxu0 %v5878
      %5888 = vmatpush.bf16.xpose.msra.mxu0 %v5877
      %5889 = vmatmul.bf16.gmra.mxu0 %v5849
      %v5890 = vpop.f32.mrf.mxu0
      %v5891 = vadd.f32 0.0, %v5890
      %v5892 = vpop.f32.mrf.mxu0
      %v5893 = vadd.f32 0.0, %v5892
      %5894 = vmatmul.bf16.gmra.mxu0 %v5850
      %v5895 = vpop.f32.mrf.mxu0
      %v5896 = vadd.f32 0.0, %v5895
      %v5897 = vpop.f32.mrf.mxu0
      %v5898 = vadd.f32 0.0, %v5897
      %5899 = vmatmul.bf16.gmra.mxu0 %v5851
      %v5900 = vpop.f32.mrf.mxu0
      %v5901 = vadd.f32 0.0, %v5900
      %v5902 = vpop.f32.mrf.mxu0
      %v5903 = vadd.f32 0.0, %v5902
      %5904 = vmatmul.bf16.gmra.mxu0 %v5852
      %v5905 = vpop.f32.mrf.mxu0
      %v5906 = vadd.f32 0.0, %v5905
      %v5907 = vpop.f32.mrf.mxu0
      %v5908 = vadd.f32 0.0, %v5907
      %5909 = vdwg.mxu0
      %v5910 = vsel %vm2437, %v5891, -inf
      %5911 = vmax.xlane.f32.xlu0 %v5910
      %v5912 = vpop.xlane.xlu0 %5911
      %v5913 = vsel %vm2437, %v5893, -inf
      %5914 = vmax.xlane.f32.xlu0 %v5913
      %v5915 = vpop.xlane.xlu0 %5914
      %v5916 = vsel %vm2437, %v5896, -inf
      %5917 = vmax.xlane.f32.xlu0 %v5916
      %v5918 = vpop.xlane.xlu0 %5917
      %v5919 = vsel %vm2437, %v5898, -inf
      %5920 = vmax.xlane.f32.xlu0 %v5919
      %v5921 = vpop.xlane.xlu0 %5920
      %v5922 = vsel %vm2437, %v5901, -inf
      %5923 = vmax.xlane.f32.xlu0 %v5922
      %v5924 = vpop.xlane.xlu0 %5923
      %v5925 = vsel %vm2437, %v5903, -inf
      %5926 = vmax.xlane.f32.xlu0 %v5925
      %v5927 = vpop.xlane.xlu0 %5926
      %v5928 = vsel %vm2437, %v5906, -inf
      %5929 = vmax.xlane.f32.xlu0 %v5928
      %v5930 = vpop.xlane.xlu0 %5929
      %v5931 = vsel %vm2437, %v5908, -inf
      %5932 = vmax.xlane.f32.xlu0 %v5931
      %v5933 = vpop.xlane.xlu0 %5932
      %v5934 = vsub.f32 -inf, %v5912
      %v5935 = vsub.f32 -inf, %v5915
      %v5936 = vsub.f32 -inf, %v5918
      %v5937 = vsub.f32 -inf, %v5921
      %v5938 = vsub.f32 -inf, %v5924
      %v5939 = vsub.f32 -inf, %v5927
      %v5940 = vsub.f32 -inf, %v5930
      %v5941 = vsub.f32 -inf, %v5933
      %v5942 = vmul.f32 %v5934, 1.442695
      %v5943 = vpow.pop %v5942
      %v5944 = vmul.f32 %v5935, 1.442695
      %v5945 = vpow.pop %v5944
      %v5946 = vmul.f32 %v5936, 1.442695
      %v5947 = vpow.pop %v5946
      %v5948 = vmul.f32 %v5937, 1.442695
      %v5949 = vpow.pop %v5948
      %v5950 = vmul.f32 %v5938, 1.442695
      %v5951 = vpow.pop %v5950
      %v5952 = vmul.f32 %v5939, 1.442695
      %v5953 = vpow.pop %v5952
      %v5954 = vmul.f32 %v5940, 1.442695
      %v5955 = vpow.pop %v5954
      %v5956 = vmul.f32 %v5941, 1.442695
      %v5957 = vpow.pop %v5956
      %v5958 = vsub.f32 %v5891, %v5912
      %v5959 = vsub.f32 %v5893, %v5915
      %v5960 = vsub.f32 %v5896, %v5918
      %v5961 = vsub.f32 %v5898, %v5921
      %v5962 = vsub.f32 %v5901, %v5924
      %v5963 = vsub.f32 %v5903, %v5927
      %v5964 = vsub.f32 %v5906, %v5930
      %v5965 = vsub.f32 %v5908, %v5933
      %v5966 = vmul.f32 %v5958, 1.442695
      %v5967 = vpow.pop %v5966
      %v5968 = vmul.f32 %v5959, 1.442695
      %v5969 = vpow.pop %v5968
      %v5970 = vmul.f32 %v5960, 1.442695
      %v5971 = vpow.pop %v5970
      %v5972 = vmul.f32 %v5961, 1.442695
      %v5973 = vpow.pop %v5972
      %v5974 = vmul.f32 %v5962, 1.442695
      %v5975 = vpow.pop %v5974
      %v5976 = vmul.f32 %v5963, 1.442695
      %v5977 = vpow.pop %v5976
      %v5978 = vmul.f32 %v5964, 1.442695
      %v5979 = vpow.pop %v5978
      %v5980 = vmul.f32 %v5965, 1.442695
      %v5981 = vpow.pop %v5980
      %v5982 = vmul.f32 %v5943, 0.0
      %v5983 = vmul.f32 %v5945, 0.0
      %v5984 = vmul.f32 %v5947, 0.0
      %v5985 = vmul.f32 %v5949, 0.0
      %v5986 = vmul.f32 %v5951, 0.0
      %v5987 = vmul.f32 %v5953, 0.0
      %v5988 = vmul.f32 %v5955, 0.0
      %v5989 = vmul.f32 %v5957, 0.0
      %v5990 = vsel %vm2437, %v5967, 0.0
      %5991 = vadd.xlane.f32.xlu0 %v5990
      %v5992 = vpop.xlane.xlu0 %5991
      %v5993 = vsel %vm2437, %v5969, 0.0
      %5994 = vadd.xlane.f32.xlu0 %v5993
      %v5995 = vpop.xlane.xlu0 %5994
      %v5996 = vsel %vm2437, %v5971, 0.0
      %5997 = vadd.xlane.f32.xlu0 %v5996
      %v5998 = vpop.xlane.xlu0 %5997
      %v5999 = vsel %vm2437, %v5973, 0.0
      %6000 = vadd.xlane.f32.xlu0 %v5999
      %v6001 = vpop.xlane.xlu0 %6000
      %v6002 = vsel %vm2437, %v5975, 0.0
      %6003 = vadd.xlane.f32.xlu0 %v6002
      %v6004 = vpop.xlane.xlu0 %6003
      %v6005 = vsel %vm2437, %v5977, 0.0
      %6006 = vadd.xlane.f32.xlu0 %v6005
      %v6007 = vpop.xlane.xlu0 %6006
      %v6008 = vsel %vm2437, %v5979, 0.0
      %6009 = vadd.xlane.f32.xlu0 %v6008
      %v6010 = vpop.xlane.xlu0 %6009
      %v6011 = vsel %vm2437, %v5981, 0.0
      %6012 = vadd.xlane.f32.xlu0 %v6011
      %v6013 = vpop.xlane.xlu0 %6012
      %v6014 = vadd.f32 %v5982, %v5992
      %v6015 = vadd.f32 %v5983, %v5995
      %v6016 = vadd.f32 %v5984, %v5998
      %v6017 = vadd.f32 %v5985, %v6001
      %v6018 = vadd.f32 %v5986, %v6004
      %v6019 = vadd.f32 %v5987, %v6007
      %v6020 = vadd.f32 %v5988, %v6010
      %v6021 = vadd.f32 %v5989, %v6013
      %v6022 = vpack.c.bf16 %v5969, %v5967
      %v6023 = vpack.c.bf16 %v5973, %v5971
      %v6024 = vpack.c.bf16 %v5977, %v5975
      %v6025 = vpack.c.bf16 %v5981, %v5979
      %v6030 = vunpack.c.l.b16 %v5861
      %v6031 = vunpack.c.l.b16 %v5862
      %v6032 = vunpack.c.l.b16 %v5863
      %v6033 = vunpack.c.l.b16 %v5864
      %v6034 = vpack.c.b16 %v6031, %v6030
      %v6035 = vpack.c.b16 %v6033, %v6032
      %v6039 = vsel %vm2437, %v6022, 0
      %v6042 = vsel %vm2437, %v6023, 0
      %v6045 = vsel %vm2437, %v6024, 0
      %v6048 = vsel %vm2437, %v6025, 0
      %6050 = vmatpush.bf16.msra.mxu0 0
      %6051 = vmatpush.bf16.msra.mxu0 0
      %6052 = vmatpush.bf16.msra.mxu0 0
      %6053 = vmatpush.bf16.msra.mxu0 0
      %6054 = vmatpush.bf16.msra.mxu0 0
      %6055 = vmatpush.bf16.msra.mxu0 0
      %6056 = vmatpush.bf16.msra.mxu0 %v6035
      %6057 = vmatpush.bf16.msra.mxu0 %v6034
      %6058 = vmatmul.bf16.gmra.mxu0 %v6039
      %v6059 = vpop.f32.mrf.mxu0
      %v6060 = vadd.f32 0.0, %v6059
      %v6061 = vpop.f32.mrf.mxu0
      %v6062 = vadd.f32 0.0, %v6061
      %6063 = vmatmul.bf16.gmra.mxu0 %v6042
      %v6064 = vpop.f32.mrf.mxu0
      %v6065 = vadd.f32 0.0, %v6064
      %v6066 = vpop.f32.mrf.mxu0
      %v6067 = vadd.f32 0.0, %v6066
      %6068 = vmatmul.bf16.gmra.mxu0 %v6045
      %v6069 = vpop.f32.mrf.mxu0
      %v6070 = vadd.f32 0.0, %v6069
      %v6071 = vpop.f32.mrf.mxu0
      %v6072 = vadd.f32 0.0, %v6071
      %6073 = vmatmul.bf16.gmra.mxu0 %v6048
      %v6074 = vpop.f32.mrf.mxu0
      %v6075 = vadd.f32 0.0, %v6074
      %v6076 = vpop.f32.mrf.mxu0
      %v6077 = vadd.f32 0.0, %v6076
      %6078 = vdwg.mxu0
      %v6079 = vadd.f32 %v5982, %v6060
      %v6080 = vadd.f32 %v5983, %v6062
      %v6081 = vadd.f32 %v5984, %v6065
      %v6082 = vadd.f32 %v5985, %v6067
      %v6083 = vadd.f32 %v5986, %v6070
      %v6084 = vadd.f32 %v5987, %v6072
      %v6085 = vadd.f32 %v5988, %v6075
      %v6086 = vadd.f32 %v5989, %v6077
      %v6091 = vunpack.c.l.b16 %v5857
      %v6092 = vunpack.c.l.b16 %v5858
      %v6093 = vunpack.c.l.b16 %v5859
      %v6094 = vunpack.c.l.b16 %v5860
      %v6095 = vpack.c.b16 %v6092, %v6091
      %v6096 = vpack.c.b16 %v6094, %v6093
      %6099 = vmatpush.bf16.xpose.msra.mxu0 0
      %6100 = vmatpush.bf16.xpose.msra.mxu0 0
      %6101 = vmatpush.bf16.xpose.msra.mxu0 0
      %6102 = vmatpush.bf16.xpose.msra.mxu0 0
      %6103 = vmatpush.bf16.xpose.msra.mxu0 0
      %6104 = vmatpush.bf16.xpose.msra.mxu0 0
      %6105 = vmatpush.bf16.xpose.msra.mxu0 %v6096
      %6106 = vmatpush.bf16.xpose.msra.mxu0 %v6095
      %6107 = vmatmul.bf16.gmra.mxu0 %v5849
      %v6108 = vpop.f32.mrf.mxu0
      %v6109 = vadd.f32 0.0, %v6108
      %v6110 = vpop.f32.mrf.mxu0
      %v6111 = vadd.f32 0.0, %v6110
      %6112 = vmatmul.bf16.gmra.mxu0 %v5850
      %v6113 = vpop.f32.mrf.mxu0
      %v6114 = vadd.f32 0.0, %v6113
      %v6115 = vpop.f32.mrf.mxu0
      %v6116 = vadd.f32 0.0, %v6115
      %6117 = vmatmul.bf16.gmra.mxu0 %v5851
      %v6118 = vpop.f32.mrf.mxu0
      %v6119 = vadd.f32 0.0, %v6118
      %v6120 = vpop.f32.mrf.mxu0
      %v6121 = vadd.f32 0.0, %v6120
      %6122 = vmatmul.bf16.gmra.mxu0 %v5852
      %v6123 = vpop.f32.mrf.mxu0
      %v6124 = vadd.f32 0.0, %v6123
      %v6125 = vpop.f32.mrf.mxu0
      %v6126 = vadd.f32 0.0, %v6125
      %6127 = vdwg.mxu0
      %v6128 = vsel %vm2437, %v6109, -inf
      %6129 = vmax.xlane.f32.xlu0 %v6128
      %v6130 = vpop.xlane.xlu0 %6129
      %v6131 = vsel %vm2437, %v6111, -inf
      %6132 = vmax.xlane.f32.xlu0 %v6131
      %v6133 = vpop.xlane.xlu0 %6132
      %v6134 = vsel %vm2437, %v6114, -inf
      %6135 = vmax.xlane.f32.xlu0 %v6134
      %v6136 = vpop.xlane.xlu0 %6135
      %v6137 = vsel %vm2437, %v6116, -inf
      %6138 = vmax.xlane.f32.xlu0 %v6137
      %v6139 = vpop.xlane.xlu0 %6138
      %v6140 = vsel %vm2437, %v6119, -inf
      %6141 = vmax.xlane.f32.xlu0 %v6140
      %v6142 = vpop.xlane.xlu0 %6141
      %v6143 = vsel %vm2437, %v6121, -inf
      %6144 = vmax.xlane.f32.xlu0 %v6143
      %v6145 = vpop.xlane.xlu0 %6144
      %v6146 = vsel %vm2437, %v6124, -inf
      %6147 = vmax.xlane.f32.xlu0 %v6146
      %v6148 = vpop.xlane.xlu0 %6147
      %v6149 = vsel %vm2437, %v6126, -inf
      %6150 = vmax.xlane.f32.xlu0 %v6149
      %v6151 = vpop.xlane.xlu0 %6150
      %v6152 = vmax.f32 %v5912, %v6130
      %v6153 = vmax.f32 %v5915, %v6133
      %v6154 = vmax.f32 %v5918, %v6136
      %v6155 = vmax.f32 %v5921, %v6139
      %v6156 = vmax.f32 %v5924, %v6142
      %v6157 = vmax.f32 %v5927, %v6145
      %v6158 = vmax.f32 %v5930, %v6148
      %v6159 = vmax.f32 %v5933, %v6151
      %v6160 = vsub.f32 %v5912, %v6152
      %v6161 = vsub.f32 %v5915, %v6153
      %v6162 = vsub.f32 %v5918, %v6154
      %v6163 = vsub.f32 %v5921, %v6155
      %v6164 = vsub.f32 %v5924, %v6156
      %v6165 = vsub.f32 %v5927, %v6157
      %v6166 = vsub.f32 %v5930, %v6158
      %v6167 = vsub.f32 %v5933, %v6159
      %v6168 = vmul.f32 %v6160, 1.442695
      %v6169 = vpow.pop %v6168
      %v6170 = vmul.f32 %v6161, 1.442695
      %v6171 = vpow.pop %v6170
      %v6172 = vmul.f32 %v6162, 1.442695
      %v6173 = vpow.pop %v6172
      %v6174 = vmul.f32 %v6163, 1.442695
      %v6175 = vpow.pop %v6174
      %v6176 = vmul.f32 %v6164, 1.442695
      %v6177 = vpow.pop %v6176
      %v6178 = vmul.f32 %v6165, 1.442695
      %v6179 = vpow.pop %v6178
      %v6180 = vmul.f32 %v6166, 1.442695
      %v6181 = vpow.pop %v6180
      %v6182 = vmul.f32 %v6167, 1.442695
      %v6183 = vpow.pop %v6182
      %v6184 = vsub.f32 %v6109, %v6152
      %v6185 = vsub.f32 %v6111, %v6153
      %v6186 = vsub.f32 %v6114, %v6154
      %v6187 = vsub.f32 %v6116, %v6155
      %v6188 = vsub.f32 %v6119, %v6156
      %v6189 = vsub.f32 %v6121, %v6157
      %v6190 = vsub.f32 %v6124, %v6158
      %v6191 = vsub.f32 %v6126, %v6159
      %v6192 = vmul.f32 %v6184, 1.442695
      %v6193 = vpow.pop %v6192
      %v6194 = vmul.f32 %v6185, 1.442695
      %v6195 = vpow.pop %v6194
      %v6196 = vmul.f32 %v6186, 1.442695
      %v6197 = vpow.pop %v6196
      %v6198 = vmul.f32 %v6187, 1.442695
      %v6199 = vpow.pop %v6198
      %v6200 = vmul.f32 %v6188, 1.442695
      %v6201 = vpow.pop %v6200
      %v6202 = vmul.f32 %v6189, 1.442695
      %v6203 = vpow.pop %v6202
      %v6204 = vmul.f32 %v6190, 1.442695
      %v6205 = vpow.pop %v6204
      %v6206 = vmul.f32 %v6191, 1.442695
      %v6207 = vpow.pop %v6206
      %v6208 = vmul.f32 %v6169, %v6014
      %v6209 = vmul.f32 %v6171, %v6015
      %v6210 = vmul.f32 %v6173, %v6016
      %v6211 = vmul.f32 %v6175, %v6017
      %v6212 = vmul.f32 %v6177, %v6018
      %v6213 = vmul.f32 %v6179, %v6019
      %v6214 = vmul.f32 %v6181, %v6020
      %v6215 = vmul.f32 %v6183, %v6021
      %v6216 = vsel %vm2437, %v6193, 0.0
      %6217 = vadd.xlane.f32.xlu0 %v6216
      %v6218 = vpop.xlane.xlu0 %6217
      %v6219 = vsel %vm2437, %v6195, 0.0
      %6220 = vadd.xlane.f32.xlu0 %v6219
      %v6221 = vpop.xlane.xlu0 %6220
      %v6222 = vsel %vm2437, %v6197, 0.0
      %6223 = vadd.xlane.f32.xlu0 %v6222
      %v6224 = vpop.xlane.xlu0 %6223
      %v6225 = vsel %vm2437, %v6199, 0.0
      %6226 = vadd.xlane.f32.xlu0 %v6225
      %v6227 = vpop.xlane.xlu0 %6226
      %v6228 = vsel %vm2437, %v6201, 0.0
      %6229 = vadd.xlane.f32.xlu0 %v6228
      %v6230 = vpop.xlane.xlu0 %6229
      %v6231 = vsel %vm2437, %v6203, 0.0
      %6232 = vadd.xlane.f32.xlu0 %v6231
      %v6233 = vpop.xlane.xlu0 %6232
      %v6234 = vsel %vm2437, %v6205, 0.0
      %6235 = vadd.xlane.f32.xlu0 %v6234
      %v6236 = vpop.xlane.xlu0 %6235
      %v6237 = vsel %vm2437, %v6207, 0.0
      %6238 = vadd.xlane.f32.xlu0 %v6237
      %v6239 = vpop.xlane.xlu0 %6238
      %v6240 = vadd.f32 %v6208, %v6218
      %v6241 = vadd.f32 %v6209, %v6221
      %v6242 = vadd.f32 %v6210, %v6224
      %v6243 = vadd.f32 %v6211, %v6227
      %v6244 = vadd.f32 %v6212, %v6230
      %v6245 = vadd.f32 %v6213, %v6233
      %v6246 = vadd.f32 %v6214, %v6236
      %v6247 = vadd.f32 %v6215, %v6239
      %v6248 = vmul.f32 %v6169, %v6079
      %v6249 = vmul.f32 %v6171, %v6080
      %v6250 = vmul.f32 %v6173, %v6081
      %v6251 = vmul.f32 %v6175, %v6082
      %v6252 = vmul.f32 %v6177, %v6083
      %v6253 = vmul.f32 %v6179, %v6084
      %v6254 = vmul.f32 %v6181, %v6085
      %v6255 = vmul.f32 %v6183, %v6086
      %v6256 = vpack.c.bf16 %v6195, %v6193
      %v6257 = vpack.c.bf16 %v6199, %v6197
      %v6258 = vpack.c.bf16 %v6203, %v6201
      %v6259 = vpack.c.bf16 %v6207, %v6205
      %v6264 = vunpack.c.l.b16 %v5865
      %v6265 = vunpack.c.l.b16 %v5866
      %v6266 = vunpack.c.l.b16 %v5867
      %v6267 = vunpack.c.l.b16 %v5868
      %v6268 = vpack.c.b16 %v6265, %v6264
      %v6269 = vpack.c.b16 %v6267, %v6266
      %v6273 = vsel %vm2437, %v6256, 0
      %v6276 = vsel %vm2437, %v6257, 0
      %v6279 = vsel %vm2437, %v6258, 0
      %v6282 = vsel %vm2437, %v6259, 0
      %6284 = vmatpush.bf16.msra.mxu0 0
      %6285 = vmatpush.bf16.msra.mxu0 0
      %6286 = vmatpush.bf16.msra.mxu0 0
      %6287 = vmatpush.bf16.msra.mxu0 0
      %6288 = vmatpush.bf16.msra.mxu0 0
      %6289 = vmatpush.bf16.msra.mxu0 0
      %6290 = vmatpush.bf16.msra.mxu0 %v6269
      %6291 = vmatpush.bf16.msra.mxu0 %v6268
      %6292 = vmatmul.bf16.gmra.mxu0 %v6273
      %v6293 = vpop.f32.mrf.mxu0
      %v6294 = vadd.f32 0.0, %v6293
      %v6295 = vpop.f32.mrf.mxu0
      %v6296 = vadd.f32 0.0, %v6295
      %6297 = vmatmul.bf16.gmra.mxu0 %v6276
      %v6298 = vpop.f32.mrf.mxu0
      %v6299 = vadd.f32 0.0, %v6298
      %v6300 = vpop.f32.mrf.mxu0
      %v6301 = vadd.f32 0.0, %v6300
      %6302 = vmatmul.bf16.gmra.mxu0 %v6279
      %v6303 = vpop.f32.mrf.mxu0
      %v6304 = vadd.f32 0.0, %v6303
      %v6305 = vpop.f32.mrf.mxu0
      %v6306 = vadd.f32 0.0, %v6305
      %6307 = vmatmul.bf16.gmra.mxu0 %v6282
      %v6308 = vpop.f32.mrf.mxu0
      %v6309 = vadd.f32 0.0, %v6308
      %v6310 = vpop.f32.mrf.mxu0
      %v6311 = vadd.f32 0.0, %v6310
      %6312 = vdwg.mxu0
      %v6313 = vadd.f32 %v6248, %v6294
      %v6314 = vadd.f32 %v6249, %v6296
      %v6315 = vadd.f32 %v6250, %v6299
      %v6316 = vadd.f32 %v6251, %v6301
      %v6317 = vadd.f32 %v6252, %v6304
      %v6318 = vadd.f32 %v6253, %v6306
      %v6319 = vadd.f32 %v6254, %v6309
      %v6320 = vadd.f32 %v6255, %v6311
      %v6321 = vrcp.pop %v6240
      %v6322 = vrcp.pop %v6241
      %v6323 = vrcp.pop %v6242
      %v6324 = vrcp.pop %v6243
      %v6325 = vrcp.pop %v6244
      %v6326 = vrcp.pop %v6245
      %v6327 = vrcp.pop %v6246
      %v6328 = vrcp.pop %v6247
      %v6329 = vmul.f32 %v6313, %v6321
      %v6330 = vmul.f32 %v6314, %v6322
      %v6331 = vmul.f32 %v6315, %v6323
      %v6332 = vmul.f32 %v6316, %v6324
      %v6333 = vmul.f32 %v6317, %v6325
      %v6334 = vmul.f32 %v6318, %v6326
      %v6335 = vmul.f32 %v6319, %v6327
      %v6336 = vmul.f32 %v6320, %v6328
      %v6337 = vpack.c.bf16 %v2858, %v2857
      %v6338 = vpack.c.bf16 %v3354, %v3353
      %v6339 = vpack.c.bf16 %v3850, %v3849
      %v6340 = vpack.c.bf16 %v4346, %v4345
      %v6341 = vpack.c.bf16 %v4842, %v4841
      %v6342 = vpack.c.bf16 %v5338, %v5337
      %v6343 = vpack.c.bf16 %v5834, %v5833
      %v6344 = vpack.c.bf16 %v6330, %v6329
      %v6345 = vpack.c.bf16 %v2860, %v2859
      %v6346 = vpack.c.bf16 %v3356, %v3355
      %v6347 = vpack.c.bf16 %v3852, %v3851
      %v6348 = vpack.c.bf16 %v4348, %v4347
      %v6349 = vpack.c.bf16 %v4844, %v4843
      %v6350 = vpack.c.bf16 %v5340, %v5339
      %v6351 = vpack.c.bf16 %v5836, %v5835
      %v6352 = vpack.c.bf16 %v6332, %v6331
      %v6353 = vpack.c.bf16 %v2862, %v2861
      %v6354 = vpack.c.bf16 %v3358, %v3357
      %v6355 = vpack.c.bf16 %v3854, %v3853
      %v6356 = vpack.c.bf16 %v4350, %v4349
      %v6357 = vpack.c.bf16 %v4846, %v4845
      %v6358 = vpack.c.bf16 %v5342, %v5341
      %v6359 = vpack.c.bf16 %v5838, %v5837
      %v6360 = vpack.c.bf16 %v6334, %v6333
      %v6361 = vpack.c.bf16 %v2864, %v2863
      %v6362 = vpack.c.bf16 %v3360, %v3359
      %v6363 = vpack.c.bf16 %v3856, %v3855
      %v6364 = vpack.c.bf16 %v4352, %v4351
      %v6365 = vpack.c.bf16 %v4848, %v4847
      %v6366 = vpack.c.bf16 %v5344, %v5343
      %v6367 = vpack.c.bf16 %v5840, %v5839
      %v6368 = vpack.c.bf16 %v6336, %v6335
      %v6369 = vld [vmem:[%s6] sm:$0xf]
      %v6370 = vld [vmem:[%s6 + $0x4] sm:$0xf]
      %v6371 = vld [vmem:[%s6 + $0x8] sm:$0xf]
      %v6372 = vld [vmem:[%s6 + $0xc] sm:$0xf]
      %v6373 = vld [vmem:[%s6 + $0x10] sm:$0xf]
      %v6374 = vld [vmem:[%s6 + $0x14] sm:$0xf]
      %v6375 = vld [vmem:[%s6 + $0x18] sm:$0xf]
      %v6376 = vld [vmem:[%s6 + $0x1c] sm:$0xf]
      %v6377 = vld [vmem:[%s6 + $0x20] sm:$0xf]
      %v6378 = vld [vmem:[%s6 + $0x24] sm:$0xf]
      %v6379 = vld [vmem:[%s6 + $0x28] sm:$0xf]
      %v6380 = vld [vmem:[%s6 + $0x2c] sm:$0xf]
      %v6381 = vld [vmem:[%s6 + $0x30] sm:$0xf]
      %v6382 = vld [vmem:[%s6 + $0x34] sm:$0xf]
      %v6383 = vld [vmem:[%s6 + $0x38] sm:$0xf]
      %v6384 = vld [vmem:[%s6 + $0x3c] sm:$0xf]
      %v6385 = vld [vmem:[%s6 + $0x40] sm:$0xf]
      %v6386 = vld [vmem:[%s6 + $0x44] sm:$0xf]
      %v6387 = vld [vmem:[%s6 + $0x48] sm:$0xf]
      %v6388 = vld [vmem:[%s6 + $0x4c] sm:$0xf]
      %v6389 = vld [vmem:[%s6 + $0x50] sm:$0xf]
      %v6390 = vld [vmem:[%s6 + $0x54] sm:$0xf]
      %v6391 = vld [vmem:[%s6 + $0x58] sm:$0xf]
      %v6392 = vld [vmem:[%s6 + $0x5c] sm:$0xf]
      %v6393 = vld [vmem:[%s6 + $0x60] sm:$0xf]
      %v6394 = vld [vmem:[%s6 + $0x64] sm:$0xf]
      %v6395 = vld [vmem:[%s6 + $0x68] sm:$0xf]
      %v6396 = vld [vmem:[%s6 + $0x6c] sm:$0xf]
      %v6397 = vld [vmem:[%s6 + $0x70] sm:$0xf]
      %v6398 = vld [vmem:[%s6 + $0x74] sm:$0xf]
      %v6399 = vld [vmem:[%s6 + $0x78] sm:$0xf]
      %v6400 = vld [vmem:[%s6 + $0x7c] sm:$0xf]
      %v6401 = vld [vmem:[%s6 + $0x80] sm:$0xf]
      %v6402 = vld [vmem:[%s6 + $0x84] sm:$0xf]
      %v6403 = vld [vmem:[%s6 + $0x88] sm:$0xf]
      %v6404 = vld [vmem:[%s6 + $0x8c] sm:$0xf]
      %v6405 = vld [vmem:[%s6 + $0x90] sm:$0xf]
      %v6406 = vld [vmem:[%s6 + $0x94] sm:$0xf]
      %v6407 = vld [vmem:[%s6 + $0x98] sm:$0xf]
      %v6408 = vld [vmem:[%s6 + $0x9c] sm:$0xf]
      %v6409 = vld [vmem:[%s6 + $0xa0] sm:$0xf]
      %v6410 = vld [vmem:[%s6 + $0xa4] sm:$0xf]
      %v6411 = vld [vmem:[%s6 + $0xa8] sm:$0xf]
      %v6412 = vld [vmem:[%s6 + $0xac] sm:$0xf]
      %v6413 = vld [vmem:[%s6 + $0xb0] sm:$0xf]
      %v6414 = vld [vmem:[%s6 + $0xb4] sm:$0xf]
      %v6415 = vld [vmem:[%s6 + $0xb8] sm:$0xf]
      %v6416 = vld [vmem:[%s6 + $0xbc] sm:$0xf]
      %v6417 = vld [vmem:[%s6 + $0xc0] sm:$0xf]
      %v6418 = vld [vmem:[%s6 + $0xc4] sm:$0xf]
      %v6419 = vld [vmem:[%s6 + $0xc8] sm:$0xf]
      %v6420 = vld [vmem:[%s6 + $0xcc] sm:$0xf]
      %v6421 = vld [vmem:[%s6 + $0xd0] sm:$0xf]
      %v6422 = vld [vmem:[%s6 + $0xd4] sm:$0xf]
      %v6423 = vld [vmem:[%s6 + $0xd8] sm:$0xf]
      %v6424 = vld [vmem:[%s6 + $0xdc] sm:$0xf]
      %v6425 = vld [vmem:[%s6 + $0xe0] sm:$0xf]
      %v6426 = vld [vmem:[%s6 + $0xe4] sm:$0xf]
      %v6427 = vld [vmem:[%s6 + $0xe8] sm:$0xf]
      %v6428 = vld [vmem:[%s6 + $0xec] sm:$0xf]
      %v6429 = vld [vmem:[%s6 + $0xf0] sm:$0xf]
      %v6430 = vld [vmem:[%s6 + $0xf4] sm:$0xf]
      %v6431 = vld [vmem:[%s6 + $0xf8] sm:$0xf]
      %v6432 = vld [vmem:[%s6 + $0xfc] sm:$0xf]
      %v6433 = vld [vmem:[%s6 + $0x100] sm:$0xf]
      %v6434 = vld [vmem:[%s6 + $0x104] sm:$0xf]
      %v6435 = vld [vmem:[%s6 + $0x108] sm:$0xf]
      %v6436 = vld [vmem:[%s6 + $0x10c] sm:$0xf]
      %v6437 = vld [vmem:[%s6 + $0x110] sm:$0xf]
      %v6438 = vld [vmem:[%s6 + $0x114] sm:$0xf]
      %v6439 = vld [vmem:[%s6 + $0x118] sm:$0xf]
      %v6440 = vld [vmem:[%s6 + $0x11c] sm:$0xf]
      %v6441 = vld [vmem:[%s6 + $0x120] sm:$0xf]
      %v6442 = vld [vmem:[%s6 + $0x124] sm:$0xf]
      %v6443 = vld [vmem:[%s6 + $0x128] sm:$0xf]
      %v6444 = vld [vmem:[%s6 + $0x12c] sm:$0xf]
      %v6445 = vld [vmem:[%s6 + $0x130] sm:$0xf]
      %v6446 = vld [vmem:[%s6 + $0x134] sm:$0xf]
      %v6447 = vld [vmem:[%s6 + $0x138] sm:$0xf]
      %v6448 = vld [vmem:[%s6 + $0x13c] sm:$0xf]
      %v6449 = vld [vmem:[%s6 + $0x140] sm:$0xf]
      %v6450 = vld [vmem:[%s6 + $0x144] sm:$0xf]
      %v6451 = vld [vmem:[%s6 + $0x148] sm:$0xf]
      %v6452 = vld [vmem:[%s6 + $0x14c] sm:$0xf]
      %v6453 = vld [vmem:[%s6 + $0x150] sm:$0xf]
      %v6454 = vld [vmem:[%s6 + $0x154] sm:$0xf]
      %v6455 = vld [vmem:[%s6 + $0x158] sm:$0xf]
      %v6456 = vld [vmem:[%s6 + $0x15c] sm:$0xf]
      %v6457 = vld [vmem:[%s6 + $0x160] sm:$0xf]
      %v6458 = vld [vmem:[%s6 + $0x164] sm:$0xf]
      %v6459 = vld [vmem:[%s6 + $0x168] sm:$0xf]
      %v6460 = vld [vmem:[%s6 + $0x16c] sm:$0xf]
      %v6461 = vld [vmem:[%s6 + $0x170] sm:$0xf]
      %v6462 = vld [vmem:[%s6 + $0x174] sm:$0xf]
      %v6463 = vld [vmem:[%s6 + $0x178] sm:$0xf]
      %v6464 = vld [vmem:[%s6 + $0x17c] sm:$0xf]
      %v6465 = vld [vmem:[%s6 + $0x180] sm:$0xf]
      %v6466 = vld [vmem:[%s6 + $0x184] sm:$0xf]
      %v6467 = vld [vmem:[%s6 + $0x188] sm:$0xf]
      %v6468 = vld [vmem:[%s6 + $0x18c] sm:$0xf]
      %v6469 = vld [vmem:[%s6 + $0x190] sm:$0xf]
      %v6470 = vld [vmem:[%s6 + $0x194] sm:$0xf]
      %v6471 = vld [vmem:[%s6 + $0x198] sm:$0xf]
      %v6472 = vld [vmem:[%s6 + $0x19c] sm:$0xf]
      %v6473 = vld [vmem:[%s6 + $0x1a0] sm:$0xf]
      %v6474 = vld [vmem:[%s6 + $0x1a4] sm:$0xf]
      %v6475 = vld [vmem:[%s6 + $0x1a8] sm:$0xf]
      %v6476 = vld [vmem:[%s6 + $0x1ac] sm:$0xf]
      %v6477 = vld [vmem:[%s6 + $0x1b0] sm:$0xf]
      %v6478 = vld [vmem:[%s6 + $0x1b4] sm:$0xf]
      %v6479 = vld [vmem:[%s6 + $0x1b8] sm:$0xf]
      %v6480 = vld [vmem:[%s6 + $0x1bc] sm:$0xf]
      %v6481 = vld [vmem:[%s6 + $0x1c0] sm:$0xf]
      %v6482 = vld [vmem:[%s6 + $0x1c4] sm:$0xf]
      %v6483 = vld [vmem:[%s6 + $0x1c8] sm:$0xf]
      %v6484 = vld [vmem:[%s6 + $0x1cc] sm:$0xf]
      %v6485 = vld [vmem:[%s6 + $0x1d0] sm:$0xf]
      %v6486 = vld [vmem:[%s6 + $0x1d4] sm:$0xf]
      %v6487 = vld [vmem:[%s6 + $0x1d8] sm:$0xf]
      %v6488 = vld [vmem:[%s6 + $0x1dc] sm:$0xf]
      %v6489 = vld [vmem:[%s6 + $0x1e0] sm:$0xf]
      %v6490 = vld [vmem:[%s6 + $0x1e4] sm:$0xf]
      %v6491 = vld [vmem:[%s6 + $0x1e8] sm:$0xf]
      %v6492 = vld [vmem:[%s6 + $0x1ec] sm:$0xf]
      %v6493 = vld [vmem:[%s6 + $0x1f0] sm:$0xf]
      %v6494 = vld [vmem:[%s6 + $0x1f4] sm:$0xf]
      %v6495 = vld [vmem:[%s6 + $0x1f8] sm:$0xf]
      %v6496 = vld [vmem:[%s6 + $0x1fc] sm:$0xf]
      %v6625 = vunpack.c.l.b16 %v6369
      %v6626 = vunpack.c.l.b16 %v6370
      %v6627 = vunpack.c.l.b16 %v6371
      %v6628 = vunpack.c.l.b16 %v6372
      %v6629 = vunpack.c.l.b16 %v6373
      %v6630 = vunpack.c.l.b16 %v6374
      %v6631 = vunpack.c.l.b16 %v6375
      %v6632 = vunpack.c.l.b16 %v6376
      %v6633 = vunpack.c.l.b16 %v6377
      %v6634 = vunpack.c.l.b16 %v6378
      %v6635 = vunpack.c.l.b16 %v6379
      %v6636 = vunpack.c.l.b16 %v6380
      %v6637 = vunpack.c.l.b16 %v6381
      %v6638 = vunpack.c.l.b16 %v6382
      %v6639 = vunpack.c.l.b16 %v6383
      %v6640 = vunpack.c.l.b16 %v6384
      %v6641 = vunpack.c.l.b16 %v6385
      %v6642 = vunpack.c.l.b16 %v6386
      %v6643 = vunpack.c.l.b16 %v6387
      %v6644 = vunpack.c.l.b16 %v6388
      %v6645 = vunpack.c.l.b16 %v6389
      %v6646 = vunpack.c.l.b16 %v6390
      %v6647 = vunpack.c.l.b16 %v6391
      %v6648 = vunpack.c.l.b16 %v6392
      %v6649 = vunpack.c.l.b16 %v6393
      %v6650 = vunpack.c.l.b16 %v6394
      %v6651 = vunpack.c.l.b16 %v6395
      %v6652 = vunpack.c.l.b16 %v6396
      %v6653 = vunpack.c.l.b16 %v6397
      %v6654 = vunpack.c.l.b16 %v6398
      %v6655 = vunpack.c.l.b16 %v6399
      %v6656 = vunpack.c.l.b16 %v6400
      %v6657 = vunpack.c.l.b16 %v6401
      %v6658 = vunpack.c.l.b16 %v6402
      %v6659 = vunpack.c.l.b16 %v6403
      %v6660 = vunpack.c.l.b16 %v6404
      %v6661 = vunpack.c.l.b16 %v6405
      %v6662 = vunpack.c.l.b16 %v6406
      %v6663 = vunpack.c.l.b16 %v6407
      %v6664 = vunpack.c.l.b16 %v6408
      %v6665 = vunpack.c.l.b16 %v6409
      %v6666 = vunpack.c.l.b16 %v6410
      %v6667 = vunpack.c.l.b16 %v6411
      %v6668 = vunpack.c.l.b16 %v6412
      %v6669 = vunpack.c.l.b16 %v6413
      %v6670 = vunpack.c.l.b16 %v6414
      %v6671 = vunpack.c.l.b16 %v6415
      %v6672 = vunpack.c.l.b16 %v6416
      %v6673 = vunpack.c.l.b16 %v6417
      %v6674 = vunpack.c.l.b16 %v6418
      %v6675 = vunpack.c.l.b16 %v6419
      %v6676 = vunpack.c.l.b16 %v6420
      %v6677 = vunpack.c.l.b16 %v6421
      %v6678 = vunpack.c.l.b16 %v6422
      %v6679 = vunpack.c.l.b16 %v6423
      %v6680 = vunpack.c.l.b16 %v6424
      %v6681 = vunpack.c.l.b16 %v6425
      %v6682 = vunpack.c.l.b16 %v6426
      %v6683 = vunpack.c.l.b16 %v6427
      %v6684 = vunpack.c.l.b16 %v6428
      %v6685 = vunpack.c.l.b16 %v6429
      %v6686 = vunpack.c.l.b16 %v6430
      %v6687 = vunpack.c.l.b16 %v6431
      %v6688 = vunpack.c.l.b16 %v6432
      %v6689 = vunpack.c.l.b16 %v6433
      %v6690 = vunpack.c.l.b16 %v6434
      %v6691 = vunpack.c.l.b16 %v6435
      %v6692 = vunpack.c.l.b16 %v6436
      %v6693 = vunpack.c.l.b16 %v6437
      %v6694 = vunpack.c.l.b16 %v6438
      %v6695 = vunpack.c.l.b16 %v6439
      %v6696 = vunpack.c.l.b16 %v6440
      %v6697 = vunpack.c.l.b16 %v6441
      %v6698 = vunpack.c.l.b16 %v6442
      %v6699 = vunpack.c.l.b16 %v6443
      %v6700 = vunpack.c.l.b16 %v6444
      %v6701 = vunpack.c.l.b16 %v6445
      %v6702 = vunpack.c.l.b16 %v6446
      %v6703 = vunpack.c.l.b16 %v6447
      %v6704 = vunpack.c.l.b16 %v6448
      %v6705 = vunpack.c.l.b16 %v6449
      %v6706 = vunpack.c.l.b16 %v6450
      %v6707 = vunpack.c.l.b16 %v6451
      %v6708 = vunpack.c.l.b16 %v6452
      %v6709 = vunpack.c.l.b16 %v6453
      %v6710 = vunpack.c.l.b16 %v6454
      %v6711 = vunpack.c.l.b16 %v6455
      %v6712 = vunpack.c.l.b16 %v6456
      %v6713 = vunpack.c.l.b16 %v6457
      %v6714 = vunpack.c.l.b16 %v6458
      %v6715 = vunpack.c.l.b16 %v6459
      %v6716 = vunpack.c.l.b16 %v6460
      %v6717 = vunpack.c.l.b16 %v6461
      %v6718 = vunpack.c.l.b16 %v6462
      %v6719 = vunpack.c.l.b16 %v6463
      %v6720 = vunpack.c.l.b16 %v6464
      %v6721 = vunpack.c.l.b16 %v6465
      %v6722 = vunpack.c.l.b16 %v6466
      %v6723 = vunpack.c.l.b16 %v6467
      %v6724 = vunpack.c.l.b16 %v6468
      %v6725 = vunpack.c.l.b16 %v6469
      %v6726 = vunpack.c.l.b16 %v6470
      %v6727 = vunpack.c.l.b16 %v6471
      %v6728 = vunpack.c.l.b16 %v6472
      %v6729 = vunpack.c.l.b16 %v6473
      %v6730 = vunpack.c.l.b16 %v6474
      %v6731 = vunpack.c.l.b16 %v6475
      %v6732 = vunpack.c.l.b16 %v6476
      %v6733 = vunpack.c.l.b16 %v6477
      %v6734 = vunpack.c.l.b16 %v6478
      %v6735 = vunpack.c.l.b16 %v6479
      %v6736 = vunpack.c.l.b16 %v6480
      %v6737 = vunpack.c.l.b16 %v6481
      %v6738 = vunpack.c.l.b16 %v6482
      %v6739 = vunpack.c.l.b16 %v6483
      %v6740 = vunpack.c.l.b16 %v6484
      %v6741 = vunpack.c.l.b16 %v6485
      %v6742 = vunpack.c.l.b16 %v6486
      %v6743 = vunpack.c.l.b16 %v6487
      %v6744 = vunpack.c.l.b16 %v6488
      %v6745 = vunpack.c.l.b16 %v6489
      %v6746 = vunpack.c.l.b16 %v6490
      %v6747 = vunpack.c.l.b16 %v6491
      %v6748 = vunpack.c.l.b16 %v6492
      %v6749 = vunpack.c.l.b16 %v6493
      %v6750 = vunpack.c.l.b16 %v6494
      %v6751 = vunpack.c.l.b16 %v6495
      %v6752 = vunpack.c.l.b16 %v6496
      %v6753 = vpack.c.b16 %v6626, %v6625
      %v6754 = vpack.c.b16 %v6628, %v6627
      %v6755 = vpack.c.b16 %v6630, %v6629
      %v6756 = vpack.c.b16 %v6632, %v6631
      %v6757 = vpack.c.b16 %v6634, %v6633
      %v6758 = vpack.c.b16 %v6636, %v6635
      %v6759 = vpack.c.b16 %v6638, %v6637
      %v6760 = vpack.c.b16 %v6640, %v6639
      %v6761 = vpack.c.b16 %v6642, %v6641
      %v6762 = vpack.c.b16 %v6644, %v6643
      %v6763 = vpack.c.b16 %v6646, %v6645
      %v6764 = vpack.c.b16 %v6648, %v6647
      %v6765 = vpack.c.b16 %v6650, %v6649
      %v6766 = vpack.c.b16 %v6652, %v6651
      %v6767 = vpack.c.b16 %v6654, %v6653
      %v6768 = vpack.c.b16 %v6656, %v6655
      %v6769 = vpack.c.b16 %v6658, %v6657
      %v6770 = vpack.c.b16 %v6660, %v6659
      %v6771 = vpack.c.b16 %v6662, %v6661
      %v6772 = vpack.c.b16 %v6664, %v6663
      %v6773 = vpack.c.b16 %v6666, %v6665
      %v6774 = vpack.c.b16 %v6668, %v6667
      %v6775 = vpack.c.b16 %v6670, %v6669
      %v6776 = vpack.c.b16 %v6672, %v6671
      %v6777 = vpack.c.b16 %v6674, %v6673
      %v6778 = vpack.c.b16 %v6676, %v6675
      %v6779 = vpack.c.b16 %v6678, %v6677
      %v6780 = vpack.c.b16 %v6680, %v6679
      %v6781 = vpack.c.b16 %v6682, %v6681
      %v6782 = vpack.c.b16 %v6684, %v6683
      %v6783 = vpack.c.b16 %v6686, %v6685
      %v6784 = vpack.c.b16 %v6688, %v6687
      %v6785 = vpack.c.b16 %v6690, %v6689
      %v6786 = vpack.c.b16 %v6692, %v6691
      %v6787 = vpack.c.b16 %v6694, %v6693
      %v6788 = vpack.c.b16 %v6696, %v6695
      %v6789 = vpack.c.b16 %v6698, %v6697
      %v6790 = vpack.c.b16 %v6700, %v6699
      %v6791 = vpack.c.b16 %v6702, %v6701
      %v6792 = vpack.c.b16 %v6704, %v6703
      %v6793 = vpack.c.b16 %v6706, %v6705
      %v6794 = vpack.c.b16 %v6708, %v6707
      %v6795 = vpack.c.b16 %v6710, %v6709
      %v6796 = vpack.c.b16 %v6712, %v6711
      %v6797 = vpack.c.b16 %v6714, %v6713
      %v6798 = vpack.c.b16 %v6716, %v6715
      %v6799 = vpack.c.b16 %v6718, %v6717
      %v6800 = vpack.c.b16 %v6720, %v6719
      %v6801 = vpack.c.b16 %v6722, %v6721
      %v6802 = vpack.c.b16 %v6724, %v6723
      %v6803 = vpack.c.b16 %v6726, %v6725
      %v6804 = vpack.c.b16 %v6728, %v6727
      %v6805 = vpack.c.b16 %v6730, %v6729
      %v6806 = vpack.c.b16 %v6732, %v6731
      %v6807 = vpack.c.b16 %v6734, %v6733
      %v6808 = vpack.c.b16 %v6736, %v6735
      %v6809 = vpack.c.b16 %v6738, %v6737
      %v6810 = vpack.c.b16 %v6740, %v6739
      %v6811 = vpack.c.b16 %v6742, %v6741
      %v6812 = vpack.c.b16 %v6744, %v6743
      %v6813 = vpack.c.b16 %v6746, %v6745
      %v6814 = vpack.c.b16 %v6748, %v6747
      %v6815 = vpack.c.b16 %v6750, %v6749
      %v6816 = vpack.c.b16 %v6752, %v6751
      %6881 = vmatpush.bf16.msra.mxu0 %v6760
      %6882 = vmatpush.bf16.msra.mxu0 %v6759
      %6883 = vmatpush.bf16.msra.mxu0 %v6758
      %6884 = vmatpush.bf16.msra.mxu0 %v6757
      %6885 = vmatpush.bf16.msra.mxu0 %v6756
      %6886 = vmatpush.bf16.msra.mxu0 %v6755
      %6887 = vmatpush.bf16.msra.mxu0 %v6754
      %6888 = vmatpush.bf16.msra.mxu0 %v6753
      %6889 = vmatmul.bf16.gmra.mxu0 %v6337
      %v6890 = vpop.f32.mrf.mxu0
      %v6891 = vadd.f32 0.0, %v6890
      %v6892 = vpop.f32.mrf.mxu0
      %v6893 = vadd.f32 0.0, %v6892
      %6894 = vmatmul.bf16.gmra.mxu0 %v6345
      %v6895 = vpop.f32.mrf.mxu0
      %v6896 = vadd.f32 0.0, %v6895
      %v6897 = vpop.f32.mrf.mxu0
      %v6898 = vadd.f32 0.0, %v6897
      %6899 = vmatmul.bf16.gmra.mxu0 %v6353
      %v6900 = vpop.f32.mrf.mxu0
      %v6901 = vadd.f32 0.0, %v6900
      %v6902 = vpop.f32.mrf.mxu0
      %v6903 = vadd.f32 0.0, %v6902
      %6904 = vmatmul.bf16.gmra.mxu0 %v6361
      %v6905 = vpop.f32.mrf.mxu0
      %v6906 = vadd.f32 0.0, %v6905
      %v6907 = vpop.f32.mrf.mxu0
      %v6908 = vadd.f32 0.0, %v6907
      %6909 = vdwg.mxu0
      %6910 = vmatpush.bf16.msra.mxu0 %v6768
      %6911 = vmatpush.bf16.msra.mxu0 %v6767
      %6912 = vmatpush.bf16.msra.mxu0 %v6766
      %6913 = vmatpush.bf16.msra.mxu0 %v6765
      %6914 = vmatpush.bf16.msra.mxu0 %v6764
      %6915 = vmatpush.bf16.msra.mxu0 %v6763
      %6916 = vmatpush.bf16.msra.mxu0 %v6762
      %6917 = vmatpush.bf16.msra.mxu0 %v6761
      %6918 = vmatmul.bf16.gmra.mxu0 %v6338
      %v6919 = vpop.f32.mrf.mxu0
      %v6920 = vadd.f32 %v6891, %v6919
      %v6921 = vpop.f32.mrf.mxu0
      %v6922 = vadd.f32 %v6893, %v6921
      %6923 = vmatmul.bf16.gmra.mxu0 %v6346
      %v6924 = vpop.f32.mrf.mxu0
      %v6925 = vadd.f32 %v6896, %v6924
      %v6926 = vpop.f32.mrf.mxu0
      %v6927 = vadd.f32 %v6898, %v6926
      %6928 = vmatmul.bf16.gmra.mxu0 %v6354
      %v6929 = vpop.f32.mrf.mxu0
      %v6930 = vadd.f32 %v6901, %v6929
      %v6931 = vpop.f32.mrf.mxu0
      %v6932 = vadd.f32 %v6903, %v6931
      %6933 = vmatmul.bf16.gmra.mxu0 %v6362
      %v6934 = vpop.f32.mrf.mxu0
      %v6935 = vadd.f32 %v6906, %v6934
      %v6936 = vpop.f32.mrf.mxu0
      %v6937 = vadd.f32 %v6908, %v6936
      %6938 = vdwg.mxu0
      %6939 = vmatpush.bf16.msra.mxu0 %v6776
      %6940 = vmatpush.bf16.msra.mxu0 %v6775
      %6941 = vmatpush.bf16.msra.mxu0 %v6774
      %6942 = vmatpush.bf16.msra.mxu0 %v6773
      %6943 = vmatpush.bf16.msra.mxu0 %v6772
      %6944 = vmatpush.bf16.msra.mxu0 %v6771
      %6945 = vmatpush.bf16.msra.mxu0 %v6770
      %6946 = vmatpush.bf16.msra.mxu0 %v6769
      %6947 = vmatmul.bf16.gmra.mxu0 %v6339
      %v6948 = vpop.f32.mrf.mxu0
      %v6949 = vadd.f32 %v6920, %v6948
      %v6950 = vpop.f32.mrf.mxu0
      %v6951 = vadd.f32 %v6922, %v6950
      %6952 = vmatmul.bf16.gmra.mxu0 %v6347
      %v6953 = vpop.f32.mrf.mxu0
      %v6954 = vadd.f32 %v6925, %v6953
      %v6955 = vpop.f32.mrf.mxu0
      %v6956 = vadd.f32 %v6927, %v6955
      %6957 = vmatmul.bf16.gmra.mxu0 %v6355
      %v6958 = vpop.f32.mrf.mxu0
      %v6959 = vadd.f32 %v6930, %v6958
      %v6960 = vpop.f32.mrf.mxu0
      %v6961 = vadd.f32 %v6932, %v6960
      %6962 = vmatmul.bf16.gmra.mxu0 %v6363
      %v6963 = vpop.f32.mrf.mxu0
      %v6964 = vadd.f32 %v6935, %v6963
      %v6965 = vpop.f32.mrf.mxu0
      %v6966 = vadd.f32 %v6937, %v6965
      %6967 = vdwg.mxu0
      %6968 = vmatpush.bf16.msra.mxu0 %v6784
      %6969 = vmatpush.bf16.msra.mxu0 %v6783
      %6970 = vmatpush.bf16.msra.mxu0 %v6782
      %6971 = vmatpush.bf16.msra.mxu0 %v6781
      %6972 = vmatpush.bf16.msra.mxu0 %v6780
      %6973 = vmatpush.bf16.msra.mxu0 %v6779
      %6974 = vmatpush.bf16.msra.mxu0 %v6778
      %6975 = vmatpush.bf16.msra.mxu0 %v6777
      %6976 = vmatmul.bf16.gmra.mxu0 %v6340
      %v6977 = vpop.f32.mrf.mxu0
      %v6978 = vadd.f32 %v6949, %v6977
      %v6979 = vpop.f32.mrf.mxu0
      %v6980 = vadd.f32 %v6951, %v6979
      %6981 = vmatmul.bf16.gmra.mxu0 %v6348
      %v6982 = vpop.f32.mrf.mxu0
      %v6983 = vadd.f32 %v6954, %v6982
      %v6984 = vpop.f32.mrf.mxu0
      %v6985 = vadd.f32 %v6956, %v6984
      %6986 = vmatmul.bf16.gmra.mxu0 %v6356
      %v6987 = vpop.f32.mrf.mxu0
      %v6988 = vadd.f32 %v6959, %v6987
      %v6989 = vpop.f32.mrf.mxu0
      %v6990 = vadd.f32 %v6961, %v6989
      %6991 = vmatmul.bf16.gmra.mxu0 %v6364
      %v6992 = vpop.f32.mrf.mxu0
      %v6993 = vadd.f32 %v6964, %v6992
      %v6994 = vpop.f32.mrf.mxu0
      %v6995 = vadd.f32 %v6966, %v6994
      %6996 = vdwg.mxu0
      %6997 = vmatpush.bf16.msra.mxu0 %v6792
      %6998 = vmatpush.bf16.msra.mxu0 %v6791
      %6999 = vmatpush.bf16.msra.mxu0 %v6790
      %7000 = vmatpush.bf16.msra.mxu0 %v6789
      %7001 = vmatpush.bf16.msra.mxu0 %v6788
      %7002 = vmatpush.bf16.msra.mxu0 %v6787
      %7003 = vmatpush.bf16.msra.mxu0 %v6786
      %7004 = vmatpush.bf16.msra.mxu0 %v6785
      %7005 = vmatmul.bf16.gmra.mxu0 %v6341
      %v7006 = vpop.f32.mrf.mxu0
      %v7007 = vadd.f32 %v6978, %v7006
      %v7008 = vpop.f32.mrf.mxu0
      %v7009 = vadd.f32 %v6980, %v7008
      %7010 = vmatmul.bf16.gmra.mxu0 %v6349
      %v7011 = vpop.f32.mrf.mxu0
      %v7012 = vadd.f32 %v6983, %v7011
      %v7013 = vpop.f32.mrf.mxu0
      %v7014 = vadd.f32 %v6985, %v7013
      %7015 = vmatmul.bf16.gmra.mxu0 %v6357
      %v7016 = vpop.f32.mrf.mxu0
      %v7017 = vadd.f32 %v6988, %v7016
      %v7018 = vpop.f32.mrf.mxu0
      %v7019 = vadd.f32 %v6990, %v7018
      %7020 = vmatmul.bf16.gmra.mxu0 %v6365
      %v7021 = vpop.f32.mrf.mxu0
      %v7022 = vadd.f32 %v6993, %v7021
      %v7023 = vpop.f32.mrf.mxu0
      %v7024 = vadd.f32 %v6995, %v7023
      %7025 = vdwg.mxu0
      %7026 = vmatpush.bf16.msra.mxu0 %v6800
      %7027 = vmatpush.bf16.msra.mxu0 %v6799
      %7028 = vmatpush.bf16.msra.mxu0 %v6798
      %7029 = vmatpush.bf16.msra.mxu0 %v6797
      %7030 = vmatpush.bf16.msra.mxu0 %v6796
      %7031 = vmatpush.bf16.msra.mxu0 %v6795
      %7032 = vmatpush.bf16.msra.mxu0 %v6794
      %7033 = vmatpush.bf16.msra.mxu0 %v6793
      %7034 = vmatmul.bf16.gmra.mxu0 %v6342
      %v7035 = vpop.f32.mrf.mxu0
      %v7036 = vadd.f32 %v7007, %v7035
      %v7037 = vpop.f32.mrf.mxu0
      %v7038 = vadd.f32 %v7009, %v7037
      %7039 = vmatmul.bf16.gmra.mxu0 %v6350
      %v7040 = vpop.f32.mrf.mxu0
      %v7041 = vadd.f32 %v7012, %v7040
      %v7042 = vpop.f32.mrf.mxu0
      %v7043 = vadd.f32 %v7014, %v7042
      %7044 = vmatmul.bf16.gmra.mxu0 %v6358
      %v7045 = vpop.f32.mrf.mxu0
      %v7046 = vadd.f32 %v7017, %v7045
      %v7047 = vpop.f32.mrf.mxu0
      %v7048 = vadd.f32 %v7019, %v7047
      %7049 = vmatmul.bf16.gmra.mxu0 %v6366
      %v7050 = vpop.f32.mrf.mxu0
      %v7051 = vadd.f32 %v7022, %v7050
      %v7052 = vpop.f32.mrf.mxu0
      %v7053 = vadd.f32 %v7024, %v7052
      %7054 = vdwg.mxu0
      %7055 = vmatpush.bf16.msra.mxu0 %v6808
      %7056 = vmatpush.bf16.msra.mxu0 %v6807
      %7057 = vmatpush.bf16.msra.mxu0 %v6806
      %7058 = vmatpush.bf16.msra.mxu0 %v6805
      %7059 = vmatpush.bf16.msra.mxu0 %v6804
      %7060 = vmatpush.bf16.msra.mxu0 %v6803
      %7061 = vmatpush.bf16.msra.mxu0 %v6802
      %7062 = vmatpush.bf16.msra.mxu0 %v6801
      %7063 = vmatmul.bf16.gmra.mxu0 %v6343
      %v7064 = vpop.f32.mrf.mxu0
      %v7065 = vadd.f32 %v7036, %v7064
      %v7066 = vpop.f32.mrf.mxu0
      %v7067 = vadd.f32 %v7038, %v7066
      %7068 = vmatmul.bf16.gmra.mxu0 %v6351
      %v7069 = vpop.f32.mrf.mxu0
      %v7070 = vadd.f32 %v7041, %v7069
      %v7071 = vpop.f32.mrf.mxu0
      %v7072 = vadd.f32 %v7043, %v7071
      %7073 = vmatmul.bf16.gmra.mxu0 %v6359
      %v7074 = vpop.f32.mrf.mxu0
      %v7075 = vadd.f32 %v7046, %v7074
      %v7076 = vpop.f32.mrf.mxu0
      %v7077 = vadd.f32 %v7048, %v7076
      %7078 = vmatmul.bf16.gmra.mxu0 %v6367
      %v7079 = vpop.f32.mrf.mxu0
      %v7080 = vadd.f32 %v7051, %v7079
      %v7081 = vpop.f32.mrf.mxu0
      %v7082 = vadd.f32 %v7053, %v7081
      %7083 = vdwg.mxu0
      %7084 = vmatpush.bf16.msra.mxu0 %v6816
      %7085 = vmatpush.bf16.msra.mxu0 %v6815
      %7086 = vmatpush.bf16.msra.mxu0 %v6814
      %7087 = vmatpush.bf16.msra.mxu0 %v6813
      %7088 = vmatpush.bf16.msra.mxu0 %v6812
      %7089 = vmatpush.bf16.msra.mxu0 %v6811
      %7090 = vmatpush.bf16.msra.mxu0 %v6810
      %7091 = vmatpush.bf16.msra.mxu0 %v6809
      %7092 = vmatmul.bf16.gmra.mxu0 %v6344
      %v7093 = vpop.f32.mrf.mxu0
      %v7094 = vadd.f32 %v7065, %v7093
      %v7095 = vpop.f32.mrf.mxu0
      %v7096 = vadd.f32 %v7067, %v7095
      %7097 = vmatmul.bf16.gmra.mxu0 %v6352
      %v7098 = vpop.f32.mrf.mxu0
      %v7099 = vadd.f32 %v7070, %v7098
      %v7100 = vpop.f32.mrf.mxu0
      %v7101 = vadd.f32 %v7072, %v7100
      %7102 = vmatmul.bf16.gmra.mxu0 %v6360
      %v7103 = vpop.f32.mrf.mxu0
      %v7104 = vadd.f32 %v7075, %v7103
      %v7105 = vpop.f32.mrf.mxu0
      %v7106 = vadd.f32 %v7077, %v7105
      %7107 = vmatmul.bf16.gmra.mxu0 %v6368
      %v7108 = vpop.f32.mrf.mxu0
      %v7109 = vadd.f32 %v7080, %v7108
      %v7110 = vpop.f32.mrf.mxu0
      %v7111 = vadd.f32 %v7082, %v7110
      %7112 = vdwg.mxu0
      %v7113 = vadd.f32 %v307, %v7094
      %v7114 = vadd.f32 %v308, %v7096
      %v7115 = vadd.f32 %v309, %v7099
      %v7116 = vadd.f32 %v310, %v7101
      %v7117 = vadd.f32 %v311, %v7104
      %v7118 = vadd.f32 %v312, %v7106
      %v7119 = vadd.f32 %v313, %v7109
      %v7120 = vadd.f32 %v314, %v7111
      %v7121 = vld [vmem:[%s7] sm:$0x1]
      %v7123 = vperm.slane %v7121, 0
      %v7125 = vadd.f32 %v7113, %v7123
      %v7126 = vadd.f32 %v7114, %v7123
      %v7127 = vadd.f32 %v7115, %v7123
      %v7128 = vadd.f32 %v7116, %v7123
      %v7129 = vadd.f32 %v7117, %v7123
      %v7130 = vadd.f32 %v7118, %v7123
      %v7131 = vadd.f32 %v7119, %v7123
      %v7132 = vadd.f32 %v7120, %v7123
      %7133 = vst [vmem:[%s305] sm:$0xff] %v7125
      %7134 = vst [vmem:[%s305 + $0x8] sm:$0xff] %v7126
      %7135 = vst [vmem:[%s305 + $0x10] sm:$0xff] %v7127
      %7136 = vst [vmem:[%s305 + $0x18] sm:$0xff] %v7128
      %7137 = vst [vmem:[%s305 + $0x20] sm:$0xff] %v7129
      %7138 = vst [vmem:[%s305 + $0x28] sm:$0xff] %v7130
      %7139 = vst [vmem:[%s305 + $0x30] sm:$0xff] %v7131
      %7140 = vst [vmem:[%s305 + $0x38] sm:$0xff] %v7132
      %p7141 = scmp.lt.s32.totalorder %s19, 1
      %s7142 = scalar_select %p7141, %s19, 1
      %s7143 = smul.addr %s7142, 8
      %s7144 = smul.addr %s7143, 8
      %s7145 = scalar_lea.vmem %s8, %s7144
      // Predicated region
      $region53: #{self_attention.1} parent=51 // pred_check
        %p7146 = pneg %p210
      $region54: #{self_attention.1} parent=51 // pred_check_branch
        %7148 = sbr.rel (%p7146) target = $region56
      $region55: #{self_attention.1} parent=51 // pred_region
        _
      $region56: #{self_attention.1} parent=51 // pred_fallthru
        _
    $region52: #{self_attention.1} parent=5 // pred_fallthru
      _
    %p7149 = scmp.le.s32.totalorder 2, %s14
    // Predicated region
    $region57: #{self_attention.1} parent=5 // pred_check
      %p7150 = pneg %p7149
    $region58: #{self_attention.1} parent=5 // pred_check_branch
      %7152 = sbr.rel (%p7150) target = $region60
    $region59: #{self_attention.1} parent=5 // pred_region
      %s7153 = ssub.s32 %s14, 2
      // Predicated region
      $region61: #{self_attention.1} parent=59 // pred_check
        %p7154 = pneg %p216
      $region62: #{self_attention.1} parent=59 // pred_check_branch
        %7156 = sbr.rel (%p7154) target = $region64
      $region63: #{self_attention.1} parent=59 // pred_region
        %p7157 = scmp.lt.s32.totalorder %s20, 1
        %s7158 = scalar_select %p7157, %s20, 1
        %s7159 = smul.addr %s7158, 8
        %s7160 = smul.addr %s7159, 8
        %s7161 = scalar_lea.vmem %s8, %s7160
      $region64: #{self_attention.1} parent=59 // pred_fallthru
        _
    $region60: #{self_attention.1} parent=5 // pred_fallthru
      _
  $region6: #{self_attention.1} parent=0 // loop_footer
    %s18 = sadd.s32 1, %s14
  $region7: #{self_attention.1} parent=0 // loop_footer_branch
    %13 = sbr.rel target = $region3
  $region8: #{self_attention.1} parent=0 // loop_exit
    _

</llo_original>
